<compile_context>
chip_gen: v7x
topology: tpu7x:2x2x1
jax: 0.10.0
libtpu: 0.0.40
codegen_flags: <defaults>
</compile_context>

<pallas_src>
import functools
import numpy as np
import jax
import jax.numpy as jnp
from jax.experimental import pallas as pl
from jax.experimental.pallas import tpu as pltpu


# ----------------------------------------------------------------------------
# Fused encoder + max-pool kernel
# ----------------------------------------------------------------------------
def _encoder_maxpool_kernel(x_ref,
                            w1a, b1a, w1bs, b1r,
                            w2a, b2a, w2bs, b2r,
                            w3a, b3a, w3bs, b3r,
                            o_ref, acc_ref):
    """One (batch b, shard s, point-tile t) step of the CdwExtractorS forward."""
    t = pl.program_id(2)
    nt = pl.num_programs(2)

    x = x_ref[0]                                        # (TN, 3) f32

    # ---- Block 1 (3 -> 64): K=3/6 contractions stay on the VPU -------------
    wa = w1a[...]                                       # (3, 3)  f32
    wbs = w1bs[...]                                     # (6, 64) f32 = [wb; ws]
    x0, x1, x2 = x[:, 0:1], x[:, 1:2], x[:, 2:3]
    h = jnp.maximum(x0 * wa[0:1, :] + x1 * wa[1:2, :] + x2 * wa[2:3, :]
                    + b1a[...], 0.0)                    # (TN, 3)
    h0, h1, h2 = h[:, 0:1], h[:, 1:2], h[:, 2:3]
    y = (h0 * wbs[0:1, :] + h1 * wbs[1:2, :] + h2 * wbs[2:3, :]
         + x0 * wbs[3:4, :] + x1 * wbs[4:5, :] + x2 * wbs[5:6, :]
         + b1r[...])
    y = jnp.maximum(y, 0.0)                             # (TN, 64) f32

    # ---- Blocks 2 & 3 on the MXU: bf16 inputs, fused [wb; ws] second stage --
    def res_block(xin, wa_ref, ba_ref, wbs_ref, br_ref):
        xb = xin.astype(jnp.bfloat16)
        hh = jnp.dot(xb, wa_ref[...],
                     preferred_element_type=jnp.float32) + ba_ref[...]
        hh = jnp.maximum(hh, 0.0)                       # hidden width padded to 128k
        hx = jnp.concatenate([hh.astype(jnp.bfloat16), xb], axis=-1)
        yy = jnp.dot(hx, wbs_ref[...],
                     preferred_element_type=jnp.float32) + br_ref[...]
        return jnp.maximum(yy, 0.0)

    y = res_block(y, w2a, b2a, w2bs, b2r)               # (TN, 128) f32
    y = res_block(y, w3a, b3a, w3bs, b3r)               # (TN, E)   f32

    # ---- Running channel-wise max over the point axis -----------------------
    # Reduce TN rows -> 8 rows with pure vreg-wise vmax (sublane-aligned
    # halving tree); no cross-sublane (XLU) collapse in the inner loop.
    part = y
    while part.shape[0] > 8 and part.shape[0] % 16 == 0:
        m = part.shape[0] // 2
        part = jnp.maximum(part[:m, :], part[m:, :])
    if part.shape[0] > 8:   # odd tile sizes (never hit for power-of-two tiles)
        part = jnp.broadcast_to(jnp.max(part, axis=0, keepdims=True),
                                (8, part.shape[1]))

    @pl.when(t == 0)
    def _():
        acc_ref[...] = part

    @pl.when(t != 0)
    def _():
        acc_ref[...] = jnp.maximum(acc_ref[...], part)

    @pl.when(t == nt - 1)
    def _():
        o_ref[...] = acc_ref[...][None, None]           # (1, 1, 8, E)


# ----------------------------------------------------------------------------
# Parameter preparation (offline folding / fusion / bf16 cast / padding)
# ----------------------------------------------------------------------------
def _prep_mxu_block(blk):
    """Fuse [wb; ws], zero-pad the hidden width to a 128 multiple, cast to bf16."""
    wa, ba, wb, ws, br = blk['wa'], blk['ba'], blk['wb'], blk['ws'], blk['br']
    ic, oc = wb.shape
    hp = -(-ic // 128) * 128
    pad = hp - ic
    if pad:
        wa = jnp.concatenate([wa, jnp.zeros((ic, pad), wa.dtype)], axis=1)
        ba = jnp.concatenate([ba, jnp.zeros((1, pad), ba.dtype)], axis=1)
        wb = jnp.concatenate([wb, jnp.zeros((pad, oc), wb.dtype)], axis=0)
    wbs = jnp.concatenate([wb, ws], axis=0)             # (hp + ic, oc)
    return [wa.astype(jnp.bfloat16), ba, wbs.astype(jnp.bfloat16), br]


def _prepare_operands(params):
    blk1 = params['blocks'][0]
    ops = [blk1['wa'], blk1['ba'],                                   # f32 (VPU path)
           jnp.concatenate([blk1['wb'], blk1['ws']], axis=0),        # (6, 64) f32
           blk1['br']]
    for blk in params['blocks'][1:]:
        ops += _prep_mxu_block(blk)
    return ops


# ----------------------------------------------------------------------------
# Wrapper
# ----------------------------------------------------------------------------
def _choose_point_tile(n):
    n8 = -(-n // 8) * 8
    if n8 <= 256:
        return n8
    best_t, best_pad = None, None
    for t in (2048, 1024, 512, 256):          # largest tile with minimal padding
        padded = -(-n // t) * t
        if best_pad is None or padded < best_pad:
            best_t, best_pad = t, padded
    return best_t


@functools.partial(jax.jit, static_argnames=('tile_n',))
def cdw_extractor_forward(params, pts, tile_n=None):
    """pts: (B, N, 3) float32 -> cdw: (B, ebd_dim) float32."""
    B, N, C = pts.shape
    assert C == 3
    ops = _prepare_operands(params)
    E = params['blocks'][-1]['br'].shape[-1]

    TN = tile_n if tile_n is not None else _choose_point_tile(N)
    assert TN % 8 == 0
    num_tiles = -(-N // TN)
    n_pad = num_tiles * TN
    if n_pad != N:
        # Pad by duplicating real points: zero-padding would flow through the
        # biases + ReLU and could win the channel-wise max.
        idx = jnp.arange(n_pad) % N
        pts = jnp.take(pts, idx, axis=1)

    # Split the point axis across a second "parallel" grid axis so both
    # TensorCores stay busy on v7x even when B is small/odd (no-op on 1-TC chips).
    S = 2 if (num_tiles >= 2 and num_tiles % 2 == 0) else 1
    tiles_per_shard = num_tiles // S

    def const_spec(arr):
        nd = arr.ndim
        return pl.BlockSpec(arr.shape, lambda b, s, t: (0,) * nd)

    in_specs = [pl.BlockSpec((1, TN, 3),
                             lambda b, s, t: (b, s * tiles_per_shard + t, 0))]
    in_specs += [const_spec(a) for a in ops]

    out = pl.pallas_call(
        _encoder_maxpool_kernel,
        out_shape=jax.ShapeDtypeStruct((B, S, 8, E), jnp.float32),
        grid=(B, S, tiles_per_shard),
        in_specs=in_specs,
        out_specs=pl.BlockSpec((1, 1, 8, E), lambda b, s, t: (b, s, 0, 0)),
        scratch_shapes=[pltpu.VMEM((8, E), jnp.float32)],
        compiler_params=pltpu.CompilerParams(
            dimension_semantics=("parallel", "parallel", "arbitrary"),
            vmem_limit_bytes=32 * 1024 * 1024),
    )(pts, *ops)

    return jnp.max(out, axis=(1, 2))                    # (B, E)


# ----------------------------------------------------------------------------
# Synthetic parameters: Conv2d(1x1, bias=False) + BatchNorm2d (eval) folded
# ----------------------------------------------------------------------------
def _fold_bn_smlp(key, ic, oc):
    """SMLP(ic, oc, is_bn=True, nl='none'): BN folded into (weight, bias)."""
    kw, kg, kb, km, kv = jax.random.split(key, 5)
    w = jax.random.normal(kw, (ic, oc), jnp.float32) * (1.0 / np.sqrt(ic))
    gamma = 1.0 + 0.1 * jax.random.normal(kg, (oc,), jnp.float32)
    beta = 0.1 * jax.random.normal(kb, (oc,), jnp.float32)
    mean = 0.1 * jax.random.normal(km, (oc,), jnp.float32)
    var = jax.random.uniform(kv, (oc,), jnp.float32, minval=0.5, maxval=1.5)
    scale = gamma / jnp.sqrt(var + 1e-5)
    return w * scale[None, :], beta - mean * scale       # folded weight, bias


def _init_res_block(key, ic, oc):
    k1, k2, k3 = jax.random.split(key, 3)
    wa, ba = _fold_bn_smlp(k1, ic, ic)     # smlp_1 (followed by external ReLU)
    wb, bb = _fold_bn_smlp(k2, ic, oc)     # smlp_2
    if ic != oc:
        ws, bs = _fold_bn_smlp(k3, ic, oc)     # shortcut SMLP
    else:
        # Identity residual branch: relu(x + out) == relu(x @ I + 0 + out)
        ws = jnp.eye(ic, dtype=jnp.float32)
        bs = jnp.zeros((oc,), jnp.float32)
    return {'wa': wa, 'ba': ba.reshape(1, ic),
            'wb': wb, 'ws': ws,
            'br': (bb + bs).reshape(1, oc)}    # combined smlp_2 + shortcut bias


def init_params(key, ebd_dim):
    k1, k2, k3 = jax.random.split(key, 3)
    return {'blocks': [_init_res_block(k1, 3, 64),
                       _init_res_block(k2, 64, 128),
                       _init_res_block(k3, 128, ebd_dim)]}


# ----------------------------------------------------------------------------
# Pure-JAX reference with the kernel's numerics (block 1 f32, blocks 2-3 with
# bf16 matmul inputs / f32 accumulation) for a correctness check.
# ----------------------------------------------------------------------------
def cdw_extractor_reference(params, pts):
    hp = jax.lax.Precision.HIGHEST
    blocks = params['blocks']
    b1 = blocks[0]
    x = pts
    h = jnp.maximum(jnp.dot(x, b1['wa'], precision=hp) + b1['ba'], 0.0)
    x = jnp.maximum(jnp.dot(h, b1['wb'], precision=hp)
                    + jnp.dot(x, b1['ws'], precision=hp) + b1['br'], 0.0)
    for blk in blocks[1:]:
        xb = x.astype(jnp.bfloat16)
        h = jnp.maximum(
            jnp.dot(xb, blk['wa'].astype(jnp.bfloat16),
                    preferred_element_type=jnp.float32) + blk['ba'], 0.0)
        x = jnp.maximum(
            jnp.dot(h.astype(jnp.bfloat16), blk['wb'].astype(jnp.bfloat16),
                    preferred_element_type=jnp.float32)
            + jnp.dot(xb, blk['ws'].astype(jnp.bfloat16),
                      preferred_element_type=jnp.float32)
            + blk['br'], 0.0)
    return jnp.max(x, axis=1)


# ----------------------------------------------------------------------------
if __name__ == "__main__":
    key = jax.random.PRNGKey(0)
    k_pts, k_params, k_pts2 = jax.random.split(key, 3)

    ebd_dim = 256          # module default; lane-dense output (2 x 128 lanes)
    params = init_params(k_params, ebd_dim)

    # Test 1: auto-tiled path (single 1024-point tile, S = 1).
    B, N = 2, 1024
    pts = jax.random.normal(k_pts, (B, N, 3), jnp.float32)
    cdw = jax.block_until_ready(cdw_extractor_forward(params, pts))
    assert cdw.shape == (B, ebd_dim)
    assert bool(jnp.all(jnp.isfinite(cdw)))
    ref = jax.block_until_ready(jax.jit(cdw_extractor_reference)(params, pts))
    rel1 = float(jnp.max(jnp.abs(cdw - ref)) / (jnp.max(jnp.abs(ref)) + 1e-6))
    assert rel1 < 2e-2, f"test1 relative error vs reference too large: {rel1}"

    # Test 2: multi-tile path with point padding (N=1000 -> 1024 by duplicating
    # real points) and the two-shard "parallel" point axis (grid (3, 2, 4)).
    B2, N2 = 3, 1000
    pts2 = jax.random.normal(k_pts2, (B2, N2, 3), jnp.float32)
    cdw2 = jax.block_until_ready(cdw_extractor_forward(params, pts2, tile_n=128))
    assert cdw2.shape == (B2, ebd_dim)
    ref2 = jax.block_until_ready(jax.jit(cdw_extractor_reference)(params, pts2))
    rel2 = float(jnp.max(jnp.abs(cdw2 - ref2)) / (jnp.max(jnp.abs(ref2)) + 1e-6))
    assert rel2 < 2e-2, f"test2 relative error vs reference too large: {rel2}"

    print("KERNEL_OK")
</pallas_src>

<mosaic_0001>
module attributes {stable_mosaic.version = 11 : i64} {
  func.func @_encoder_maxpool_kernel(%arg0: i32, %arg1: i32, %arg2: i32, %arg3: memref<1x1024x3xf32, #tpu.memory_space<vmem>>, %arg4: memref<3x3xf32, #tpu.memory_space<vmem>>, %arg5: memref<1x3xf32, #tpu.memory_space<vmem>>, %arg6: memref<6x64xf32, #tpu.memory_space<vmem>>, %arg7: memref<1x64xf32, #tpu.memory_space<vmem>>, %arg8: memref<64x128xbf16, #tpu.memory_space<vmem>>, %arg9: memref<1x128xf32, #tpu.memory_space<vmem>>, %arg10: memref<192x128xbf16, #tpu.memory_space<vmem>>, %arg11: memref<1x128xf32, #tpu.memory_space<vmem>>, %arg12: memref<128x128xbf16, #tpu.memory_space<vmem>>, %arg13: memref<1x128xf32, #tpu.memory_space<vmem>>, %arg14: memref<256x256xbf16, #tpu.memory_space<vmem>>, %arg15: memref<1x256xf32, #tpu.memory_space<vmem>>, %arg16: memref<1x1x8x256xf32, #tpu.memory_space<vmem>>, %arg17: memref<8x256xf32, #tpu.memory_space<vmem>>) attributes {dimension_semantics = [#tpu.dimension_semantics<parallel>, #tpu.dimension_semantics<parallel>, #tpu.dimension_semantics<arbitrary>], iteration_bounds = array<i64: 2, 1, 1>, scalar_prefetch = 0 : i64, scratch_operands = 1 : i64, tpu.core_type = #tpu.core_type<tc>, window_params = [{transform_indices = @transform_0, window_bounds = array<i64: 1, 1024, 3>}, {pipeline_mode = #tpu.pipeline_mode<synchronous>, transform_indices = @transform_1, window_bounds = array<i64: 3, 3>}, {pipeline_mode = #tpu.pipeline_mode<synchronous>, transform_indices = @transform_2, window_bounds = array<i64: 1, 3>}, {pipeline_mode = #tpu.pipeline_mode<synchronous>, transform_indices = @transform_3, window_bounds = array<i64: 6, 64>}, {pipeline_mode = #tpu.pipeline_mode<synchronous>, transform_indices = @transform_4, window_bounds = array<i64: 1, 64>}, {pipeline_mode = #tpu.pipeline_mode<synchronous>, transform_indices = @transform_5, window_bounds = array<i64: 64, 128>}, {pipeline_mode = #tpu.pipeline_mode<synchronous>, transform_indices = @transform_6, window_bounds = array<i64: 1, 128>}, {pipeline_mode = #tpu.pipeline_mode<synchronous>, transform_indices = @transform_7, window_bounds = array<i64: 192, 128>}, {pipeline_mode = #tpu.pipeline_mode<synchronous>, transform_indices = @transform_8, window_bounds = array<i64: 1, 128>}, {pipeline_mode = #tpu.pipeline_mode<synchronous>, transform_indices = @transform_9, window_bounds = array<i64: 128, 128>}, {pipeline_mode = #tpu.pipeline_mode<synchronous>, transform_indices = @transform_10, window_bounds = array<i64: 1, 128>}, {pipeline_mode = #tpu.pipeline_mode<synchronous>, transform_indices = @transform_11, window_bounds = array<i64: 256, 256>}, {pipeline_mode = #tpu.pipeline_mode<synchronous>, transform_indices = @transform_12, window_bounds = array<i64: 1, 256>}, {transform_indices = @transform_13, window_bounds = array<i64: 1, 1, 8, 256>}]} {
    %c0 = arith.constant 0 : index
    %c0_0 = arith.constant 0 : index
    %c0_1 = arith.constant 0 : index
    %0 = vector.load %arg3[%c0, %c0_0, %c0_1] : memref<1x1024x3xf32, #tpu.memory_space<vmem>>, vector<1x1024x3xf32>
    %1 = vector.shape_cast %0 : vector<1x1024x3xf32> to vector<1024x3xf32>
    %c0_2 = arith.constant 0 : index
    %c0_3 = arith.constant 0 : index
    %2 = vector.load %arg4[%c0_2, %c0_3] : memref<3x3xf32, #tpu.memory_space<vmem>>, vector<3x3xf32>
    %c0_4 = arith.constant 0 : index
    %c0_5 = arith.constant 0 : index
    %3 = vector.load %arg6[%c0_4, %c0_5] : memref<6x64xf32, #tpu.memory_space<vmem>>, vector<6x64xf32>
    %4 = vector.extract_strided_slice %1 {offsets = [0, 0], sizes = [1024, 1], strides = [1, 1]} : vector<1024x3xf32> to vector<1024x1xf32>
    %5 = vector.extract_strided_slice %1 {offsets = [0, 1], sizes = [1024, 1], strides = [1, 1]} : vector<1024x3xf32> to vector<1024x1xf32>
    %6 = vector.extract_strided_slice %1 {offsets = [0, 2], sizes = [1024, 1], strides = [1, 1]} : vector<1024x3xf32> to vector<1024x1xf32>
    %7 = vector.extract_strided_slice %2 {offsets = [0, 0], sizes = [1, 3], strides = [1, 1]} : vector<3x3xf32> to vector<1x3xf32>
    %8 = vector.broadcast %4 : vector<1024x1xf32> to vector<1024x3xf32>
    %9 = vector.broadcast %7 : vector<1x3xf32> to vector<1024x3xf32>
    %10 = arith.mulf %8, %9 : vector<1024x3xf32>
    %11 = vector.extract_strided_slice %2 {offsets = [1, 0], sizes = [1, 3], strides = [1, 1]} : vector<3x3xf32> to vector<1x3xf32>
    %12 = vector.broadcast %5 : vector<1024x1xf32> to vector<1024x3xf32>
    %13 = vector.broadcast %11 : vector<1x3xf32> to vector<1024x3xf32>
    %14 = arith.mulf %12, %13 : vector<1024x3xf32>
    %15 = arith.addf %10, %14 : vector<1024x3xf32>
    %16 = vector.extract_strided_slice %2 {offsets = [2, 0], sizes = [1, 3], strides = [1, 1]} : vector<3x3xf32> to vector<1x3xf32>
    %17 = vector.broadcast %6 : vector<1024x1xf32> to vector<1024x3xf32>
    %18 = vector.broadcast %16 : vector<1x3xf32> to vector<1024x3xf32>
    %19 = arith.mulf %17, %18 : vector<1024x3xf32>
    %20 = arith.addf %15, %19 : vector<1024x3xf32>
    %c0_6 = arith.constant 0 : index
    %c0_7 = arith.constant 0 : index
    %21 = vector.load %arg5[%c0_6, %c0_7] : memref<1x3xf32, #tpu.memory_space<vmem>>, vector<1x3xf32>
    %22 = vector.broadcast %21 : vector<1x3xf32> to vector<1024x3xf32>
    %23 = arith.addf %20, %22 : vector<1024x3xf32>
    %cst = arith.constant 0.000000e+00 : f32
    %24 = vector.broadcast %cst : f32 to vector<1024x3xf32>
    %25 = arith.maximumf %23, %24 : vector<1024x3xf32>
    %26 = vector.extract_strided_slice %25 {offsets = [0, 0], sizes = [1024, 1], strides = [1, 1]} : vector<1024x3xf32> to vector<1024x1xf32>
    %27 = vector.extract_strided_slice %25 {offsets = [0, 1], sizes = [1024, 1], strides = [1, 1]} : vector<1024x3xf32> to vector<1024x1xf32>
    %28 = vector.extract_strided_slice %25 {offsets = [0, 2], sizes = [1024, 1], strides = [1, 1]} : vector<1024x3xf32> to vector<1024x1xf32>
    %29 = vector.extract_strided_slice %3 {offsets = [0, 0], sizes = [1, 64], strides = [1, 1]} : vector<6x64xf32> to vector<1x64xf32>
    %30 = vector.broadcast %26 : vector<1024x1xf32> to vector<1024x64xf32>
    %31 = vector.broadcast %29 : vector<1x64xf32> to vector<1024x64xf32>
    %32 = arith.mulf %30, %31 : vector<1024x64xf32>
    %33 = vector.extract_strided_slice %3 {offsets = [1, 0], sizes = [1, 64], strides = [1, 1]} : vector<6x64xf32> to vector<1x64xf32>
    %34 = vector.broadcast %27 : vector<1024x1xf32> to vector<1024x64xf32>
    %35 = vector.broadcast %33 : vector<1x64xf32> to vector<1024x64xf32>
    %36 = arith.mulf %34, %35 : vector<1024x64xf32>
    %37 = arith.addf %32, %36 : vector<1024x64xf32>
    %38 = vector.extract_strided_slice %3 {offsets = [2, 0], sizes = [1, 64], strides = [1, 1]} : vector<6x64xf32> to vector<1x64xf32>
    %39 = vector.broadcast %28 : vector<1024x1xf32> to vector<1024x64xf32>
    %40 = vector.broadcast %38 : vector<1x64xf32> to vector<1024x64xf32>
    %41 = arith.mulf %39, %40 : vector<1024x64xf32>
    %42 = arith.addf %37, %41 : vector<1024x64xf32>
    %43 = vector.extract_strided_slice %3 {offsets = [3, 0], sizes = [1, 64], strides = [1, 1]} : vector<6x64xf32> to vector<1x64xf32>
    %44 = vector.broadcast %4 : vector<1024x1xf32> to vector<1024x64xf32>
    %45 = vector.broadcast %43 : vector<1x64xf32> to vector<1024x64xf32>
    %46 = arith.mulf %44, %45 : vector<1024x64xf32>
    %47 = arith.addf %42, %46 : vector<1024x64xf32>
    %48 = vector.extract_strided_slice %3 {offsets = [4, 0], sizes = [1, 64], strides = [1, 1]} : vector<6x64xf32> to vector<1x64xf32>
    %49 = vector.broadcast %5 : vector<1024x1xf32> to vector<1024x64xf32>
    %50 = vector.broadcast %48 : vector<1x64xf32> to vector<1024x64xf32>
    %51 = arith.mulf %49, %50 : vector<1024x64xf32>
    %52 = arith.addf %47, %51 : vector<1024x64xf32>
    %53 = vector.extract_strided_slice %3 {offsets = [5, 0], sizes = [1, 64], strides = [1, 1]} : vector<6x64xf32> to vector<1x64xf32>
    %54 = vector.broadcast %6 : vector<1024x1xf32> to vector<1024x64xf32>
    %55 = vector.broadcast %53 : vector<1x64xf32> to vector<1024x64xf32>
    %56 = arith.mulf %54, %55 : vector<1024x64xf32>
    %57 = arith.addf %52, %56 : vector<1024x64xf32>
    %c0_8 = arith.constant 0 : index
    %c0_9 = arith.constant 0 : index
    %58 = vector.load %arg7[%c0_8, %c0_9] : memref<1x64xf32, #tpu.memory_space<vmem>>, vector<1x64xf32>
    %59 = vector.broadcast %58 : vector<1x64xf32> to vector<1024x64xf32>
    %60 = arith.addf %57, %59 : vector<1024x64xf32>
    %cst_10 = arith.constant 0.000000e+00 : f32
    %61 = vector.broadcast %cst_10 : f32 to vector<1024x64xf32>
    %62 = arith.maximumf %60, %61 : vector<1024x64xf32>
    %63 = arith.truncf %62 : vector<1024x64xf32> to vector<1024x64xbf16>
    %c0_11 = arith.constant 0 : index
    %c0_12 = arith.constant 0 : index
    %64 = vector.load %arg8[%c0_11, %c0_12] : memref<64x128xbf16, #tpu.memory_space<vmem>>, vector<64x128xbf16>
    %cst_13 = arith.constant dense<0.000000e+00> : vector<1024x128xf32>
    %65 = tpu.matmul %63, %64, %cst_13 {dimension_numbers = #tpu.dot_dimension_numbers<[1], [0], [0], [1], [0, 0, 1, 1], [], []>} : vector<1024x64xbf16>, vector<64x128xbf16>, vector<1024x128xf32> -> vector<1024x128xf32>
    %c0_14 = arith.constant 0 : index
    %c0_15 = arith.constant 0 : index
    %66 = vector.load %arg9[%c0_14, %c0_15] : memref<1x128xf32, #tpu.memory_space<vmem>>, vector<1x128xf32>
    %67 = vector.broadcast %66 : vector<1x128xf32> to vector<1024x128xf32>
    %68 = arith.addf %65, %67 : vector<1024x128xf32>
    %cst_16 = arith.constant 0.000000e+00 : f32
    %69 = vector.broadcast %cst_16 : f32 to vector<1024x128xf32>
    %70 = arith.maximumf %68, %69 : vector<1024x128xf32>
    %71 = arith.truncf %70 : vector<1024x128xf32> to vector<1024x128xbf16>
    %72 = tpu.concatenate %71, %63 in 1 : vector<1024x128xbf16>, vector<1024x64xbf16> -> vector<1024x192xbf16>
    %c0_17 = arith.constant 0 : index
    %c0_18 = arith.constant 0 : index
    %73 = vector.load %arg10[%c0_17, %c0_18] : memref<192x128xbf16, #tpu.memory_space<vmem>>, vector<192x128xbf16>
    %cst_19 = arith.constant dense<0.000000e+00> : vector<1024x128xf32>
    %74 = tpu.matmul %72, %73, %cst_19 {dimension_numbers = #tpu.dot_dimension_numbers<[1], [0], [0], [1], [0, 0, 1, 1], [], []>} : vector<1024x192xbf16>, vector<192x128xbf16>, vector<1024x128xf32> -> vector<1024x128xf32>
    %c0_20 = arith.constant 0 : index
    %c0_21 = arith.constant 0 : index
    %75 = vector.load %arg11[%c0_20, %c0_21] : memref<1x128xf32, #tpu.memory_space<vmem>>, vector<1x128xf32>
    %76 = vector.broadcast %75 : vector<1x128xf32> to vector<1024x128xf32>
    %77 = arith.addf %74, %76 : vector<1024x128xf32>
    %cst_22 = arith.constant 0.000000e+00 : f32
    %78 = vector.broadcast %cst_22 : f32 to vector<1024x128xf32>
    %79 = arith.maximumf %77, %78 : vector<1024x128xf32>
    %80 = arith.truncf %79 : vector<1024x128xf32> to vector<1024x128xbf16>
    %c0_23 = arith.constant 0 : index
    %c0_24 = arith.constant 0 : index
    %81 = vector.load %arg12[%c0_23, %c0_24] : memref<128x128xbf16, #tpu.memory_space<vmem>>, vector<128x128xbf16>
    %cst_25 = arith.constant dense<0.000000e+00> : vector<1024x128xf32>
    %82 = tpu.matmul %80, %81, %cst_25 {dimension_numbers = #tpu.dot_dimension_numbers<[1], [0], [0], [1], [0, 0, 1, 1], [], []>} : vector<1024x128xbf16>, vector<128x128xbf16>, vector<1024x128xf32> -> vector<1024x128xf32>
    %c0_26 = arith.constant 0 : index
    %c0_27 = arith.constant 0 : index
    %83 = vector.load %arg13[%c0_26, %c0_27] : memref<1x128xf32, #tpu.memory_space<vmem>>, vector<1x128xf32>
    %84 = vector.broadcast %83 : vector<1x128xf32> to vector<1024x128xf32>
    %85 = arith.addf %82, %84 : vector<1024x128xf32>
    %cst_28 = arith.constant 0.000000e+00 : f32
    %86 = vector.broadcast %cst_28 : f32 to vector<1024x128xf32>
    %87 = arith.maximumf %85, %86 : vector<1024x128xf32>
    %88 = arith.truncf %87 : vector<1024x128xf32> to vector<1024x128xbf16>
    %89 = tpu.concatenate %88, %80 in 1 : vector<1024x128xbf16>, vector<1024x128xbf16> -> vector<1024x256xbf16>
    %c0_29 = arith.constant 0 : index
    %c0_30 = arith.constant 0 : index
    %90 = vector.load %arg14[%c0_29, %c0_30] : memref<256x256xbf16, #tpu.memory_space<vmem>>, vector<256x256xbf16>
    %cst_31 = arith.constant dense<0.000000e+00> : vector<1024x256xf32>
    %91 = tpu.matmul %89, %90, %cst_31 {dimension_numbers = #tpu.dot_dimension_numbers<[1], [0], [0], [1], [0, 0, 1, 1], [], []>} : vector<1024x256xbf16>, vector<256x256xbf16>, vector<1024x256xf32> -> vector<1024x256xf32>
    %c0_32 = arith.constant 0 : index
    %c0_33 = arith.constant 0 : index
    %92 = vector.load %arg15[%c0_32, %c0_33] : memref<1x256xf32, #tpu.memory_space<vmem>>, vector<1x256xf32>
    %93 = vector.broadcast %92 : vector<1x256xf32> to vector<1024x256xf32>
    %94 = arith.addf %91, %93 : vector<1024x256xf32>
    %cst_34 = arith.constant 0.000000e+00 : f32
    %95 = vector.broadcast %cst_34 : f32 to vector<1024x256xf32>
    %96 = arith.maximumf %94, %95 : vector<1024x256xf32>
    %97 = vector.extract_strided_slice %96 {offsets = [0, 0], sizes = [512, 256], strides = [1, 1]} : vector<1024x256xf32> to vector<512x256xf32>
    %98 = vector.extract_strided_slice %96 {offsets = [512, 0], sizes = [512, 256], strides = [1, 1]} : vector<1024x256xf32> to vector<512x256xf32>
    %99 = arith.maximumf %97, %98 : vector<512x256xf32>
    %100 = vector.extract_strided_slice %99 {offsets = [0, 0], sizes = [256, 256], strides = [1, 1]} : vector<512x256xf32> to vector<256x256xf32>
    %101 = vector.extract_strided_slice %99 {offsets = [256, 0], sizes = [256, 256], strides = [1, 1]} : vector<512x256xf32> to vector<256x256xf32>
    %102 = arith.maximumf %100, %101 : vector<256x256xf32>
    %103 = vector.extract_strided_slice %102 {offsets = [0, 0], sizes = [128, 256], strides = [1, 1]} : vector<256x256xf32> to vector<128x256xf32>
    %104 = vector.extract_strided_slice %102 {offsets = [128, 0], sizes = [128, 256], strides = [1, 1]} : vector<256x256xf32> to vector<128x256xf32>
    %105 = arith.maximumf %103, %104 : vector<128x256xf32>
    %106 = vector.extract_strided_slice %105 {offsets = [0, 0], sizes = [64, 256], strides = [1, 1]} : vector<128x256xf32> to vector<64x256xf32>
    %107 = vector.extract_strided_slice %105 {offsets = [64, 0], sizes = [64, 256], strides = [1, 1]} : vector<128x256xf32> to vector<64x256xf32>
    %108 = arith.maximumf %106, %107 : vector<64x256xf32>
    %109 = vector.extract_strided_slice %108 {offsets = [0, 0], sizes = [32, 256], strides = [1, 1]} : vector<64x256xf32> to vector<32x256xf32>
    %110 = vector.extract_strided_slice %108 {offsets = [32, 0], sizes = [32, 256], strides = [1, 1]} : vector<64x256xf32> to vector<32x256xf32>
    %111 = arith.maximumf %109, %110 : vector<32x256xf32>
    %112 = vector.extract_strided_slice %111 {offsets = [0, 0], sizes = [16, 256], strides = [1, 1]} : vector<32x256xf32> to vector<16x256xf32>
    %113 = vector.extract_strided_slice %111 {offsets = [16, 0], sizes = [16, 256], strides = [1, 1]} : vector<32x256xf32> to vector<16x256xf32>
    %114 = arith.maximumf %112, %113 : vector<16x256xf32>
    %115 = vector.extract_strided_slice %114 {offsets = [0, 0], sizes = [8, 256], strides = [1, 1]} : vector<16x256xf32> to vector<8x256xf32>
    %116 = vector.extract_strided_slice %114 {offsets = [8, 0], sizes = [8, 256], strides = [1, 1]} : vector<16x256xf32> to vector<8x256xf32>
    %117 = arith.maximumf %115, %116 : vector<8x256xf32>
    %c0_i32 = arith.constant 0 : i32
    %118 = arith.cmpi eq, %arg2, %c0_i32 : i32
    %119 = arith.extui %118 : i1 to i32
    %c0_i32_35 = arith.constant 0 : i32
    %120 = arith.cmpi ne, %119, %c0_i32_35 : i32
    scf.if %120 {
      %c0_40 = arith.constant 0 : index
      %c0_41 = arith.constant 0 : index
      %127 = vector.load %arg17[%c0_40, %c0_41] : memref<8x256xf32, #tpu.memory_space<vmem>>, vector<8x256xf32>
      tpu.vector_store %arg17[%c0_40, %c0_41], %117 {strides = array<i32>} : memref<8x256xf32, #tpu.memory_space<vmem>>, vector<8x256xf32>,
    } else {
    }
    %c0_i32_36 = arith.constant 0 : i32
    %121 = arith.cmpi ne, %arg2, %c0_i32_36 : i32
    %122 = arith.extui %121 : i1 to i32
    %c0_i32_37 = arith.constant 0 : i32
    %123 = arith.cmpi ne, %122, %c0_i32_37 : i32
    scf.if %123 {
      %c0_40 = arith.constant 0 : index
      %c0_41 = arith.constant 0 : index
      %127 = vector.load %arg17[%c0_40, %c0_41] : memref<8x256xf32, #tpu.memory_space<vmem>>, vector<8x256xf32>
      %128 = arith.maximumf %127, %117 : vector<8x256xf32>
      %c0_42 = arith.constant 0 : index
      %c0_43 = arith.constant 0 : index
      %129 = vector.load %arg17[%c0_42, %c0_43] : memref<8x256xf32, #tpu.memory_space<vmem>>, vector<8x256xf32>
      tpu.vector_store %arg17[%c0_42, %c0_43], %128 {strides = array<i32>} : memref<8x256xf32, #tpu.memory_space<vmem>>, vector<8x256xf32>,
    } else {
    }
    %c0_i32_38 = arith.constant 0 : i32
    %124 = arith.cmpi eq, %arg2, %c0_i32_38 : i32
    %125 = arith.extui %124 : i1 to i32
    %c0_i32_39 = arith.constant 0 : i32
    %126 = arith.cmpi ne, %125, %c0_i32_39 : i32
    scf.if %126 {
      %c0_40 = arith.constant 0 : index
      %c0_41 = arith.constant 0 : index
      %127 = vector.load %arg17[%c0_40, %c0_41] : memref<8x256xf32, #tpu.memory_space<vmem>>, vector<8x256xf32>
      %128 = vector.shape_cast %127 : vector<8x256xf32> to vector<1x1x8x256xf32>
      %c0_42 = arith.constant 0 : index
      %c0_43 = arith.constant 0 : index
      %c0_44 = arith.constant 0 : index
      %c0_45 = arith.constant 0 : index
      %129 = vector.load %arg16[%c0_42, %c0_43, %c0_44, %c0_45] : memref<1x1x8x256xf32, #tpu.memory_space<vmem>>, vector<1x1x8x256xf32>
      tpu.vector_store %arg16[%c0_42, %c0_43, %c0_44, %c0_45], %128 {strides = array<i32>} : memref<1x1x8x256xf32, #tpu.memory_space<vmem>>, vector<1x1x8x256xf32>,
    } else {
    }
    return
  }
  func.func @transform_0(%arg0: i32, %arg1: i32, %arg2: i32) -> (i32, i32, i32) {
    %c1_i32 = arith.constant 1 : i32
    %0 = arith.muli %arg1, %c1_i32 : i32
    %1 = arith.addi %0, %arg2 : i32
    %c0_i32 = arith.constant 0 : i32
    %c0_i32_0 = arith.constant 0 : i32
    return %arg0, %1, %c0_i32 : i32, i32, i32
  }
  func.func @transform_1(%arg0: i32, %arg1: i32, %arg2: i32) -> (i32, i32) {
    %c0_i32 = arith.constant 0 : i32
    %c0_i32_0 = arith.constant 0 : i32
    %c0_i32_1 = arith.constant 0 : i32
    return %c0_i32, %c0_i32_0 : i32, i32
  }
  func.func @transform_2(%arg0: i32, %arg1: i32, %arg2: i32) -> (i32, i32) {
    %c0_i32 = arith.constant 0 : i32
    %c0_i32_0 = arith.constant 0 : i32
    %c0_i32_1 = arith.constant 0 : i32
    return %c0_i32, %c0_i32_0 : i32, i32
  }
  func.func @transform_3(%arg0: i32, %arg1: i32, %arg2: i32) -> (i32, i32) {
    %c0_i32 = arith.constant 0 : i32
    %c0_i32_0 = arith.constant 0 : i32
    %c0_i32_1 = arith.constant 0 : i32
    return %c0_i32, %c0_i32_0 : i32, i32
  }
  func.func @transform_4(%arg0: i32, %arg1: i32, %arg2: i32) -> (i32, i32) {
    %c0_i32 = arith.constant 0 : i32
    %c0_i32_0 = arith.constant 0 : i32
    %c0_i32_1 = arith.constant 0 : i32
    return %c0_i32, %c0_i32_0 : i32, i32
  }
  func.func @transform_5(%arg0: i32, %arg1: i32, %arg2: i32) -> (i32, i32) {
    %c0_i32 = arith.constant 0 : i32
    %c0_i32_0 = arith.constant 0 : i32
    %c0_i32_1 = arith.constant 0 : i32
    return %c0_i32, %c0_i32_0 : i32, i32
  }
  func.func @transform_6(%arg0: i32, %arg1: i32, %arg2: i32) -> (i32, i32) {
    %c0_i32 = arith.constant 0 : i32
    %c0_i32_0 = arith.constant 0 : i32
    %c0_i32_1 = arith.constant 0 : i32
    return %c0_i32, %c0_i32_0 : i32, i32
  }
  func.func @transform_7(%arg0: i32, %arg1: i32, %arg2: i32) -> (i32, i32) {
    %c0_i32 = arith.constant 0 : i32
    %c0_i32_0 = arith.constant 0 : i32
    %c0_i32_1 = arith.constant 0 : i32
    return %c0_i32, %c0_i32_0 : i32, i32
  }
  func.func @transform_8(%arg0: i32, %arg1: i32, %arg2: i32) -> (i32, i32) {
    %c0_i32 = arith.constant 0 : i32
    %c0_i32_0 = arith.constant 0 : i32
    %c0_i32_1 = arith.constant 0 : i32
    return %c0_i32, %c0_i32_0 : i32, i32
  }
  func.func @transform_9(%arg0: i32, %arg1: i32, %arg2: i32) -> (i32, i32) {
    %c0_i32 = arith.constant 0 : i32
    %c0_i32_0 = arith.constant 0 : i32
    %c0_i32_1 = arith.constant 0 : i32
    return %c0_i32, %c0_i32_0 : i32, i32
  }
  func.func @transform_10(%arg0: i32, %arg1: i32, %arg2: i32) -> (i32, i32) {
    %c0_i32 = arith.constant 0 : i32
    %c0_i32_0 = arith.constant 0 : i32
    %c0_i32_1 = arith.constant 0 : i32
    return %c0_i32, %c0_i32_0 : i32, i32
  }
  func.func @transform_11(%arg0: i32, %arg1: i32, %arg2: i32) -> (i32, i32) {
    %c0_i32 = arith.constant 0 : i32
    %c0_i32_0 = arith.constant 0 : i32
    %c0_i32_1 = arith.constant 0 : i32
    return %c0_i32, %c0_i32_0 : i32, i32
  }
  func.func @transform_12(%arg0: i32, %arg1: i32, %arg2: i32) -> (i32, i32) {
    %c0_i32 = arith.constant 0 : i32
    %c0_i32_0 = arith.constant 0 : i32
    %c0_i32_1 = arith.constant 0 : i32
    return %c0_i32, %c0_i32_0 : i32, i32
  }
  func.func @transform_13(%arg0: i32, %arg1: i32, %arg2: i32) -> (i32, i32, i32, i32) {
    %c0_i32 = arith.constant 0 : i32
    %c0_i32_0 = arith.constant 0 : i32
    %c0_i32_1 = arith.constant 0 : i32
    return %arg0, %arg1, %c0_i32, %c0_i32_0 : i32, i32, i32, i32
  }
}

</mosaic_0001>

<llo_original>
// kernel: cdw_extractor_forward.1
$region0: #{cdw_extractor_forward.1}
  #allocation0 [shape = 'u32[]', space=smem, size = 0x4, offset = 0x4, fixed_abs, tag = 'smem constant byte address 0x4 - core index']
  #allocation1 [shape = 'u32[144,128]{1,0:T(1,128)}', space=vmem, size = 0x12000, scoped, tag = 'internal scratch']
  #allocation2 [shape = 'f32[8,256]{1,0:T(8,128)}', space=vmem, size = 0x2000, scoped, tag = 'scratch operand']
  %s0 = inlined_call_operand.vmem [shape: f32[2,1024,3], index: 0, kind: input, shape index: {}]
  %s1 = inlined_call_operand.vmem [shape: f32[3,3], index: 1, kind: input, shape index: {}]
  %s2 = inlined_call_operand.vmem [shape: f32[1,3], index: 2, kind: input, shape index: {}]
  %s3 = inlined_call_operand.vmem [shape: f32[6,64], index: 3, kind: input, shape index: {}]
  %s4 = inlined_call_operand.vmem [shape: f32[1,64], index: 4, kind: input, shape index: {}]
  %s5 = inlined_call_operand.vmem [shape: bf16[64,128], index: 5, kind: input, shape index: {}]
  %s6 = inlined_call_operand.vmem [shape: f32[1,128], index: 6, kind: input, shape index: {}]
  %s7 = inlined_call_operand.vmem [shape: bf16[192,128], index: 7, kind: input, shape index: {}]
  %s8 = inlined_call_operand.vmem [shape: f32[1,128], index: 8, kind: input, shape index: {}]
  %s9 = inlined_call_operand.vmem [shape: bf16[128,128], index: 9, kind: input, shape index: {}]
  %s10 = inlined_call_operand.vmem [shape: f32[1,128], index: 10, kind: input, shape index: {}]
  %s11 = inlined_call_operand.vmem [shape: bf16[256,256], index: 11, kind: input, shape index: {}]
  %s12 = inlined_call_operand.vmem [shape: f32[1,256], index: 12, kind: input, shape index: {}]
  %s13 = inlined_call_operand.vmem [shape: f32[2,1,8,256], index: 13, kind: output, shape index: {}]
  %s14 = sld [smem:[#allocation0]]
  $region97: #{cdw_extractor_forward.1} parent=0
    _
  %s16 = ssub.s32 1, %s14
  %s17 = scalar_select 0, %s16, %s14
  loop: start=0, step=1, limit=4
  $region2: #{cdw_extractor_forward.1} parent=0 // loop_pre_header
    _
  $region3: #{cdw_extractor_forward.1} parent=0 // loop_header
    %s19 = sphi 0, %s23
    %p20 = scmp.ge.s32.totalorder %s19, 4
    %s26 = sphi 0, %s45
    %s27 = sphi 0, %s41
    %s28 = sphi 0, %s37
    %s29 = sphi 0, %s26
    %s30 = sphi 0, %s27
    %s31 = sphi 0, %s28
    %s32 = sphi 0, %s29
    %s33 = sphi 0, %s30
    %s34 = sphi 0, %s31
    %s52 = sphi 0, %s54
    %s55 = sphi 0, %s52
    %s56 = sphi 0, %s55
    %s72 = sphi 0, %s56
    %s76 = sphi 0, %s76
    %s78 = sphi 0, %s76
    %s79 = sphi 0, %s78
    %s93 = sphi 0, %s79
    %s97 = sphi 0, %s97
    %s99 = sphi 0, %s97
    %s100 = sphi 0, %s99
    %s114 = sphi 0, %s100
    %s118 = sphi 0, %s118
    %s120 = sphi 0, %s118
    %s121 = sphi 0, %s120
    %s135 = sphi 0, %s121
    %s139 = sphi 0, %s139
    %s141 = sphi 0, %s139
    %s142 = sphi 0, %s141
    %s156 = sphi 0, %s142
    %s160 = sphi 0, %s160
    %s162 = sphi 0, %s160
    %s163 = sphi 0, %s162
    %s177 = sphi 0, %s163
    %s181 = sphi 0, %s181
    %s183 = sphi 0, %s181
    %s184 = sphi 0, %s183
    %s198 = sphi 0, %s184
    %s202 = sphi 0, %s202
    %s204 = sphi 0, %s202
    %s205 = sphi 0, %s204
    %s219 = sphi 0, %s205
    %s223 = sphi 0, %s223
    %s225 = sphi 0, %s223
    %s226 = sphi 0, %s225
    %s240 = sphi 0, %s226
    %s244 = sphi 0, %s244
    %s246 = sphi 0, %s244
    %s247 = sphi 0, %s246
    %s261 = sphi 0, %s247
    %s265 = sphi 0, %s265
    %s267 = sphi 0, %s265
    %s268 = sphi 0, %s267
    %s282 = sphi 0, %s268
    %s286 = sphi 0, %s286
    %s288 = sphi 0, %s286
    %s289 = sphi 0, %s288
    %s303 = sphi 0, %s289
    %s307 = sphi 0, %s307
    %s309 = sphi 0, %s307
    %s310 = sphi 0, %s309
    %s324 = sphi 0, %s310
    %s332 = sphi 0, %s334
    %s335 = sphi 0, %s332
    %s336 = sphi 0, %s335
    %s352 = sphi 0, %s336
  $region4: #{cdw_extractor_forward.1} parent=0 // loop_header_branch
    %22 = sbr.rel (%p20) target = $region8
  $region5: #{cdw_extractor_forward.1} parent=0 // loop_body
    %s24 = ssub.s32 %s19, 1
    %s25 = ssub.s32 %s19, 2
    %s35 = sadd.s32 1, %s28
    %p36 = scmp.ge.s32.totalorder %s35, 1
    %s37 = scalar_select %p36, 0, %s35
    %s38 = sadd.s32 1, %s27
    %s39 = scalar_select %p36, %s38, %s27
    %p40 = scmp.ge.s32.totalorder %s39, 1
    %s41 = scalar_select %p40, 0, %s39
    %s42 = sadd.s32 1, %s26
    %s43 = scalar_select %p40, %s42, %s26
    %p44 = scmp.ge.s32.totalorder %s43, 2
    %s45 = scalar_select %p44, 0, %s43
    %s46 = sadd.s32 %s27, %s28
    %s47 = sadd.s32 %s41, %s37
    %s48 = ssub.s32 %s26, %s45
    %s49 = ssub.s32 %s46, %s47
    %s50 = sor.u32 %s48, %s49
    %p51 = scmp.eq.s32.totalorder %s50, 0
    %s53 = sadd.s32 %s52, 1
    %s54 = scalar_select %p51, %s52, %s53
    %p57 = pneg %p51
    %p58 = scmp.eq.s32.totalorder %s19, 1
    %p59 = por %p57, %p58
    %p60 = scmp.ne.s32.totalorder %s52, %s55
    %p61 = scmp.eq.s32.totalorder %s19, 0
    %p62 = por %p60, %p61
    %p63 = scmp.ne.s32.totalorder %s52, %s55
    %p64 = scmp.eq.s32.totalorder %s24, 1
    %p65 = por %p63, %p64
    %p66 = scmp.ne.s32.totalorder %s55, %s56
    %p67 = scmp.eq.s32.totalorder %s24, 0
    %p68 = por %p66, %p67
    %p69 = scmp.ne.s32.totalorder %s55, %s56
    %p70 = scmp.eq.s32.totalorder %s25, 1
    %p71 = por %p69, %p70
    %p73 = scmp.ne.s32.totalorder %s56, %s72
    %p74 = scmp.eq.s32.totalorder %s25, 0
    %p75 = por %p73, %p74
    %s77 = sadd.s32 %s76, 1
    %p80 = scmp.eq.s32.totalorder %s19, 1
    %p81 = scmp.ne.s32.totalorder %s76, %s78
    %p82 = scmp.eq.s32.totalorder %s19, 0
    %p83 = por %p81, %p82
    %p84 = scmp.ne.s32.totalorder %s76, %s78
    %p85 = scmp.eq.s32.totalorder %s24, 1
    %p86 = por %p84, %p85
    %p87 = scmp.ne.s32.totalorder %s78, %s79
    %p88 = scmp.eq.s32.totalorder %s24, 0
    %p89 = por %p87, %p88
    %p90 = scmp.ne.s32.totalorder %s78, %s79
    %p91 = scmp.eq.s32.totalorder %s25, 1
    %p92 = por %p90, %p91
    %p94 = scmp.ne.s32.totalorder %s79, %s93
    %p95 = scmp.eq.s32.totalorder %s25, 0
    %p96 = por %p94, %p95
    %s98 = sadd.s32 %s97, 1
    %p101 = scmp.eq.s32.totalorder %s19, 1
    %p102 = scmp.ne.s32.totalorder %s97, %s99
    %p103 = scmp.eq.s32.totalorder %s19, 0
    %p104 = por %p102, %p103
    %p105 = scmp.ne.s32.totalorder %s97, %s99
    %p106 = scmp.eq.s32.totalorder %s24, 1
    %p107 = por %p105, %p106
    %p108 = scmp.ne.s32.totalorder %s99, %s100
    %p109 = scmp.eq.s32.totalorder %s24, 0
    %p110 = por %p108, %p109
    %p111 = scmp.ne.s32.totalorder %s99, %s100
    %p112 = scmp.eq.s32.totalorder %s25, 1
    %p113 = por %p111, %p112
    %p115 = scmp.ne.s32.totalorder %s100, %s114
    %p116 = scmp.eq.s32.totalorder %s25, 0
    %p117 = por %p115, %p116
    %s119 = sadd.s32 %s118, 1
    %p122 = scmp.eq.s32.totalorder %s19, 1
    %p123 = scmp.ne.s32.totalorder %s118, %s120
    %p124 = scmp.eq.s32.totalorder %s19, 0
    %p125 = por %p123, %p124
    %p126 = scmp.ne.s32.totalorder %s118, %s120
    %p127 = scmp.eq.s32.totalorder %s24, 1
    %p128 = por %p126, %p127
    %p129 = scmp.ne.s32.totalorder %s120, %s121
    %p130 = scmp.eq.s32.totalorder %s24, 0
    %p131 = por %p129, %p130
    %p132 = scmp.ne.s32.totalorder %s120, %s121
    %p133 = scmp.eq.s32.totalorder %s25, 1
    %p134 = por %p132, %p133
    %p136 = scmp.ne.s32.totalorder %s121, %s135
    %p137 = scmp.eq.s32.totalorder %s25, 0
    %p138 = por %p136, %p137
    %s140 = sadd.s32 %s139, 1
    %p143 = scmp.eq.s32.totalorder %s19, 1
    %p144 = scmp.ne.s32.totalorder %s139, %s141
    %p145 = scmp.eq.s32.totalorder %s19, 0
    %p146 = por %p144, %p145
    %p147 = scmp.ne.s32.totalorder %s139, %s141
    %p148 = scmp.eq.s32.totalorder %s24, 1
    %p149 = por %p147, %p148
    %p150 = scmp.ne.s32.totalorder %s141, %s142
    %p151 = scmp.eq.s32.totalorder %s24, 0
    %p152 = por %p150, %p151
    %p153 = scmp.ne.s32.totalorder %s141, %s142
    %p154 = scmp.eq.s32.totalorder %s25, 1
    %p155 = por %p153, %p154
    %p157 = scmp.ne.s32.totalorder %s142, %s156
    %p158 = scmp.eq.s32.totalorder %s25, 0
    %p159 = por %p157, %p158
    %s161 = sadd.s32 %s160, 1
    %p164 = scmp.eq.s32.totalorder %s19, 1
    %p165 = scmp.ne.s32.totalorder %s160, %s162
    %p166 = scmp.eq.s32.totalorder %s19, 0
    %p167 = por %p165, %p166
    %p168 = scmp.ne.s32.totalorder %s160, %s162
    %p169 = scmp.eq.s32.totalorder %s24, 1
    %p170 = por %p168, %p169
    %p171 = scmp.ne.s32.totalorder %s162, %s163
    %p172 = scmp.eq.s32.totalorder %s24, 0
    %p173 = por %p171, %p172
    %p174 = scmp.ne.s32.totalorder %s162, %s163
    %p175 = scmp.eq.s32.totalorder %s25, 1
    %p176 = por %p174, %p175
    %p178 = scmp.ne.s32.totalorder %s163, %s177
    %p179 = scmp.eq.s32.totalorder %s25, 0
    %p180 = por %p178, %p179
    %s182 = sadd.s32 %s181, 1
    %p185 = scmp.eq.s32.totalorder %s19, 1
    %p186 = scmp.ne.s32.totalorder %s181, %s183
    %p187 = scmp.eq.s32.totalorder %s19, 0
    %p188 = por %p186, %p187
    %p189 = scmp.ne.s32.totalorder %s181, %s183
    %p190 = scmp.eq.s32.totalorder %s24, 1
    %p191 = por %p189, %p190
    %p192 = scmp.ne.s32.totalorder %s183, %s184
    %p193 = scmp.eq.s32.totalorder %s24, 0
    %p194 = por %p192, %p193
    %p195 = scmp.ne.s32.totalorder %s183, %s184
    %p196 = scmp.eq.s32.totalorder %s25, 1
    %p197 = por %p195, %p196
    %p199 = scmp.ne.s32.totalorder %s184, %s198
    %p200 = scmp.eq.s32.totalorder %s25, 0
    %p201 = por %p199, %p200
    %s203 = sadd.s32 %s202, 1
    %p206 = scmp.eq.s32.totalorder %s19, 1
    %p207 = scmp.ne.s32.totalorder %s202, %s204
    %p208 = scmp.eq.s32.totalorder %s19, 0
    %p209 = por %p207, %p208
    %p210 = scmp.ne.s32.totalorder %s202, %s204
    %p211 = scmp.eq.s32.totalorder %s24, 1
    %p212 = por %p210, %p211
    %p213 = scmp.ne.s32.totalorder %s204, %s205
    %p214 = scmp.eq.s32.totalorder %s24, 0
    %p215 = por %p213, %p214
    %p216 = scmp.ne.s32.totalorder %s204, %s205
    %p217 = scmp.eq.s32.totalorder %s25, 1
    %p218 = por %p216, %p217
    %p220 = scmp.ne.s32.totalorder %s205, %s219
    %p221 = scmp.eq.s32.totalorder %s25, 0
    %p222 = por %p220, %p221
    %s224 = sadd.s32 %s223, 1
    %p227 = scmp.eq.s32.totalorder %s19, 1
    %p228 = scmp.ne.s32.totalorder %s223, %s225
    %p229 = scmp.eq.s32.totalorder %s19, 0
    %p230 = por %p228, %p229
    %p231 = scmp.ne.s32.totalorder %s223, %s225
    %p232 = scmp.eq.s32.totalorder %s24, 1
    %p233 = por %p231, %p232
    %p234 = scmp.ne.s32.totalorder %s225, %s226
    %p235 = scmp.eq.s32.totalorder %s24, 0
    %p236 = por %p234, %p235
    %p237 = scmp.ne.s32.totalorder %s225, %s226
    %p238 = scmp.eq.s32.totalorder %s25, 1
    %p239 = por %p237, %p238
    %p241 = scmp.ne.s32.totalorder %s226, %s240
    %p242 = scmp.eq.s32.totalorder %s25, 0
    %p243 = por %p241, %p242
    %s245 = sadd.s32 %s244, 1
    %p248 = scmp.eq.s32.totalorder %s19, 1
    %p249 = scmp.ne.s32.totalorder %s244, %s246
    %p250 = scmp.eq.s32.totalorder %s19, 0
    %p251 = por %p249, %p250
    %p252 = scmp.ne.s32.totalorder %s244, %s246
    %p253 = scmp.eq.s32.totalorder %s24, 1
    %p254 = por %p252, %p253
    %p255 = scmp.ne.s32.totalorder %s246, %s247
    %p256 = scmp.eq.s32.totalorder %s24, 0
    %p257 = por %p255, %p256
    %p258 = scmp.ne.s32.totalorder %s246, %s247
    %p259 = scmp.eq.s32.totalorder %s25, 1
    %p260 = por %p258, %p259
    %p262 = scmp.ne.s32.totalorder %s247, %s261
    %p263 = scmp.eq.s32.totalorder %s25, 0
    %p264 = por %p262, %p263
    %s266 = sadd.s32 %s265, 1
    %p269 = scmp.eq.s32.totalorder %s19, 1
    %p270 = scmp.ne.s32.totalorder %s265, %s267
    %p271 = scmp.eq.s32.totalorder %s19, 0
    %p272 = por %p270, %p271
    %p273 = scmp.ne.s32.totalorder %s265, %s267
    %p274 = scmp.eq.s32.totalorder %s24, 1
    %p275 = por %p273, %p274
    %p276 = scmp.ne.s32.totalorder %s267, %s268
    %p277 = scmp.eq.s32.totalorder %s24, 0
    %p278 = por %p276, %p277
    %p279 = scmp.ne.s32.totalorder %s267, %s268
    %p280 = scmp.eq.s32.totalorder %s25, 1
    %p281 = por %p279, %p280
    %p283 = scmp.ne.s32.totalorder %s268, %s282
    %p284 = scmp.eq.s32.totalorder %s25, 0
    %p285 = por %p283, %p284
    %s287 = sadd.s32 %s286, 1
    %p290 = scmp.eq.s32.totalorder %s19, 1
    %p291 = scmp.ne.s32.totalorder %s286, %s288
    %p292 = scmp.eq.s32.totalorder %s19, 0
    %p293 = por %p291, %p292
    %p294 = scmp.ne.s32.totalorder %s286, %s288
    %p295 = scmp.eq.s32.totalorder %s24, 1
    %p296 = por %p294, %p295
    %p297 = scmp.ne.s32.totalorder %s288, %s289
    %p298 = scmp.eq.s32.totalorder %s24, 0
    %p299 = por %p297, %p298
    %p300 = scmp.ne.s32.totalorder %s288, %s289
    %p301 = scmp.eq.s32.totalorder %s25, 1
    %p302 = por %p300, %p301
    %p304 = scmp.ne.s32.totalorder %s289, %s303
    %p305 = scmp.eq.s32.totalorder %s25, 0
    %p306 = por %p304, %p305
    %s308 = sadd.s32 %s307, 1
    %p311 = scmp.eq.s32.totalorder %s19, 1
    %p312 = scmp.ne.s32.totalorder %s307, %s309
    %p313 = scmp.eq.s32.totalorder %s19, 0
    %p314 = por %p312, %p313
    %p315 = scmp.ne.s32.totalorder %s307, %s309
    %p316 = scmp.eq.s32.totalorder %s24, 1
    %p317 = por %p315, %p316
    %p318 = scmp.ne.s32.totalorder %s309, %s310
    %p319 = scmp.eq.s32.totalorder %s24, 0
    %p320 = por %p318, %p319
    %p321 = scmp.ne.s32.totalorder %s309, %s310
    %p322 = scmp.eq.s32.totalorder %s25, 1
    %p323 = por %p321, %p322
    %p325 = scmp.ne.s32.totalorder %s310, %s324
    %p326 = scmp.eq.s32.totalorder %s25, 0
    %p327 = por %p325, %p326
    %s328 = ssub.s32 %s26, %s45
    %s329 = ssub.s32 %s27, %s41
    %s330 = sor.u32 %s328, %s329
    %p331 = scmp.eq.s32.totalorder %s330, 0
    %s333 = sadd.s32 %s332, 1
    %s334 = scalar_select %p331, %s332, %s333
    %p337 = pneg %p331
    %p338 = scmp.eq.s32.totalorder %s19, 1
    %p339 = por %p337, %p338
    %p340 = scmp.ne.s32.totalorder %s332, %s335
    %p341 = scmp.eq.s32.totalorder %s19, 0
    %p342 = por %p340, %p341
    %p343 = scmp.ne.s32.totalorder %s332, %s335
    %p344 = scmp.eq.s32.totalorder %s24, 1
    %p345 = por %p343, %p344
    %p346 = scmp.ne.s32.totalorder %s335, %s336
    %p347 = scmp.eq.s32.totalorder %s24, 0
    %p348 = por %p346, %p347
    %p349 = scmp.ne.s32.totalorder %s335, %s336
    %p350 = scmp.eq.s32.totalorder %s25, 1
    %p351 = por %p349, %p350
    %p353 = scmp.ne.s32.totalorder %s336, %s352
    %p354 = scmp.eq.s32.totalorder %s25, 0
    %p355 = por %p353, %p354
    %p356 = scmp.le.s32.totalorder 1, %s19
    %p357 = scmp.lt.s32.totalorder %s19, 3
    %p358 = pnand %p356, %p357
    %p359 = pneg %p358
    // Predicated region
    $region9: #{cdw_extractor_forward.1} parent=5 // pred_check
      _
    $region10: #{cdw_extractor_forward.1} parent=5 // pred_check_branch
      %361 = sbr.rel (%p358) target = $region12
    $region11: #{cdw_extractor_forward.1} parent=5 // pred_region
      %s362 = ssub.s32 %s19, 1
      // Predicated region
      $region13: #{cdw_extractor_forward.1} parent=11 // pred_check
        %p363 = pneg %p89
      $region14: #{cdw_extractor_forward.1} parent=11 // pred_check_branch
        %365 = sbr.rel (%p363) target = $region16
      $region15: #{cdw_extractor_forward.1} parent=11 // pred_region
        _
      $region16: #{cdw_extractor_forward.1} parent=11 // pred_fallthru
        _
      // Predicated region
      $region17: #{cdw_extractor_forward.1} parent=11 // pred_check
        %p366 = pneg %p110
      $region18: #{cdw_extractor_forward.1} parent=11 // pred_check_branch
        %368 = sbr.rel (%p366) target = $region20
      $region19: #{cdw_extractor_forward.1} parent=11 // pred_region
        _
      $region20: #{cdw_extractor_forward.1} parent=11 // pred_fallthru
        _
      // Predicated region
      $region21: #{cdw_extractor_forward.1} parent=11 // pred_check
        %p369 = pneg %p131
      $region22: #{cdw_extractor_forward.1} parent=11 // pred_check_branch
        %371 = sbr.rel (%p369) target = $region24
      $region23: #{cdw_extractor_forward.1} parent=11 // pred_region
        _
      $region24: #{cdw_extractor_forward.1} parent=11 // pred_fallthru
        _
      // Predicated region
      $region25: #{cdw_extractor_forward.1} parent=11 // pred_check
        %p372 = pneg %p152
      $region26: #{cdw_extractor_forward.1} parent=11 // pred_check_branch
        %374 = sbr.rel (%p372) target = $region28
      $region27: #{cdw_extractor_forward.1} parent=11 // pred_region
        _
      $region28: #{cdw_extractor_forward.1} parent=11 // pred_fallthru
        _
      // Predicated region
      $region29: #{cdw_extractor_forward.1} parent=11 // pred_check
        %p375 = pneg %p173
      $region30: #{cdw_extractor_forward.1} parent=11 // pred_check_branch
        %377 = sbr.rel (%p375) target = $region32
      $region31: #{cdw_extractor_forward.1} parent=11 // pred_region
        _
      $region32: #{cdw_extractor_forward.1} parent=11 // pred_fallthru
        _
      // Predicated region
      $region33: #{cdw_extractor_forward.1} parent=11 // pred_check
        %p378 = pneg %p194
      $region34: #{cdw_extractor_forward.1} parent=11 // pred_check_branch
        %380 = sbr.rel (%p378) target = $region36
      $region35: #{cdw_extractor_forward.1} parent=11 // pred_region
        _
      $region36: #{cdw_extractor_forward.1} parent=11 // pred_fallthru
        _
      // Predicated region
      $region37: #{cdw_extractor_forward.1} parent=11 // pred_check
        %p381 = pneg %p215
      $region38: #{cdw_extractor_forward.1} parent=11 // pred_check_branch
        %383 = sbr.rel (%p381) target = $region40
      $region39: #{cdw_extractor_forward.1} parent=11 // pred_region
        _
      $region40: #{cdw_extractor_forward.1} parent=11 // pred_fallthru
        _
      // Predicated region
      $region41: #{cdw_extractor_forward.1} parent=11 // pred_check
        %p384 = pneg %p236
      $region42: #{cdw_extractor_forward.1} parent=11 // pred_check_branch
        %386 = sbr.rel (%p384) target = $region44
      $region43: #{cdw_extractor_forward.1} parent=11 // pred_region
        _
      $region44: #{cdw_extractor_forward.1} parent=11 // pred_fallthru
        _
      // Predicated region
      $region45: #{cdw_extractor_forward.1} parent=11 // pred_check
        %p387 = pneg %p257
      $region46: #{cdw_extractor_forward.1} parent=11 // pred_check_branch
        %389 = sbr.rel (%p387) target = $region48
      $region47: #{cdw_extractor_forward.1} parent=11 // pred_region
        _
      $region48: #{cdw_extractor_forward.1} parent=11 // pred_fallthru
        _
      // Predicated region
      $region49: #{cdw_extractor_forward.1} parent=11 // pred_check
        %p390 = pneg %p278
      $region50: #{cdw_extractor_forward.1} parent=11 // pred_check_branch
        %392 = sbr.rel (%p390) target = $region52
      $region51: #{cdw_extractor_forward.1} parent=11 // pred_region
        _
      $region52: #{cdw_extractor_forward.1} parent=11 // pred_fallthru
        _
      // Predicated region
      $region53: #{cdw_extractor_forward.1} parent=11 // pred_check
        %p393 = pneg %p299
      $region54: #{cdw_extractor_forward.1} parent=11 // pred_check_branch
        %395 = sbr.rel (%p393) target = $region56
      $region55: #{cdw_extractor_forward.1} parent=11 // pred_region
        _
      $region56: #{cdw_extractor_forward.1} parent=11 // pred_fallthru
        _
      // Predicated region
      $region57: #{cdw_extractor_forward.1} parent=11 // pred_check
        %p396 = pneg %p320
      $region58: #{cdw_extractor_forward.1} parent=11 // pred_check_branch
        %398 = sbr.rel (%p396) target = $region60
      $region59: #{cdw_extractor_forward.1} parent=11 // pred_region
        _
      $region60: #{cdw_extractor_forward.1} parent=11 // pred_fallthru
        _
    $region12: #{cdw_extractor_forward.1} parent=5 // pred_fallthru
      _
    %p399 = scmp.lt.s32.totalorder %s19, 2
    // Predicated region
    $region61: #{cdw_extractor_forward.1} parent=5 // pred_check
      %p400 = pneg %p399
    $region62: #{cdw_extractor_forward.1} parent=5 // pred_check_branch
      %402 = sbr.rel (%p400) target = $region64
    $region63: #{cdw_extractor_forward.1} parent=5 // pred_region
      // Predicated region
      $region65: #{cdw_extractor_forward.1} parent=63 // pred_check
        %p403 = pneg %p62
      $region66: #{cdw_extractor_forward.1} parent=63 // pred_check_branch
        %405 = sbr.rel (%p403) target = $region68
      $region67: #{cdw_extractor_forward.1} parent=63 // pred_region
        %s406 = sadd.s32 %s27, %s28
        %s407 = smul.u32 128, %s406
        %p408 = scmp.lt.s32.totalorder %s26, 1
        %s409 = scalar_select %p408, %s26, 1
        %p410 = scmp.lt.s32.totalorder %s407, 127
        %s411 = scalar_select %p410, %s407, 127
        %s412 = smul.addr %s409, 128
        %s413 = sadd.s32 %s411, %s412
        %s414 = smul.addr %s413, 8
        %s415 = scalar_lea.vmem %s0, %s414
        %s416 = sadd.s32 %s27, %s28
        %s417 = smul.u32 128, %s416
      $region68: #{cdw_extractor_forward.1} parent=63 // pred_fallthru
        _
    $region64: #{cdw_extractor_forward.1} parent=5 // pred_fallthru
      _
    %p418 = scmp.le.s32.totalorder 1, %s19
    %p419 = scmp.lt.s32.totalorder %s19, 3
    %p420 = pnand %p418, %p419
    %p421 = pneg %p420
    // Predicated region
    $region69: #{cdw_extractor_forward.1} parent=5 // pred_check
      _
    $region70: #{cdw_extractor_forward.1} parent=5 // pred_check_branch
      %423 = sbr.rel (%p420) target = $region72
    $region71: #{cdw_extractor_forward.1} parent=5 // pred_region
      %s424 = ssub.s32 %s19, 1
      %s425 = sadd.s32 %s30, %s31
      %s426 = smul.u32 128, %s425
      %p427 = scmp.lt.s32.totalorder %s29, 1
      %s428 = scalar_select %p427, %s29, 1
      %p429 = scmp.lt.s32.totalorder %s426, 127
      %s430 = scalar_select %p429, %s426, 127
      %s431 = smul.addr %s428, 128
      %s432 = sadd.s32 %s430, %s431
      %s433 = smul.addr %s432, 8
      %s434 = scalar_lea.vmem %s0, %s433
      %p435 = pneg %p68
      %p436 = pneg %p65
      %p437 = pneg %p89
      %p438 = pneg %p86
      %p439 = pneg %p110
      %p440 = pneg %p107
      %p441 = pneg %p131
      %p442 = pneg %p128
      %p443 = pneg %p152
      %p444 = pneg %p149
      %p445 = pneg %p173
      %p446 = pneg %p170
      %p447 = pneg %p194
      %p448 = pneg %p191
      %p449 = pneg %p215
      %p450 = pneg %p212
      %p451 = pneg %p236
      %p452 = pneg %p233
      %p453 = pneg %p257
      %p454 = pneg %p254
      %p455 = pneg %p278
      %p456 = pneg %p275
      %p457 = pneg %p299
      %p458 = pneg %p296
      %p459 = pneg %p320
      %p460 = pneg %p317
      %p461 = pneg %p348
      %p462 = pneg %p345
      %p463 = scmp.lt.s32.totalorder %s29, 1
      %s464 = scalar_select %p463, %s29, 1
      %p465 = scmp.lt.s32.totalorder %s30, 0
      %s466 = scalar_select %p465, %s30, 0
      %s467 = smul.addr %s466, 2
      %s468 = smul.addr %s464, 2
      %s469 = sadd.s32 %s467, %s468
      %s470 = smul.addr %s469, 8
      %s471 = scalar_lea.vmem %s13, %s470
      %s472 = sadd.s32 %s30, %s31
      %s473 = smul.u32 128, %s472
      %p474 = scmp.lt.s32.totalorder %s29, 1
      %s475 = scalar_select %p474, %s29, 1
      %p476 = scmp.lt.s32.totalorder %s473, 127
      %s477 = scalar_select %p476, %s473, 127
      %s478 = smul.addr %s475, 128
      %s479 = sadd.s32 %s477, %s478
      %s480 = smul.addr %s479, 8
      %s481 = scalar_lea.vmem %s0, %s480
      %s482 = sadd.s32 %s30, %s31
      %s483 = smul.u32 128, %s482
      %p484 = scmp.lt.s32.totalorder %s29, 1
      %s485 = scalar_select %p484, %s29, 1
      %p486 = scmp.lt.s32.totalorder %s30, 0
      %s487 = scalar_select %p486, %s30, 0
      %s488 = smul.addr %s487, 2
      %s489 = smul.addr %s485, 2
      %s490 = sadd.s32 %s488, %s489
      %s491 = smul.addr %s490, 8
      %s492 = scalar_lea.vmem %s13, %s491
      %v494 = vld [vmem:[%s481] sm:$0xff]
      %v495 = vld [vmem:[%s481 + $0x8] sm:$0xff]
      %v496 = vld [vmem:[%s481 + $0x10] sm:$0xff]
      %v497 = vld [vmem:[%s481 + $0x18] sm:$0xff]
      %v498 = vld [vmem:[%s481 + $0x20] sm:$0xff]
      %v499 = vld [vmem:[%s481 + $0x28] sm:$0xff]
      %v500 = vld [vmem:[%s481 + $0x30] sm:$0xff]
      %v501 = vld [vmem:[%s481 + $0x38] sm:$0xff]
      %v502 = vld [vmem:[%s481 + $0x40] sm:$0xff]
      %v503 = vld [vmem:[%s481 + $0x48] sm:$0xff]
      %v504 = vld [vmem:[%s481 + $0x50] sm:$0xff]
      %v505 = vld [vmem:[%s481 + $0x58] sm:$0xff]
      %v506 = vld [vmem:[%s481 + $0x60] sm:$0xff]
      %v507 = vld [vmem:[%s481 + $0x68] sm:$0xff]
      %v508 = vld [vmem:[%s481 + $0x70] sm:$0xff]
      %v509 = vld [vmem:[%s481 + $0x78] sm:$0xff]
      %v510 = vld [vmem:[%s481 + $0x80] sm:$0xff]
      %v511 = vld [vmem:[%s481 + $0x88] sm:$0xff]
      %v512 = vld [vmem:[%s481 + $0x90] sm:$0xff]
      %v513 = vld [vmem:[%s481 + $0x98] sm:$0xff]
      %v514 = vld [vmem:[%s481 + $0xa0] sm:$0xff]
      %v515 = vld [vmem:[%s481 + $0xa8] sm:$0xff]
      %v516 = vld [vmem:[%s481 + $0xb0] sm:$0xff]
      %v517 = vld [vmem:[%s481 + $0xb8] sm:$0xff]
      %v518 = vld [vmem:[%s481 + $0xc0] sm:$0xff]
      %v519 = vld [vmem:[%s481 + $0xc8] sm:$0xff]
      %v520 = vld [vmem:[%s481 + $0xd0] sm:$0xff]
      %v521 = vld [vmem:[%s481 + $0xd8] sm:$0xff]
      %v522 = vld [vmem:[%s481 + $0xe0] sm:$0xff]
      %v523 = vld [vmem:[%s481 + $0xe8] sm:$0xff]
      %v524 = vld [vmem:[%s481 + $0xf0] sm:$0xff]
      %v525 = vld [vmem:[%s481 + $0xf8] sm:$0xff]
      %v526 = vld [vmem:[%s481 + $0x100] sm:$0xff]
      %v527 = vld [vmem:[%s481 + $0x108] sm:$0xff]
      %v528 = vld [vmem:[%s481 + $0x110] sm:$0xff]
      %v529 = vld [vmem:[%s481 + $0x118] sm:$0xff]
      %v530 = vld [vmem:[%s481 + $0x120] sm:$0xff]
      %v531 = vld [vmem:[%s481 + $0x128] sm:$0xff]
      %v532 = vld [vmem:[%s481 + $0x130] sm:$0xff]
      %v533 = vld [vmem:[%s481 + $0x138] sm:$0xff]
      %v534 = vld [vmem:[%s481 + $0x140] sm:$0xff]
      %v535 = vld [vmem:[%s481 + $0x148] sm:$0xff]
      %v536 = vld [vmem:[%s481 + $0x150] sm:$0xff]
      %v537 = vld [vmem:[%s481 + $0x158] sm:$0xff]
      %v538 = vld [vmem:[%s481 + $0x160] sm:$0xff]
      %v539 = vld [vmem:[%s481 + $0x168] sm:$0xff]
      %v540 = vld [vmem:[%s481 + $0x170] sm:$0xff]
      %v541 = vld [vmem:[%s481 + $0x178] sm:$0xff]
      %v542 = vld [vmem:[%s481 + $0x180] sm:$0xff]
      %v543 = vld [vmem:[%s481 + $0x188] sm:$0xff]
      %v544 = vld [vmem:[%s481 + $0x190] sm:$0xff]
      %v545 = vld [vmem:[%s481 + $0x198] sm:$0xff]
      %v546 = vld [vmem:[%s481 + $0x1a0] sm:$0xff]
      %v547 = vld [vmem:[%s481 + $0x1a8] sm:$0xff]
      %v548 = vld [vmem:[%s481 + $0x1b0] sm:$0xff]
      %v549 = vld [vmem:[%s481 + $0x1b8] sm:$0xff]
      %v550 = vld [vmem:[%s481 + $0x1c0] sm:$0xff]
      %v551 = vld [vmem:[%s481 + $0x1c8] sm:$0xff]
      %v552 = vld [vmem:[%s481 + $0x1d0] sm:$0xff]
      %v553 = vld [vmem:[%s481 + $0x1d8] sm:$0xff]
      %v554 = vld [vmem:[%s481 + $0x1e0] sm:$0xff]
      %v555 = vld [vmem:[%s481 + $0x1e8] sm:$0xff]
      %v556 = vld [vmem:[%s481 + $0x1f0] sm:$0xff]
      %v557 = vld [vmem:[%s481 + $0x1f8] sm:$0xff]
      %v558 = vld [vmem:[%s481 + $0x200] sm:$0xff]
      %v559 = vld [vmem:[%s481 + $0x208] sm:$0xff]
      %v560 = vld [vmem:[%s481 + $0x210] sm:$0xff]
      %v561 = vld [vmem:[%s481 + $0x218] sm:$0xff]
      %v562 = vld [vmem:[%s481 + $0x220] sm:$0xff]
      %v563 = vld [vmem:[%s481 + $0x228] sm:$0xff]
      %v564 = vld [vmem:[%s481 + $0x230] sm:$0xff]
      %v565 = vld [vmem:[%s481 + $0x238] sm:$0xff]
      %v566 = vld [vmem:[%s481 + $0x240] sm:$0xff]
      %v567 = vld [vmem:[%s481 + $0x248] sm:$0xff]
      %v568 = vld [vmem:[%s481 + $0x250] sm:$0xff]
      %v569 = vld [vmem:[%s481 + $0x258] sm:$0xff]
      %v570 = vld [vmem:[%s481 + $0x260] sm:$0xff]
      %v571 = vld [vmem:[%s481 + $0x268] sm:$0xff]
      %v572 = vld [vmem:[%s481 + $0x270] sm:$0xff]
      %v573 = vld [vmem:[%s481 + $0x278] sm:$0xff]
      %v574 = vld [vmem:[%s481 + $0x280] sm:$0xff]
      %v575 = vld [vmem:[%s481 + $0x288] sm:$0xff]
      %v576 = vld [vmem:[%s481 + $0x290] sm:$0xff]
      %v577 = vld [vmem:[%s481 + $0x298] sm:$0xff]
      %v578 = vld [vmem:[%s481 + $0x2a0] sm:$0xff]
      %v579 = vld [vmem:[%s481 + $0x2a8] sm:$0xff]
      %v580 = vld [vmem:[%s481 + $0x2b0] sm:$0xff]
      %v581 = vld [vmem:[%s481 + $0x2b8] sm:$0xff]
      %v582 = vld [vmem:[%s481 + $0x2c0] sm:$0xff]
      %v583 = vld [vmem:[%s481 + $0x2c8] sm:$0xff]
      %v584 = vld [vmem:[%s481 + $0x2d0] sm:$0xff]
      %v585 = vld [vmem:[%s481 + $0x2d8] sm:$0xff]
      %v586 = vld [vmem:[%s481 + $0x2e0] sm:$0xff]
      %v587 = vld [vmem:[%s481 + $0x2e8] sm:$0xff]
      %v588 = vld [vmem:[%s481 + $0x2f0] sm:$0xff]
      %v589 = vld [vmem:[%s481 + $0x2f8] sm:$0xff]
      %v590 = vld [vmem:[%s481 + $0x300] sm:$0xff]
      %v591 = vld [vmem:[%s481 + $0x308] sm:$0xff]
      %v592 = vld [vmem:[%s481 + $0x310] sm:$0xff]
      %v593 = vld [vmem:[%s481 + $0x318] sm:$0xff]
      %v594 = vld [vmem:[%s481 + $0x320] sm:$0xff]
      %v595 = vld [vmem:[%s481 + $0x328] sm:$0xff]
      %v596 = vld [vmem:[%s481 + $0x330] sm:$0xff]
      %v597 = vld [vmem:[%s481 + $0x338] sm:$0xff]
      %v598 = vld [vmem:[%s481 + $0x340] sm:$0xff]
      %v599 = vld [vmem:[%s481 + $0x348] sm:$0xff]
      %v600 = vld [vmem:[%s481 + $0x350] sm:$0xff]
      %v601 = vld [vmem:[%s481 + $0x358] sm:$0xff]
      %v602 = vld [vmem:[%s481 + $0x360] sm:$0xff]
      %v603 = vld [vmem:[%s481 + $0x368] sm:$0xff]
      %v604 = vld [vmem:[%s481 + $0x370] sm:$0xff]
      %v605 = vld [vmem:[%s481 + $0x378] sm:$0xff]
      %v606 = vld [vmem:[%s481 + $0x380] sm:$0xff]
      %v607 = vld [vmem:[%s481 + $0x388] sm:$0xff]
      %v608 = vld [vmem:[%s481 + $0x390] sm:$0xff]
      %v609 = vld [vmem:[%s481 + $0x398] sm:$0xff]
      %v610 = vld [vmem:[%s481 + $0x3a0] sm:$0xff]
      %v611 = vld [vmem:[%s481 + $0x3a8] sm:$0xff]
      %v612 = vld [vmem:[%s481 + $0x3b0] sm:$0xff]
      %v613 = vld [vmem:[%s481 + $0x3b8] sm:$0xff]
      %v614 = vld [vmem:[%s481 + $0x3c0] sm:$0xff]
      %v615 = vld [vmem:[%s481 + $0x3c8] sm:$0xff]
      %v616 = vld [vmem:[%s481 + $0x3d0] sm:$0xff]
      %v617 = vld [vmem:[%s481 + $0x3d8] sm:$0xff]
      %v618 = vld [vmem:[%s481 + $0x3e0] sm:$0xff]
      %v619 = vld [vmem:[%s481 + $0x3e8] sm:$0xff]
      %v620 = vld [vmem:[%s481 + $0x3f0] sm:$0xff]
      %v621 = vld [vmem:[%s481 + $0x3f8] sm:$0xff]
      %v622 = vld [vmem:[%s1] sm:$0x7]
      %v623 = vld [vmem:[%s3] sm:$0x3f]
      %625 = vset.pattern.permute.xlu0 0
      %626 = vperm.xlu0 %625, %v494
      %v627 = vpop.permute.xlu0 %626
      %630 = vset.pattern.permute.xlu0 0
      %631 = vperm.xlu0 %630, %v495
      %v632 = vpop.permute.xlu0 %631
      %635 = vset.pattern.permute.xlu0 0
      %636 = vperm.xlu0 %635, %v496
      %v637 = vpop.permute.xlu0 %636
      %640 = vset.pattern.permute.xlu0 0
      %641 = vperm.xlu0 %640, %v497
      %v642 = vpop.permute.xlu0 %641
      %645 = vset.pattern.permute.xlu0 0
      %646 = vperm.xlu0 %645, %v498
      %v647 = vpop.permute.xlu0 %646
      %650 = vset.pattern.permute.xlu0 0
      %651 = vperm.xlu0 %650, %v499
      %v652 = vpop.permute.xlu0 %651
      %655 = vset.pattern.permute.xlu0 0
      %656 = vperm.xlu0 %655, %v500
      %v657 = vpop.permute.xlu0 %656
      %660 = vset.pattern.permute.xlu0 0
      %661 = vperm.xlu0 %660, %v501
      %v662 = vpop.permute.xlu0 %661
      %665 = vset.pattern.permute.xlu0 0
      %666 = vperm.xlu0 %665, %v502
      %v667 = vpop.permute.xlu0 %666
      %670 = vset.pattern.permute.xlu0 0
      %671 = vperm.xlu0 %670, %v503
      %v672 = vpop.permute.xlu0 %671
      %675 = vset.pattern.permute.xlu0 0
      %676 = vperm.xlu0 %675, %v504
      %v677 = vpop.permute.xlu0 %676
      %680 = vset.pattern.permute.xlu0 0
      %681 = vperm.xlu0 %680, %v505
      %v682 = vpop.permute.xlu0 %681
      %685 = vset.pattern.permute.xlu0 0
      %686 = vperm.xlu0 %685, %v506
      %v687 = vpop.permute.xlu0 %686
      %690 = vset.pattern.permute.xlu0 0
      %691 = vperm.xlu0 %690, %v507
      %v692 = vpop.permute.xlu0 %691
      %695 = vset.pattern.permute.xlu0 0
      %696 = vperm.xlu0 %695, %v508
      %v697 = vpop.permute.xlu0 %696
      %700 = vset.pattern.permute.xlu0 0
      %701 = vperm.xlu0 %700, %v509
      %v702 = vpop.permute.xlu0 %701
      %705 = vset.pattern.permute.xlu0 0
      %706 = vperm.xlu0 %705, %v510
      %v707 = vpop.permute.xlu0 %706
      %710 = vset.pattern.permute.xlu0 0
      %711 = vperm.xlu0 %710, %v511
      %v712 = vpop.permute.xlu0 %711
      %715 = vset.pattern.permute.xlu0 0
      %716 = vperm.xlu0 %715, %v512
      %v717 = vpop.permute.xlu0 %716
      %720 = vset.pattern.permute.xlu0 0
      %721 = vperm.xlu0 %720, %v513
      %v722 = vpop.permute.xlu0 %721
      %725 = vset.pattern.permute.xlu0 0
      %726 = vperm.xlu0 %725, %v514
      %v727 = vpop.permute.xlu0 %726
      %730 = vset.pattern.permute.xlu0 0
      %731 = vperm.xlu0 %730, %v515
      %v732 = vpop.permute.xlu0 %731
      %735 = vset.pattern.permute.xlu0 0
      %736 = vperm.xlu0 %735, %v516
      %v737 = vpop.permute.xlu0 %736
      %740 = vset.pattern.permute.xlu0 0
      %741 = vperm.xlu0 %740, %v517
      %v742 = vpop.permute.xlu0 %741
      %745 = vset.pattern.permute.xlu0 0
      %746 = vperm.xlu0 %745, %v518
      %v747 = vpop.permute.xlu0 %746
      %750 = vset.pattern.permute.xlu0 0
      %751 = vperm.xlu0 %750, %v519
      %v752 = vpop.permute.xlu0 %751
      %755 = vset.pattern.permute.xlu0 0
      %756 = vperm.xlu0 %755, %v520
      %v757 = vpop.permute.xlu0 %756
      %760 = vset.pattern.permute.xlu0 0
      %761 = vperm.xlu0 %760, %v521
      %v762 = vpop.permute.xlu0 %761
      %765 = vset.pattern.permute.xlu0 0
      %766 = vperm.xlu0 %765, %v522
      %v767 = vpop.permute.xlu0 %766
      %770 = vset.pattern.permute.xlu0 0
      %771 = vperm.xlu0 %770, %v523
      %v772 = vpop.permute.xlu0 %771
      %775 = vset.pattern.permute.xlu0 0
      %776 = vperm.xlu0 %775, %v524
      %v777 = vpop.permute.xlu0 %776
      %780 = vset.pattern.permute.xlu0 0
      %781 = vperm.xlu0 %780, %v525
      %v782 = vpop.permute.xlu0 %781
      %785 = vset.pattern.permute.xlu0 0
      %786 = vperm.xlu0 %785, %v526
      %v787 = vpop.permute.xlu0 %786
      %790 = vset.pattern.permute.xlu0 0
      %791 = vperm.xlu0 %790, %v527
      %v792 = vpop.permute.xlu0 %791
      %795 = vset.pattern.permute.xlu0 0
      %796 = vperm.xlu0 %795, %v528
      %v797 = vpop.permute.xlu0 %796
      %800 = vset.pattern.permute.xlu0 0
      %801 = vperm.xlu0 %800, %v529
      %v802 = vpop.permute.xlu0 %801
      %805 = vset.pattern.permute.xlu0 0
      %806 = vperm.xlu0 %805, %v530
      %v807 = vpop.permute.xlu0 %806
      %810 = vset.pattern.permute.xlu0 0
      %811 = vperm.xlu0 %810, %v531
      %v812 = vpop.permute.xlu0 %811
      %815 = vset.pattern.permute.xlu0 0
      %816 = vperm.xlu0 %815, %v532
      %v817 = vpop.permute.xlu0 %816
      %820 = vset.pattern.permute.xlu0 0
      %821 = vperm.xlu0 %820, %v533
      %v822 = vpop.permute.xlu0 %821
      %825 = vset.pattern.permute.xlu0 0
      %826 = vperm.xlu0 %825, %v534
      %v827 = vpop.permute.xlu0 %826
      %830 = vset.pattern.permute.xlu0 0
      %831 = vperm.xlu0 %830, %v535
      %v832 = vpop.permute.xlu0 %831
      %835 = vset.pattern.permute.xlu0 0
      %836 = vperm.xlu0 %835, %v536
      %v837 = vpop.permute.xlu0 %836
      %840 = vset.pattern.permute.xlu0 0
      %841 = vperm.xlu0 %840, %v537
      %v842 = vpop.permute.xlu0 %841
      %845 = vset.pattern.permute.xlu0 0
      %846 = vperm.xlu0 %845, %v538
      %v847 = vpop.permute.xlu0 %846
      %850 = vset.pattern.permute.xlu0 0
      %851 = vperm.xlu0 %850, %v539
      %v852 = vpop.permute.xlu0 %851
      %855 = vset.pattern.permute.xlu0 0
      %856 = vperm.xlu0 %855, %v540
      %v857 = vpop.permute.xlu0 %856
      %860 = vset.pattern.permute.xlu0 0
      %861 = vperm.xlu0 %860, %v541
      %v862 = vpop.permute.xlu0 %861
      %865 = vset.pattern.permute.xlu0 0
      %866 = vperm.xlu0 %865, %v542
      %v867 = vpop.permute.xlu0 %866
      %870 = vset.pattern.permute.xlu0 0
      %871 = vperm.xlu0 %870, %v543
      %v872 = vpop.permute.xlu0 %871
      %875 = vset.pattern.permute.xlu0 0
      %876 = vperm.xlu0 %875, %v544
      %v877 = vpop.permute.xlu0 %876
      %880 = vset.pattern.permute.xlu0 0
      %881 = vperm.xlu0 %880, %v545
      %v882 = vpop.permute.xlu0 %881
      %885 = vset.pattern.permute.xlu0 0
      %886 = vperm.xlu0 %885, %v546
      %v887 = vpop.permute.xlu0 %886
      %890 = vset.pattern.permute.xlu0 0
      %891 = vperm.xlu0 %890, %v547
      %v892 = vpop.permute.xlu0 %891
      %895 = vset.pattern.permute.xlu0 0
      %896 = vperm.xlu0 %895, %v548
      %v897 = vpop.permute.xlu0 %896
      %900 = vset.pattern.permute.xlu0 0
      %901 = vperm.xlu0 %900, %v549
      %v902 = vpop.permute.xlu0 %901
      %905 = vset.pattern.permute.xlu0 0
      %906 = vperm.xlu0 %905, %v550
      %v907 = vpop.permute.xlu0 %906
      %910 = vset.pattern.permute.xlu0 0
      %911 = vperm.xlu0 %910, %v551
      %v912 = vpop.permute.xlu0 %911
      %915 = vset.pattern.permute.xlu0 0
      %916 = vperm.xlu0 %915, %v552
      %v917 = vpop.permute.xlu0 %916
      %920 = vset.pattern.permute.xlu0 0
      %921 = vperm.xlu0 %920, %v553
      %v922 = vpop.permute.xlu0 %921
      %925 = vset.pattern.permute.xlu0 0
      %926 = vperm.xlu0 %925, %v554
      %v927 = vpop.permute.xlu0 %926
      %930 = vset.pattern.permute.xlu0 0
      %931 = vperm.xlu0 %930, %v555
      %v932 = vpop.permute.xlu0 %931
      %935 = vset.pattern.permute.xlu0 0
      %936 = vperm.xlu0 %935, %v556
      %v937 = vpop.permute.xlu0 %936
      %940 = vset.pattern.permute.xlu0 0
      %941 = vperm.xlu0 %940, %v557
      %v942 = vpop.permute.xlu0 %941
      %945 = vset.pattern.permute.xlu0 0
      %946 = vperm.xlu0 %945, %v558
      %v947 = vpop.permute.xlu0 %946
      %950 = vset.pattern.permute.xlu0 0
      %951 = vperm.xlu0 %950, %v559
      %v952 = vpop.permute.xlu0 %951
      %955 = vset.pattern.permute.xlu0 0
      %956 = vperm.xlu0 %955, %v560
      %v957 = vpop.permute.xlu0 %956
      %960 = vset.pattern.permute.xlu0 0
      %961 = vperm.xlu0 %960, %v561
      %v962 = vpop.permute.xlu0 %961
      %965 = vset.pattern.permute.xlu0 0
      %966 = vperm.xlu0 %965, %v562
      %v967 = vpop.permute.xlu0 %966
      %970 = vset.pattern.permute.xlu0 0
      %971 = vperm.xlu0 %970, %v563
      %v972 = vpop.permute.xlu0 %971
      %975 = vset.pattern.permute.xlu0 0
      %976 = vperm.xlu0 %975, %v564
      %v977 = vpop.permute.xlu0 %976
      %980 = vset.pattern.permute.xlu0 0
      %981 = vperm.xlu0 %980, %v565
      %v982 = vpop.permute.xlu0 %981
      %985 = vset.pattern.permute.xlu0 0
      %986 = vperm.xlu0 %985, %v566
      %v987 = vpop.permute.xlu0 %986
      %990 = vset.pattern.permute.xlu0 0
      %991 = vperm.xlu0 %990, %v567
      %v992 = vpop.permute.xlu0 %991
      %995 = vset.pattern.permute.xlu0 0
      %996 = vperm.xlu0 %995, %v568
      %v997 = vpop.permute.xlu0 %996
      %1000 = vset.pattern.permute.xlu0 0
      %1001 = vperm.xlu0 %1000, %v569
      %v1002 = vpop.permute.xlu0 %1001
      %1005 = vset.pattern.permute.xlu0 0
      %1006 = vperm.xlu0 %1005, %v570
      %v1007 = vpop.permute.xlu0 %1006
      %1010 = vset.pattern.permute.xlu0 0
      %1011 = vperm.xlu0 %1010, %v571
      %v1012 = vpop.permute.xlu0 %1011
      %1015 = vset.pattern.permute.xlu0 0
      %1016 = vperm.xlu0 %1015, %v572
      %v1017 = vpop.permute.xlu0 %1016
      %1020 = vset.pattern.permute.xlu0 0
      %1021 = vperm.xlu0 %1020, %v573
      %v1022 = vpop.permute.xlu0 %1021
      %1025 = vset.pattern.permute.xlu0 0
      %1026 = vperm.xlu0 %1025, %v574
      %v1027 = vpop.permute.xlu0 %1026
      %1030 = vset.pattern.permute.xlu0 0
      %1031 = vperm.xlu0 %1030, %v575
      %v1032 = vpop.permute.xlu0 %1031
      %1035 = vset.pattern.permute.xlu0 0
      %1036 = vperm.xlu0 %1035, %v576
      %v1037 = vpop.permute.xlu0 %1036
      %1040 = vset.pattern.permute.xlu0 0
      %1041 = vperm.xlu0 %1040, %v577
      %v1042 = vpop.permute.xlu0 %1041
      %1045 = vset.pattern.permute.xlu0 0
      %1046 = vperm.xlu0 %1045, %v578
      %v1047 = vpop.permute.xlu0 %1046
      %1050 = vset.pattern.permute.xlu0 0
      %1051 = vperm.xlu0 %1050, %v579
      %v1052 = vpop.permute.xlu0 %1051
      %1055 = vset.pattern.permute.xlu0 0
      %1056 = vperm.xlu0 %1055, %v580
      %v1057 = vpop.permute.xlu0 %1056
      %1060 = vset.pattern.permute.xlu0 0
      %1061 = vperm.xlu0 %1060, %v581
      %v1062 = vpop.permute.xlu0 %1061
      %1065 = vset.pattern.permute.xlu0 0
      %1066 = vperm.xlu0 %1065, %v582
      %v1067 = vpop.permute.xlu0 %1066
      %1070 = vset.pattern.permute.xlu0 0
      %1071 = vperm.xlu0 %1070, %v583
      %v1072 = vpop.permute.xlu0 %1071
      %1075 = vset.pattern.permute.xlu0 0
      %1076 = vperm.xlu0 %1075, %v584
      %v1077 = vpop.permute.xlu0 %1076
      %1080 = vset.pattern.permute.xlu0 0
      %1081 = vperm.xlu0 %1080, %v585
      %v1082 = vpop.permute.xlu0 %1081
      %1085 = vset.pattern.permute.xlu0 0
      %1086 = vperm.xlu0 %1085, %v586
      %v1087 = vpop.permute.xlu0 %1086
      %1090 = vset.pattern.permute.xlu0 0
      %1091 = vperm.xlu0 %1090, %v587
      %v1092 = vpop.permute.xlu0 %1091
      %1095 = vset.pattern.permute.xlu0 0
      %1096 = vperm.xlu0 %1095, %v588
      %v1097 = vpop.permute.xlu0 %1096
      %1100 = vset.pattern.permute.xlu0 0
      %1101 = vperm.xlu0 %1100, %v589
      %v1102 = vpop.permute.xlu0 %1101
      %1105 = vset.pattern.permute.xlu0 0
      %1106 = vperm.xlu0 %1105, %v590
      %v1107 = vpop.permute.xlu0 %1106
      %1110 = vset.pattern.permute.xlu0 0
      %1111 = vperm.xlu0 %1110, %v591
      %v1112 = vpop.permute.xlu0 %1111
      %1115 = vset.pattern.permute.xlu0 0
      %1116 = vperm.xlu0 %1115, %v592
      %v1117 = vpop.permute.xlu0 %1116
      %1120 = vset.pattern.permute.xlu0 0
      %1121 = vperm.xlu0 %1120, %v593
      %v1122 = vpop.permute.xlu0 %1121
      %1125 = vset.pattern.permute.xlu0 0
      %1126 = vperm.xlu0 %1125, %v594
      %v1127 = vpop.permute.xlu0 %1126
      %1130 = vset.pattern.permute.xlu0 0
      %1131 = vperm.xlu0 %1130, %v595
      %v1132 = vpop.permute.xlu0 %1131
      %1135 = vset.pattern.permute.xlu0 0
      %1136 = vperm.xlu0 %1135, %v596
      %v1137 = vpop.permute.xlu0 %1136
      %1140 = vset.pattern.permute.xlu0 0
      %1141 = vperm.xlu0 %1140, %v597
      %v1142 = vpop.permute.xlu0 %1141
      %1145 = vset.pattern.permute.xlu0 0
      %1146 = vperm.xlu0 %1145, %v598
      %v1147 = vpop.permute.xlu0 %1146
      %1150 = vset.pattern.permute.xlu0 0
      %1151 = vperm.xlu0 %1150, %v599
      %v1152 = vpop.permute.xlu0 %1151
      %1155 = vset.pattern.permute.xlu0 0
      %1156 = vperm.xlu0 %1155, %v600
      %v1157 = vpop.permute.xlu0 %1156
      %1160 = vset.pattern.permute.xlu0 0
      %1161 = vperm.xlu0 %1160, %v601
      %v1162 = vpop.permute.xlu0 %1161
      %1165 = vset.pattern.permute.xlu0 0
      %1166 = vperm.xlu0 %1165, %v602
      %v1167 = vpop.permute.xlu0 %1166
      %1170 = vset.pattern.permute.xlu0 0
      %1171 = vperm.xlu0 %1170, %v603
      %v1172 = vpop.permute.xlu0 %1171
      %1175 = vset.pattern.permute.xlu0 0
      %1176 = vperm.xlu0 %1175, %v604
      %v1177 = vpop.permute.xlu0 %1176
      %1180 = vset.pattern.permute.xlu0 0
      %1181 = vperm.xlu0 %1180, %v605
      %v1182 = vpop.permute.xlu0 %1181
      %1185 = vset.pattern.permute.xlu0 0
      %1186 = vperm.xlu0 %1185, %v606
      %v1187 = vpop.permute.xlu0 %1186
      %1190 = vset.pattern.permute.xlu0 0
      %1191 = vperm.xlu0 %1190, %v607
      %v1192 = vpop.permute.xlu0 %1191
      %1195 = vset.pattern.permute.xlu0 0
      %1196 = vperm.xlu0 %1195, %v608
      %v1197 = vpop.permute.xlu0 %1196
      %1200 = vset.pattern.permute.xlu0 0
      %1201 = vperm.xlu0 %1200, %v609
      %v1202 = vpop.permute.xlu0 %1201
      %1205 = vset.pattern.permute.xlu0 0
      %1206 = vperm.xlu0 %1205, %v610
      %v1207 = vpop.permute.xlu0 %1206
      %1210 = vset.pattern.permute.xlu0 0
      %1211 = vperm.xlu0 %1210, %v611
      %v1212 = vpop.permute.xlu0 %1211
      %1215 = vset.pattern.permute.xlu0 0
      %1216 = vperm.xlu0 %1215, %v612
      %v1217 = vpop.permute.xlu0 %1216
      %1220 = vset.pattern.permute.xlu0 0
      %1221 = vperm.xlu0 %1220, %v613
      %v1222 = vpop.permute.xlu0 %1221
      %1225 = vset.pattern.permute.xlu0 0
      %1226 = vperm.xlu0 %1225, %v614
      %v1227 = vpop.permute.xlu0 %1226
      %1230 = vset.pattern.permute.xlu0 0
      %1231 = vperm.xlu0 %1230, %v615
      %v1232 = vpop.permute.xlu0 %1231
      %1235 = vset.pattern.permute.xlu0 0
      %1236 = vperm.xlu0 %1235, %v616
      %v1237 = vpop.permute.xlu0 %1236
      %1240 = vset.pattern.permute.xlu0 0
      %1241 = vperm.xlu0 %1240, %v617
      %v1242 = vpop.permute.xlu0 %1241
      %1245 = vset.pattern.permute.xlu0 0
      %1246 = vperm.xlu0 %1245, %v618
      %v1247 = vpop.permute.xlu0 %1246
      %1250 = vset.pattern.permute.xlu0 0
      %1251 = vperm.xlu0 %1250, %v619
      %v1252 = vpop.permute.xlu0 %1251
      %1255 = vset.pattern.permute.xlu0 0
      %1256 = vperm.xlu0 %1255, %v620
      %v1257 = vpop.permute.xlu0 %1256
      %1260 = vset.pattern.permute.xlu0 0
      %1261 = vperm.xlu0 %1260, %v621
      %v1262 = vpop.permute.xlu0 %1261
      %v1264 = vlaneseq
      %v1265 = vshrl.u32 %v1264, 7
      %v1266 = vsub.s32 0, %v1265
      %v1267 = vrot.slane %v622, %v1266
      %v1268 = vmul.f32 %v627, %v1267
      %v1269 = vmul.f32 %v632, %v1267
      %v1270 = vmul.f32 %v637, %v1267
      %v1271 = vmul.f32 %v642, %v1267
      %v1272 = vmul.f32 %v647, %v1267
      %v1273 = vmul.f32 %v652, %v1267
      %v1274 = vmul.f32 %v657, %v1267
      %v1275 = vmul.f32 %v662, %v1267
      %v1276 = vmul.f32 %v667, %v1267
      %v1277 = vmul.f32 %v672, %v1267
      %v1278 = vmul.f32 %v677, %v1267
      %v1279 = vmul.f32 %v682, %v1267
      %v1280 = vmul.f32 %v687, %v1267
      %v1281 = vmul.f32 %v692, %v1267
      %v1282 = vmul.f32 %v697, %v1267
      %v1283 = vmul.f32 %v702, %v1267
      %v1284 = vmul.f32 %v707, %v1267
      %v1285 = vmul.f32 %v712, %v1267
      %v1286 = vmul.f32 %v717, %v1267
      %v1287 = vmul.f32 %v722, %v1267
      %v1288 = vmul.f32 %v727, %v1267
      %v1289 = vmul.f32 %v732, %v1267
      %v1290 = vmul.f32 %v737, %v1267
      %v1291 = vmul.f32 %v742, %v1267
      %v1292 = vmul.f32 %v747, %v1267
      %v1293 = vmul.f32 %v752, %v1267
      %v1294 = vmul.f32 %v757, %v1267
      %v1295 = vmul.f32 %v762, %v1267
      %v1296 = vmul.f32 %v767, %v1267
      %v1297 = vmul.f32 %v772, %v1267
      %v1298 = vmul.f32 %v777, %v1267
      %v1299 = vmul.f32 %v782, %v1267
      %v1300 = vmul.f32 %v787, %v1267
      %v1301 = vmul.f32 %v792, %v1267
      %v1302 = vmul.f32 %v797, %v1267
      %v1303 = vmul.f32 %v802, %v1267
      %v1304 = vmul.f32 %v807, %v1267
      %v1305 = vmul.f32 %v812, %v1267
      %v1306 = vmul.f32 %v817, %v1267
      %v1307 = vmul.f32 %v822, %v1267
      %v1308 = vmul.f32 %v827, %v1267
      %v1309 = vmul.f32 %v832, %v1267
      %v1310 = vmul.f32 %v837, %v1267
      %v1311 = vmul.f32 %v842, %v1267
      %v1312 = vmul.f32 %v847, %v1267
      %v1313 = vmul.f32 %v852, %v1267
      %v1314 = vmul.f32 %v857, %v1267
      %v1315 = vmul.f32 %v862, %v1267
      %v1316 = vmul.f32 %v867, %v1267
      %v1317 = vmul.f32 %v872, %v1267
      %v1318 = vmul.f32 %v877, %v1267
      %v1319 = vmul.f32 %v882, %v1267
      %v1320 = vmul.f32 %v887, %v1267
      %v1321 = vmul.f32 %v892, %v1267
      %v1322 = vmul.f32 %v897, %v1267
      %v1323 = vmul.f32 %v902, %v1267
      %v1324 = vmul.f32 %v907, %v1267
      %v1325 = vmul.f32 %v912, %v1267
      %v1326 = vmul.f32 %v917, %v1267
      %v1327 = vmul.f32 %v922, %v1267
      %v1328 = vmul.f32 %v927, %v1267
      %v1329 = vmul.f32 %v932, %v1267
      %v1330 = vmul.f32 %v937, %v1267
      %v1331 = vmul.f32 %v942, %v1267
      %v1332 = vmul.f32 %v947, %v1267
      %v1333 = vmul.f32 %v952, %v1267
      %v1334 = vmul.f32 %v957, %v1267
      %v1335 = vmul.f32 %v962, %v1267
      %v1336 = vmul.f32 %v967, %v1267
      %v1337 = vmul.f32 %v972, %v1267
      %v1338 = vmul.f32 %v977, %v1267
      %v1339 = vmul.f32 %v982, %v1267
      %v1340 = vmul.f32 %v987, %v1267
      %v1341 = vmul.f32 %v992, %v1267
      %v1342 = vmul.f32 %v997, %v1267
      %v1343 = vmul.f32 %v1002, %v1267
      %v1344 = vmul.f32 %v1007, %v1267
      %v1345 = vmul.f32 %v1012, %v1267
      %v1346 = vmul.f32 %v1017, %v1267
      %v1347 = vmul.f32 %v1022, %v1267
      %v1348 = vmul.f32 %v1027, %v1267
      %v1349 = vmul.f32 %v1032, %v1267
      %v1350 = vmul.f32 %v1037, %v1267
      %v1351 = vmul.f32 %v1042, %v1267
      %v1352 = vmul.f32 %v1047, %v1267
      %v1353 = vmul.f32 %v1052, %v1267
      %v1354 = vmul.f32 %v1057, %v1267
      %v1355 = vmul.f32 %v1062, %v1267
      %v1356 = vmul.f32 %v1067, %v1267
      %v1357 = vmul.f32 %v1072, %v1267
      %v1358 = vmul.f32 %v1077, %v1267
      %v1359 = vmul.f32 %v1082, %v1267
      %v1360 = vmul.f32 %v1087, %v1267
      %v1361 = vmul.f32 %v1092, %v1267
      %v1362 = vmul.f32 %v1097, %v1267
      %v1363 = vmul.f32 %v1102, %v1267
      %v1364 = vmul.f32 %v1107, %v1267
      %v1365 = vmul.f32 %v1112, %v1267
      %v1366 = vmul.f32 %v1117, %v1267
      %v1367 = vmul.f32 %v1122, %v1267
      %v1368 = vmul.f32 %v1127, %v1267
      %v1369 = vmul.f32 %v1132, %v1267
      %v1370 = vmul.f32 %v1137, %v1267
      %v1371 = vmul.f32 %v1142, %v1267
      %v1372 = vmul.f32 %v1147, %v1267
      %v1373 = vmul.f32 %v1152, %v1267
      %v1374 = vmul.f32 %v1157, %v1267
      %v1375 = vmul.f32 %v1162, %v1267
      %v1376 = vmul.f32 %v1167, %v1267
      %v1377 = vmul.f32 %v1172, %v1267
      %v1378 = vmul.f32 %v1177, %v1267
      %v1379 = vmul.f32 %v1182, %v1267
      %v1380 = vmul.f32 %v1187, %v1267
      %v1381 = vmul.f32 %v1192, %v1267
      %v1382 = vmul.f32 %v1197, %v1267
      %v1383 = vmul.f32 %v1202, %v1267
      %v1384 = vmul.f32 %v1207, %v1267
      %v1385 = vmul.f32 %v1212, %v1267
      %v1386 = vmul.f32 %v1217, %v1267
      %v1387 = vmul.f32 %v1222, %v1267
      %v1388 = vmul.f32 %v1227, %v1267
      %v1389 = vmul.f32 %v1232, %v1267
      %v1390 = vmul.f32 %v1237, %v1267
      %v1391 = vmul.f32 %v1242, %v1267
      %v1392 = vmul.f32 %v1247, %v1267
      %v1393 = vmul.f32 %v1252, %v1267
      %v1394 = vmul.f32 %v1257, %v1267
      %v1395 = vmul.f32 %v1262, %v1267
      %1396 = vset.pattern.permute.xlu0 1
      %1397 = vperm.xlu0 %1396, %v494
      %v1398 = vpop.permute.xlu0 %1397
      %1400 = vset.pattern.permute.xlu0 1
      %1401 = vperm.xlu0 %1400, %v495
      %v1402 = vpop.permute.xlu0 %1401
      %1404 = vset.pattern.permute.xlu0 1
      %1405 = vperm.xlu0 %1404, %v496
      %v1406 = vpop.permute.xlu0 %1405
      %1408 = vset.pattern.permute.xlu0 1
      %1409 = vperm.xlu0 %1408, %v497
      %v1410 = vpop.permute.xlu0 %1409
      %1412 = vset.pattern.permute.xlu0 1
      %1413 = vperm.xlu0 %1412, %v498
      %v1414 = vpop.permute.xlu0 %1413
      %1416 = vset.pattern.permute.xlu0 1
      %1417 = vperm.xlu0 %1416, %v499
      %v1418 = vpop.permute.xlu0 %1417
      %1420 = vset.pattern.permute.xlu0 1
      %1421 = vperm.xlu0 %1420, %v500
      %v1422 = vpop.permute.xlu0 %1421
      %1424 = vset.pattern.permute.xlu0 1
      %1425 = vperm.xlu0 %1424, %v501
      %v1426 = vpop.permute.xlu0 %1425
      %1428 = vset.pattern.permute.xlu0 1
      %1429 = vperm.xlu0 %1428, %v502
      %v1430 = vpop.permute.xlu0 %1429
      %1432 = vset.pattern.permute.xlu0 1
      %1433 = vperm.xlu0 %1432, %v503
      %v1434 = vpop.permute.xlu0 %1433
      %1436 = vset.pattern.permute.xlu0 1
      %1437 = vperm.xlu0 %1436, %v504
      %v1438 = vpop.permute.xlu0 %1437
      %1440 = vset.pattern.permute.xlu0 1
      %1441 = vperm.xlu0 %1440, %v505
      %v1442 = vpop.permute.xlu0 %1441
      %1444 = vset.pattern.permute.xlu0 1
      %1445 = vperm.xlu0 %1444, %v506
      %v1446 = vpop.permute.xlu0 %1445
      %1448 = vset.pattern.permute.xlu0 1
      %1449 = vperm.xlu0 %1448, %v507
      %v1450 = vpop.permute.xlu0 %1449
      %1452 = vset.pattern.permute.xlu0 1
      %1453 = vperm.xlu0 %1452, %v508
      %v1454 = vpop.permute.xlu0 %1453
      %1456 = vset.pattern.permute.xlu0 1
      %1457 = vperm.xlu0 %1456, %v509
      %v1458 = vpop.permute.xlu0 %1457
      %1460 = vset.pattern.permute.xlu0 1
      %1461 = vperm.xlu0 %1460, %v510
      %v1462 = vpop.permute.xlu0 %1461
      %1464 = vset.pattern.permute.xlu0 1
      %1465 = vperm.xlu0 %1464, %v511
      %v1466 = vpop.permute.xlu0 %1465
      %1468 = vset.pattern.permute.xlu0 1
      %1469 = vperm.xlu0 %1468, %v512
      %v1470 = vpop.permute.xlu0 %1469
      %1472 = vset.pattern.permute.xlu0 1
      %1473 = vperm.xlu0 %1472, %v513
      %v1474 = vpop.permute.xlu0 %1473
      %1476 = vset.pattern.permute.xlu0 1
      %1477 = vperm.xlu0 %1476, %v514
      %v1478 = vpop.permute.xlu0 %1477
      %1480 = vset.pattern.permute.xlu0 1
      %1481 = vperm.xlu0 %1480, %v515
      %v1482 = vpop.permute.xlu0 %1481
      %1484 = vset.pattern.permute.xlu0 1
      %1485 = vperm.xlu0 %1484, %v516
      %v1486 = vpop.permute.xlu0 %1485
      %1488 = vset.pattern.permute.xlu0 1
      %1489 = vperm.xlu0 %1488, %v517
      %v1490 = vpop.permute.xlu0 %1489
      %1492 = vset.pattern.permute.xlu0 1
      %1493 = vperm.xlu0 %1492, %v518
      %v1494 = vpop.permute.xlu0 %1493
      %1496 = vset.pattern.permute.xlu0 1
      %1497 = vperm.xlu0 %1496, %v519
      %v1498 = vpop.permute.xlu0 %1497
      %1500 = vset.pattern.permute.xlu0 1
      %1501 = vperm.xlu0 %1500, %v520
      %v1502 = vpop.permute.xlu0 %1501
      %1504 = vset.pattern.permute.xlu0 1
      %1505 = vperm.xlu0 %1504, %v521
      %v1506 = vpop.permute.xlu0 %1505
      %1508 = vset.pattern.permute.xlu0 1
      %1509 = vperm.xlu0 %1508, %v522
      %v1510 = vpop.permute.xlu0 %1509
      %1512 = vset.pattern.permute.xlu0 1
      %1513 = vperm.xlu0 %1512, %v523
      %v1514 = vpop.permute.xlu0 %1513
      %1516 = vset.pattern.permute.xlu0 1
      %1517 = vperm.xlu0 %1516, %v524
      %v1518 = vpop.permute.xlu0 %1517
      %1520 = vset.pattern.permute.xlu0 1
      %1521 = vperm.xlu0 %1520, %v525
      %v1522 = vpop.permute.xlu0 %1521
      %1524 = vset.pattern.permute.xlu0 1
      %1525 = vperm.xlu0 %1524, %v526
      %v1526 = vpop.permute.xlu0 %1525
      %1528 = vset.pattern.permute.xlu0 1
      %1529 = vperm.xlu0 %1528, %v527
      %v1530 = vpop.permute.xlu0 %1529
      %1532 = vset.pattern.permute.xlu0 1
      %1533 = vperm.xlu0 %1532, %v528
      %v1534 = vpop.permute.xlu0 %1533
      %1536 = vset.pattern.permute.xlu0 1
      %1537 = vperm.xlu0 %1536, %v529
      %v1538 = vpop.permute.xlu0 %1537
      %1540 = vset.pattern.permute.xlu0 1
      %1541 = vperm.xlu0 %1540, %v530
      %v1542 = vpop.permute.xlu0 %1541
      %1544 = vset.pattern.permute.xlu0 1
      %1545 = vperm.xlu0 %1544, %v531
      %v1546 = vpop.permute.xlu0 %1545
      %1548 = vset.pattern.permute.xlu0 1
      %1549 = vperm.xlu0 %1548, %v532
      %v1550 = vpop.permute.xlu0 %1549
      %1552 = vset.pattern.permute.xlu0 1
      %1553 = vperm.xlu0 %1552, %v533
      %v1554 = vpop.permute.xlu0 %1553
      %1556 = vset.pattern.permute.xlu0 1
      %1557 = vperm.xlu0 %1556, %v534
      %v1558 = vpop.permute.xlu0 %1557
      %1560 = vset.pattern.permute.xlu0 1
      %1561 = vperm.xlu0 %1560, %v535
      %v1562 = vpop.permute.xlu0 %1561
      %1564 = vset.pattern.permute.xlu0 1
      %1565 = vperm.xlu0 %1564, %v536
      %v1566 = vpop.permute.xlu0 %1565
      %1568 = vset.pattern.permute.xlu0 1
      %1569 = vperm.xlu0 %1568, %v537
      %v1570 = vpop.permute.xlu0 %1569
      %1572 = vset.pattern.permute.xlu0 1
      %1573 = vperm.xlu0 %1572, %v538
      %v1574 = vpop.permute.xlu0 %1573
      %1576 = vset.pattern.permute.xlu0 1
      %1577 = vperm.xlu0 %1576, %v539
      %v1578 = vpop.permute.xlu0 %1577
      %1580 = vset.pattern.permute.xlu0 1
      %1581 = vperm.xlu0 %1580, %v540
      %v1582 = vpop.permute.xlu0 %1581
      %1584 = vset.pattern.permute.xlu0 1
      %1585 = vperm.xlu0 %1584, %v541
      %v1586 = vpop.permute.xlu0 %1585
      %1588 = vset.pattern.permute.xlu0 1
      %1589 = vperm.xlu0 %1588, %v542
      %v1590 = vpop.permute.xlu0 %1589
      %1592 = vset.pattern.permute.xlu0 1
      %1593 = vperm.xlu0 %1592, %v543
      %v1594 = vpop.permute.xlu0 %1593
      %1596 = vset.pattern.permute.xlu0 1
      %1597 = vperm.xlu0 %1596, %v544
      %v1598 = vpop.permute.xlu0 %1597
      %1600 = vset.pattern.permute.xlu0 1
      %1601 = vperm.xlu0 %1600, %v545
      %v1602 = vpop.permute.xlu0 %1601
      %1604 = vset.pattern.permute.xlu0 1
      %1605 = vperm.xlu0 %1604, %v546
      %v1606 = vpop.permute.xlu0 %1605
      %1608 = vset.pattern.permute.xlu0 1
      %1609 = vperm.xlu0 %1608, %v547
      %v1610 = vpop.permute.xlu0 %1609
      %1612 = vset.pattern.permute.xlu0 1
      %1613 = vperm.xlu0 %1612, %v548
      %v1614 = vpop.permute.xlu0 %1613
      %1616 = vset.pattern.permute.xlu0 1
      %1617 = vperm.xlu0 %1616, %v549
      %v1618 = vpop.permute.xlu0 %1617
      %1620 = vset.pattern.permute.xlu0 1
      %1621 = vperm.xlu0 %1620, %v550
      %v1622 = vpop.permute.xlu0 %1621
      %1624 = vset.pattern.permute.xlu0 1
      %1625 = vperm.xlu0 %1624, %v551
      %v1626 = vpop.permute.xlu0 %1625
      %1628 = vset.pattern.permute.xlu0 1
      %1629 = vperm.xlu0 %1628, %v552
      %v1630 = vpop.permute.xlu0 %1629
      %1632 = vset.pattern.permute.xlu0 1
      %1633 = vperm.xlu0 %1632, %v553
      %v1634 = vpop.permute.xlu0 %1633
      %1636 = vset.pattern.permute.xlu0 1
      %1637 = vperm.xlu0 %1636, %v554
      %v1638 = vpop.permute.xlu0 %1637
      %1640 = vset.pattern.permute.xlu0 1
      %1641 = vperm.xlu0 %1640, %v555
      %v1642 = vpop.permute.xlu0 %1641
      %1644 = vset.pattern.permute.xlu0 1
      %1645 = vperm.xlu0 %1644, %v556
      %v1646 = vpop.permute.xlu0 %1645
      %1648 = vset.pattern.permute.xlu0 1
      %1649 = vperm.xlu0 %1648, %v557
      %v1650 = vpop.permute.xlu0 %1649
      %1652 = vset.pattern.permute.xlu0 1
      %1653 = vperm.xlu0 %1652, %v558
      %v1654 = vpop.permute.xlu0 %1653
      %1656 = vset.pattern.permute.xlu0 1
      %1657 = vperm.xlu0 %1656, %v559
      %v1658 = vpop.permute.xlu0 %1657
      %1660 = vset.pattern.permute.xlu0 1
      %1661 = vperm.xlu0 %1660, %v560
      %v1662 = vpop.permute.xlu0 %1661
      %1664 = vset.pattern.permute.xlu0 1
      %1665 = vperm.xlu0 %1664, %v561
      %v1666 = vpop.permute.xlu0 %1665
      %1668 = vset.pattern.permute.xlu0 1
      %1669 = vperm.xlu0 %1668, %v562
      %v1670 = vpop.permute.xlu0 %1669
      %1672 = vset.pattern.permute.xlu0 1
      %1673 = vperm.xlu0 %1672, %v563
      %v1674 = vpop.permute.xlu0 %1673
      %1676 = vset.pattern.permute.xlu0 1
      %1677 = vperm.xlu0 %1676, %v564
      %v1678 = vpop.permute.xlu0 %1677
      %1680 = vset.pattern.permute.xlu0 1
      %1681 = vperm.xlu0 %1680, %v565
      %v1682 = vpop.permute.xlu0 %1681
      %1684 = vset.pattern.permute.xlu0 1
      %1685 = vperm.xlu0 %1684, %v566
      %v1686 = vpop.permute.xlu0 %1685
      %1688 = vset.pattern.permute.xlu0 1
      %1689 = vperm.xlu0 %1688, %v567
      %v1690 = vpop.permute.xlu0 %1689
      %1692 = vset.pattern.permute.xlu0 1
      %1693 = vperm.xlu0 %1692, %v568
      %v1694 = vpop.permute.xlu0 %1693
      %1696 = vset.pattern.permute.xlu0 1
      %1697 = vperm.xlu0 %1696, %v569
      %v1698 = vpop.permute.xlu0 %1697
      %1700 = vset.pattern.permute.xlu0 1
      %1701 = vperm.xlu0 %1700, %v570
      %v1702 = vpop.permute.xlu0 %1701
      %1704 = vset.pattern.permute.xlu0 1
      %1705 = vperm.xlu0 %1704, %v571
      %v1706 = vpop.permute.xlu0 %1705
      %1708 = vset.pattern.permute.xlu0 1
      %1709 = vperm.xlu0 %1708, %v572
      %v1710 = vpop.permute.xlu0 %1709
      %1712 = vset.pattern.permute.xlu0 1
      %1713 = vperm.xlu0 %1712, %v573
      %v1714 = vpop.permute.xlu0 %1713
      %1716 = vset.pattern.permute.xlu0 1
      %1717 = vperm.xlu0 %1716, %v574
      %v1718 = vpop.permute.xlu0 %1717
      %1720 = vset.pattern.permute.xlu0 1
      %1721 = vperm.xlu0 %1720, %v575
      %v1722 = vpop.permute.xlu0 %1721
      %1724 = vset.pattern.permute.xlu0 1
      %1725 = vperm.xlu0 %1724, %v576
      %v1726 = vpop.permute.xlu0 %1725
      %1728 = vset.pattern.permute.xlu0 1
      %1729 = vperm.xlu0 %1728, %v577
      %v1730 = vpop.permute.xlu0 %1729
      %1732 = vset.pattern.permute.xlu0 1
      %1733 = vperm.xlu0 %1732, %v578
      %v1734 = vpop.permute.xlu0 %1733
      %1736 = vset.pattern.permute.xlu0 1
      %1737 = vperm.xlu0 %1736, %v579
      %v1738 = vpop.permute.xlu0 %1737
      %1740 = vset.pattern.permute.xlu0 1
      %1741 = vperm.xlu0 %1740, %v580
      %v1742 = vpop.permute.xlu0 %1741
      %1744 = vset.pattern.permute.xlu0 1
      %1745 = vperm.xlu0 %1744, %v581
      %v1746 = vpop.permute.xlu0 %1745
      %1748 = vset.pattern.permute.xlu0 1
      %1749 = vperm.xlu0 %1748, %v582
      %v1750 = vpop.permute.xlu0 %1749
      %1752 = vset.pattern.permute.xlu0 1
      %1753 = vperm.xlu0 %1752, %v583
      %v1754 = vpop.permute.xlu0 %1753
      %1756 = vset.pattern.permute.xlu0 1
      %1757 = vperm.xlu0 %1756, %v584
      %v1758 = vpop.permute.xlu0 %1757
      %1760 = vset.pattern.permute.xlu0 1
      %1761 = vperm.xlu0 %1760, %v585
      %v1762 = vpop.permute.xlu0 %1761
      %1764 = vset.pattern.permute.xlu0 1
      %1765 = vperm.xlu0 %1764, %v586
      %v1766 = vpop.permute.xlu0 %1765
      %1768 = vset.pattern.permute.xlu0 1
      %1769 = vperm.xlu0 %1768, %v587
      %v1770 = vpop.permute.xlu0 %1769
      %1772 = vset.pattern.permute.xlu0 1
      %1773 = vperm.xlu0 %1772, %v588
      %v1774 = vpop.permute.xlu0 %1773
      %1776 = vset.pattern.permute.xlu0 1
      %1777 = vperm.xlu0 %1776, %v589
      %v1778 = vpop.permute.xlu0 %1777
      %1780 = vset.pattern.permute.xlu0 1
      %1781 = vperm.xlu0 %1780, %v590
      %v1782 = vpop.permute.xlu0 %1781
      %1784 = vset.pattern.permute.xlu0 1
      %1785 = vperm.xlu0 %1784, %v591
      %v1786 = vpop.permute.xlu0 %1785
      %1788 = vset.pattern.permute.xlu0 1
      %1789 = vperm.xlu0 %1788, %v592
      %v1790 = vpop.permute.xlu0 %1789
      %1792 = vset.pattern.permute.xlu0 1
      %1793 = vperm.xlu0 %1792, %v593
      %v1794 = vpop.permute.xlu0 %1793
      %1796 = vset.pattern.permute.xlu0 1
      %1797 = vperm.xlu0 %1796, %v594
      %v1798 = vpop.permute.xlu0 %1797
      %1800 = vset.pattern.permute.xlu0 1
      %1801 = vperm.xlu0 %1800, %v595
      %v1802 = vpop.permute.xlu0 %1801
      %1804 = vset.pattern.permute.xlu0 1
      %1805 = vperm.xlu0 %1804, %v596
      %v1806 = vpop.permute.xlu0 %1805
      %1808 = vset.pattern.permute.xlu0 1
      %1809 = vperm.xlu0 %1808, %v597
      %v1810 = vpop.permute.xlu0 %1809
      %1812 = vset.pattern.permute.xlu0 1
      %1813 = vperm.xlu0 %1812, %v598
      %v1814 = vpop.permute.xlu0 %1813
      %1816 = vset.pattern.permute.xlu0 1
      %1817 = vperm.xlu0 %1816, %v599
      %v1818 = vpop.permute.xlu0 %1817
      %1820 = vset.pattern.permute.xlu0 1
      %1821 = vperm.xlu0 %1820, %v600
      %v1822 = vpop.permute.xlu0 %1821
      %1824 = vset.pattern.permute.xlu0 1
      %1825 = vperm.xlu0 %1824, %v601
      %v1826 = vpop.permute.xlu0 %1825
      %1828 = vset.pattern.permute.xlu0 1
      %1829 = vperm.xlu0 %1828, %v602
      %v1830 = vpop.permute.xlu0 %1829
      %1832 = vset.pattern.permute.xlu0 1
      %1833 = vperm.xlu0 %1832, %v603
      %v1834 = vpop.permute.xlu0 %1833
      %1836 = vset.pattern.permute.xlu0 1
      %1837 = vperm.xlu0 %1836, %v604
      %v1838 = vpop.permute.xlu0 %1837
      %1840 = vset.pattern.permute.xlu0 1
      %1841 = vperm.xlu0 %1840, %v605
      %v1842 = vpop.permute.xlu0 %1841
      %1844 = vset.pattern.permute.xlu0 1
      %1845 = vperm.xlu0 %1844, %v606
      %v1846 = vpop.permute.xlu0 %1845
      %1848 = vset.pattern.permute.xlu0 1
      %1849 = vperm.xlu0 %1848, %v607
      %v1850 = vpop.permute.xlu0 %1849
      %1852 = vset.pattern.permute.xlu0 1
      %1853 = vperm.xlu0 %1852, %v608
      %v1854 = vpop.permute.xlu0 %1853
      %1856 = vset.pattern.permute.xlu0 1
      %1857 = vperm.xlu0 %1856, %v609
      %v1858 = vpop.permute.xlu0 %1857
      %1860 = vset.pattern.permute.xlu0 1
      %1861 = vperm.xlu0 %1860, %v610
      %v1862 = vpop.permute.xlu0 %1861
      %1864 = vset.pattern.permute.xlu0 1
      %1865 = vperm.xlu0 %1864, %v611
      %v1866 = vpop.permute.xlu0 %1865
      %1868 = vset.pattern.permute.xlu0 1
      %1869 = vperm.xlu0 %1868, %v612
      %v1870 = vpop.permute.xlu0 %1869
      %1872 = vset.pattern.permute.xlu0 1
      %1873 = vperm.xlu0 %1872, %v613
      %v1874 = vpop.permute.xlu0 %1873
      %1876 = vset.pattern.permute.xlu0 1
      %1877 = vperm.xlu0 %1876, %v614
      %v1878 = vpop.permute.xlu0 %1877
      %1880 = vset.pattern.permute.xlu0 1
      %1881 = vperm.xlu0 %1880, %v615
      %v1882 = vpop.permute.xlu0 %1881
      %1884 = vset.pattern.permute.xlu0 1
      %1885 = vperm.xlu0 %1884, %v616
      %v1886 = vpop.permute.xlu0 %1885
      %1888 = vset.pattern.permute.xlu0 1
      %1889 = vperm.xlu0 %1888, %v617
      %v1890 = vpop.permute.xlu0 %1889
      %1892 = vset.pattern.permute.xlu0 1
      %1893 = vperm.xlu0 %1892, %v618
      %v1894 = vpop.permute.xlu0 %1893
      %1896 = vset.pattern.permute.xlu0 1
      %1897 = vperm.xlu0 %1896, %v619
      %v1898 = vpop.permute.xlu0 %1897
      %1900 = vset.pattern.permute.xlu0 1
      %1901 = vperm.xlu0 %1900, %v620
      %v1902 = vpop.permute.xlu0 %1901
      %1904 = vset.pattern.permute.xlu0 1
      %1905 = vperm.xlu0 %1904, %v621
      %v1906 = vpop.permute.xlu0 %1905
      %v1908 = vlaneseq
      %v1909 = vshrl.u32 %v1908, 7
      %v1910 = vsub.s32 1, %v1909
      %v1911 = vrot.slane %v622, %v1910
      %v1912 = vmul.f32 %v1398, %v1911
      %v1913 = vmul.f32 %v1402, %v1911
      %v1914 = vmul.f32 %v1406, %v1911
      %v1915 = vmul.f32 %v1410, %v1911
      %v1916 = vmul.f32 %v1414, %v1911
      %v1917 = vmul.f32 %v1418, %v1911
      %v1918 = vmul.f32 %v1422, %v1911
      %v1919 = vmul.f32 %v1426, %v1911
      %v1920 = vmul.f32 %v1430, %v1911
      %v1921 = vmul.f32 %v1434, %v1911
      %v1922 = vmul.f32 %v1438, %v1911
      %v1923 = vmul.f32 %v1442, %v1911
      %v1924 = vmul.f32 %v1446, %v1911
      %v1925 = vmul.f32 %v1450, %v1911
      %v1926 = vmul.f32 %v1454, %v1911
      %v1927 = vmul.f32 %v1458, %v1911
      %v1928 = vmul.f32 %v1462, %v1911
      %v1929 = vmul.f32 %v1466, %v1911
      %v1930 = vmul.f32 %v1470, %v1911
      %v1931 = vmul.f32 %v1474, %v1911
      %v1932 = vmul.f32 %v1478, %v1911
      %v1933 = vmul.f32 %v1482, %v1911
      %v1934 = vmul.f32 %v1486, %v1911
      %v1935 = vmul.f32 %v1490, %v1911
      %v1936 = vmul.f32 %v1494, %v1911
      %v1937 = vmul.f32 %v1498, %v1911
      %v1938 = vmul.f32 %v1502, %v1911
      %v1939 = vmul.f32 %v1506, %v1911
      %v1940 = vmul.f32 %v1510, %v1911
      %v1941 = vmul.f32 %v1514, %v1911
      %v1942 = vmul.f32 %v1518, %v1911
      %v1943 = vmul.f32 %v1522, %v1911
      %v1944 = vmul.f32 %v1526, %v1911
      %v1945 = vmul.f32 %v1530, %v1911
      %v1946 = vmul.f32 %v1534, %v1911
      %v1947 = vmul.f32 %v1538, %v1911
      %v1948 = vmul.f32 %v1542, %v1911
      %v1949 = vmul.f32 %v1546, %v1911
      %v1950 = vmul.f32 %v1550, %v1911
      %v1951 = vmul.f32 %v1554, %v1911
      %v1952 = vmul.f32 %v1558, %v1911
      %v1953 = vmul.f32 %v1562, %v1911
      %v1954 = vmul.f32 %v1566, %v1911
      %v1955 = vmul.f32 %v1570, %v1911
      %v1956 = vmul.f32 %v1574, %v1911
      %v1957 = vmul.f32 %v1578, %v1911
      %v1958 = vmul.f32 %v1582, %v1911
      %v1959 = vmul.f32 %v1586, %v1911
      %v1960 = vmul.f32 %v1590, %v1911
      %v1961 = vmul.f32 %v1594, %v1911
      %v1962 = vmul.f32 %v1598, %v1911
      %v1963 = vmul.f32 %v1602, %v1911
      %v1964 = vmul.f32 %v1606, %v1911
      %v1965 = vmul.f32 %v1610, %v1911
      %v1966 = vmul.f32 %v1614, %v1911
      %v1967 = vmul.f32 %v1618, %v1911
      %v1968 = vmul.f32 %v1622, %v1911
      %v1969 = vmul.f32 %v1626, %v1911
      %v1970 = vmul.f32 %v1630, %v1911
      %v1971 = vmul.f32 %v1634, %v1911
      %v1972 = vmul.f32 %v1638, %v1911
      %v1973 = vmul.f32 %v1642, %v1911
      %v1974 = vmul.f32 %v1646, %v1911
      %v1975 = vmul.f32 %v1650, %v1911
      %v1976 = vmul.f32 %v1654, %v1911
      %v1977 = vmul.f32 %v1658, %v1911
      %v1978 = vmul.f32 %v1662, %v1911
      %v1979 = vmul.f32 %v1666, %v1911
      %v1980 = vmul.f32 %v1670, %v1911
      %v1981 = vmul.f32 %v1674, %v1911
      %v1982 = vmul.f32 %v1678, %v1911
      %v1983 = vmul.f32 %v1682, %v1911
      %v1984 = vmul.f32 %v1686, %v1911
      %v1985 = vmul.f32 %v1690, %v1911
      %v1986 = vmul.f32 %v1694, %v1911
      %v1987 = vmul.f32 %v1698, %v1911
      %v1988 = vmul.f32 %v1702, %v1911
      %v1989 = vmul.f32 %v1706, %v1911
      %v1990 = vmul.f32 %v1710, %v1911
      %v1991 = vmul.f32 %v1714, %v1911
      %v1992 = vmul.f32 %v1718, %v1911
      %v1993 = vmul.f32 %v1722, %v1911
      %v1994 = vmul.f32 %v1726, %v1911
      %v1995 = vmul.f32 %v1730, %v1911
      %v1996 = vmul.f32 %v1734, %v1911
      %v1997 = vmul.f32 %v1738, %v1911
      %v1998 = vmul.f32 %v1742, %v1911
      %v1999 = vmul.f32 %v1746, %v1911
      %v2000 = vmul.f32 %v1750, %v1911
      %v2001 = vmul.f32 %v1754, %v1911
      %v2002 = vmul.f32 %v1758, %v1911
      %v2003 = vmul.f32 %v1762, %v1911
      %v2004 = vmul.f32 %v1766, %v1911
      %v2005 = vmul.f32 %v1770, %v1911
      %v2006 = vmul.f32 %v1774, %v1911
      %v2007 = vmul.f32 %v1778, %v1911
      %v2008 = vmul.f32 %v1782, %v1911
      %v2009 = vmul.f32 %v1786, %v1911
      %v2010 = vmul.f32 %v1790, %v1911
      %v2011 = vmul.f32 %v1794, %v1911
      %v2012 = vmul.f32 %v1798, %v1911
      %v2013 = vmul.f32 %v1802, %v1911
      %v2014 = vmul.f32 %v1806, %v1911
      %v2015 = vmul.f32 %v1810, %v1911
      %v2016 = vmul.f32 %v1814, %v1911
      %v2017 = vmul.f32 %v1818, %v1911
      %v2018 = vmul.f32 %v1822, %v1911
      %v2019 = vmul.f32 %v1826, %v1911
      %v2020 = vmul.f32 %v1830, %v1911
      %v2021 = vmul.f32 %v1834, %v1911
      %v2022 = vmul.f32 %v1838, %v1911
      %v2023 = vmul.f32 %v1842, %v1911
      %v2024 = vmul.f32 %v1846, %v1911
      %v2025 = vmul.f32 %v1850, %v1911
      %v2026 = vmul.f32 %v1854, %v1911
      %v2027 = vmul.f32 %v1858, %v1911
      %v2028 = vmul.f32 %v1862, %v1911
      %v2029 = vmul.f32 %v1866, %v1911
      %v2030 = vmul.f32 %v1870, %v1911
      %v2031 = vmul.f32 %v1874, %v1911
      %v2032 = vmul.f32 %v1878, %v1911
      %v2033 = vmul.f32 %v1882, %v1911
      %v2034 = vmul.f32 %v1886, %v1911
      %v2035 = vmul.f32 %v1890, %v1911
      %v2036 = vmul.f32 %v1894, %v1911
      %v2037 = vmul.f32 %v1898, %v1911
      %v2038 = vmul.f32 %v1902, %v1911
      %v2039 = vmul.f32 %v1906, %v1911
      %v2040 = vadd.f32 %v1268, %v1912
      %v2041 = vadd.f32 %v1269, %v1913
      %v2042 = vadd.f32 %v1270, %v1914
      %v2043 = vadd.f32 %v1271, %v1915
      %v2044 = vadd.f32 %v1272, %v1916
      %v2045 = vadd.f32 %v1273, %v1917
      %v2046 = vadd.f32 %v1274, %v1918
      %v2047 = vadd.f32 %v1275, %v1919
      %v2048 = vadd.f32 %v1276, %v1920
      %v2049 = vadd.f32 %v1277, %v1921
      %v2050 = vadd.f32 %v1278, %v1922
      %v2051 = vadd.f32 %v1279, %v1923
      %v2052 = vadd.f32 %v1280, %v1924
      %v2053 = vadd.f32 %v1281, %v1925
      %v2054 = vadd.f32 %v1282, %v1926
      %v2055 = vadd.f32 %v1283, %v1927
      %v2056 = vadd.f32 %v1284, %v1928
      %v2057 = vadd.f32 %v1285, %v1929
      %v2058 = vadd.f32 %v1286, %v1930
      %v2059 = vadd.f32 %v1287, %v1931
      %v2060 = vadd.f32 %v1288, %v1932
      %v2061 = vadd.f32 %v1289, %v1933
      %v2062 = vadd.f32 %v1290, %v1934
      %v2063 = vadd.f32 %v1291, %v1935
      %v2064 = vadd.f32 %v1292, %v1936
      %v2065 = vadd.f32 %v1293, %v1937
      %v2066 = vadd.f32 %v1294, %v1938
      %v2067 = vadd.f32 %v1295, %v1939
      %v2068 = vadd.f32 %v1296, %v1940
      %v2069 = vadd.f32 %v1297, %v1941
      %v2070 = vadd.f32 %v1298, %v1942
      %v2071 = vadd.f32 %v1299, %v1943
      %v2072 = vadd.f32 %v1300, %v1944
      %v2073 = vadd.f32 %v1301, %v1945
      %v2074 = vadd.f32 %v1302, %v1946
      %v2075 = vadd.f32 %v1303, %v1947
      %v2076 = vadd.f32 %v1304, %v1948
      %v2077 = vadd.f32 %v1305, %v1949
      %v2078 = vadd.f32 %v1306, %v1950
      %v2079 = vadd.f32 %v1307, %v1951
      %v2080 = vadd.f32 %v1308, %v1952
      %v2081 = vadd.f32 %v1309, %v1953
      %v2082 = vadd.f32 %v1310, %v1954
      %v2083 = vadd.f32 %v1311, %v1955
      %v2084 = vadd.f32 %v1312, %v1956
      %v2085 = vadd.f32 %v1313, %v1957
      %v2086 = vadd.f32 %v1314, %v1958
      %v2087 = vadd.f32 %v1315, %v1959
      %v2088 = vadd.f32 %v1316, %v1960
      %v2089 = vadd.f32 %v1317, %v1961
      %v2090 = vadd.f32 %v1318, %v1962
      %v2091 = vadd.f32 %v1319, %v1963
      %v2092 = vadd.f32 %v1320, %v1964
      %v2093 = vadd.f32 %v1321, %v1965
      %v2094 = vadd.f32 %v1322, %v1966
      %v2095 = vadd.f32 %v1323, %v1967
      %v2096 = vadd.f32 %v1324, %v1968
      %v2097 = vadd.f32 %v1325, %v1969
      %v2098 = vadd.f32 %v1326, %v1970
      %v2099 = vadd.f32 %v1327, %v1971
      %v2100 = vadd.f32 %v1328, %v1972
      %v2101 = vadd.f32 %v1329, %v1973
      %v2102 = vadd.f32 %v1330, %v1974
      %v2103 = vadd.f32 %v1331, %v1975
      %v2104 = vadd.f32 %v1332, %v1976
      %v2105 = vadd.f32 %v1333, %v1977
      %v2106 = vadd.f32 %v1334, %v1978
      %v2107 = vadd.f32 %v1335, %v1979
      %v2108 = vadd.f32 %v1336, %v1980
      %v2109 = vadd.f32 %v1337, %v1981
      %v2110 = vadd.f32 %v1338, %v1982
      %v2111 = vadd.f32 %v1339, %v1983
      %v2112 = vadd.f32 %v1340, %v1984
      %v2113 = vadd.f32 %v1341, %v1985
      %v2114 = vadd.f32 %v1342, %v1986
      %v2115 = vadd.f32 %v1343, %v1987
      %v2116 = vadd.f32 %v1344, %v1988
      %v2117 = vadd.f32 %v1345, %v1989
      %v2118 = vadd.f32 %v1346, %v1990
      %v2119 = vadd.f32 %v1347, %v1991
      %v2120 = vadd.f32 %v1348, %v1992
      %v2121 = vadd.f32 %v1349, %v1993
      %v2122 = vadd.f32 %v1350, %v1994
      %v2123 = vadd.f32 %v1351, %v1995
      %v2124 = vadd.f32 %v1352, %v1996
      %v2125 = vadd.f32 %v1353, %v1997
      %v2126 = vadd.f32 %v1354, %v1998
      %v2127 = vadd.f32 %v1355, %v1999
      %v2128 = vadd.f32 %v1356, %v2000
      %v2129 = vadd.f32 %v1357, %v2001
      %v2130 = vadd.f32 %v1358, %v2002
      %v2131 = vadd.f32 %v1359, %v2003
      %v2132 = vadd.f32 %v1360, %v2004
      %v2133 = vadd.f32 %v1361, %v2005
      %v2134 = vadd.f32 %v1362, %v2006
      %v2135 = vadd.f32 %v1363, %v2007
      %v2136 = vadd.f32 %v1364, %v2008
      %v2137 = vadd.f32 %v1365, %v2009
      %v2138 = vadd.f32 %v1366, %v2010
      %v2139 = vadd.f32 %v1367, %v2011
      %v2140 = vadd.f32 %v1368, %v2012
      %v2141 = vadd.f32 %v1369, %v2013
      %v2142 = vadd.f32 %v1370, %v2014
      %v2143 = vadd.f32 %v1371, %v2015
      %v2144 = vadd.f32 %v1372, %v2016
      %v2145 = vadd.f32 %v1373, %v2017
      %v2146 = vadd.f32 %v1374, %v2018
      %v2147 = vadd.f32 %v1375, %v2019
      %v2148 = vadd.f32 %v1376, %v2020
      %v2149 = vadd.f32 %v1377, %v2021
      %v2150 = vadd.f32 %v1378, %v2022
      %v2151 = vadd.f32 %v1379, %v2023
      %v2152 = vadd.f32 %v1380, %v2024
      %v2153 = vadd.f32 %v1381, %v2025
      %v2154 = vadd.f32 %v1382, %v2026
      %v2155 = vadd.f32 %v1383, %v2027
      %v2156 = vadd.f32 %v1384, %v2028
      %v2157 = vadd.f32 %v1385, %v2029
      %v2158 = vadd.f32 %v1386, %v2030
      %v2159 = vadd.f32 %v1387, %v2031
      %v2160 = vadd.f32 %v1388, %v2032
      %v2161 = vadd.f32 %v1389, %v2033
      %v2162 = vadd.f32 %v1390, %v2034
      %v2163 = vadd.f32 %v1391, %v2035
      %v2164 = vadd.f32 %v1392, %v2036
      %v2165 = vadd.f32 %v1393, %v2037
      %v2166 = vadd.f32 %v1394, %v2038
      %v2167 = vadd.f32 %v1395, %v2039
      %2168 = vset.pattern.permute.xlu0 2
      %2169 = vperm.xlu0 %2168, %v494
      %v2170 = vpop.permute.xlu0 %2169
      %2172 = vset.pattern.permute.xlu0 2
      %2173 = vperm.xlu0 %2172, %v495
      %v2174 = vpop.permute.xlu0 %2173
      %2176 = vset.pattern.permute.xlu0 2
      %2177 = vperm.xlu0 %2176, %v496
      %v2178 = vpop.permute.xlu0 %2177
      %2180 = vset.pattern.permute.xlu0 2
      %2181 = vperm.xlu0 %2180, %v497
      %v2182 = vpop.permute.xlu0 %2181
      %2184 = vset.pattern.permute.xlu0 2
      %2185 = vperm.xlu0 %2184, %v498
      %v2186 = vpop.permute.xlu0 %2185
      %2188 = vset.pattern.permute.xlu0 2
      %2189 = vperm.xlu0 %2188, %v499
      %v2190 = vpop.permute.xlu0 %2189
      %2192 = vset.pattern.permute.xlu0 2
      %2193 = vperm.xlu0 %2192, %v500
      %v2194 = vpop.permute.xlu0 %2193
      %2196 = vset.pattern.permute.xlu0 2
      %2197 = vperm.xlu0 %2196, %v501
      %v2198 = vpop.permute.xlu0 %2197
      %2200 = vset.pattern.permute.xlu0 2
      %2201 = vperm.xlu0 %2200, %v502
      %v2202 = vpop.permute.xlu0 %2201
      %2204 = vset.pattern.permute.xlu0 2
      %2205 = vperm.xlu0 %2204, %v503
      %v2206 = vpop.permute.xlu0 %2205
      %2208 = vset.pattern.permute.xlu0 2
      %2209 = vperm.xlu0 %2208, %v504
      %v2210 = vpop.permute.xlu0 %2209
      %2212 = vset.pattern.permute.xlu0 2
      %2213 = vperm.xlu0 %2212, %v505
      %v2214 = vpop.permute.xlu0 %2213
      %2216 = vset.pattern.permute.xlu0 2
      %2217 = vperm.xlu0 %2216, %v506
      %v2218 = vpop.permute.xlu0 %2217
      %2220 = vset.pattern.permute.xlu0 2
      %2221 = vperm.xlu0 %2220, %v507
      %v2222 = vpop.permute.xlu0 %2221
      %2224 = vset.pattern.permute.xlu0 2
      %2225 = vperm.xlu0 %2224, %v508
      %v2226 = vpop.permute.xlu0 %2225
      %2228 = vset.pattern.permute.xlu0 2
      %2229 = vperm.xlu0 %2228, %v509
      %v2230 = vpop.permute.xlu0 %2229
      %2232 = vset.pattern.permute.xlu0 2
      %2233 = vperm.xlu0 %2232, %v510
      %v2234 = vpop.permute.xlu0 %2233
      %2236 = vset.pattern.permute.xlu0 2
      %2237 = vperm.xlu0 %2236, %v511
      %v2238 = vpop.permute.xlu0 %2237
      %2240 = vset.pattern.permute.xlu0 2
      %2241 = vperm.xlu0 %2240, %v512
      %v2242 = vpop.permute.xlu0 %2241
      %2244 = vset.pattern.permute.xlu0 2
      %2245 = vperm.xlu0 %2244, %v513
      %v2246 = vpop.permute.xlu0 %2245
      %2248 = vset.pattern.permute.xlu0 2
      %2249 = vperm.xlu0 %2248, %v514
      %v2250 = vpop.permute.xlu0 %2249
      %2252 = vset.pattern.permute.xlu0 2
      %2253 = vperm.xlu0 %2252, %v515
      %v2254 = vpop.permute.xlu0 %2253
      %2256 = vset.pattern.permute.xlu0 2
      %2257 = vperm.xlu0 %2256, %v516
      %v2258 = vpop.permute.xlu0 %2257
      %2260 = vset.pattern.permute.xlu0 2
      %2261 = vperm.xlu0 %2260, %v517
      %v2262 = vpop.permute.xlu0 %2261
      %2264 = vset.pattern.permute.xlu0 2
      %2265 = vperm.xlu0 %2264, %v518
      %v2266 = vpop.permute.xlu0 %2265
      %2268 = vset.pattern.permute.xlu0 2
      %2269 = vperm.xlu0 %2268, %v519
      %v2270 = vpop.permute.xlu0 %2269
      %2272 = vset.pattern.permute.xlu0 2
      %2273 = vperm.xlu0 %2272, %v520
      %v2274 = vpop.permute.xlu0 %2273
      %2276 = vset.pattern.permute.xlu0 2
      %2277 = vperm.xlu0 %2276, %v521
      %v2278 = vpop.permute.xlu0 %2277
      %2280 = vset.pattern.permute.xlu0 2
      %2281 = vperm.xlu0 %2280, %v522
      %v2282 = vpop.permute.xlu0 %2281
      %2284 = vset.pattern.permute.xlu0 2
      %2285 = vperm.xlu0 %2284, %v523
      %v2286 = vpop.permute.xlu0 %2285
      %2288 = vset.pattern.permute.xlu0 2
      %2289 = vperm.xlu0 %2288, %v524
      %v2290 = vpop.permute.xlu0 %2289
      %2292 = vset.pattern.permute.xlu0 2
      %2293 = vperm.xlu0 %2292, %v525
      %v2294 = vpop.permute.xlu0 %2293
      %2296 = vset.pattern.permute.xlu0 2
      %2297 = vperm.xlu0 %2296, %v526
      %v2298 = vpop.permute.xlu0 %2297
      %2300 = vset.pattern.permute.xlu0 2
      %2301 = vperm.xlu0 %2300, %v527
      %v2302 = vpop.permute.xlu0 %2301
      %2304 = vset.pattern.permute.xlu0 2
      %2305 = vperm.xlu0 %2304, %v528
      %v2306 = vpop.permute.xlu0 %2305
      %2308 = vset.pattern.permute.xlu0 2
      %2309 = vperm.xlu0 %2308, %v529
      %v2310 = vpop.permute.xlu0 %2309
      %2312 = vset.pattern.permute.xlu0 2
      %2313 = vperm.xlu0 %2312, %v530
      %v2314 = vpop.permute.xlu0 %2313
      %2316 = vset.pattern.permute.xlu0 2
      %2317 = vperm.xlu0 %2316, %v531
      %v2318 = vpop.permute.xlu0 %2317
      %2320 = vset.pattern.permute.xlu0 2
      %2321 = vperm.xlu0 %2320, %v532
      %v2322 = vpop.permute.xlu0 %2321
      %2324 = vset.pattern.permute.xlu0 2
      %2325 = vperm.xlu0 %2324, %v533
      %v2326 = vpop.permute.xlu0 %2325
      %2328 = vset.pattern.permute.xlu0 2
      %2329 = vperm.xlu0 %2328, %v534
      %v2330 = vpop.permute.xlu0 %2329
      %2332 = vset.pattern.permute.xlu0 2
      %2333 = vperm.xlu0 %2332, %v535
      %v2334 = vpop.permute.xlu0 %2333
      %2336 = vset.pattern.permute.xlu0 2
      %2337 = vperm.xlu0 %2336, %v536
      %v2338 = vpop.permute.xlu0 %2337
      %2340 = vset.pattern.permute.xlu0 2
      %2341 = vperm.xlu0 %2340, %v537
      %v2342 = vpop.permute.xlu0 %2341
      %2344 = vset.pattern.permute.xlu0 2
      %2345 = vperm.xlu0 %2344, %v538
      %v2346 = vpop.permute.xlu0 %2345
      %2348 = vset.pattern.permute.xlu0 2
      %2349 = vperm.xlu0 %2348, %v539
      %v2350 = vpop.permute.xlu0 %2349
      %2352 = vset.pattern.permute.xlu0 2
      %2353 = vperm.xlu0 %2352, %v540
      %v2354 = vpop.permute.xlu0 %2353
      %2356 = vset.pattern.permute.xlu0 2
      %2357 = vperm.xlu0 %2356, %v541
      %v2358 = vpop.permute.xlu0 %2357
      %2360 = vset.pattern.permute.xlu0 2
      %2361 = vperm.xlu0 %2360, %v542
      %v2362 = vpop.permute.xlu0 %2361
      %2364 = vset.pattern.permute.xlu0 2
      %2365 = vperm.xlu0 %2364, %v543
      %v2366 = vpop.permute.xlu0 %2365
      %2368 = vset.pattern.permute.xlu0 2
      %2369 = vperm.xlu0 %2368, %v544
      %v2370 = vpop.permute.xlu0 %2369
      %2372 = vset.pattern.permute.xlu0 2
      %2373 = vperm.xlu0 %2372, %v545
      %v2374 = vpop.permute.xlu0 %2373
      %2376 = vset.pattern.permute.xlu0 2
      %2377 = vperm.xlu0 %2376, %v546
      %v2378 = vpop.permute.xlu0 %2377
      %2380 = vset.pattern.permute.xlu0 2
      %2381 = vperm.xlu0 %2380, %v547
      %v2382 = vpop.permute.xlu0 %2381
      %2384 = vset.pattern.permute.xlu0 2
      %2385 = vperm.xlu0 %2384, %v548
      %v2386 = vpop.permute.xlu0 %2385
      %2388 = vset.pattern.permute.xlu0 2
      %2389 = vperm.xlu0 %2388, %v549
      %v2390 = vpop.permute.xlu0 %2389
      %2392 = vset.pattern.permute.xlu0 2
      %2393 = vperm.xlu0 %2392, %v550
      %v2394 = vpop.permute.xlu0 %2393
      %2396 = vset.pattern.permute.xlu0 2
      %2397 = vperm.xlu0 %2396, %v551
      %v2398 = vpop.permute.xlu0 %2397
      %2400 = vset.pattern.permute.xlu0 2
      %2401 = vperm.xlu0 %2400, %v552
      %v2402 = vpop.permute.xlu0 %2401
      %2404 = vset.pattern.permute.xlu0 2
      %2405 = vperm.xlu0 %2404, %v553
      %v2406 = vpop.permute.xlu0 %2405
      %2408 = vset.pattern.permute.xlu0 2
      %2409 = vperm.xlu0 %2408, %v554
      %v2410 = vpop.permute.xlu0 %2409
      %2412 = vset.pattern.permute.xlu0 2
      %2413 = vperm.xlu0 %2412, %v555
      %v2414 = vpop.permute.xlu0 %2413
      %2416 = vset.pattern.permute.xlu0 2
      %2417 = vperm.xlu0 %2416, %v556
      %v2418 = vpop.permute.xlu0 %2417
      %2420 = vset.pattern.permute.xlu0 2
      %2421 = vperm.xlu0 %2420, %v557
      %v2422 = vpop.permute.xlu0 %2421
      %2424 = vset.pattern.permute.xlu0 2
      %2425 = vperm.xlu0 %2424, %v558
      %v2426 = vpop.permute.xlu0 %2425
      %2428 = vset.pattern.permute.xlu0 2
      %2429 = vperm.xlu0 %2428, %v559
      %v2430 = vpop.permute.xlu0 %2429
      %2432 = vset.pattern.permute.xlu0 2
      %2433 = vperm.xlu0 %2432, %v560
      %v2434 = vpop.permute.xlu0 %2433
      %2436 = vset.pattern.permute.xlu0 2
      %2437 = vperm.xlu0 %2436, %v561
      %v2438 = vpop.permute.xlu0 %2437
      %2440 = vset.pattern.permute.xlu0 2
      %2441 = vperm.xlu0 %2440, %v562
      %v2442 = vpop.permute.xlu0 %2441
      %2444 = vset.pattern.permute.xlu0 2
      %2445 = vperm.xlu0 %2444, %v563
      %v2446 = vpop.permute.xlu0 %2445
      %2448 = vset.pattern.permute.xlu0 2
      %2449 = vperm.xlu0 %2448, %v564
      %v2450 = vpop.permute.xlu0 %2449
      %2452 = vset.pattern.permute.xlu0 2
      %2453 = vperm.xlu0 %2452, %v565
      %v2454 = vpop.permute.xlu0 %2453
      %2456 = vset.pattern.permute.xlu0 2
      %2457 = vperm.xlu0 %2456, %v566
      %v2458 = vpop.permute.xlu0 %2457
      %2460 = vset.pattern.permute.xlu0 2
      %2461 = vperm.xlu0 %2460, %v567
      %v2462 = vpop.permute.xlu0 %2461
      %2464 = vset.pattern.permute.xlu0 2
      %2465 = vperm.xlu0 %2464, %v568
      %v2466 = vpop.permute.xlu0 %2465
      %2468 = vset.pattern.permute.xlu0 2
      %2469 = vperm.xlu0 %2468, %v569
      %v2470 = vpop.permute.xlu0 %2469
      %2472 = vset.pattern.permute.xlu0 2
      %2473 = vperm.xlu0 %2472, %v570
      %v2474 = vpop.permute.xlu0 %2473
      %2476 = vset.pattern.permute.xlu0 2
      %2477 = vperm.xlu0 %2476, %v571
      %v2478 = vpop.permute.xlu0 %2477
      %2480 = vset.pattern.permute.xlu0 2
      %2481 = vperm.xlu0 %2480, %v572
      %v2482 = vpop.permute.xlu0 %2481
      %2484 = vset.pattern.permute.xlu0 2
      %2485 = vperm.xlu0 %2484, %v573
      %v2486 = vpop.permute.xlu0 %2485
      %2488 = vset.pattern.permute.xlu0 2
      %2489 = vperm.xlu0 %2488, %v574
      %v2490 = vpop.permute.xlu0 %2489
      %2492 = vset.pattern.permute.xlu0 2
      %2493 = vperm.xlu0 %2492, %v575
      %v2494 = vpop.permute.xlu0 %2493
      %2496 = vset.pattern.permute.xlu0 2
      %2497 = vperm.xlu0 %2496, %v576
      %v2498 = vpop.permute.xlu0 %2497
      %2500 = vset.pattern.permute.xlu0 2
      %2501 = vperm.xlu0 %2500, %v577
      %v2502 = vpop.permute.xlu0 %2501
      %2504 = vset.pattern.permute.xlu0 2
      %2505 = vperm.xlu0 %2504, %v578
      %v2506 = vpop.permute.xlu0 %2505
      %2508 = vset.pattern.permute.xlu0 2
      %2509 = vperm.xlu0 %2508, %v579
      %v2510 = vpop.permute.xlu0 %2509
      %2512 = vset.pattern.permute.xlu0 2
      %2513 = vperm.xlu0 %2512, %v580
      %v2514 = vpop.permute.xlu0 %2513
      %2516 = vset.pattern.permute.xlu0 2
      %2517 = vperm.xlu0 %2516, %v581
      %v2518 = vpop.permute.xlu0 %2517
      %2520 = vset.pattern.permute.xlu0 2
      %2521 = vperm.xlu0 %2520, %v582
      %v2522 = vpop.permute.xlu0 %2521
      %2524 = vset.pattern.permute.xlu0 2
      %2525 = vperm.xlu0 %2524, %v583
      %v2526 = vpop.permute.xlu0 %2525
      %2528 = vset.pattern.permute.xlu0 2
      %2529 = vperm.xlu0 %2528, %v584
      %v2530 = vpop.permute.xlu0 %2529
      %2532 = vset.pattern.permute.xlu0 2
      %2533 = vperm.xlu0 %2532, %v585
      %v2534 = vpop.permute.xlu0 %2533
      %2536 = vset.pattern.permute.xlu0 2
      %2537 = vperm.xlu0 %2536, %v586
      %v2538 = vpop.permute.xlu0 %2537
      %2540 = vset.pattern.permute.xlu0 2
      %2541 = vperm.xlu0 %2540, %v587
      %v2542 = vpop.permute.xlu0 %2541
      %2544 = vset.pattern.permute.xlu0 2
      %2545 = vperm.xlu0 %2544, %v588
      %v2546 = vpop.permute.xlu0 %2545
      %2548 = vset.pattern.permute.xlu0 2
      %2549 = vperm.xlu0 %2548, %v589
      %v2550 = vpop.permute.xlu0 %2549
      %2552 = vset.pattern.permute.xlu0 2
      %2553 = vperm.xlu0 %2552, %v590
      %v2554 = vpop.permute.xlu0 %2553
      %2556 = vset.pattern.permute.xlu0 2
      %2557 = vperm.xlu0 %2556, %v591
      %v2558 = vpop.permute.xlu0 %2557
      %2560 = vset.pattern.permute.xlu0 2
      %2561 = vperm.xlu0 %2560, %v592
      %v2562 = vpop.permute.xlu0 %2561
      %2564 = vset.pattern.permute.xlu0 2
      %2565 = vperm.xlu0 %2564, %v593
      %v2566 = vpop.permute.xlu0 %2565
      %2568 = vset.pattern.permute.xlu0 2
      %2569 = vperm.xlu0 %2568, %v594
      %v2570 = vpop.permute.xlu0 %2569
      %2572 = vset.pattern.permute.xlu0 2
      %2573 = vperm.xlu0 %2572, %v595
      %v2574 = vpop.permute.xlu0 %2573
      %2576 = vset.pattern.permute.xlu0 2
      %2577 = vperm.xlu0 %2576, %v596
      %v2578 = vpop.permute.xlu0 %2577
      %2580 = vset.pattern.permute.xlu0 2
      %2581 = vperm.xlu0 %2580, %v597
      %v2582 = vpop.permute.xlu0 %2581
      %2584 = vset.pattern.permute.xlu0 2
      %2585 = vperm.xlu0 %2584, %v598
      %v2586 = vpop.permute.xlu0 %2585
      %2588 = vset.pattern.permute.xlu0 2
      %2589 = vperm.xlu0 %2588, %v599
      %v2590 = vpop.permute.xlu0 %2589
      %2592 = vset.pattern.permute.xlu0 2
      %2593 = vperm.xlu0 %2592, %v600
      %v2594 = vpop.permute.xlu0 %2593
      %2596 = vset.pattern.permute.xlu0 2
      %2597 = vperm.xlu0 %2596, %v601
      %v2598 = vpop.permute.xlu0 %2597
      %2600 = vset.pattern.permute.xlu0 2
      %2601 = vperm.xlu0 %2600, %v602
      %v2602 = vpop.permute.xlu0 %2601
      %2604 = vset.pattern.permute.xlu0 2
      %2605 = vperm.xlu0 %2604, %v603
      %v2606 = vpop.permute.xlu0 %2605
      %2608 = vset.pattern.permute.xlu0 2
      %2609 = vperm.xlu0 %2608, %v604
      %v2610 = vpop.permute.xlu0 %2609
      %2612 = vset.pattern.permute.xlu0 2
      %2613 = vperm.xlu0 %2612, %v605
      %v2614 = vpop.permute.xlu0 %2613
      %2616 = vset.pattern.permute.xlu0 2
      %2617 = vperm.xlu0 %2616, %v606
      %v2618 = vpop.permute.xlu0 %2617
      %2620 = vset.pattern.permute.xlu0 2
      %2621 = vperm.xlu0 %2620, %v607
      %v2622 = vpop.permute.xlu0 %2621
      %2624 = vset.pattern.permute.xlu0 2
      %2625 = vperm.xlu0 %2624, %v608
      %v2626 = vpop.permute.xlu0 %2625
      %2628 = vset.pattern.permute.xlu0 2
      %2629 = vperm.xlu0 %2628, %v609
      %v2630 = vpop.permute.xlu0 %2629
      %2632 = vset.pattern.permute.xlu0 2
      %2633 = vperm.xlu0 %2632, %v610
      %v2634 = vpop.permute.xlu0 %2633
      %2636 = vset.pattern.permute.xlu0 2
      %2637 = vperm.xlu0 %2636, %v611
      %v2638 = vpop.permute.xlu0 %2637
      %2640 = vset.pattern.permute.xlu0 2
      %2641 = vperm.xlu0 %2640, %v612
      %v2642 = vpop.permute.xlu0 %2641
      %2644 = vset.pattern.permute.xlu0 2
      %2645 = vperm.xlu0 %2644, %v613
      %v2646 = vpop.permute.xlu0 %2645
      %2648 = vset.pattern.permute.xlu0 2
      %2649 = vperm.xlu0 %2648, %v614
      %v2650 = vpop.permute.xlu0 %2649
      %2652 = vset.pattern.permute.xlu0 2
      %2653 = vperm.xlu0 %2652, %v615
      %v2654 = vpop.permute.xlu0 %2653
      %2656 = vset.pattern.permute.xlu0 2
      %2657 = vperm.xlu0 %2656, %v616
      %v2658 = vpop.permute.xlu0 %2657
      %2660 = vset.pattern.permute.xlu0 2
      %2661 = vperm.xlu0 %2660, %v617
      %v2662 = vpop.permute.xlu0 %2661
      %2664 = vset.pattern.permute.xlu0 2
      %2665 = vperm.xlu0 %2664, %v618
      %v2666 = vpop.permute.xlu0 %2665
      %2668 = vset.pattern.permute.xlu0 2
      %2669 = vperm.xlu0 %2668, %v619
      %v2670 = vpop.permute.xlu0 %2669
      %2672 = vset.pattern.permute.xlu0 2
      %2673 = vperm.xlu0 %2672, %v620
      %v2674 = vpop.permute.xlu0 %2673
      %2676 = vset.pattern.permute.xlu0 2
      %2677 = vperm.xlu0 %2676, %v621
      %v2678 = vpop.permute.xlu0 %2677
      %v2680 = vlaneseq
      %v2681 = vshrl.u32 %v2680, 7
      %v2682 = vsub.s32 2, %v2681
      %v2683 = vrot.slane %v622, %v2682
      %v2684 = vmul.f32 %v2170, %v2683
      %v2685 = vmul.f32 %v2174, %v2683
      %v2686 = vmul.f32 %v2178, %v2683
      %v2687 = vmul.f32 %v2182, %v2683
      %v2688 = vmul.f32 %v2186, %v2683
      %v2689 = vmul.f32 %v2190, %v2683
      %v2690 = vmul.f32 %v2194, %v2683
      %v2691 = vmul.f32 %v2198, %v2683
      %v2692 = vmul.f32 %v2202, %v2683
      %v2693 = vmul.f32 %v2206, %v2683
      %v2694 = vmul.f32 %v2210, %v2683
      %v2695 = vmul.f32 %v2214, %v2683
      %v2696 = vmul.f32 %v2218, %v2683
      %v2697 = vmul.f32 %v2222, %v2683
      %v2698 = vmul.f32 %v2226, %v2683
      %v2699 = vmul.f32 %v2230, %v2683
      %v2700 = vmul.f32 %v2234, %v2683
      %v2701 = vmul.f32 %v2238, %v2683
      %v2702 = vmul.f32 %v2242, %v2683
      %v2703 = vmul.f32 %v2246, %v2683
      %v2704 = vmul.f32 %v2250, %v2683
      %v2705 = vmul.f32 %v2254, %v2683
      %v2706 = vmul.f32 %v2258, %v2683
      %v2707 = vmul.f32 %v2262, %v2683
      %v2708 = vmul.f32 %v2266, %v2683
      %v2709 = vmul.f32 %v2270, %v2683
      %v2710 = vmul.f32 %v2274, %v2683
      %v2711 = vmul.f32 %v2278, %v2683
      %v2712 = vmul.f32 %v2282, %v2683
      %v2713 = vmul.f32 %v2286, %v2683
      %v2714 = vmul.f32 %v2290, %v2683
      %v2715 = vmul.f32 %v2294, %v2683
      %v2716 = vmul.f32 %v2298, %v2683
      %v2717 = vmul.f32 %v2302, %v2683
      %v2718 = vmul.f32 %v2306, %v2683
      %v2719 = vmul.f32 %v2310, %v2683
      %v2720 = vmul.f32 %v2314, %v2683
      %v2721 = vmul.f32 %v2318, %v2683
      %v2722 = vmul.f32 %v2322, %v2683
      %v2723 = vmul.f32 %v2326, %v2683
      %v2724 = vmul.f32 %v2330, %v2683
      %v2725 = vmul.f32 %v2334, %v2683
      %v2726 = vmul.f32 %v2338, %v2683
      %v2727 = vmul.f32 %v2342, %v2683
      %v2728 = vmul.f32 %v2346, %v2683
      %v2729 = vmul.f32 %v2350, %v2683
      %v2730 = vmul.f32 %v2354, %v2683
      %v2731 = vmul.f32 %v2358, %v2683
      %v2732 = vmul.f32 %v2362, %v2683
      %v2733 = vmul.f32 %v2366, %v2683
      %v2734 = vmul.f32 %v2370, %v2683
      %v2735 = vmul.f32 %v2374, %v2683
      %v2736 = vmul.f32 %v2378, %v2683
      %v2737 = vmul.f32 %v2382, %v2683
      %v2738 = vmul.f32 %v2386, %v2683
      %v2739 = vmul.f32 %v2390, %v2683
      %v2740 = vmul.f32 %v2394, %v2683
      %v2741 = vmul.f32 %v2398, %v2683
      %v2742 = vmul.f32 %v2402, %v2683
      %v2743 = vmul.f32 %v2406, %v2683
      %v2744 = vmul.f32 %v2410, %v2683
      %v2745 = vmul.f32 %v2414, %v2683
      %v2746 = vmul.f32 %v2418, %v2683
      %v2747 = vmul.f32 %v2422, %v2683
      %v2748 = vmul.f32 %v2426, %v2683
      %v2749 = vmul.f32 %v2430, %v2683
      %v2750 = vmul.f32 %v2434, %v2683
      %v2751 = vmul.f32 %v2438, %v2683
      %v2752 = vmul.f32 %v2442, %v2683
      %v2753 = vmul.f32 %v2446, %v2683
      %v2754 = vmul.f32 %v2450, %v2683
      %v2755 = vmul.f32 %v2454, %v2683
      %v2756 = vmul.f32 %v2458, %v2683
      %v2757 = vmul.f32 %v2462, %v2683
      %v2758 = vmul.f32 %v2466, %v2683
      %v2759 = vmul.f32 %v2470, %v2683
      %v2760 = vmul.f32 %v2474, %v2683
      %v2761 = vmul.f32 %v2478, %v2683
      %v2762 = vmul.f32 %v2482, %v2683
      %v2763 = vmul.f32 %v2486, %v2683
      %v2764 = vmul.f32 %v2490, %v2683
      %v2765 = vmul.f32 %v2494, %v2683
      %v2766 = vmul.f32 %v2498, %v2683
      %v2767 = vmul.f32 %v2502, %v2683
      %v2768 = vmul.f32 %v2506, %v2683
      %v2769 = vmul.f32 %v2510, %v2683
      %v2770 = vmul.f32 %v2514, %v2683
      %v2771 = vmul.f32 %v2518, %v2683
      %v2772 = vmul.f32 %v2522, %v2683
      %v2773 = vmul.f32 %v2526, %v2683
      %v2774 = vmul.f32 %v2530, %v2683
      %v2775 = vmul.f32 %v2534, %v2683
      %v2776 = vmul.f32 %v2538, %v2683
      %v2777 = vmul.f32 %v2542, %v2683
      %v2778 = vmul.f32 %v2546, %v2683
      %v2779 = vmul.f32 %v2550, %v2683
      %v2780 = vmul.f32 %v2554, %v2683
      %v2781 = vmul.f32 %v2558, %v2683
      %v2782 = vmul.f32 %v2562, %v2683
      %v2783 = vmul.f32 %v2566, %v2683
      %v2784 = vmul.f32 %v2570, %v2683
      %v2785 = vmul.f32 %v2574, %v2683
      %v2786 = vmul.f32 %v2578, %v2683
      %v2787 = vmul.f32 %v2582, %v2683
      %v2788 = vmul.f32 %v2586, %v2683
      %v2789 = vmul.f32 %v2590, %v2683
      %v2790 = vmul.f32 %v2594, %v2683
      %v2791 = vmul.f32 %v2598, %v2683
      %v2792 = vmul.f32 %v2602, %v2683
      %v2793 = vmul.f32 %v2606, %v2683
      %v2794 = vmul.f32 %v2610, %v2683
      %v2795 = vmul.f32 %v2614, %v2683
      %v2796 = vmul.f32 %v2618, %v2683
      %v2797 = vmul.f32 %v2622, %v2683
      %v2798 = vmul.f32 %v2626, %v2683
      %v2799 = vmul.f32 %v2630, %v2683
      %v2800 = vmul.f32 %v2634, %v2683
      %v2801 = vmul.f32 %v2638, %v2683
      %v2802 = vmul.f32 %v2642, %v2683
      %v2803 = vmul.f32 %v2646, %v2683
      %v2804 = vmul.f32 %v2650, %v2683
      %v2805 = vmul.f32 %v2654, %v2683
      %v2806 = vmul.f32 %v2658, %v2683
      %v2807 = vmul.f32 %v2662, %v2683
      %v2808 = vmul.f32 %v2666, %v2683
      %v2809 = vmul.f32 %v2670, %v2683
      %v2810 = vmul.f32 %v2674, %v2683
      %v2811 = vmul.f32 %v2678, %v2683
      %v2812 = vadd.f32 %v2040, %v2684
      %v2813 = vadd.f32 %v2041, %v2685
      %v2814 = vadd.f32 %v2042, %v2686
      %v2815 = vadd.f32 %v2043, %v2687
      %v2816 = vadd.f32 %v2044, %v2688
      %v2817 = vadd.f32 %v2045, %v2689
      %v2818 = vadd.f32 %v2046, %v2690
      %v2819 = vadd.f32 %v2047, %v2691
      %v2820 = vadd.f32 %v2048, %v2692
      %v2821 = vadd.f32 %v2049, %v2693
      %v2822 = vadd.f32 %v2050, %v2694
      %v2823 = vadd.f32 %v2051, %v2695
      %v2824 = vadd.f32 %v2052, %v2696
      %v2825 = vadd.f32 %v2053, %v2697
      %v2826 = vadd.f32 %v2054, %v2698
      %v2827 = vadd.f32 %v2055, %v2699
      %v2828 = vadd.f32 %v2056, %v2700
      %v2829 = vadd.f32 %v2057, %v2701
      %v2830 = vadd.f32 %v2058, %v2702
      %v2831 = vadd.f32 %v2059, %v2703
      %v2832 = vadd.f32 %v2060, %v2704
      %v2833 = vadd.f32 %v2061, %v2705
      %v2834 = vadd.f32 %v2062, %v2706
      %v2835 = vadd.f32 %v2063, %v2707
      %v2836 = vadd.f32 %v2064, %v2708
      %v2837 = vadd.f32 %v2065, %v2709
      %v2838 = vadd.f32 %v2066, %v2710
      %v2839 = vadd.f32 %v2067, %v2711
      %v2840 = vadd.f32 %v2068, %v2712
      %v2841 = vadd.f32 %v2069, %v2713
      %v2842 = vadd.f32 %v2070, %v2714
      %v2843 = vadd.f32 %v2071, %v2715
      %v2844 = vadd.f32 %v2072, %v2716
      %v2845 = vadd.f32 %v2073, %v2717
      %v2846 = vadd.f32 %v2074, %v2718
      %v2847 = vadd.f32 %v2075, %v2719
      %v2848 = vadd.f32 %v2076, %v2720
      %v2849 = vadd.f32 %v2077, %v2721
      %v2850 = vadd.f32 %v2078, %v2722
      %v2851 = vadd.f32 %v2079, %v2723
      %v2852 = vadd.f32 %v2080, %v2724
      %v2853 = vadd.f32 %v2081, %v2725
      %v2854 = vadd.f32 %v2082, %v2726
      %v2855 = vadd.f32 %v2083, %v2727
      %v2856 = vadd.f32 %v2084, %v2728
      %v2857 = vadd.f32 %v2085, %v2729
      %v2858 = vadd.f32 %v2086, %v2730
      %v2859 = vadd.f32 %v2087, %v2731
      %v2860 = vadd.f32 %v2088, %v2732
      %v2861 = vadd.f32 %v2089, %v2733
      %v2862 = vadd.f32 %v2090, %v2734
      %v2863 = vadd.f32 %v2091, %v2735
      %v2864 = vadd.f32 %v2092, %v2736
      %v2865 = vadd.f32 %v2093, %v2737
      %v2866 = vadd.f32 %v2094, %v2738
      %v2867 = vadd.f32 %v2095, %v2739
      %v2868 = vadd.f32 %v2096, %v2740
      %v2869 = vadd.f32 %v2097, %v2741
      %v2870 = vadd.f32 %v2098, %v2742
      %v2871 = vadd.f32 %v2099, %v2743
      %v2872 = vadd.f32 %v2100, %v2744
      %v2873 = vadd.f32 %v2101, %v2745
      %v2874 = vadd.f32 %v2102, %v2746
      %v2875 = vadd.f32 %v2103, %v2747
      %v2876 = vadd.f32 %v2104, %v2748
      %v2877 = vadd.f32 %v2105, %v2749
      %v2878 = vadd.f32 %v2106, %v2750
      %v2879 = vadd.f32 %v2107, %v2751
      %v2880 = vadd.f32 %v2108, %v2752
      %v2881 = vadd.f32 %v2109, %v2753
      %v2882 = vadd.f32 %v2110, %v2754
      %v2883 = vadd.f32 %v2111, %v2755
      %v2884 = vadd.f32 %v2112, %v2756
      %v2885 = vadd.f32 %v2113, %v2757
      %v2886 = vadd.f32 %v2114, %v2758
      %v2887 = vadd.f32 %v2115, %v2759
      %v2888 = vadd.f32 %v2116, %v2760
      %v2889 = vadd.f32 %v2117, %v2761
      %v2890 = vadd.f32 %v2118, %v2762
      %v2891 = vadd.f32 %v2119, %v2763
      %v2892 = vadd.f32 %v2120, %v2764
      %v2893 = vadd.f32 %v2121, %v2765
      %v2894 = vadd.f32 %v2122, %v2766
      %v2895 = vadd.f32 %v2123, %v2767
      %v2896 = vadd.f32 %v2124, %v2768
      %v2897 = vadd.f32 %v2125, %v2769
      %v2898 = vadd.f32 %v2126, %v2770
      %v2899 = vadd.f32 %v2127, %v2771
      %v2900 = vadd.f32 %v2128, %v2772
      %v2901 = vadd.f32 %v2129, %v2773
      %v2902 = vadd.f32 %v2130, %v2774
      %v2903 = vadd.f32 %v2131, %v2775
      %v2904 = vadd.f32 %v2132, %v2776
      %v2905 = vadd.f32 %v2133, %v2777
      %v2906 = vadd.f32 %v2134, %v2778
      %v2907 = vadd.f32 %v2135, %v2779
      %v2908 = vadd.f32 %v2136, %v2780
      %v2909 = vadd.f32 %v2137, %v2781
      %v2910 = vadd.f32 %v2138, %v2782
      %v2911 = vadd.f32 %v2139, %v2783
      %v2912 = vadd.f32 %v2140, %v2784
      %v2913 = vadd.f32 %v2141, %v2785
      %v2914 = vadd.f32 %v2142, %v2786
      %v2915 = vadd.f32 %v2143, %v2787
      %v2916 = vadd.f32 %v2144, %v2788
      %v2917 = vadd.f32 %v2145, %v2789
      %v2918 = vadd.f32 %v2146, %v2790
      %v2919 = vadd.f32 %v2147, %v2791
      %v2920 = vadd.f32 %v2148, %v2792
      %v2921 = vadd.f32 %v2149, %v2793
      %v2922 = vadd.f32 %v2150, %v2794
      %v2923 = vadd.f32 %v2151, %v2795
      %v2924 = vadd.f32 %v2152, %v2796
      %v2925 = vadd.f32 %v2153, %v2797
      %v2926 = vadd.f32 %v2154, %v2798
      %v2927 = vadd.f32 %v2155, %v2799
      %v2928 = vadd.f32 %v2156, %v2800
      %v2929 = vadd.f32 %v2157, %v2801
      %v2930 = vadd.f32 %v2158, %v2802
      %v2931 = vadd.f32 %v2159, %v2803
      %v2932 = vadd.f32 %v2160, %v2804
      %v2933 = vadd.f32 %v2161, %v2805
      %v2934 = vadd.f32 %v2162, %v2806
      %v2935 = vadd.f32 %v2163, %v2807
      %v2936 = vadd.f32 %v2164, %v2808
      %v2937 = vadd.f32 %v2165, %v2809
      %v2938 = vadd.f32 %v2166, %v2810
      %v2939 = vadd.f32 %v2167, %v2811
      %v2940 = vld [vmem:[%s2] sm:$0x1]
      %v2942 = vlaneseq
      %v2943 = vshrl.u32 %v2942, 7
      %v2944 = vsub.s32 0, %v2943
      %v2945 = vrot.slane %v2940, %v2944
      %v2947 = vadd.f32 %v2812, %v2945
      %v2948 = vadd.f32 %v2813, %v2945
      %v2949 = vadd.f32 %v2814, %v2945
      %v2950 = vadd.f32 %v2815, %v2945
      %v2951 = vadd.f32 %v2816, %v2945
      %v2952 = vadd.f32 %v2817, %v2945
      %v2953 = vadd.f32 %v2818, %v2945
      %v2954 = vadd.f32 %v2819, %v2945
      %v2955 = vadd.f32 %v2820, %v2945
      %v2956 = vadd.f32 %v2821, %v2945
      %v2957 = vadd.f32 %v2822, %v2945
      %v2958 = vadd.f32 %v2823, %v2945
      %v2959 = vadd.f32 %v2824, %v2945
      %v2960 = vadd.f32 %v2825, %v2945
      %v2961 = vadd.f32 %v2826, %v2945
      %v2962 = vadd.f32 %v2827, %v2945
      %v2963 = vadd.f32 %v2828, %v2945
      %v2964 = vadd.f32 %v2829, %v2945
      %v2965 = vadd.f32 %v2830, %v2945
      %v2966 = vadd.f32 %v2831, %v2945
      %v2967 = vadd.f32 %v2832, %v2945
      %v2968 = vadd.f32 %v2833, %v2945
      %v2969 = vadd.f32 %v2834, %v2945
      %v2970 = vadd.f32 %v2835, %v2945
      %v2971 = vadd.f32 %v2836, %v2945
      %v2972 = vadd.f32 %v2837, %v2945
      %v2973 = vadd.f32 %v2838, %v2945
      %v2974 = vadd.f32 %v2839, %v2945
      %v2975 = vadd.f32 %v2840, %v2945
      %v2976 = vadd.f32 %v2841, %v2945
      %v2977 = vadd.f32 %v2842, %v2945
      %v2978 = vadd.f32 %v2843, %v2945
      %v2979 = vadd.f32 %v2844, %v2945
      %v2980 = vadd.f32 %v2845, %v2945
      %v2981 = vadd.f32 %v2846, %v2945
      %v2982 = vadd.f32 %v2847, %v2945
      %v2983 = vadd.f32 %v2848, %v2945
      %v2984 = vadd.f32 %v2849, %v2945
      %v2985 = vadd.f32 %v2850, %v2945
      %v2986 = vadd.f32 %v2851, %v2945
      %v2987 = vadd.f32 %v2852, %v2945
      %v2988 = vadd.f32 %v2853, %v2945
      %v2989 = vadd.f32 %v2854, %v2945
      %v2990 = vadd.f32 %v2855, %v2945
      %v2991 = vadd.f32 %v2856, %v2945
      %v2992 = vadd.f32 %v2857, %v2945
      %v2993 = vadd.f32 %v2858, %v2945
      %v2994 = vadd.f32 %v2859, %v2945
      %v2995 = vadd.f32 %v2860, %v2945
      %v2996 = vadd.f32 %v2861, %v2945
      %v2997 = vadd.f32 %v2862, %v2945
      %v2998 = vadd.f32 %v2863, %v2945
      %v2999 = vadd.f32 %v2864, %v2945
      %v3000 = vadd.f32 %v2865, %v2945
      %v3001 = vadd.f32 %v2866, %v2945
      %v3002 = vadd.f32 %v2867, %v2945
      %v3003 = vadd.f32 %v2868, %v2945
      %v3004 = vadd.f32 %v2869, %v2945
      %v3005 = vadd.f32 %v2870, %v2945
      %v3006 = vadd.f32 %v2871, %v2945
      %v3007 = vadd.f32 %v2872, %v2945
      %v3008 = vadd.f32 %v2873, %v2945
      %v3009 = vadd.f32 %v2874, %v2945
      %v3010 = vadd.f32 %v2875, %v2945
      %v3011 = vadd.f32 %v2876, %v2945
      %v3012 = vadd.f32 %v2877, %v2945
      %v3013 = vadd.f32 %v2878, %v2945
      %v3014 = vadd.f32 %v2879, %v2945
      %v3015 = vadd.f32 %v2880, %v2945
      %v3016 = vadd.f32 %v2881, %v2945
      %v3017 = vadd.f32 %v2882, %v2945
      %v3018 = vadd.f32 %v2883, %v2945
      %v3019 = vadd.f32 %v2884, %v2945
      %v3020 = vadd.f32 %v2885, %v2945
      %v3021 = vadd.f32 %v2886, %v2945
      %v3022 = vadd.f32 %v2887, %v2945
      %v3023 = vadd.f32 %v2888, %v2945
      %v3024 = vadd.f32 %v2889, %v2945
      %v3025 = vadd.f32 %v2890, %v2945
      %v3026 = vadd.f32 %v2891, %v2945
      %v3027 = vadd.f32 %v2892, %v2945
      %v3028 = vadd.f32 %v2893, %v2945
      %v3029 = vadd.f32 %v2894, %v2945
      %v3030 = vadd.f32 %v2895, %v2945
      %v3031 = vadd.f32 %v2896, %v2945
      %v3032 = vadd.f32 %v2897, %v2945
      %v3033 = vadd.f32 %v2898, %v2945
      %v3034 = vadd.f32 %v2899, %v2945
      %v3035 = vadd.f32 %v2900, %v2945
      %v3036 = vadd.f32 %v2901, %v2945
      %v3037 = vadd.f32 %v2902, %v2945
      %v3038 = vadd.f32 %v2903, %v2945
      %v3039 = vadd.f32 %v2904, %v2945
      %v3040 = vadd.f32 %v2905, %v2945
      %v3041 = vadd.f32 %v2906, %v2945
      %v3042 = vadd.f32 %v2907, %v2945
      %v3043 = vadd.f32 %v2908, %v2945
      %v3044 = vadd.f32 %v2909, %v2945
      %v3045 = vadd.f32 %v2910, %v2945
      %v3046 = vadd.f32 %v2911, %v2945
      %v3047 = vadd.f32 %v2912, %v2945
      %v3048 = vadd.f32 %v2913, %v2945
      %v3049 = vadd.f32 %v2914, %v2945
      %v3050 = vadd.f32 %v2915, %v2945
      %v3051 = vadd.f32 %v2916, %v2945
      %v3052 = vadd.f32 %v2917, %v2945
      %v3053 = vadd.f32 %v2918, %v2945
      %v3054 = vadd.f32 %v2919, %v2945
      %v3055 = vadd.f32 %v2920, %v2945
      %v3056 = vadd.f32 %v2921, %v2945
      %v3057 = vadd.f32 %v2922, %v2945
      %v3058 = vadd.f32 %v2923, %v2945
      %v3059 = vadd.f32 %v2924, %v2945
      %v3060 = vadd.f32 %v2925, %v2945
      %v3061 = vadd.f32 %v2926, %v2945
      %v3062 = vadd.f32 %v2927, %v2945
      %v3063 = vadd.f32 %v2928, %v2945
      %v3064 = vadd.f32 %v2929, %v2945
      %v3065 = vadd.f32 %v2930, %v2945
      %v3066 = vadd.f32 %v2931, %v2945
      %v3067 = vadd.f32 %v2932, %v2945
      %v3068 = vadd.f32 %v2933, %v2945
      %v3069 = vadd.f32 %v2934, %v2945
      %v3070 = vadd.f32 %v2935, %v2945
      %v3071 = vadd.f32 %v2936, %v2945
      %v3072 = vadd.f32 %v2937, %v2945
      %v3073 = vadd.f32 %v2938, %v2945
      %v3074 = vadd.f32 %v2939, %v2945
      %v3075 = vmax.f32 %v2947, 0.0
      %v3076 = vmax.f32 %v2948, 0.0
      %v3077 = vmax.f32 %v2949, 0.0
      %v3078 = vmax.f32 %v2950, 0.0
      %v3079 = vmax.f32 %v2951, 0.0
      %v3080 = vmax.f32 %v2952, 0.0
      %v3081 = vmax.f32 %v2953, 0.0
      %v3082 = vmax.f32 %v2954, 0.0
      %v3083 = vmax.f32 %v2955, 0.0
      %v3084 = vmax.f32 %v2956, 0.0
      %v3085 = vmax.f32 %v2957, 0.0
      %v3086 = vmax.f32 %v2958, 0.0
      %v3087 = vmax.f32 %v2959, 0.0
      %v3088 = vmax.f32 %v2960, 0.0
      %v3089 = vmax.f32 %v2961, 0.0
      %v3090 = vmax.f32 %v2962, 0.0
      %v3091 = vmax.f32 %v2963, 0.0
      %v3092 = vmax.f32 %v2964, 0.0
      %v3093 = vmax.f32 %v2965, 0.0
      %v3094 = vmax.f32 %v2966, 0.0
      %v3095 = vmax.f32 %v2967, 0.0
      %v3096 = vmax.f32 %v2968, 0.0
      %v3097 = vmax.f32 %v2969, 0.0
      %v3098 = vmax.f32 %v2970, 0.0
      %v3099 = vmax.f32 %v2971, 0.0
      %v3100 = vmax.f32 %v2972, 0.0
      %v3101 = vmax.f32 %v2973, 0.0
      %v3102 = vmax.f32 %v2974, 0.0
      %v3103 = vmax.f32 %v2975, 0.0
      %v3104 = vmax.f32 %v2976, 0.0
      %v3105 = vmax.f32 %v2977, 0.0
      %v3106 = vmax.f32 %v2978, 0.0
      %v3107 = vmax.f32 %v2979, 0.0
      %v3108 = vmax.f32 %v2980, 0.0
      %v3109 = vmax.f32 %v2981, 0.0
      %v3110 = vmax.f32 %v2982, 0.0
      %v3111 = vmax.f32 %v2983, 0.0
      %v3112 = vmax.f32 %v2984, 0.0
      %v3113 = vmax.f32 %v2985, 0.0
      %v3114 = vmax.f32 %v2986, 0.0
      %v3115 = vmax.f32 %v2987, 0.0
      %v3116 = vmax.f32 %v2988, 0.0
      %v3117 = vmax.f32 %v2989, 0.0
      %v3118 = vmax.f32 %v2990, 0.0
      %v3119 = vmax.f32 %v2991, 0.0
      %v3120 = vmax.f32 %v2992, 0.0
      %v3121 = vmax.f32 %v2993, 0.0
      %v3122 = vmax.f32 %v2994, 0.0
      %v3123 = vmax.f32 %v2995, 0.0
      %v3124 = vmax.f32 %v2996, 0.0
      %v3125 = vmax.f32 %v2997, 0.0
      %v3126 = vmax.f32 %v2998, 0.0
      %v3127 = vmax.f32 %v2999, 0.0
      %v3128 = vmax.f32 %v3000, 0.0
      %v3129 = vmax.f32 %v3001, 0.0
      %v3130 = vmax.f32 %v3002, 0.0
      %v3131 = vmax.f32 %v3003, 0.0
      %v3132 = vmax.f32 %v3004, 0.0
      %v3133 = vmax.f32 %v3005, 0.0
      %v3134 = vmax.f32 %v3006, 0.0
      %v3135 = vmax.f32 %v3007, 0.0
      %v3136 = vmax.f32 %v3008, 0.0
      %v3137 = vmax.f32 %v3009, 0.0
      %v3138 = vmax.f32 %v3010, 0.0
      %v3139 = vmax.f32 %v3011, 0.0
      %v3140 = vmax.f32 %v3012, 0.0
      %v3141 = vmax.f32 %v3013, 0.0
      %v3142 = vmax.f32 %v3014, 0.0
      %v3143 = vmax.f32 %v3015, 0.0
      %v3144 = vmax.f32 %v3016, 0.0
      %v3145 = vmax.f32 %v3017, 0.0
      %v3146 = vmax.f32 %v3018, 0.0
      %v3147 = vmax.f32 %v3019, 0.0
      %v3148 = vmax.f32 %v3020, 0.0
      %v3149 = vmax.f32 %v3021, 0.0
      %v3150 = vmax.f32 %v3022, 0.0
      %v3151 = vmax.f32 %v3023, 0.0
      %v3152 = vmax.f32 %v3024, 0.0
      %v3153 = vmax.f32 %v3025, 0.0
      %v3154 = vmax.f32 %v3026, 0.0
      %v3155 = vmax.f32 %v3027, 0.0
      %v3156 = vmax.f32 %v3028, 0.0
      %v3157 = vmax.f32 %v3029, 0.0
      %v3158 = vmax.f32 %v3030, 0.0
      %v3159 = vmax.f32 %v3031, 0.0
      %v3160 = vmax.f32 %v3032, 0.0
      %v3161 = vmax.f32 %v3033, 0.0
      %v3162 = vmax.f32 %v3034, 0.0
      %v3163 = vmax.f32 %v3035, 0.0
      %v3164 = vmax.f32 %v3036, 0.0
      %v3165 = vmax.f32 %v3037, 0.0
      %v3166 = vmax.f32 %v3038, 0.0
      %v3167 = vmax.f32 %v3039, 0.0
      %v3168 = vmax.f32 %v3040, 0.0
      %v3169 = vmax.f32 %v3041, 0.0
      %v3170 = vmax.f32 %v3042, 0.0
      %v3171 = vmax.f32 %v3043, 0.0
      %v3172 = vmax.f32 %v3044, 0.0
      %v3173 = vmax.f32 %v3045, 0.0
      %v3174 = vmax.f32 %v3046, 0.0
      %v3175 = vmax.f32 %v3047, 0.0
      %v3176 = vmax.f32 %v3048, 0.0
      %v3177 = vmax.f32 %v3049, 0.0
      %v3178 = vmax.f32 %v3050, 0.0
      %v3179 = vmax.f32 %v3051, 0.0
      %v3180 = vmax.f32 %v3052, 0.0
      %v3181 = vmax.f32 %v3053, 0.0
      %v3182 = vmax.f32 %v3054, 0.0
      %v3183 = vmax.f32 %v3055, 0.0
      %v3184 = vmax.f32 %v3056, 0.0
      %v3185 = vmax.f32 %v3057, 0.0
      %v3186 = vmax.f32 %v3058, 0.0
      %v3187 = vmax.f32 %v3059, 0.0
      %v3188 = vmax.f32 %v3060, 0.0
      %v3189 = vmax.f32 %v3061, 0.0
      %v3190 = vmax.f32 %v3062, 0.0
      %v3191 = vmax.f32 %v3063, 0.0
      %v3192 = vmax.f32 %v3064, 0.0
      %v3193 = vmax.f32 %v3065, 0.0
      %v3194 = vmax.f32 %v3066, 0.0
      %v3195 = vmax.f32 %v3067, 0.0
      %v3196 = vmax.f32 %v3068, 0.0
      %v3197 = vmax.f32 %v3069, 0.0
      %v3198 = vmax.f32 %v3070, 0.0
      %v3199 = vmax.f32 %v3071, 0.0
      %v3200 = vmax.f32 %v3072, 0.0
      %v3201 = vmax.f32 %v3073, 0.0
      %v3202 = vmax.f32 %v3074, 0.0
      %3204 = vset.pattern.permute.xlu0 0
      %3205 = vperm.xlu0 %3204, %v3075
      %v3206 = vpop.permute.xlu0 %3205
      %3209 = vset.pattern.permute.xlu0 0
      %3210 = vperm.xlu0 %3209, %v3076
      %v3211 = vpop.permute.xlu0 %3210
      %3214 = vset.pattern.permute.xlu0 0
      %3215 = vperm.xlu0 %3214, %v3077
      %v3216 = vpop.permute.xlu0 %3215
      %3219 = vset.pattern.permute.xlu0 0
      %3220 = vperm.xlu0 %3219, %v3078
      %v3221 = vpop.permute.xlu0 %3220
      %3224 = vset.pattern.permute.xlu0 0
      %3225 = vperm.xlu0 %3224, %v3079
      %v3226 = vpop.permute.xlu0 %3225
      %3229 = vset.pattern.permute.xlu0 0
      %3230 = vperm.xlu0 %3229, %v3080
      %v3231 = vpop.permute.xlu0 %3230
      %3234 = vset.pattern.permute.xlu0 0
      %3235 = vperm.xlu0 %3234, %v3081
      %v3236 = vpop.permute.xlu0 %3235
      %3239 = vset.pattern.permute.xlu0 0
      %3240 = vperm.xlu0 %3239, %v3082
      %v3241 = vpop.permute.xlu0 %3240
      %3244 = vset.pattern.permute.xlu0 0
      %3245 = vperm.xlu0 %3244, %v3083
      %v3246 = vpop.permute.xlu0 %3245
      %3249 = vset.pattern.permute.xlu0 0
      %3250 = vperm.xlu0 %3249, %v3084
      %v3251 = vpop.permute.xlu0 %3250
      %3254 = vset.pattern.permute.xlu0 0
      %3255 = vperm.xlu0 %3254, %v3085
      %v3256 = vpop.permute.xlu0 %3255
      %3259 = vset.pattern.permute.xlu0 0
      %3260 = vperm.xlu0 %3259, %v3086
      %v3261 = vpop.permute.xlu0 %3260
      %3264 = vset.pattern.permute.xlu0 0
      %3265 = vperm.xlu0 %3264, %v3087
      %v3266 = vpop.permute.xlu0 %3265
      %3269 = vset.pattern.permute.xlu0 0
      %3270 = vperm.xlu0 %3269, %v3088
      %v3271 = vpop.permute.xlu0 %3270
      %3274 = vset.pattern.permute.xlu0 0
      %3275 = vperm.xlu0 %3274, %v3089
      %v3276 = vpop.permute.xlu0 %3275
      %3279 = vset.pattern.permute.xlu0 0
      %3280 = vperm.xlu0 %3279, %v3090
      %v3281 = vpop.permute.xlu0 %3280
      %3284 = vset.pattern.permute.xlu0 0
      %3285 = vperm.xlu0 %3284, %v3091
      %v3286 = vpop.permute.xlu0 %3285
      %3289 = vset.pattern.permute.xlu0 0
      %3290 = vperm.xlu0 %3289, %v3092
      %v3291 = vpop.permute.xlu0 %3290
      %3294 = vset.pattern.permute.xlu0 0
      %3295 = vperm.xlu0 %3294, %v3093
      %v3296 = vpop.permute.xlu0 %3295
      %3299 = vset.pattern.permute.xlu0 0
      %3300 = vperm.xlu0 %3299, %v3094
      %v3301 = vpop.permute.xlu0 %3300
      %3304 = vset.pattern.permute.xlu0 0
      %3305 = vperm.xlu0 %3304, %v3095
      %v3306 = vpop.permute.xlu0 %3305
      %3309 = vset.pattern.permute.xlu0 0
      %3310 = vperm.xlu0 %3309, %v3096
      %v3311 = vpop.permute.xlu0 %3310
      %3314 = vset.pattern.permute.xlu0 0
      %3315 = vperm.xlu0 %3314, %v3097
      %v3316 = vpop.permute.xlu0 %3315
      %3319 = vset.pattern.permute.xlu0 0
      %3320 = vperm.xlu0 %3319, %v3098
      %v3321 = vpop.permute.xlu0 %3320
      %3324 = vset.pattern.permute.xlu0 0
      %3325 = vperm.xlu0 %3324, %v3099
      %v3326 = vpop.permute.xlu0 %3325
      %3329 = vset.pattern.permute.xlu0 0
      %3330 = vperm.xlu0 %3329, %v3100
      %v3331 = vpop.permute.xlu0 %3330
      %3334 = vset.pattern.permute.xlu0 0
      %3335 = vperm.xlu0 %3334, %v3101
      %v3336 = vpop.permute.xlu0 %3335
      %3339 = vset.pattern.permute.xlu0 0
      %3340 = vperm.xlu0 %3339, %v3102
      %v3341 = vpop.permute.xlu0 %3340
      %3344 = vset.pattern.permute.xlu0 0
      %3345 = vperm.xlu0 %3344, %v3103
      %v3346 = vpop.permute.xlu0 %3345
      %3349 = vset.pattern.permute.xlu0 0
      %3350 = vperm.xlu0 %3349, %v3104
      %v3351 = vpop.permute.xlu0 %3350
      %3354 = vset.pattern.permute.xlu0 0
      %3355 = vperm.xlu0 %3354, %v3105
      %v3356 = vpop.permute.xlu0 %3355
      %3359 = vset.pattern.permute.xlu0 0
      %3360 = vperm.xlu0 %3359, %v3106
      %v3361 = vpop.permute.xlu0 %3360
      %3364 = vset.pattern.permute.xlu0 0
      %3365 = vperm.xlu0 %3364, %v3107
      %v3366 = vpop.permute.xlu0 %3365
      %3369 = vset.pattern.permute.xlu0 0
      %3370 = vperm.xlu0 %3369, %v3108
      %v3371 = vpop.permute.xlu0 %3370
      %3374 = vset.pattern.permute.xlu0 0
      %3375 = vperm.xlu0 %3374, %v3109
      %v3376 = vpop.permute.xlu0 %3375
      %3379 = vset.pattern.permute.xlu0 0
      %3380 = vperm.xlu0 %3379, %v3110
      %v3381 = vpop.permute.xlu0 %3380
      %3384 = vset.pattern.permute.xlu0 0
      %3385 = vperm.xlu0 %3384, %v3111
      %v3386 = vpop.permute.xlu0 %3385
      %3389 = vset.pattern.permute.xlu0 0
      %3390 = vperm.xlu0 %3389, %v3112
      %v3391 = vpop.permute.xlu0 %3390
      %3394 = vset.pattern.permute.xlu0 0
      %3395 = vperm.xlu0 %3394, %v3113
      %v3396 = vpop.permute.xlu0 %3395
      %3399 = vset.pattern.permute.xlu0 0
      %3400 = vperm.xlu0 %3399, %v3114
      %v3401 = vpop.permute.xlu0 %3400
      %3404 = vset.pattern.permute.xlu0 0
      %3405 = vperm.xlu0 %3404, %v3115
      %v3406 = vpop.permute.xlu0 %3405
      %3409 = vset.pattern.permute.xlu0 0
      %3410 = vperm.xlu0 %3409, %v3116
      %v3411 = vpop.permute.xlu0 %3410
      %3414 = vset.pattern.permute.xlu0 0
      %3415 = vperm.xlu0 %3414, %v3117
      %v3416 = vpop.permute.xlu0 %3415
      %3419 = vset.pattern.permute.xlu0 0
      %3420 = vperm.xlu0 %3419, %v3118
      %v3421 = vpop.permute.xlu0 %3420
      %3424 = vset.pattern.permute.xlu0 0
      %3425 = vperm.xlu0 %3424, %v3119
      %v3426 = vpop.permute.xlu0 %3425
      %3429 = vset.pattern.permute.xlu0 0
      %3430 = vperm.xlu0 %3429, %v3120
      %v3431 = vpop.permute.xlu0 %3430
      %3434 = vset.pattern.permute.xlu0 0
      %3435 = vperm.xlu0 %3434, %v3121
      %v3436 = vpop.permute.xlu0 %3435
      %3439 = vset.pattern.permute.xlu0 0
      %3440 = vperm.xlu0 %3439, %v3122
      %v3441 = vpop.permute.xlu0 %3440
      %3444 = vset.pattern.permute.xlu0 0
      %3445 = vperm.xlu0 %3444, %v3123
      %v3446 = vpop.permute.xlu0 %3445
      %3449 = vset.pattern.permute.xlu0 0
      %3450 = vperm.xlu0 %3449, %v3124
      %v3451 = vpop.permute.xlu0 %3450
      %3454 = vset.pattern.permute.xlu0 0
      %3455 = vperm.xlu0 %3454, %v3125
      %v3456 = vpop.permute.xlu0 %3455
      %3459 = vset.pattern.permute.xlu0 0
      %3460 = vperm.xlu0 %3459, %v3126
      %v3461 = vpop.permute.xlu0 %3460
      %3464 = vset.pattern.permute.xlu0 0
      %3465 = vperm.xlu0 %3464, %v3127
      %v3466 = vpop.permute.xlu0 %3465
      %3469 = vset.pattern.permute.xlu0 0
      %3470 = vperm.xlu0 %3469, %v3128
      %v3471 = vpop.permute.xlu0 %3470
      %3474 = vset.pattern.permute.xlu0 0
      %3475 = vperm.xlu0 %3474, %v3129
      %v3476 = vpop.permute.xlu0 %3475
      %3479 = vset.pattern.permute.xlu0 0
      %3480 = vperm.xlu0 %3479, %v3130
      %v3481 = vpop.permute.xlu0 %3480
      %3484 = vset.pattern.permute.xlu0 0
      %3485 = vperm.xlu0 %3484, %v3131
      %v3486 = vpop.permute.xlu0 %3485
      %3489 = vset.pattern.permute.xlu0 0
      %3490 = vperm.xlu0 %3489, %v3132
      %v3491 = vpop.permute.xlu0 %3490
      %3494 = vset.pattern.permute.xlu0 0
      %3495 = vperm.xlu0 %3494, %v3133
      %v3496 = vpop.permute.xlu0 %3495
      %3499 = vset.pattern.permute.xlu0 0
      %3500 = vperm.xlu0 %3499, %v3134
      %v3501 = vpop.permute.xlu0 %3500
      %3504 = vset.pattern.permute.xlu0 0
      %3505 = vperm.xlu0 %3504, %v3135
      %v3506 = vpop.permute.xlu0 %3505
      %3509 = vset.pattern.permute.xlu0 0
      %3510 = vperm.xlu0 %3509, %v3136
      %v3511 = vpop.permute.xlu0 %3510
      %3514 = vset.pattern.permute.xlu0 0
      %3515 = vperm.xlu0 %3514, %v3137
      %v3516 = vpop.permute.xlu0 %3515
      %3519 = vset.pattern.permute.xlu0 0
      %3520 = vperm.xlu0 %3519, %v3138
      %v3521 = vpop.permute.xlu0 %3520
      %3524 = vset.pattern.permute.xlu0 0
      %3525 = vperm.xlu0 %3524, %v3139
      %v3526 = vpop.permute.xlu0 %3525
      %3529 = vset.pattern.permute.xlu0 0
      %3530 = vperm.xlu0 %3529, %v3140
      %v3531 = vpop.permute.xlu0 %3530
      %3534 = vset.pattern.permute.xlu0 0
      %3535 = vperm.xlu0 %3534, %v3141
      %v3536 = vpop.permute.xlu0 %3535
      %3539 = vset.pattern.permute.xlu0 0
      %3540 = vperm.xlu0 %3539, %v3142
      %v3541 = vpop.permute.xlu0 %3540
      %3544 = vset.pattern.permute.xlu0 0
      %3545 = vperm.xlu0 %3544, %v3143
      %v3546 = vpop.permute.xlu0 %3545
      %3549 = vset.pattern.permute.xlu0 0
      %3550 = vperm.xlu0 %3549, %v3144
      %v3551 = vpop.permute.xlu0 %3550
      %3554 = vset.pattern.permute.xlu0 0
      %3555 = vperm.xlu0 %3554, %v3145
      %v3556 = vpop.permute.xlu0 %3555
      %3559 = vset.pattern.permute.xlu0 0
      %3560 = vperm.xlu0 %3559, %v3146
      %v3561 = vpop.permute.xlu0 %3560
      %3564 = vset.pattern.permute.xlu0 0
      %3565 = vperm.xlu0 %3564, %v3147
      %v3566 = vpop.permute.xlu0 %3565
      %3569 = vset.pattern.permute.xlu0 0
      %3570 = vperm.xlu0 %3569, %v3148
      %v3571 = vpop.permute.xlu0 %3570
      %3574 = vset.pattern.permute.xlu0 0
      %3575 = vperm.xlu0 %3574, %v3149
      %v3576 = vpop.permute.xlu0 %3575
      %3579 = vset.pattern.permute.xlu0 0
      %3580 = vperm.xlu0 %3579, %v3150
      %v3581 = vpop.permute.xlu0 %3580
      %3584 = vset.pattern.permute.xlu0 0
      %3585 = vperm.xlu0 %3584, %v3151
      %v3586 = vpop.permute.xlu0 %3585
      %3589 = vset.pattern.permute.xlu0 0
      %3590 = vperm.xlu0 %3589, %v3152
      %v3591 = vpop.permute.xlu0 %3590
      %3594 = vset.pattern.permute.xlu0 0
      %3595 = vperm.xlu0 %3594, %v3153
      %v3596 = vpop.permute.xlu0 %3595
      %3599 = vset.pattern.permute.xlu0 0
      %3600 = vperm.xlu0 %3599, %v3154
      %v3601 = vpop.permute.xlu0 %3600
      %3604 = vset.pattern.permute.xlu0 0
      %3605 = vperm.xlu0 %3604, %v3155
      %v3606 = vpop.permute.xlu0 %3605
      %3609 = vset.pattern.permute.xlu0 0
      %3610 = vperm.xlu0 %3609, %v3156
      %v3611 = vpop.permute.xlu0 %3610
      %3614 = vset.pattern.permute.xlu0 0
      %3615 = vperm.xlu0 %3614, %v3157
      %v3616 = vpop.permute.xlu0 %3615
      %3619 = vset.pattern.permute.xlu0 0
      %3620 = vperm.xlu0 %3619, %v3158
      %v3621 = vpop.permute.xlu0 %3620
      %3624 = vset.pattern.permute.xlu0 0
      %3625 = vperm.xlu0 %3624, %v3159
      %v3626 = vpop.permute.xlu0 %3625
      %3629 = vset.pattern.permute.xlu0 0
      %3630 = vperm.xlu0 %3629, %v3160
      %v3631 = vpop.permute.xlu0 %3630
      %3634 = vset.pattern.permute.xlu0 0
      %3635 = vperm.xlu0 %3634, %v3161
      %v3636 = vpop.permute.xlu0 %3635
      %3639 = vset.pattern.permute.xlu0 0
      %3640 = vperm.xlu0 %3639, %v3162
      %v3641 = vpop.permute.xlu0 %3640
      %3644 = vset.pattern.permute.xlu0 0
      %3645 = vperm.xlu0 %3644, %v3163
      %v3646 = vpop.permute.xlu0 %3645
      %3649 = vset.pattern.permute.xlu0 0
      %3650 = vperm.xlu0 %3649, %v3164
      %v3651 = vpop.permute.xlu0 %3650
      %3654 = vset.pattern.permute.xlu0 0
      %3655 = vperm.xlu0 %3654, %v3165
      %v3656 = vpop.permute.xlu0 %3655
      %3659 = vset.pattern.permute.xlu0 0
      %3660 = vperm.xlu0 %3659, %v3166
      %v3661 = vpop.permute.xlu0 %3660
      %3664 = vset.pattern.permute.xlu0 0
      %3665 = vperm.xlu0 %3664, %v3167
      %v3666 = vpop.permute.xlu0 %3665
      %3669 = vset.pattern.permute.xlu0 0
      %3670 = vperm.xlu0 %3669, %v3168
      %v3671 = vpop.permute.xlu0 %3670
      %3674 = vset.pattern.permute.xlu0 0
      %3675 = vperm.xlu0 %3674, %v3169
      %v3676 = vpop.permute.xlu0 %3675
      %3679 = vset.pattern.permute.xlu0 0
      %3680 = vperm.xlu0 %3679, %v3170
      %v3681 = vpop.permute.xlu0 %3680
      %3684 = vset.pattern.permute.xlu0 0
      %3685 = vperm.xlu0 %3684, %v3171
      %v3686 = vpop.permute.xlu0 %3685
      %3689 = vset.pattern.permute.xlu0 0
      %3690 = vperm.xlu0 %3689, %v3172
      %v3691 = vpop.permute.xlu0 %3690
      %3694 = vset.pattern.permute.xlu0 0
      %3695 = vperm.xlu0 %3694, %v3173
      %v3696 = vpop.permute.xlu0 %3695
      %3699 = vset.pattern.permute.xlu0 0
      %3700 = vperm.xlu0 %3699, %v3174
      %v3701 = vpop.permute.xlu0 %3700
      %3704 = vset.pattern.permute.xlu0 0
      %3705 = vperm.xlu0 %3704, %v3175
      %v3706 = vpop.permute.xlu0 %3705
      %3709 = vset.pattern.permute.xlu0 0
      %3710 = vperm.xlu0 %3709, %v3176
      %v3711 = vpop.permute.xlu0 %3710
      %3714 = vset.pattern.permute.xlu0 0
      %3715 = vperm.xlu0 %3714, %v3177
      %v3716 = vpop.permute.xlu0 %3715
      %3719 = vset.pattern.permute.xlu0 0
      %3720 = vperm.xlu0 %3719, %v3178
      %v3721 = vpop.permute.xlu0 %3720
      %3724 = vset.pattern.permute.xlu0 0
      %3725 = vperm.xlu0 %3724, %v3179
      %v3726 = vpop.permute.xlu0 %3725
      %3729 = vset.pattern.permute.xlu0 0
      %3730 = vperm.xlu0 %3729, %v3180
      %v3731 = vpop.permute.xlu0 %3730
      %3734 = vset.pattern.permute.xlu0 0
      %3735 = vperm.xlu0 %3734, %v3181
      %v3736 = vpop.permute.xlu0 %3735
      %3739 = vset.pattern.permute.xlu0 0
      %3740 = vperm.xlu0 %3739, %v3182
      %v3741 = vpop.permute.xlu0 %3740
      %3744 = vset.pattern.permute.xlu0 0
      %3745 = vperm.xlu0 %3744, %v3183
      %v3746 = vpop.permute.xlu0 %3745
      %3749 = vset.pattern.permute.xlu0 0
      %3750 = vperm.xlu0 %3749, %v3184
      %v3751 = vpop.permute.xlu0 %3750
      %3754 = vset.pattern.permute.xlu0 0
      %3755 = vperm.xlu0 %3754, %v3185
      %v3756 = vpop.permute.xlu0 %3755
      %3759 = vset.pattern.permute.xlu0 0
      %3760 = vperm.xlu0 %3759, %v3186
      %v3761 = vpop.permute.xlu0 %3760
      %3764 = vset.pattern.permute.xlu0 0
      %3765 = vperm.xlu0 %3764, %v3187
      %v3766 = vpop.permute.xlu0 %3765
      %3769 = vset.pattern.permute.xlu0 0
      %3770 = vperm.xlu0 %3769, %v3188
      %v3771 = vpop.permute.xlu0 %3770
      %3774 = vset.pattern.permute.xlu0 0
      %3775 = vperm.xlu0 %3774, %v3189
      %v3776 = vpop.permute.xlu0 %3775
      %3779 = vset.pattern.permute.xlu0 0
      %3780 = vperm.xlu0 %3779, %v3190
      %v3781 = vpop.permute.xlu0 %3780
      %3784 = vset.pattern.permute.xlu0 0
      %3785 = vperm.xlu0 %3784, %v3191
      %v3786 = vpop.permute.xlu0 %3785
      %3789 = vset.pattern.permute.xlu0 0
      %3790 = vperm.xlu0 %3789, %v3192
      %v3791 = vpop.permute.xlu0 %3790
      %3794 = vset.pattern.permute.xlu0 0
      %3795 = vperm.xlu0 %3794, %v3193
      %v3796 = vpop.permute.xlu0 %3795
      %3799 = vset.pattern.permute.xlu0 0
      %3800 = vperm.xlu0 %3799, %v3194
      %v3801 = vpop.permute.xlu0 %3800
      %3804 = vset.pattern.permute.xlu0 0
      %3805 = vperm.xlu0 %3804, %v3195
      %v3806 = vpop.permute.xlu0 %3805
      %3809 = vset.pattern.permute.xlu0 0
      %3810 = vperm.xlu0 %3809, %v3196
      %v3811 = vpop.permute.xlu0 %3810
      %3814 = vset.pattern.permute.xlu0 0
      %3815 = vperm.xlu0 %3814, %v3197
      %v3816 = vpop.permute.xlu0 %3815
      %3819 = vset.pattern.permute.xlu0 0
      %3820 = vperm.xlu0 %3819, %v3198
      %v3821 = vpop.permute.xlu0 %3820
      %3824 = vset.pattern.permute.xlu0 0
      %3825 = vperm.xlu0 %3824, %v3199
      %v3826 = vpop.permute.xlu0 %3825
      %3829 = vset.pattern.permute.xlu0 0
      %3830 = vperm.xlu0 %3829, %v3200
      %v3831 = vpop.permute.xlu0 %3830
      %3834 = vset.pattern.permute.xlu0 0
      %3835 = vperm.xlu0 %3834, %v3201
      %v3836 = vpop.permute.xlu0 %3835
      %3839 = vset.pattern.permute.xlu0 0
      %3840 = vperm.xlu0 %3839, %v3202
      %v3841 = vpop.permute.xlu0 %3840
      %v3843 = vlaneseq
      %v3844 = vshrl.u32 %v3843, 7
      %v3845 = vsub.s32 0, %v3844
      %v3846 = vrot.slane %v623, %v3845
      %v3847 = vmul.f32 %v3206, %v3846
      %v3848 = vmul.f32 %v3211, %v3846
      %v3849 = vmul.f32 %v3216, %v3846
      %v3850 = vmul.f32 %v3221, %v3846
      %v3851 = vmul.f32 %v3226, %v3846
      %v3852 = vmul.f32 %v3231, %v3846
      %v3853 = vmul.f32 %v3236, %v3846
      %v3854 = vmul.f32 %v3241, %v3846
      %v3855 = vmul.f32 %v3246, %v3846
      %v3856 = vmul.f32 %v3251, %v3846
      %v3857 = vmul.f32 %v3256, %v3846
      %v3858 = vmul.f32 %v3261, %v3846
      %v3859 = vmul.f32 %v3266, %v3846
      %v3860 = vmul.f32 %v3271, %v3846
      %v3861 = vmul.f32 %v3276, %v3846
      %v3862 = vmul.f32 %v3281, %v3846
      %v3863 = vmul.f32 %v3286, %v3846
      %v3864 = vmul.f32 %v3291, %v3846
      %v3865 = vmul.f32 %v3296, %v3846
      %v3866 = vmul.f32 %v3301, %v3846
      %v3867 = vmul.f32 %v3306, %v3846
      %v3868 = vmul.f32 %v3311, %v3846
      %v3869 = vmul.f32 %v3316, %v3846
      %v3870 = vmul.f32 %v3321, %v3846
      %v3871 = vmul.f32 %v3326, %v3846
      %v3872 = vmul.f32 %v3331, %v3846
      %v3873 = vmul.f32 %v3336, %v3846
      %v3874 = vmul.f32 %v3341, %v3846
      %v3875 = vmul.f32 %v3346, %v3846
      %v3876 = vmul.f32 %v3351, %v3846
      %v3877 = vmul.f32 %v3356, %v3846
      %v3878 = vmul.f32 %v3361, %v3846
      %v3879 = vmul.f32 %v3366, %v3846
      %v3880 = vmul.f32 %v3371, %v3846
      %v3881 = vmul.f32 %v3376, %v3846
      %v3882 = vmul.f32 %v3381, %v3846
      %v3883 = vmul.f32 %v3386, %v3846
      %v3884 = vmul.f32 %v3391, %v3846
      %v3885 = vmul.f32 %v3396, %v3846
      %v3886 = vmul.f32 %v3401, %v3846
      %v3887 = vmul.f32 %v3406, %v3846
      %v3888 = vmul.f32 %v3411, %v3846
      %v3889 = vmul.f32 %v3416, %v3846
      %v3890 = vmul.f32 %v3421, %v3846
      %v3891 = vmul.f32 %v3426, %v3846
      %v3892 = vmul.f32 %v3431, %v3846
      %v3893 = vmul.f32 %v3436, %v3846
      %v3894 = vmul.f32 %v3441, %v3846
      %v3895 = vmul.f32 %v3446, %v3846
      %v3896 = vmul.f32 %v3451, %v3846
      %v3897 = vmul.f32 %v3456, %v3846
      %v3898 = vmul.f32 %v3461, %v3846
      %v3899 = vmul.f32 %v3466, %v3846
      %v3900 = vmul.f32 %v3471, %v3846
      %v3901 = vmul.f32 %v3476, %v3846
      %v3902 = vmul.f32 %v3481, %v3846
      %v3903 = vmul.f32 %v3486, %v3846
      %v3904 = vmul.f32 %v3491, %v3846
      %v3905 = vmul.f32 %v3496, %v3846
      %v3906 = vmul.f32 %v3501, %v3846
      %v3907 = vmul.f32 %v3506, %v3846
      %v3908 = vmul.f32 %v3511, %v3846
      %v3909 = vmul.f32 %v3516, %v3846
      %v3910 = vmul.f32 %v3521, %v3846
      %v3911 = vmul.f32 %v3526, %v3846
      %v3912 = vmul.f32 %v3531, %v3846
      %v3913 = vmul.f32 %v3536, %v3846
      %v3914 = vmul.f32 %v3541, %v3846
      %v3915 = vmul.f32 %v3546, %v3846
      %v3916 = vmul.f32 %v3551, %v3846
      %v3917 = vmul.f32 %v3556, %v3846
      %v3918 = vmul.f32 %v3561, %v3846
      %v3919 = vmul.f32 %v3566, %v3846
      %v3920 = vmul.f32 %v3571, %v3846
      %v3921 = vmul.f32 %v3576, %v3846
      %v3922 = vmul.f32 %v3581, %v3846
      %v3923 = vmul.f32 %v3586, %v3846
      %v3924 = vmul.f32 %v3591, %v3846
      %v3925 = vmul.f32 %v3596, %v3846
      %v3926 = vmul.f32 %v3601, %v3846
      %v3927 = vmul.f32 %v3606, %v3846
      %v3928 = vmul.f32 %v3611, %v3846
      %v3929 = vmul.f32 %v3616, %v3846
      %v3930 = vmul.f32 %v3621, %v3846
      %v3931 = vmul.f32 %v3626, %v3846
      %v3932 = vmul.f32 %v3631, %v3846
      %v3933 = vmul.f32 %v3636, %v3846
      %v3934 = vmul.f32 %v3641, %v3846
      %v3935 = vmul.f32 %v3646, %v3846
      %v3936 = vmul.f32 %v3651, %v3846
      %v3937 = vmul.f32 %v3656, %v3846
      %v3938 = vmul.f32 %v3661, %v3846
      %v3939 = vmul.f32 %v3666, %v3846
      %v3940 = vmul.f32 %v3671, %v3846
      %v3941 = vmul.f32 %v3676, %v3846
      %v3942 = vmul.f32 %v3681, %v3846
      %v3943 = vmul.f32 %v3686, %v3846
      %v3944 = vmul.f32 %v3691, %v3846
      %v3945 = vmul.f32 %v3696, %v3846
      %v3946 = vmul.f32 %v3701, %v3846
      %v3947 = vmul.f32 %v3706, %v3846
      %v3948 = vmul.f32 %v3711, %v3846
      %v3949 = vmul.f32 %v3716, %v3846
      %v3950 = vmul.f32 %v3721, %v3846
      %v3951 = vmul.f32 %v3726, %v3846
      %v3952 = vmul.f32 %v3731, %v3846
      %v3953 = vmul.f32 %v3736, %v3846
      %v3954 = vmul.f32 %v3741, %v3846
      %v3955 = vmul.f32 %v3746, %v3846
      %v3956 = vmul.f32 %v3751, %v3846
      %v3957 = vmul.f32 %v3756, %v3846
      %v3958 = vmul.f32 %v3761, %v3846
      %v3959 = vmul.f32 %v3766, %v3846
      %v3960 = vmul.f32 %v3771, %v3846
      %v3961 = vmul.f32 %v3776, %v3846
      %v3962 = vmul.f32 %v3781, %v3846
      %v3963 = vmul.f32 %v3786, %v3846
      %v3964 = vmul.f32 %v3791, %v3846
      %v3965 = vmul.f32 %v3796, %v3846
      %v3966 = vmul.f32 %v3801, %v3846
      %v3967 = vmul.f32 %v3806, %v3846
      %v3968 = vmul.f32 %v3811, %v3846
      %v3969 = vmul.f32 %v3816, %v3846
      %v3970 = vmul.f32 %v3821, %v3846
      %v3971 = vmul.f32 %v3826, %v3846
      %v3972 = vmul.f32 %v3831, %v3846
      %v3973 = vmul.f32 %v3836, %v3846
      %v3974 = vmul.f32 %v3841, %v3846
      %3975 = vset.pattern.permute.xlu0 1
      %3976 = vperm.xlu0 %3975, %v3075
      %v3977 = vpop.permute.xlu0 %3976
      %3979 = vset.pattern.permute.xlu0 1
      %3980 = vperm.xlu0 %3979, %v3076
      %v3981 = vpop.permute.xlu0 %3980
      %3983 = vset.pattern.permute.xlu0 1
      %3984 = vperm.xlu0 %3983, %v3077
      %v3985 = vpop.permute.xlu0 %3984
      %3987 = vset.pattern.permute.xlu0 1
      %3988 = vperm.xlu0 %3987, %v3078
      %v3989 = vpop.permute.xlu0 %3988
      %3991 = vset.pattern.permute.xlu0 1
      %3992 = vperm.xlu0 %3991, %v3079
      %v3993 = vpop.permute.xlu0 %3992
      %3995 = vset.pattern.permute.xlu0 1
      %3996 = vperm.xlu0 %3995, %v3080
      %v3997 = vpop.permute.xlu0 %3996
      %3999 = vset.pattern.permute.xlu0 1
      %4000 = vperm.xlu0 %3999, %v3081
      %v4001 = vpop.permute.xlu0 %4000
      %4003 = vset.pattern.permute.xlu0 1
      %4004 = vperm.xlu0 %4003, %v3082
      %v4005 = vpop.permute.xlu0 %4004
      %4007 = vset.pattern.permute.xlu0 1
      %4008 = vperm.xlu0 %4007, %v3083
      %v4009 = vpop.permute.xlu0 %4008
      %4011 = vset.pattern.permute.xlu0 1
      %4012 = vperm.xlu0 %4011, %v3084
      %v4013 = vpop.permute.xlu0 %4012
      %4015 = vset.pattern.permute.xlu0 1
      %4016 = vperm.xlu0 %4015, %v3085
      %v4017 = vpop.permute.xlu0 %4016
      %4019 = vset.pattern.permute.xlu0 1
      %4020 = vperm.xlu0 %4019, %v3086
      %v4021 = vpop.permute.xlu0 %4020
      %4023 = vset.pattern.permute.xlu0 1
      %4024 = vperm.xlu0 %4023, %v3087
      %v4025 = vpop.permute.xlu0 %4024
      %4027 = vset.pattern.permute.xlu0 1
      %4028 = vperm.xlu0 %4027, %v3088
      %v4029 = vpop.permute.xlu0 %4028
      %4031 = vset.pattern.permute.xlu0 1
      %4032 = vperm.xlu0 %4031, %v3089
      %v4033 = vpop.permute.xlu0 %4032
      %4035 = vset.pattern.permute.xlu0 1
      %4036 = vperm.xlu0 %4035, %v3090
      %v4037 = vpop.permute.xlu0 %4036
      %4039 = vset.pattern.permute.xlu0 1
      %4040 = vperm.xlu0 %4039, %v3091
      %v4041 = vpop.permute.xlu0 %4040
      %4043 = vset.pattern.permute.xlu0 1
      %4044 = vperm.xlu0 %4043, %v3092
      %v4045 = vpop.permute.xlu0 %4044
      %4047 = vset.pattern.permute.xlu0 1
      %4048 = vperm.xlu0 %4047, %v3093
      %v4049 = vpop.permute.xlu0 %4048
      %4051 = vset.pattern.permute.xlu0 1
      %4052 = vperm.xlu0 %4051, %v3094
      %v4053 = vpop.permute.xlu0 %4052
      %4055 = vset.pattern.permute.xlu0 1
      %4056 = vperm.xlu0 %4055, %v3095
      %v4057 = vpop.permute.xlu0 %4056
      %4059 = vset.pattern.permute.xlu0 1
      %4060 = vperm.xlu0 %4059, %v3096
      %v4061 = vpop.permute.xlu0 %4060
      %4063 = vset.pattern.permute.xlu0 1
      %4064 = vperm.xlu0 %4063, %v3097
      %v4065 = vpop.permute.xlu0 %4064
      %4067 = vset.pattern.permute.xlu0 1
      %4068 = vperm.xlu0 %4067, %v3098
      %v4069 = vpop.permute.xlu0 %4068
      %4071 = vset.pattern.permute.xlu0 1
      %4072 = vperm.xlu0 %4071, %v3099
      %v4073 = vpop.permute.xlu0 %4072
      %4075 = vset.pattern.permute.xlu0 1
      %4076 = vperm.xlu0 %4075, %v3100
      %v4077 = vpop.permute.xlu0 %4076
      %4079 = vset.pattern.permute.xlu0 1
      %4080 = vperm.xlu0 %4079, %v3101
      %v4081 = vpop.permute.xlu0 %4080
      %4083 = vset.pattern.permute.xlu0 1
      %4084 = vperm.xlu0 %4083, %v3102
      %v4085 = vpop.permute.xlu0 %4084
      %4087 = vset.pattern.permute.xlu0 1
      %4088 = vperm.xlu0 %4087, %v3103
      %v4089 = vpop.permute.xlu0 %4088
      %4091 = vset.pattern.permute.xlu0 1
      %4092 = vperm.xlu0 %4091, %v3104
      %v4093 = vpop.permute.xlu0 %4092
      %4095 = vset.pattern.permute.xlu0 1
      %4096 = vperm.xlu0 %4095, %v3105
      %v4097 = vpop.permute.xlu0 %4096
      %4099 = vset.pattern.permute.xlu0 1
      %4100 = vperm.xlu0 %4099, %v3106
      %v4101 = vpop.permute.xlu0 %4100
      %4103 = vset.pattern.permute.xlu0 1
      %4104 = vperm.xlu0 %4103, %v3107
      %v4105 = vpop.permute.xlu0 %4104
      %4107 = vset.pattern.permute.xlu0 1
      %4108 = vperm.xlu0 %4107, %v3108
      %v4109 = vpop.permute.xlu0 %4108
      %4111 = vset.pattern.permute.xlu0 1
      %4112 = vperm.xlu0 %4111, %v3109
      %v4113 = vpop.permute.xlu0 %4112
      %4115 = vset.pattern.permute.xlu0 1
      %4116 = vperm.xlu0 %4115, %v3110
      %v4117 = vpop.permute.xlu0 %4116
      %4119 = vset.pattern.permute.xlu0 1
      %4120 = vperm.xlu0 %4119, %v3111
      %v4121 = vpop.permute.xlu0 %4120
      %4123 = vset.pattern.permute.xlu0 1
      %4124 = vperm.xlu0 %4123, %v3112
      %v4125 = vpop.permute.xlu0 %4124
      %4127 = vset.pattern.permute.xlu0 1
      %4128 = vperm.xlu0 %4127, %v3113
      %v4129 = vpop.permute.xlu0 %4128
      %4131 = vset.pattern.permute.xlu0 1
      %4132 = vperm.xlu0 %4131, %v3114
      %v4133 = vpop.permute.xlu0 %4132
      %4135 = vset.pattern.permute.xlu0 1
      %4136 = vperm.xlu0 %4135, %v3115
      %v4137 = vpop.permute.xlu0 %4136
      %4139 = vset.pattern.permute.xlu0 1
      %4140 = vperm.xlu0 %4139, %v3116
      %v4141 = vpop.permute.xlu0 %4140
      %4143 = vset.pattern.permute.xlu0 1
      %4144 = vperm.xlu0 %4143, %v3117
      %v4145 = vpop.permute.xlu0 %4144
      %4147 = vset.pattern.permute.xlu0 1
      %4148 = vperm.xlu0 %4147, %v3118
      %v4149 = vpop.permute.xlu0 %4148
      %4151 = vset.pattern.permute.xlu0 1
      %4152 = vperm.xlu0 %4151, %v3119
      %v4153 = vpop.permute.xlu0 %4152
      %4155 = vset.pattern.permute.xlu0 1
      %4156 = vperm.xlu0 %4155, %v3120
      %v4157 = vpop.permute.xlu0 %4156
      %4159 = vset.pattern.permute.xlu0 1
      %4160 = vperm.xlu0 %4159, %v3121
      %v4161 = vpop.permute.xlu0 %4160
      %4163 = vset.pattern.permute.xlu0 1
      %4164 = vperm.xlu0 %4163, %v3122
      %v4165 = vpop.permute.xlu0 %4164
      %4167 = vset.pattern.permute.xlu0 1
      %4168 = vperm.xlu0 %4167, %v3123
      %v4169 = vpop.permute.xlu0 %4168
      %4171 = vset.pattern.permute.xlu0 1
      %4172 = vperm.xlu0 %4171, %v3124
      %v4173 = vpop.permute.xlu0 %4172
      %4175 = vset.pattern.permute.xlu0 1
      %4176 = vperm.xlu0 %4175, %v3125
      %v4177 = vpop.permute.xlu0 %4176
      %4179 = vset.pattern.permute.xlu0 1
      %4180 = vperm.xlu0 %4179, %v3126
      %v4181 = vpop.permute.xlu0 %4180
      %4183 = vset.pattern.permute.xlu0 1
      %4184 = vperm.xlu0 %4183, %v3127
      %v4185 = vpop.permute.xlu0 %4184
      %4187 = vset.pattern.permute.xlu0 1
      %4188 = vperm.xlu0 %4187, %v3128
      %v4189 = vpop.permute.xlu0 %4188
      %4191 = vset.pattern.permute.xlu0 1
      %4192 = vperm.xlu0 %4191, %v3129
      %v4193 = vpop.permute.xlu0 %4192
      %4195 = vset.pattern.permute.xlu0 1
      %4196 = vperm.xlu0 %4195, %v3130
      %v4197 = vpop.permute.xlu0 %4196
      %4199 = vset.pattern.permute.xlu0 1
      %4200 = vperm.xlu0 %4199, %v3131
      %v4201 = vpop.permute.xlu0 %4200
      %4203 = vset.pattern.permute.xlu0 1
      %4204 = vperm.xlu0 %4203, %v3132
      %v4205 = vpop.permute.xlu0 %4204
      %4207 = vset.pattern.permute.xlu0 1
      %4208 = vperm.xlu0 %4207, %v3133
      %v4209 = vpop.permute.xlu0 %4208
      %4211 = vset.pattern.permute.xlu0 1
      %4212 = vperm.xlu0 %4211, %v3134
      %v4213 = vpop.permute.xlu0 %4212
      %4215 = vset.pattern.permute.xlu0 1
      %4216 = vperm.xlu0 %4215, %v3135
      %v4217 = vpop.permute.xlu0 %4216
      %4219 = vset.pattern.permute.xlu0 1
      %4220 = vperm.xlu0 %4219, %v3136
      %v4221 = vpop.permute.xlu0 %4220
      %4223 = vset.pattern.permute.xlu0 1
      %4224 = vperm.xlu0 %4223, %v3137
      %v4225 = vpop.permute.xlu0 %4224
      %4227 = vset.pattern.permute.xlu0 1
      %4228 = vperm.xlu0 %4227, %v3138
      %v4229 = vpop.permute.xlu0 %4228
      %4231 = vset.pattern.permute.xlu0 1
      %4232 = vperm.xlu0 %4231, %v3139
      %v4233 = vpop.permute.xlu0 %4232
      %4235 = vset.pattern.permute.xlu0 1
      %4236 = vperm.xlu0 %4235, %v3140
      %v4237 = vpop.permute.xlu0 %4236
      %4239 = vset.pattern.permute.xlu0 1
      %4240 = vperm.xlu0 %4239, %v3141
      %v4241 = vpop.permute.xlu0 %4240
      %4243 = vset.pattern.permute.xlu0 1
      %4244 = vperm.xlu0 %4243, %v3142
      %v4245 = vpop.permute.xlu0 %4244
      %4247 = vset.pattern.permute.xlu0 1
      %4248 = vperm.xlu0 %4247, %v3143
      %v4249 = vpop.permute.xlu0 %4248
      %4251 = vset.pattern.permute.xlu0 1
      %4252 = vperm.xlu0 %4251, %v3144
      %v4253 = vpop.permute.xlu0 %4252
      %4255 = vset.pattern.permute.xlu0 1
      %4256 = vperm.xlu0 %4255, %v3145
      %v4257 = vpop.permute.xlu0 %4256
      %4259 = vset.pattern.permute.xlu0 1
      %4260 = vperm.xlu0 %4259, %v3146
      %v4261 = vpop.permute.xlu0 %4260
      %4263 = vset.pattern.permute.xlu0 1
      %4264 = vperm.xlu0 %4263, %v3147
      %v4265 = vpop.permute.xlu0 %4264
      %4267 = vset.pattern.permute.xlu0 1
      %4268 = vperm.xlu0 %4267, %v3148
      %v4269 = vpop.permute.xlu0 %4268
      %4271 = vset.pattern.permute.xlu0 1
      %4272 = vperm.xlu0 %4271, %v3149
      %v4273 = vpop.permute.xlu0 %4272
      %4275 = vset.pattern.permute.xlu0 1
      %4276 = vperm.xlu0 %4275, %v3150
      %v4277 = vpop.permute.xlu0 %4276
      %4279 = vset.pattern.permute.xlu0 1
      %4280 = vperm.xlu0 %4279, %v3151
      %v4281 = vpop.permute.xlu0 %4280
      %4283 = vset.pattern.permute.xlu0 1
      %4284 = vperm.xlu0 %4283, %v3152
      %v4285 = vpop.permute.xlu0 %4284
      %4287 = vset.pattern.permute.xlu0 1
      %4288 = vperm.xlu0 %4287, %v3153
      %v4289 = vpop.permute.xlu0 %4288
      %4291 = vset.pattern.permute.xlu0 1
      %4292 = vperm.xlu0 %4291, %v3154
      %v4293 = vpop.permute.xlu0 %4292
      %4295 = vset.pattern.permute.xlu0 1
      %4296 = vperm.xlu0 %4295, %v3155
      %v4297 = vpop.permute.xlu0 %4296
      %4299 = vset.pattern.permute.xlu0 1
      %4300 = vperm.xlu0 %4299, %v3156
      %v4301 = vpop.permute.xlu0 %4300
      %4303 = vset.pattern.permute.xlu0 1
      %4304 = vperm.xlu0 %4303, %v3157
      %v4305 = vpop.permute.xlu0 %4304
      %4307 = vset.pattern.permute.xlu0 1
      %4308 = vperm.xlu0 %4307, %v3158
      %v4309 = vpop.permute.xlu0 %4308
      %4311 = vset.pattern.permute.xlu0 1
      %4312 = vperm.xlu0 %4311, %v3159
      %v4313 = vpop.permute.xlu0 %4312
      %4315 = vset.pattern.permute.xlu0 1
      %4316 = vperm.xlu0 %4315, %v3160
      %v4317 = vpop.permute.xlu0 %4316
      %4319 = vset.pattern.permute.xlu0 1
      %4320 = vperm.xlu0 %4319, %v3161
      %v4321 = vpop.permute.xlu0 %4320
      %4323 = vset.pattern.permute.xlu0 1
      %4324 = vperm.xlu0 %4323, %v3162
      %v4325 = vpop.permute.xlu0 %4324
      %4327 = vset.pattern.permute.xlu0 1
      %4328 = vperm.xlu0 %4327, %v3163
      %v4329 = vpop.permute.xlu0 %4328
      %4331 = vset.pattern.permute.xlu0 1
      %4332 = vperm.xlu0 %4331, %v3164
      %v4333 = vpop.permute.xlu0 %4332
      %4335 = vset.pattern.permute.xlu0 1
      %4336 = vperm.xlu0 %4335, %v3165
      %v4337 = vpop.permute.xlu0 %4336
      %4339 = vset.pattern.permute.xlu0 1
      %4340 = vperm.xlu0 %4339, %v3166
      %v4341 = vpop.permute.xlu0 %4340
      %4343 = vset.pattern.permute.xlu0 1
      %4344 = vperm.xlu0 %4343, %v3167
      %v4345 = vpop.permute.xlu0 %4344
      %4347 = vset.pattern.permute.xlu0 1
      %4348 = vperm.xlu0 %4347, %v3168
      %v4349 = vpop.permute.xlu0 %4348
      %4351 = vset.pattern.permute.xlu0 1
      %4352 = vperm.xlu0 %4351, %v3169
      %v4353 = vpop.permute.xlu0 %4352
      %4355 = vset.pattern.permute.xlu0 1
      %4356 = vperm.xlu0 %4355, %v3170
      %v4357 = vpop.permute.xlu0 %4356
      %4359 = vset.pattern.permute.xlu0 1
      %4360 = vperm.xlu0 %4359, %v3171
      %v4361 = vpop.permute.xlu0 %4360
      %4363 = vset.pattern.permute.xlu0 1
      %4364 = vperm.xlu0 %4363, %v3172
      %v4365 = vpop.permute.xlu0 %4364
      %4367 = vset.pattern.permute.xlu0 1
      %4368 = vperm.xlu0 %4367, %v3173
      %v4369 = vpop.permute.xlu0 %4368
      %4371 = vset.pattern.permute.xlu0 1
      %4372 = vperm.xlu0 %4371, %v3174
      %v4373 = vpop.permute.xlu0 %4372
      %4375 = vset.pattern.permute.xlu0 1
      %4376 = vperm.xlu0 %4375, %v3175
      %v4377 = vpop.permute.xlu0 %4376
      %4379 = vset.pattern.permute.xlu0 1
      %4380 = vperm.xlu0 %4379, %v3176
      %v4381 = vpop.permute.xlu0 %4380
      %4383 = vset.pattern.permute.xlu0 1
      %4384 = vperm.xlu0 %4383, %v3177
      %v4385 = vpop.permute.xlu0 %4384
      %4387 = vset.pattern.permute.xlu0 1
      %4388 = vperm.xlu0 %4387, %v3178
      %v4389 = vpop.permute.xlu0 %4388
      %4391 = vset.pattern.permute.xlu0 1
      %4392 = vperm.xlu0 %4391, %v3179
      %v4393 = vpop.permute.xlu0 %4392
      %4395 = vset.pattern.permute.xlu0 1
      %4396 = vperm.xlu0 %4395, %v3180
      %v4397 = vpop.permute.xlu0 %4396
      %4399 = vset.pattern.permute.xlu0 1
      %4400 = vperm.xlu0 %4399, %v3181
      %v4401 = vpop.permute.xlu0 %4400
      %4403 = vset.pattern.permute.xlu0 1
      %4404 = vperm.xlu0 %4403, %v3182
      %v4405 = vpop.permute.xlu0 %4404
      %4407 = vset.pattern.permute.xlu0 1
      %4408 = vperm.xlu0 %4407, %v3183
      %v4409 = vpop.permute.xlu0 %4408
      %4411 = vset.pattern.permute.xlu0 1
      %4412 = vperm.xlu0 %4411, %v3184
      %v4413 = vpop.permute.xlu0 %4412
      %4415 = vset.pattern.permute.xlu0 1
      %4416 = vperm.xlu0 %4415, %v3185
      %v4417 = vpop.permute.xlu0 %4416
      %4419 = vset.pattern.permute.xlu0 1
      %4420 = vperm.xlu0 %4419, %v3186
      %v4421 = vpop.permute.xlu0 %4420
      %4423 = vset.pattern.permute.xlu0 1
      %4424 = vperm.xlu0 %4423, %v3187
      %v4425 = vpop.permute.xlu0 %4424
      %4427 = vset.pattern.permute.xlu0 1
      %4428 = vperm.xlu0 %4427, %v3188
      %v4429 = vpop.permute.xlu0 %4428
      %4431 = vset.pattern.permute.xlu0 1
      %4432 = vperm.xlu0 %4431, %v3189
      %v4433 = vpop.permute.xlu0 %4432
      %4435 = vset.pattern.permute.xlu0 1
      %4436 = vperm.xlu0 %4435, %v3190
      %v4437 = vpop.permute.xlu0 %4436
      %4439 = vset.pattern.permute.xlu0 1
      %4440 = vperm.xlu0 %4439, %v3191
      %v4441 = vpop.permute.xlu0 %4440
      %4443 = vset.pattern.permute.xlu0 1
      %4444 = vperm.xlu0 %4443, %v3192
      %v4445 = vpop.permute.xlu0 %4444
      %4447 = vset.pattern.permute.xlu0 1
      %4448 = vperm.xlu0 %4447, %v3193
      %v4449 = vpop.permute.xlu0 %4448
      %4451 = vset.pattern.permute.xlu0 1
      %4452 = vperm.xlu0 %4451, %v3194
      %v4453 = vpop.permute.xlu0 %4452
      %4455 = vset.pattern.permute.xlu0 1
      %4456 = vperm.xlu0 %4455, %v3195
      %v4457 = vpop.permute.xlu0 %4456
      %4459 = vset.pattern.permute.xlu0 1
      %4460 = vperm.xlu0 %4459, %v3196
      %v4461 = vpop.permute.xlu0 %4460
      %4463 = vset.pattern.permute.xlu0 1
      %4464 = vperm.xlu0 %4463, %v3197
      %v4465 = vpop.permute.xlu0 %4464
      %4467 = vset.pattern.permute.xlu0 1
      %4468 = vperm.xlu0 %4467, %v3198
      %v4469 = vpop.permute.xlu0 %4468
      %4471 = vset.pattern.permute.xlu0 1
      %4472 = vperm.xlu0 %4471, %v3199
      %v4473 = vpop.permute.xlu0 %4472
      %4475 = vset.pattern.permute.xlu0 1
      %4476 = vperm.xlu0 %4475, %v3200
      %v4477 = vpop.permute.xlu0 %4476
      %4479 = vset.pattern.permute.xlu0 1
      %4480 = vperm.xlu0 %4479, %v3201
      %v4481 = vpop.permute.xlu0 %4480
      %4483 = vset.pattern.permute.xlu0 1
      %4484 = vperm.xlu0 %4483, %v3202
      %v4485 = vpop.permute.xlu0 %4484
      %v4487 = vlaneseq
      %v4488 = vshrl.u32 %v4487, 7
      %v4489 = vsub.s32 1, %v4488
      %v4490 = vrot.slane %v623, %v4489
      %v4491 = vmul.f32 %v3977, %v4490
      %v4492 = vmul.f32 %v3981, %v4490
      %v4493 = vmul.f32 %v3985, %v4490
      %v4494 = vmul.f32 %v3989, %v4490
      %v4495 = vmul.f32 %v3993, %v4490
      %v4496 = vmul.f32 %v3997, %v4490
      %v4497 = vmul.f32 %v4001, %v4490
      %v4498 = vmul.f32 %v4005, %v4490
      %v4499 = vmul.f32 %v4009, %v4490
      %v4500 = vmul.f32 %v4013, %v4490
      %v4501 = vmul.f32 %v4017, %v4490
      %v4502 = vmul.f32 %v4021, %v4490
      %v4503 = vmul.f32 %v4025, %v4490
      %v4504 = vmul.f32 %v4029, %v4490
      %v4505 = vmul.f32 %v4033, %v4490
      %v4506 = vmul.f32 %v4037, %v4490
      %v4507 = vmul.f32 %v4041, %v4490
      %v4508 = vmul.f32 %v4045, %v4490
      %v4509 = vmul.f32 %v4049, %v4490
      %v4510 = vmul.f32 %v4053, %v4490
      %v4511 = vmul.f32 %v4057, %v4490
      %v4512 = vmul.f32 %v4061, %v4490
      %v4513 = vmul.f32 %v4065, %v4490
      %v4514 = vmul.f32 %v4069, %v4490
      %v4515 = vmul.f32 %v4073, %v4490
      %v4516 = vmul.f32 %v4077, %v4490
      %v4517 = vmul.f32 %v4081, %v4490
      %v4518 = vmul.f32 %v4085, %v4490
      %v4519 = vmul.f32 %v4089, %v4490
      %v4520 = vmul.f32 %v4093, %v4490
      %v4521 = vmul.f32 %v4097, %v4490
      %v4522 = vmul.f32 %v4101, %v4490
      %v4523 = vmul.f32 %v4105, %v4490
      %v4524 = vmul.f32 %v4109, %v4490
      %v4525 = vmul.f32 %v4113, %v4490
      %v4526 = vmul.f32 %v4117, %v4490
      %v4527 = vmul.f32 %v4121, %v4490
      %v4528 = vmul.f32 %v4125, %v4490
      %v4529 = vmul.f32 %v4129, %v4490
      %v4530 = vmul.f32 %v4133, %v4490
      %v4531 = vmul.f32 %v4137, %v4490
      %v4532 = vmul.f32 %v4141, %v4490
      %v4533 = vmul.f32 %v4145, %v4490
      %v4534 = vmul.f32 %v4149, %v4490
      %v4535 = vmul.f32 %v4153, %v4490
      %v4536 = vmul.f32 %v4157, %v4490
      %v4537 = vmul.f32 %v4161, %v4490
      %v4538 = vmul.f32 %v4165, %v4490
      %v4539 = vmul.f32 %v4169, %v4490
      %v4540 = vmul.f32 %v4173, %v4490
      %v4541 = vmul.f32 %v4177, %v4490
      %v4542 = vmul.f32 %v4181, %v4490
      %v4543 = vmul.f32 %v4185, %v4490
      %v4544 = vmul.f32 %v4189, %v4490
      %v4545 = vmul.f32 %v4193, %v4490
      %v4546 = vmul.f32 %v4197, %v4490
      %v4547 = vmul.f32 %v4201, %v4490
      %v4548 = vmul.f32 %v4205, %v4490
      %v4549 = vmul.f32 %v4209, %v4490
      %v4550 = vmul.f32 %v4213, %v4490
      %v4551 = vmul.f32 %v4217, %v4490
      %v4552 = vmul.f32 %v4221, %v4490
      %v4553 = vmul.f32 %v4225, %v4490
      %v4554 = vmul.f32 %v4229, %v4490
      %v4555 = vmul.f32 %v4233, %v4490
      %v4556 = vmul.f32 %v4237, %v4490
      %v4557 = vmul.f32 %v4241, %v4490
      %v4558 = vmul.f32 %v4245, %v4490
      %v4559 = vmul.f32 %v4249, %v4490
      %v4560 = vmul.f32 %v4253, %v4490
      %v4561 = vmul.f32 %v4257, %v4490
      %v4562 = vmul.f32 %v4261, %v4490
      %v4563 = vmul.f32 %v4265, %v4490
      %v4564 = vmul.f32 %v4269, %v4490
      %v4565 = vmul.f32 %v4273, %v4490
      %v4566 = vmul.f32 %v4277, %v4490
      %v4567 = vmul.f32 %v4281, %v4490
      %v4568 = vmul.f32 %v4285, %v4490
      %v4569 = vmul.f32 %v4289, %v4490
      %v4570 = vmul.f32 %v4293, %v4490
      %v4571 = vmul.f32 %v4297, %v4490
      %v4572 = vmul.f32 %v4301, %v4490
      %v4573 = vmul.f32 %v4305, %v4490
      %v4574 = vmul.f32 %v4309, %v4490
      %v4575 = vmul.f32 %v4313, %v4490
      %v4576 = vmul.f32 %v4317, %v4490
      %v4577 = vmul.f32 %v4321, %v4490
      %v4578 = vmul.f32 %v4325, %v4490
      %v4579 = vmul.f32 %v4329, %v4490
      %v4580 = vmul.f32 %v4333, %v4490
      %v4581 = vmul.f32 %v4337, %v4490
      %v4582 = vmul.f32 %v4341, %v4490
      %v4583 = vmul.f32 %v4345, %v4490
      %v4584 = vmul.f32 %v4349, %v4490
      %v4585 = vmul.f32 %v4353, %v4490
      %v4586 = vmul.f32 %v4357, %v4490
      %v4587 = vmul.f32 %v4361, %v4490
      %v4588 = vmul.f32 %v4365, %v4490
      %v4589 = vmul.f32 %v4369, %v4490
      %v4590 = vmul.f32 %v4373, %v4490
      %v4591 = vmul.f32 %v4377, %v4490
      %v4592 = vmul.f32 %v4381, %v4490
      %v4593 = vmul.f32 %v4385, %v4490
      %v4594 = vmul.f32 %v4389, %v4490
      %v4595 = vmul.f32 %v4393, %v4490
      %v4596 = vmul.f32 %v4397, %v4490
      %v4597 = vmul.f32 %v4401, %v4490
      %v4598 = vmul.f32 %v4405, %v4490
      %v4599 = vmul.f32 %v4409, %v4490
      %v4600 = vmul.f32 %v4413, %v4490
      %v4601 = vmul.f32 %v4417, %v4490
      %v4602 = vmul.f32 %v4421, %v4490
      %v4603 = vmul.f32 %v4425, %v4490
      %v4604 = vmul.f32 %v4429, %v4490
      %v4605 = vmul.f32 %v4433, %v4490
      %v4606 = vmul.f32 %v4437, %v4490
      %v4607 = vmul.f32 %v4441, %v4490
      %v4608 = vmul.f32 %v4445, %v4490
      %v4609 = vmul.f32 %v4449, %v4490
      %v4610 = vmul.f32 %v4453, %v4490
      %v4611 = vmul.f32 %v4457, %v4490
      %v4612 = vmul.f32 %v4461, %v4490
      %v4613 = vmul.f32 %v4465, %v4490
      %v4614 = vmul.f32 %v4469, %v4490
      %v4615 = vmul.f32 %v4473, %v4490
      %v4616 = vmul.f32 %v4477, %v4490
      %v4617 = vmul.f32 %v4481, %v4490
      %v4618 = vmul.f32 %v4485, %v4490
      %v4619 = vadd.f32 %v3847, %v4491
      %v4620 = vadd.f32 %v3848, %v4492
      %v4621 = vadd.f32 %v3849, %v4493
      %v4622 = vadd.f32 %v3850, %v4494
      %v4623 = vadd.f32 %v3851, %v4495
      %v4624 = vadd.f32 %v3852, %v4496
      %v4625 = vadd.f32 %v3853, %v4497
      %v4626 = vadd.f32 %v3854, %v4498
      %v4627 = vadd.f32 %v3855, %v4499
      %v4628 = vadd.f32 %v3856, %v4500
      %v4629 = vadd.f32 %v3857, %v4501
      %v4630 = vadd.f32 %v3858, %v4502
      %v4631 = vadd.f32 %v3859, %v4503
      %v4632 = vadd.f32 %v3860, %v4504
      %v4633 = vadd.f32 %v3861, %v4505
      %v4634 = vadd.f32 %v3862, %v4506
      %v4635 = vadd.f32 %v3863, %v4507
      %v4636 = vadd.f32 %v3864, %v4508
      %v4637 = vadd.f32 %v3865, %v4509
      %v4638 = vadd.f32 %v3866, %v4510
      %v4639 = vadd.f32 %v3867, %v4511
      %v4640 = vadd.f32 %v3868, %v4512
      %v4641 = vadd.f32 %v3869, %v4513
      %v4642 = vadd.f32 %v3870, %v4514
      %v4643 = vadd.f32 %v3871, %v4515
      %v4644 = vadd.f32 %v3872, %v4516
      %v4645 = vadd.f32 %v3873, %v4517
      %v4646 = vadd.f32 %v3874, %v4518
      %v4647 = vadd.f32 %v3875, %v4519
      %v4648 = vadd.f32 %v3876, %v4520
      %v4649 = vadd.f32 %v3877, %v4521
      %v4650 = vadd.f32 %v3878, %v4522
      %v4651 = vadd.f32 %v3879, %v4523
      %v4652 = vadd.f32 %v3880, %v4524
      %v4653 = vadd.f32 %v3881, %v4525
      %v4654 = vadd.f32 %v3882, %v4526
      %v4655 = vadd.f32 %v3883, %v4527
      %v4656 = vadd.f32 %v3884, %v4528
      %v4657 = vadd.f32 %v3885, %v4529
      %v4658 = vadd.f32 %v3886, %v4530
      %v4659 = vadd.f32 %v3887, %v4531
      %v4660 = vadd.f32 %v3888, %v4532
      %v4661 = vadd.f32 %v3889, %v4533
      %v4662 = vadd.f32 %v3890, %v4534
      %v4663 = vadd.f32 %v3891, %v4535
      %v4664 = vadd.f32 %v3892, %v4536
      %v4665 = vadd.f32 %v3893, %v4537
      %v4666 = vadd.f32 %v3894, %v4538
      %v4667 = vadd.f32 %v3895, %v4539
      %v4668 = vadd.f32 %v3896, %v4540
      %v4669 = vadd.f32 %v3897, %v4541
      %v4670 = vadd.f32 %v3898, %v4542
      %v4671 = vadd.f32 %v3899, %v4543
      %v4672 = vadd.f32 %v3900, %v4544
      %v4673 = vadd.f32 %v3901, %v4545
      %v4674 = vadd.f32 %v3902, %v4546
      %v4675 = vadd.f32 %v3903, %v4547
      %v4676 = vadd.f32 %v3904, %v4548
      %v4677 = vadd.f32 %v3905, %v4549
      %v4678 = vadd.f32 %v3906, %v4550
      %v4679 = vadd.f32 %v3907, %v4551
      %v4680 = vadd.f32 %v3908, %v4552
      %v4681 = vadd.f32 %v3909, %v4553
      %v4682 = vadd.f32 %v3910, %v4554
      %v4683 = vadd.f32 %v3911, %v4555
      %v4684 = vadd.f32 %v3912, %v4556
      %v4685 = vadd.f32 %v3913, %v4557
      %v4686 = vadd.f32 %v3914, %v4558
      %v4687 = vadd.f32 %v3915, %v4559
      %v4688 = vadd.f32 %v3916, %v4560
      %v4689 = vadd.f32 %v3917, %v4561
      %v4690 = vadd.f32 %v3918, %v4562
      %v4691 = vadd.f32 %v3919, %v4563
      %v4692 = vadd.f32 %v3920, %v4564
      %v4693 = vadd.f32 %v3921, %v4565
      %v4694 = vadd.f32 %v3922, %v4566
      %v4695 = vadd.f32 %v3923, %v4567
      %v4696 = vadd.f32 %v3924, %v4568
      %v4697 = vadd.f32 %v3925, %v4569
      %v4698 = vadd.f32 %v3926, %v4570
      %v4699 = vadd.f32 %v3927, %v4571
      %v4700 = vadd.f32 %v3928, %v4572
      %v4701 = vadd.f32 %v3929, %v4573
      %v4702 = vadd.f32 %v3930, %v4574
      %v4703 = vadd.f32 %v3931, %v4575
      %v4704 = vadd.f32 %v3932, %v4576
      %v4705 = vadd.f32 %v3933, %v4577
      %v4706 = vadd.f32 %v3934, %v4578
      %v4707 = vadd.f32 %v3935, %v4579
      %v4708 = vadd.f32 %v3936, %v4580
      %v4709 = vadd.f32 %v3937, %v4581
      %v4710 = vadd.f32 %v3938, %v4582
      %v4711 = vadd.f32 %v3939, %v4583
      %v4712 = vadd.f32 %v3940, %v4584
      %v4713 = vadd.f32 %v3941, %v4585
      %v4714 = vadd.f32 %v3942, %v4586
      %v4715 = vadd.f32 %v3943, %v4587
      %v4716 = vadd.f32 %v3944, %v4588
      %v4717 = vadd.f32 %v3945, %v4589
      %v4718 = vadd.f32 %v3946, %v4590
      %v4719 = vadd.f32 %v3947, %v4591
      %v4720 = vadd.f32 %v3948, %v4592
      %v4721 = vadd.f32 %v3949, %v4593
      %v4722 = vadd.f32 %v3950, %v4594
      %v4723 = vadd.f32 %v3951, %v4595
      %v4724 = vadd.f32 %v3952, %v4596
      %v4725 = vadd.f32 %v3953, %v4597
      %v4726 = vadd.f32 %v3954, %v4598
      %v4727 = vadd.f32 %v3955, %v4599
      %v4728 = vadd.f32 %v3956, %v4600
      %v4729 = vadd.f32 %v3957, %v4601
      %v4730 = vadd.f32 %v3958, %v4602
      %v4731 = vadd.f32 %v3959, %v4603
      %v4732 = vadd.f32 %v3960, %v4604
      %v4733 = vadd.f32 %v3961, %v4605
      %v4734 = vadd.f32 %v3962, %v4606
      %v4735 = vadd.f32 %v3963, %v4607
      %v4736 = vadd.f32 %v3964, %v4608
      %v4737 = vadd.f32 %v3965, %v4609
      %v4738 = vadd.f32 %v3966, %v4610
      %v4739 = vadd.f32 %v3967, %v4611
      %v4740 = vadd.f32 %v3968, %v4612
      %v4741 = vadd.f32 %v3969, %v4613
      %v4742 = vadd.f32 %v3970, %v4614
      %v4743 = vadd.f32 %v3971, %v4615
      %v4744 = vadd.f32 %v3972, %v4616
      %v4745 = vadd.f32 %v3973, %v4617
      %v4746 = vadd.f32 %v3974, %v4618
      %4747 = vset.pattern.permute.xlu0 2
      %4748 = vperm.xlu0 %4747, %v3075
      %v4749 = vpop.permute.xlu0 %4748
      %4751 = vset.pattern.permute.xlu0 2
      %4752 = vperm.xlu0 %4751, %v3076
      %v4753 = vpop.permute.xlu0 %4752
      %4755 = vset.pattern.permute.xlu0 2
      %4756 = vperm.xlu0 %4755, %v3077
      %v4757 = vpop.permute.xlu0 %4756
      %4759 = vset.pattern.permute.xlu0 2
      %4760 = vperm.xlu0 %4759, %v3078
      %v4761 = vpop.permute.xlu0 %4760
      %4763 = vset.pattern.permute.xlu0 2
      %4764 = vperm.xlu0 %4763, %v3079
      %v4765 = vpop.permute.xlu0 %4764
      %4767 = vset.pattern.permute.xlu0 2
      %4768 = vperm.xlu0 %4767, %v3080
      %v4769 = vpop.permute.xlu0 %4768
      %4771 = vset.pattern.permute.xlu0 2
      %4772 = vperm.xlu0 %4771, %v3081
      %v4773 = vpop.permute.xlu0 %4772
      %4775 = vset.pattern.permute.xlu0 2
      %4776 = vperm.xlu0 %4775, %v3082
      %v4777 = vpop.permute.xlu0 %4776
      %4779 = vset.pattern.permute.xlu0 2
      %4780 = vperm.xlu0 %4779, %v3083
      %v4781 = vpop.permute.xlu0 %4780
      %4783 = vset.pattern.permute.xlu0 2
      %4784 = vperm.xlu0 %4783, %v3084
      %v4785 = vpop.permute.xlu0 %4784
      %4787 = vset.pattern.permute.xlu0 2
      %4788 = vperm.xlu0 %4787, %v3085
      %v4789 = vpop.permute.xlu0 %4788
      %4791 = vset.pattern.permute.xlu0 2
      %4792 = vperm.xlu0 %4791, %v3086
      %v4793 = vpop.permute.xlu0 %4792
      %4795 = vset.pattern.permute.xlu0 2
      %4796 = vperm.xlu0 %4795, %v3087
      %v4797 = vpop.permute.xlu0 %4796
      %4799 = vset.pattern.permute.xlu0 2
      %4800 = vperm.xlu0 %4799, %v3088
      %v4801 = vpop.permute.xlu0 %4800
      %4803 = vset.pattern.permute.xlu0 2
      %4804 = vperm.xlu0 %4803, %v3089
      %v4805 = vpop.permute.xlu0 %4804
      %4807 = vset.pattern.permute.xlu0 2
      %4808 = vperm.xlu0 %4807, %v3090
      %v4809 = vpop.permute.xlu0 %4808
      %4811 = vset.pattern.permute.xlu0 2
      %4812 = vperm.xlu0 %4811, %v3091
      %v4813 = vpop.permute.xlu0 %4812
      %4815 = vset.pattern.permute.xlu0 2
      %4816 = vperm.xlu0 %4815, %v3092
      %v4817 = vpop.permute.xlu0 %4816
      %4819 = vset.pattern.permute.xlu0 2
      %4820 = vperm.xlu0 %4819, %v3093
      %v4821 = vpop.permute.xlu0 %4820
      %4823 = vset.pattern.permute.xlu0 2
      %4824 = vperm.xlu0 %4823, %v3094
      %v4825 = vpop.permute.xlu0 %4824
      %4827 = vset.pattern.permute.xlu0 2
      %4828 = vperm.xlu0 %4827, %v3095
      %v4829 = vpop.permute.xlu0 %4828
      %4831 = vset.pattern.permute.xlu0 2
      %4832 = vperm.xlu0 %4831, %v3096
      %v4833 = vpop.permute.xlu0 %4832
      %4835 = vset.pattern.permute.xlu0 2
      %4836 = vperm.xlu0 %4835, %v3097
      %v4837 = vpop.permute.xlu0 %4836
      %4839 = vset.pattern.permute.xlu0 2
      %4840 = vperm.xlu0 %4839, %v3098
      %v4841 = vpop.permute.xlu0 %4840
      %4843 = vset.pattern.permute.xlu0 2
      %4844 = vperm.xlu0 %4843, %v3099
      %v4845 = vpop.permute.xlu0 %4844
      %4847 = vset.pattern.permute.xlu0 2
      %4848 = vperm.xlu0 %4847, %v3100
      %v4849 = vpop.permute.xlu0 %4848
      %4851 = vset.pattern.permute.xlu0 2
      %4852 = vperm.xlu0 %4851, %v3101
      %v4853 = vpop.permute.xlu0 %4852
      %4855 = vset.pattern.permute.xlu0 2
      %4856 = vperm.xlu0 %4855, %v3102
      %v4857 = vpop.permute.xlu0 %4856
      %4859 = vset.pattern.permute.xlu0 2
      %4860 = vperm.xlu0 %4859, %v3103
      %v4861 = vpop.permute.xlu0 %4860
      %4863 = vset.pattern.permute.xlu0 2
      %4864 = vperm.xlu0 %4863, %v3104
      %v4865 = vpop.permute.xlu0 %4864
      %4867 = vset.pattern.permute.xlu0 2
      %4868 = vperm.xlu0 %4867, %v3105
      %v4869 = vpop.permute.xlu0 %4868
      %4871 = vset.pattern.permute.xlu0 2
      %4872 = vperm.xlu0 %4871, %v3106
      %v4873 = vpop.permute.xlu0 %4872
      %4875 = vset.pattern.permute.xlu0 2
      %4876 = vperm.xlu0 %4875, %v3107
      %v4877 = vpop.permute.xlu0 %4876
      %4879 = vset.pattern.permute.xlu0 2
      %4880 = vperm.xlu0 %4879, %v3108
      %v4881 = vpop.permute.xlu0 %4880
      %4883 = vset.pattern.permute.xlu0 2
      %4884 = vperm.xlu0 %4883, %v3109
      %v4885 = vpop.permute.xlu0 %4884
      %4887 = vset.pattern.permute.xlu0 2
      %4888 = vperm.xlu0 %4887, %v3110
      %v4889 = vpop.permute.xlu0 %4888
      %4891 = vset.pattern.permute.xlu0 2
      %4892 = vperm.xlu0 %4891, %v3111
      %v4893 = vpop.permute.xlu0 %4892
      %4895 = vset.pattern.permute.xlu0 2
      %4896 = vperm.xlu0 %4895, %v3112
      %v4897 = vpop.permute.xlu0 %4896
      %4899 = vset.pattern.permute.xlu0 2
      %4900 = vperm.xlu0 %4899, %v3113
      %v4901 = vpop.permute.xlu0 %4900
      %4903 = vset.pattern.permute.xlu0 2
      %4904 = vperm.xlu0 %4903, %v3114
      %v4905 = vpop.permute.xlu0 %4904
      %4907 = vset.pattern.permute.xlu0 2
      %4908 = vperm.xlu0 %4907, %v3115
      %v4909 = vpop.permute.xlu0 %4908
      %4911 = vset.pattern.permute.xlu0 2
      %4912 = vperm.xlu0 %4911, %v3116
      %v4913 = vpop.permute.xlu0 %4912
      %4915 = vset.pattern.permute.xlu0 2
      %4916 = vperm.xlu0 %4915, %v3117
      %v4917 = vpop.permute.xlu0 %4916
      %4919 = vset.pattern.permute.xlu0 2
      %4920 = vperm.xlu0 %4919, %v3118
      %v4921 = vpop.permute.xlu0 %4920
      %4923 = vset.pattern.permute.xlu0 2
      %4924 = vperm.xlu0 %4923, %v3119
      %v4925 = vpop.permute.xlu0 %4924
      %4927 = vset.pattern.permute.xlu0 2
      %4928 = vperm.xlu0 %4927, %v3120
      %v4929 = vpop.permute.xlu0 %4928
      %4931 = vset.pattern.permute.xlu0 2
      %4932 = vperm.xlu0 %4931, %v3121
      %v4933 = vpop.permute.xlu0 %4932
      %4935 = vset.pattern.permute.xlu0 2
      %4936 = vperm.xlu0 %4935, %v3122
      %v4937 = vpop.permute.xlu0 %4936
      %4939 = vset.pattern.permute.xlu0 2
      %4940 = vperm.xlu0 %4939, %v3123
      %v4941 = vpop.permute.xlu0 %4940
      %4943 = vset.pattern.permute.xlu0 2
      %4944 = vperm.xlu0 %4943, %v3124
      %v4945 = vpop.permute.xlu0 %4944
      %4947 = vset.pattern.permute.xlu0 2
      %4948 = vperm.xlu0 %4947, %v3125
      %v4949 = vpop.permute.xlu0 %4948
      %4951 = vset.pattern.permute.xlu0 2
      %4952 = vperm.xlu0 %4951, %v3126
      %v4953 = vpop.permute.xlu0 %4952
      %4955 = vset.pattern.permute.xlu0 2
      %4956 = vperm.xlu0 %4955, %v3127
      %v4957 = vpop.permute.xlu0 %4956
      %4959 = vset.pattern.permute.xlu0 2
      %4960 = vperm.xlu0 %4959, %v3128
      %v4961 = vpop.permute.xlu0 %4960
      %4963 = vset.pattern.permute.xlu0 2
      %4964 = vperm.xlu0 %4963, %v3129
      %v4965 = vpop.permute.xlu0 %4964
      %4967 = vset.pattern.permute.xlu0 2
      %4968 = vperm.xlu0 %4967, %v3130
      %v4969 = vpop.permute.xlu0 %4968
      %4971 = vset.pattern.permute.xlu0 2
      %4972 = vperm.xlu0 %4971, %v3131
      %v4973 = vpop.permute.xlu0 %4972
      %4975 = vset.pattern.permute.xlu0 2
      %4976 = vperm.xlu0 %4975, %v3132
      %v4977 = vpop.permute.xlu0 %4976
      %4979 = vset.pattern.permute.xlu0 2
      %4980 = vperm.xlu0 %4979, %v3133
      %v4981 = vpop.permute.xlu0 %4980
      %4983 = vset.pattern.permute.xlu0 2
      %4984 = vperm.xlu0 %4983, %v3134
      %v4985 = vpop.permute.xlu0 %4984
      %4987 = vset.pattern.permute.xlu0 2
      %4988 = vperm.xlu0 %4987, %v3135
      %v4989 = vpop.permute.xlu0 %4988
      %4991 = vset.pattern.permute.xlu0 2
      %4992 = vperm.xlu0 %4991, %v3136
      %v4993 = vpop.permute.xlu0 %4992
      %4995 = vset.pattern.permute.xlu0 2
      %4996 = vperm.xlu0 %4995, %v3137
      %v4997 = vpop.permute.xlu0 %4996
      %4999 = vset.pattern.permute.xlu0 2
      %5000 = vperm.xlu0 %4999, %v3138
      %v5001 = vpop.permute.xlu0 %5000
      %5003 = vset.pattern.permute.xlu0 2
      %5004 = vperm.xlu0 %5003, %v3139
      %v5005 = vpop.permute.xlu0 %5004
      %5007 = vset.pattern.permute.xlu0 2
      %5008 = vperm.xlu0 %5007, %v3140
      %v5009 = vpop.permute.xlu0 %5008
      %5011 = vset.pattern.permute.xlu0 2
      %5012 = vperm.xlu0 %5011, %v3141
      %v5013 = vpop.permute.xlu0 %5012
      %5015 = vset.pattern.permute.xlu0 2
      %5016 = vperm.xlu0 %5015, %v3142
      %v5017 = vpop.permute.xlu0 %5016
      %5019 = vset.pattern.permute.xlu0 2
      %5020 = vperm.xlu0 %5019, %v3143
      %v5021 = vpop.permute.xlu0 %5020
      %5023 = vset.pattern.permute.xlu0 2
      %5024 = vperm.xlu0 %5023, %v3144
      %v5025 = vpop.permute.xlu0 %5024
      %5027 = vset.pattern.permute.xlu0 2
      %5028 = vperm.xlu0 %5027, %v3145
      %v5029 = vpop.permute.xlu0 %5028
      %5031 = vset.pattern.permute.xlu0 2
      %5032 = vperm.xlu0 %5031, %v3146
      %v5033 = vpop.permute.xlu0 %5032
      %5035 = vset.pattern.permute.xlu0 2
      %5036 = vperm.xlu0 %5035, %v3147
      %v5037 = vpop.permute.xlu0 %5036
      %5039 = vset.pattern.permute.xlu0 2
      %5040 = vperm.xlu0 %5039, %v3148
      %v5041 = vpop.permute.xlu0 %5040
      %5043 = vset.pattern.permute.xlu0 2
      %5044 = vperm.xlu0 %5043, %v3149
      %v5045 = vpop.permute.xlu0 %5044
      %5047 = vset.pattern.permute.xlu0 2
      %5048 = vperm.xlu0 %5047, %v3150
      %v5049 = vpop.permute.xlu0 %5048
      %5051 = vset.pattern.permute.xlu0 2
      %5052 = vperm.xlu0 %5051, %v3151
      %v5053 = vpop.permute.xlu0 %5052
      %5055 = vset.pattern.permute.xlu0 2
      %5056 = vperm.xlu0 %5055, %v3152
      %v5057 = vpop.permute.xlu0 %5056
      %5059 = vset.pattern.permute.xlu0 2
      %5060 = vperm.xlu0 %5059, %v3153
      %v5061 = vpop.permute.xlu0 %5060
      %5063 = vset.pattern.permute.xlu0 2
      %5064 = vperm.xlu0 %5063, %v3154
      %v5065 = vpop.permute.xlu0 %5064
      %5067 = vset.pattern.permute.xlu0 2
      %5068 = vperm.xlu0 %5067, %v3155
      %v5069 = vpop.permute.xlu0 %5068
      %5071 = vset.pattern.permute.xlu0 2
      %5072 = vperm.xlu0 %5071, %v3156
      %v5073 = vpop.permute.xlu0 %5072
      %5075 = vset.pattern.permute.xlu0 2
      %5076 = vperm.xlu0 %5075, %v3157
      %v5077 = vpop.permute.xlu0 %5076
      %5079 = vset.pattern.permute.xlu0 2
      %5080 = vperm.xlu0 %5079, %v3158
      %v5081 = vpop.permute.xlu0 %5080
      %5083 = vset.pattern.permute.xlu0 2
      %5084 = vperm.xlu0 %5083, %v3159
      %v5085 = vpop.permute.xlu0 %5084
      %5087 = vset.pattern.permute.xlu0 2
      %5088 = vperm.xlu0 %5087, %v3160
      %v5089 = vpop.permute.xlu0 %5088
      %5091 = vset.pattern.permute.xlu0 2
      %5092 = vperm.xlu0 %5091, %v3161
      %v5093 = vpop.permute.xlu0 %5092
      %5095 = vset.pattern.permute.xlu0 2
      %5096 = vperm.xlu0 %5095, %v3162
      %v5097 = vpop.permute.xlu0 %5096
      %5099 = vset.pattern.permute.xlu0 2
      %5100 = vperm.xlu0 %5099, %v3163
      %v5101 = vpop.permute.xlu0 %5100
      %5103 = vset.pattern.permute.xlu0 2
      %5104 = vperm.xlu0 %5103, %v3164
      %v5105 = vpop.permute.xlu0 %5104
      %5107 = vset.pattern.permute.xlu0 2
      %5108 = vperm.xlu0 %5107, %v3165
      %v5109 = vpop.permute.xlu0 %5108
      %5111 = vset.pattern.permute.xlu0 2
      %5112 = vperm.xlu0 %5111, %v3166
      %v5113 = vpop.permute.xlu0 %5112
      %5115 = vset.pattern.permute.xlu0 2
      %5116 = vperm.xlu0 %5115, %v3167
      %v5117 = vpop.permute.xlu0 %5116
      %5119 = vset.pattern.permute.xlu0 2
      %5120 = vperm.xlu0 %5119, %v3168
      %v5121 = vpop.permute.xlu0 %5120
      %5123 = vset.pattern.permute.xlu0 2
      %5124 = vperm.xlu0 %5123, %v3169
      %v5125 = vpop.permute.xlu0 %5124
      %5127 = vset.pattern.permute.xlu0 2
      %5128 = vperm.xlu0 %5127, %v3170
      %v5129 = vpop.permute.xlu0 %5128
      %5131 = vset.pattern.permute.xlu0 2
      %5132 = vperm.xlu0 %5131, %v3171
      %v5133 = vpop.permute.xlu0 %5132
      %5135 = vset.pattern.permute.xlu0 2
      %5136 = vperm.xlu0 %5135, %v3172
      %v5137 = vpop.permute.xlu0 %5136
      %5139 = vset.pattern.permute.xlu0 2
      %5140 = vperm.xlu0 %5139, %v3173
      %v5141 = vpop.permute.xlu0 %5140
      %5143 = vset.pattern.permute.xlu0 2
      %5144 = vperm.xlu0 %5143, %v3174
      %v5145 = vpop.permute.xlu0 %5144
      %5147 = vset.pattern.permute.xlu0 2
      %5148 = vperm.xlu0 %5147, %v3175
      %v5149 = vpop.permute.xlu0 %5148
      %5151 = vset.pattern.permute.xlu0 2
      %5152 = vperm.xlu0 %5151, %v3176
      %v5153 = vpop.permute.xlu0 %5152
      %5155 = vset.pattern.permute.xlu0 2
      %5156 = vperm.xlu0 %5155, %v3177
      %v5157 = vpop.permute.xlu0 %5156
      %5159 = vset.pattern.permute.xlu0 2
      %5160 = vperm.xlu0 %5159, %v3178
      %v5161 = vpop.permute.xlu0 %5160
      %5163 = vset.pattern.permute.xlu0 2
      %5164 = vperm.xlu0 %5163, %v3179
      %v5165 = vpop.permute.xlu0 %5164
      %5167 = vset.pattern.permute.xlu0 2
      %5168 = vperm.xlu0 %5167, %v3180
      %v5169 = vpop.permute.xlu0 %5168
      %5171 = vset.pattern.permute.xlu0 2
      %5172 = vperm.xlu0 %5171, %v3181
      %v5173 = vpop.permute.xlu0 %5172
      %5175 = vset.pattern.permute.xlu0 2
      %5176 = vperm.xlu0 %5175, %v3182
      %v5177 = vpop.permute.xlu0 %5176
      %5179 = vset.pattern.permute.xlu0 2
      %5180 = vperm.xlu0 %5179, %v3183
      %v5181 = vpop.permute.xlu0 %5180
      %5183 = vset.pattern.permute.xlu0 2
      %5184 = vperm.xlu0 %5183, %v3184
      %v5185 = vpop.permute.xlu0 %5184
      %5187 = vset.pattern.permute.xlu0 2
      %5188 = vperm.xlu0 %5187, %v3185
      %v5189 = vpop.permute.xlu0 %5188
      %5191 = vset.pattern.permute.xlu0 2
      %5192 = vperm.xlu0 %5191, %v3186
      %v5193 = vpop.permute.xlu0 %5192
      %5195 = vset.pattern.permute.xlu0 2
      %5196 = vperm.xlu0 %5195, %v3187
      %v5197 = vpop.permute.xlu0 %5196
      %5199 = vset.pattern.permute.xlu0 2
      %5200 = vperm.xlu0 %5199, %v3188
      %v5201 = vpop.permute.xlu0 %5200
      %5203 = vset.pattern.permute.xlu0 2
      %5204 = vperm.xlu0 %5203, %v3189
      %v5205 = vpop.permute.xlu0 %5204
      %5207 = vset.pattern.permute.xlu0 2
      %5208 = vperm.xlu0 %5207, %v3190
      %v5209 = vpop.permute.xlu0 %5208
      %5211 = vset.pattern.permute.xlu0 2
      %5212 = vperm.xlu0 %5211, %v3191
      %v5213 = vpop.permute.xlu0 %5212
      %5215 = vset.pattern.permute.xlu0 2
      %5216 = vperm.xlu0 %5215, %v3192
      %v5217 = vpop.permute.xlu0 %5216
      %5219 = vset.pattern.permute.xlu0 2
      %5220 = vperm.xlu0 %5219, %v3193
      %v5221 = vpop.permute.xlu0 %5220
      %5223 = vset.pattern.permute.xlu0 2
      %5224 = vperm.xlu0 %5223, %v3194
      %v5225 = vpop.permute.xlu0 %5224
      %5227 = vset.pattern.permute.xlu0 2
      %5228 = vperm.xlu0 %5227, %v3195
      %v5229 = vpop.permute.xlu0 %5228
      %5231 = vset.pattern.permute.xlu0 2
      %5232 = vperm.xlu0 %5231, %v3196
      %v5233 = vpop.permute.xlu0 %5232
      %5235 = vset.pattern.permute.xlu0 2
      %5236 = vperm.xlu0 %5235, %v3197
      %v5237 = vpop.permute.xlu0 %5236
      %5239 = vset.pattern.permute.xlu0 2
      %5240 = vperm.xlu0 %5239, %v3198
      %v5241 = vpop.permute.xlu0 %5240
      %5243 = vset.pattern.permute.xlu0 2
      %5244 = vperm.xlu0 %5243, %v3199
      %v5245 = vpop.permute.xlu0 %5244
      %5247 = vset.pattern.permute.xlu0 2
      %5248 = vperm.xlu0 %5247, %v3200
      %v5249 = vpop.permute.xlu0 %5248
      %5251 = vset.pattern.permute.xlu0 2
      %5252 = vperm.xlu0 %5251, %v3201
      %v5253 = vpop.permute.xlu0 %5252
      %5255 = vset.pattern.permute.xlu0 2
      %5256 = vperm.xlu0 %5255, %v3202
      %v5257 = vpop.permute.xlu0 %5256
      %v5259 = vlaneseq
      %v5260 = vshrl.u32 %v5259, 7
      %v5261 = vsub.s32 2, %v5260
      %v5262 = vrot.slane %v623, %v5261
      %v5263 = vmul.f32 %v4749, %v5262
      %v5264 = vmul.f32 %v4753, %v5262
      %v5265 = vmul.f32 %v4757, %v5262
      %v5266 = vmul.f32 %v4761, %v5262
      %v5267 = vmul.f32 %v4765, %v5262
      %v5268 = vmul.f32 %v4769, %v5262
      %v5269 = vmul.f32 %v4773, %v5262
      %v5270 = vmul.f32 %v4777, %v5262
      %v5271 = vmul.f32 %v4781, %v5262
      %v5272 = vmul.f32 %v4785, %v5262
      %v5273 = vmul.f32 %v4789, %v5262
      %v5274 = vmul.f32 %v4793, %v5262
      %v5275 = vmul.f32 %v4797, %v5262
      %v5276 = vmul.f32 %v4801, %v5262
      %v5277 = vmul.f32 %v4805, %v5262
      %v5278 = vmul.f32 %v4809, %v5262
      %v5279 = vmul.f32 %v4813, %v5262
      %v5280 = vmul.f32 %v4817, %v5262
      %v5281 = vmul.f32 %v4821, %v5262
      %v5282 = vmul.f32 %v4825, %v5262
      %v5283 = vmul.f32 %v4829, %v5262
      %v5284 = vmul.f32 %v4833, %v5262
      %v5285 = vmul.f32 %v4837, %v5262
      %v5286 = vmul.f32 %v4841, %v5262
      %v5287 = vmul.f32 %v4845, %v5262
      %v5288 = vmul.f32 %v4849, %v5262
      %v5289 = vmul.f32 %v4853, %v5262
      %v5290 = vmul.f32 %v4857, %v5262
      %v5291 = vmul.f32 %v4861, %v5262
      %v5292 = vmul.f32 %v4865, %v5262
      %v5293 = vmul.f32 %v4869, %v5262
      %v5294 = vmul.f32 %v4873, %v5262
      %v5295 = vmul.f32 %v4877, %v5262
      %v5296 = vmul.f32 %v4881, %v5262
      %v5297 = vmul.f32 %v4885, %v5262
      %v5298 = vmul.f32 %v4889, %v5262
      %v5299 = vmul.f32 %v4893, %v5262
      %v5300 = vmul.f32 %v4897, %v5262
      %v5301 = vmul.f32 %v4901, %v5262
      %v5302 = vmul.f32 %v4905, %v5262
      %v5303 = vmul.f32 %v4909, %v5262
      %v5304 = vmul.f32 %v4913, %v5262
      %v5305 = vmul.f32 %v4917, %v5262
      %v5306 = vmul.f32 %v4921, %v5262
      %v5307 = vmul.f32 %v4925, %v5262
      %v5308 = vmul.f32 %v4929, %v5262
      %v5309 = vmul.f32 %v4933, %v5262
      %v5310 = vmul.f32 %v4937, %v5262
      %v5311 = vmul.f32 %v4941, %v5262
      %v5312 = vmul.f32 %v4945, %v5262
      %v5313 = vmul.f32 %v4949, %v5262
      %v5314 = vmul.f32 %v4953, %v5262
      %v5315 = vmul.f32 %v4957, %v5262
      %v5316 = vmul.f32 %v4961, %v5262
      %v5317 = vmul.f32 %v4965, %v5262
      %v5318 = vmul.f32 %v4969, %v5262
      %v5319 = vmul.f32 %v4973, %v5262
      %v5320 = vmul.f32 %v4977, %v5262
      %v5321 = vmul.f32 %v4981, %v5262
      %v5322 = vmul.f32 %v4985, %v5262
      %v5323 = vmul.f32 %v4989, %v5262
      %v5324 = vmul.f32 %v4993, %v5262
      %v5325 = vmul.f32 %v4997, %v5262
      %v5326 = vmul.f32 %v5001, %v5262
      %v5327 = vmul.f32 %v5005, %v5262
      %v5328 = vmul.f32 %v5009, %v5262
      %v5329 = vmul.f32 %v5013, %v5262
      %v5330 = vmul.f32 %v5017, %v5262
      %v5331 = vmul.f32 %v5021, %v5262
      %v5332 = vmul.f32 %v5025, %v5262
      %v5333 = vmul.f32 %v5029, %v5262
      %v5334 = vmul.f32 %v5033, %v5262
      %v5335 = vmul.f32 %v5037, %v5262
      %v5336 = vmul.f32 %v5041, %v5262
      %v5337 = vmul.f32 %v5045, %v5262
      %v5338 = vmul.f32 %v5049, %v5262
      %v5339 = vmul.f32 %v5053, %v5262
      %v5340 = vmul.f32 %v5057, %v5262
      %v5341 = vmul.f32 %v5061, %v5262
      %v5342 = vmul.f32 %v5065, %v5262
      %v5343 = vmul.f32 %v5069, %v5262
      %v5344 = vmul.f32 %v5073, %v5262
      %v5345 = vmul.f32 %v5077, %v5262
      %v5346 = vmul.f32 %v5081, %v5262
      %v5347 = vmul.f32 %v5085, %v5262
      %v5348 = vmul.f32 %v5089, %v5262
      %v5349 = vmul.f32 %v5093, %v5262
      %v5350 = vmul.f32 %v5097, %v5262
      %v5351 = vmul.f32 %v5101, %v5262
      %v5352 = vmul.f32 %v5105, %v5262
      %v5353 = vmul.f32 %v5109, %v5262
      %v5354 = vmul.f32 %v5113, %v5262
      %v5355 = vmul.f32 %v5117, %v5262
      %v5356 = vmul.f32 %v5121, %v5262
      %v5357 = vmul.f32 %v5125, %v5262
      %v5358 = vmul.f32 %v5129, %v5262
      %v5359 = vmul.f32 %v5133, %v5262
      %v5360 = vmul.f32 %v5137, %v5262
      %v5361 = vmul.f32 %v5141, %v5262
      %v5362 = vmul.f32 %v5145, %v5262
      %v5363 = vmul.f32 %v5149, %v5262
      %v5364 = vmul.f32 %v5153, %v5262
      %v5365 = vmul.f32 %v5157, %v5262
      %v5366 = vmul.f32 %v5161, %v5262
      %v5367 = vmul.f32 %v5165, %v5262
      %v5368 = vmul.f32 %v5169, %v5262
      %v5369 = vmul.f32 %v5173, %v5262
      %v5370 = vmul.f32 %v5177, %v5262
      %v5371 = vmul.f32 %v5181, %v5262
      %v5372 = vmul.f32 %v5185, %v5262
      %v5373 = vmul.f32 %v5189, %v5262
      %v5374 = vmul.f32 %v5193, %v5262
      %v5375 = vmul.f32 %v5197, %v5262
      %v5376 = vmul.f32 %v5201, %v5262
      %v5377 = vmul.f32 %v5205, %v5262
      %v5378 = vmul.f32 %v5209, %v5262
      %v5379 = vmul.f32 %v5213, %v5262
      %v5380 = vmul.f32 %v5217, %v5262
      %v5381 = vmul.f32 %v5221, %v5262
      %v5382 = vmul.f32 %v5225, %v5262
      %v5383 = vmul.f32 %v5229, %v5262
      %v5384 = vmul.f32 %v5233, %v5262
      %v5385 = vmul.f32 %v5237, %v5262
      %v5386 = vmul.f32 %v5241, %v5262
      %v5387 = vmul.f32 %v5245, %v5262
      %v5388 = vmul.f32 %v5249, %v5262
      %v5389 = vmul.f32 %v5253, %v5262
      %v5390 = vmul.f32 %v5257, %v5262
      %v5391 = vadd.f32 %v4619, %v5263
      %v5392 = vadd.f32 %v4620, %v5264
      %v5393 = vadd.f32 %v4621, %v5265
      %v5394 = vadd.f32 %v4622, %v5266
      %v5395 = vadd.f32 %v4623, %v5267
      %v5396 = vadd.f32 %v4624, %v5268
      %v5397 = vadd.f32 %v4625, %v5269
      %v5398 = vadd.f32 %v4626, %v5270
      %v5399 = vadd.f32 %v4627, %v5271
      %v5400 = vadd.f32 %v4628, %v5272
      %v5401 = vadd.f32 %v4629, %v5273
      %v5402 = vadd.f32 %v4630, %v5274
      %v5403 = vadd.f32 %v4631, %v5275
      %v5404 = vadd.f32 %v4632, %v5276
      %v5405 = vadd.f32 %v4633, %v5277
      %v5406 = vadd.f32 %v4634, %v5278
      %v5407 = vadd.f32 %v4635, %v5279
      %v5408 = vadd.f32 %v4636, %v5280
      %v5409 = vadd.f32 %v4637, %v5281
      %v5410 = vadd.f32 %v4638, %v5282
      %v5411 = vadd.f32 %v4639, %v5283
      %v5412 = vadd.f32 %v4640, %v5284
      %v5413 = vadd.f32 %v4641, %v5285
      %v5414 = vadd.f32 %v4642, %v5286
      %v5415 = vadd.f32 %v4643, %v5287
      %v5416 = vadd.f32 %v4644, %v5288
      %v5417 = vadd.f32 %v4645, %v5289
      %v5418 = vadd.f32 %v4646, %v5290
      %v5419 = vadd.f32 %v4647, %v5291
      %v5420 = vadd.f32 %v4648, %v5292
      %v5421 = vadd.f32 %v4649, %v5293
      %v5422 = vadd.f32 %v4650, %v5294
      %v5423 = vadd.f32 %v4651, %v5295
      %v5424 = vadd.f32 %v4652, %v5296
      %v5425 = vadd.f32 %v4653, %v5297
      %v5426 = vadd.f32 %v4654, %v5298
      %v5427 = vadd.f32 %v4655, %v5299
      %v5428 = vadd.f32 %v4656, %v5300
      %v5429 = vadd.f32 %v4657, %v5301
      %v5430 = vadd.f32 %v4658, %v5302
      %v5431 = vadd.f32 %v4659, %v5303
      %v5432 = vadd.f32 %v4660, %v5304
      %v5433 = vadd.f32 %v4661, %v5305
      %v5434 = vadd.f32 %v4662, %v5306
      %v5435 = vadd.f32 %v4663, %v5307
      %v5436 = vadd.f32 %v4664, %v5308
      %v5437 = vadd.f32 %v4665, %v5309
      %v5438 = vadd.f32 %v4666, %v5310
      %v5439 = vadd.f32 %v4667, %v5311
      %v5440 = vadd.f32 %v4668, %v5312
      %v5441 = vadd.f32 %v4669, %v5313
      %v5442 = vadd.f32 %v4670, %v5314
      %v5443 = vadd.f32 %v4671, %v5315
      %v5444 = vadd.f32 %v4672, %v5316
      %v5445 = vadd.f32 %v4673, %v5317
      %v5446 = vadd.f32 %v4674, %v5318
      %v5447 = vadd.f32 %v4675, %v5319
      %v5448 = vadd.f32 %v4676, %v5320
      %v5449 = vadd.f32 %v4677, %v5321
      %v5450 = vadd.f32 %v4678, %v5322
      %v5451 = vadd.f32 %v4679, %v5323
      %v5452 = vadd.f32 %v4680, %v5324
      %v5453 = vadd.f32 %v4681, %v5325
      %v5454 = vadd.f32 %v4682, %v5326
      %v5455 = vadd.f32 %v4683, %v5327
      %v5456 = vadd.f32 %v4684, %v5328
      %v5457 = vadd.f32 %v4685, %v5329
      %v5458 = vadd.f32 %v4686, %v5330
      %v5459 = vadd.f32 %v4687, %v5331
      %v5460 = vadd.f32 %v4688, %v5332
      %v5461 = vadd.f32 %v4689, %v5333
      %v5462 = vadd.f32 %v4690, %v5334
      %v5463 = vadd.f32 %v4691, %v5335
      %v5464 = vadd.f32 %v4692, %v5336
      %v5465 = vadd.f32 %v4693, %v5337
      %v5466 = vadd.f32 %v4694, %v5338
      %v5467 = vadd.f32 %v4695, %v5339
      %v5468 = vadd.f32 %v4696, %v5340
      %v5469 = vadd.f32 %v4697, %v5341
      %v5470 = vadd.f32 %v4698, %v5342
      %v5471 = vadd.f32 %v4699, %v5343
      %v5472 = vadd.f32 %v4700, %v5344
      %v5473 = vadd.f32 %v4701, %v5345
      %v5474 = vadd.f32 %v4702, %v5346
      %v5475 = vadd.f32 %v4703, %v5347
      %v5476 = vadd.f32 %v4704, %v5348
      %v5477 = vadd.f32 %v4705, %v5349
      %v5478 = vadd.f32 %v4706, %v5350
      %v5479 = vadd.f32 %v4707, %v5351
      %v5480 = vadd.f32 %v4708, %v5352
      %v5481 = vadd.f32 %v4709, %v5353
      %v5482 = vadd.f32 %v4710, %v5354
      %v5483 = vadd.f32 %v4711, %v5355
      %v5484 = vadd.f32 %v4712, %v5356
      %v5485 = vadd.f32 %v4713, %v5357
      %v5486 = vadd.f32 %v4714, %v5358
      %v5487 = vadd.f32 %v4715, %v5359
      %v5488 = vadd.f32 %v4716, %v5360
      %v5489 = vadd.f32 %v4717, %v5361
      %v5490 = vadd.f32 %v4718, %v5362
      %v5491 = vadd.f32 %v4719, %v5363
      %v5492 = vadd.f32 %v4720, %v5364
      %v5493 = vadd.f32 %v4721, %v5365
      %v5494 = vadd.f32 %v4722, %v5366
      %v5495 = vadd.f32 %v4723, %v5367
      %v5496 = vadd.f32 %v4724, %v5368
      %v5497 = vadd.f32 %v4725, %v5369
      %v5498 = vadd.f32 %v4726, %v5370
      %v5499 = vadd.f32 %v4727, %v5371
      %v5500 = vadd.f32 %v4728, %v5372
      %v5501 = vadd.f32 %v4729, %v5373
      %v5502 = vadd.f32 %v4730, %v5374
      %v5503 = vadd.f32 %v4731, %v5375
      %v5504 = vadd.f32 %v4732, %v5376
      %v5505 = vadd.f32 %v4733, %v5377
      %v5506 = vadd.f32 %v4734, %v5378
      %v5507 = vadd.f32 %v4735, %v5379
      %v5508 = vadd.f32 %v4736, %v5380
      %v5509 = vadd.f32 %v4737, %v5381
      %v5510 = vadd.f32 %v4738, %v5382
      %v5511 = vadd.f32 %v4739, %v5383
      %v5512 = vadd.f32 %v4740, %v5384
      %v5513 = vadd.f32 %v4741, %v5385
      %v5514 = vadd.f32 %v4742, %v5386
      %v5515 = vadd.f32 %v4743, %v5387
      %v5516 = vadd.f32 %v4744, %v5388
      %v5517 = vadd.f32 %v4745, %v5389
      %v5518 = vadd.f32 %v4746, %v5390
      %v5519 = vlaneseq
      %v5520 = vshrl.u32 %v5519, 7
      %v5521 = vsub.s32 3, %v5520
      %v5522 = vrot.slane %v623, %v5521
      %v5523 = vmul.f32 %v627, %v5522
      %v5524 = vmul.f32 %v632, %v5522
      %v5525 = vmul.f32 %v637, %v5522
      %v5526 = vmul.f32 %v642, %v5522
      %v5527 = vmul.f32 %v647, %v5522
      %v5528 = vmul.f32 %v652, %v5522
      %v5529 = vmul.f32 %v657, %v5522
      %v5530 = vmul.f32 %v662, %v5522
      %v5531 = vmul.f32 %v667, %v5522
      %v5532 = vmul.f32 %v672, %v5522
      %v5533 = vmul.f32 %v677, %v5522
      %v5534 = vmul.f32 %v682, %v5522
      %v5535 = vmul.f32 %v687, %v5522
      %v5536 = vmul.f32 %v692, %v5522
      %v5537 = vmul.f32 %v697, %v5522
      %v5538 = vmul.f32 %v702, %v5522
      %v5539 = vmul.f32 %v707, %v5522
      %v5540 = vmul.f32 %v712, %v5522
      %v5541 = vmul.f32 %v717, %v5522
      %v5542 = vmul.f32 %v722, %v5522
      %v5543 = vmul.f32 %v727, %v5522
      %v5544 = vmul.f32 %v732, %v5522
      %v5545 = vmul.f32 %v737, %v5522
      %v5546 = vmul.f32 %v742, %v5522
      %v5547 = vmul.f32 %v747, %v5522
      %v5548 = vmul.f32 %v752, %v5522
      %v5549 = vmul.f32 %v757, %v5522
      %v5550 = vmul.f32 %v762, %v5522
      %v5551 = vmul.f32 %v767, %v5522
      %v5552 = vmul.f32 %v772, %v5522
      %v5553 = vmul.f32 %v777, %v5522
      %v5554 = vmul.f32 %v782, %v5522
      %v5555 = vmul.f32 %v787, %v5522
      %v5556 = vmul.f32 %v792, %v5522
      %v5557 = vmul.f32 %v797, %v5522
      %v5558 = vmul.f32 %v802, %v5522
      %v5559 = vmul.f32 %v807, %v5522
      %v5560 = vmul.f32 %v812, %v5522
      %v5561 = vmul.f32 %v817, %v5522
      %v5562 = vmul.f32 %v822, %v5522
      %v5563 = vmul.f32 %v827, %v5522
      %v5564 = vmul.f32 %v832, %v5522
      %v5565 = vmul.f32 %v837, %v5522
      %v5566 = vmul.f32 %v842, %v5522
      %v5567 = vmul.f32 %v847, %v5522
      %v5568 = vmul.f32 %v852, %v5522
      %v5569 = vmul.f32 %v857, %v5522
      %v5570 = vmul.f32 %v862, %v5522
      %v5571 = vmul.f32 %v867, %v5522
      %v5572 = vmul.f32 %v872, %v5522
      %v5573 = vmul.f32 %v877, %v5522
      %v5574 = vmul.f32 %v882, %v5522
      %v5575 = vmul.f32 %v887, %v5522
      %v5576 = vmul.f32 %v892, %v5522
      %v5577 = vmul.f32 %v897, %v5522
      %v5578 = vmul.f32 %v902, %v5522
      %v5579 = vmul.f32 %v907, %v5522
      %v5580 = vmul.f32 %v912, %v5522
      %v5581 = vmul.f32 %v917, %v5522
      %v5582 = vmul.f32 %v922, %v5522
      %v5583 = vmul.f32 %v927, %v5522
      %v5584 = vmul.f32 %v932, %v5522
      %v5585 = vmul.f32 %v937, %v5522
      %v5586 = vmul.f32 %v942, %v5522
      %v5587 = vmul.f32 %v947, %v5522
      %v5588 = vmul.f32 %v952, %v5522
      %v5589 = vmul.f32 %v957, %v5522
      %v5590 = vmul.f32 %v962, %v5522
      %v5591 = vmul.f32 %v967, %v5522
      %v5592 = vmul.f32 %v972, %v5522
      %v5593 = vmul.f32 %v977, %v5522
      %v5594 = vmul.f32 %v982, %v5522
      %v5595 = vmul.f32 %v987, %v5522
      %v5596 = vmul.f32 %v992, %v5522
      %v5597 = vmul.f32 %v997, %v5522
      %v5598 = vmul.f32 %v1002, %v5522
      %v5599 = vmul.f32 %v1007, %v5522
      %v5600 = vmul.f32 %v1012, %v5522
      %v5601 = vmul.f32 %v1017, %v5522
      %v5602 = vmul.f32 %v1022, %v5522
      %v5603 = vmul.f32 %v1027, %v5522
      %v5604 = vmul.f32 %v1032, %v5522
      %v5605 = vmul.f32 %v1037, %v5522
      %v5606 = vmul.f32 %v1042, %v5522
      %v5607 = vmul.f32 %v1047, %v5522
      %v5608 = vmul.f32 %v1052, %v5522
      %v5609 = vmul.f32 %v1057, %v5522
      %v5610 = vmul.f32 %v1062, %v5522
      %v5611 = vmul.f32 %v1067, %v5522
      %v5612 = vmul.f32 %v1072, %v5522
      %v5613 = vmul.f32 %v1077, %v5522
      %v5614 = vmul.f32 %v1082, %v5522
      %v5615 = vmul.f32 %v1087, %v5522
      %v5616 = vmul.f32 %v1092, %v5522
      %v5617 = vmul.f32 %v1097, %v5522
      %v5618 = vmul.f32 %v1102, %v5522
      %v5619 = vmul.f32 %v1107, %v5522
      %v5620 = vmul.f32 %v1112, %v5522
      %v5621 = vmul.f32 %v1117, %v5522
      %v5622 = vmul.f32 %v1122, %v5522
      %v5623 = vmul.f32 %v1127, %v5522
      %v5624 = vmul.f32 %v1132, %v5522
      %v5625 = vmul.f32 %v1137, %v5522
      %v5626 = vmul.f32 %v1142, %v5522
      %v5627 = vmul.f32 %v1147, %v5522
      %v5628 = vmul.f32 %v1152, %v5522
      %v5629 = vmul.f32 %v1157, %v5522
      %v5630 = vmul.f32 %v1162, %v5522
      %v5631 = vmul.f32 %v1167, %v5522
      %v5632 = vmul.f32 %v1172, %v5522
      %v5633 = vmul.f32 %v1177, %v5522
      %v5634 = vmul.f32 %v1182, %v5522
      %v5635 = vmul.f32 %v1187, %v5522
      %v5636 = vmul.f32 %v1192, %v5522
      %v5637 = vmul.f32 %v1197, %v5522
      %v5638 = vmul.f32 %v1202, %v5522
      %v5639 = vmul.f32 %v1207, %v5522
      %v5640 = vmul.f32 %v1212, %v5522
      %v5641 = vmul.f32 %v1217, %v5522
      %v5642 = vmul.f32 %v1222, %v5522
      %v5643 = vmul.f32 %v1227, %v5522
      %v5644 = vmul.f32 %v1232, %v5522
      %v5645 = vmul.f32 %v1237, %v5522
      %v5646 = vmul.f32 %v1242, %v5522
      %v5647 = vmul.f32 %v1247, %v5522
      %v5648 = vmul.f32 %v1252, %v5522
      %v5649 = vmul.f32 %v1257, %v5522
      %v5650 = vmul.f32 %v1262, %v5522
      %v5651 = vadd.f32 %v5391, %v5523
      %v5652 = vadd.f32 %v5392, %v5524
      %v5653 = vadd.f32 %v5393, %v5525
      %v5654 = vadd.f32 %v5394, %v5526
      %v5655 = vadd.f32 %v5395, %v5527
      %v5656 = vadd.f32 %v5396, %v5528
      %v5657 = vadd.f32 %v5397, %v5529
      %v5658 = vadd.f32 %v5398, %v5530
      %v5659 = vadd.f32 %v5399, %v5531
      %v5660 = vadd.f32 %v5400, %v5532
      %v5661 = vadd.f32 %v5401, %v5533
      %v5662 = vadd.f32 %v5402, %v5534
      %v5663 = vadd.f32 %v5403, %v5535
      %v5664 = vadd.f32 %v5404, %v5536
      %v5665 = vadd.f32 %v5405, %v5537
      %v5666 = vadd.f32 %v5406, %v5538
      %v5667 = vadd.f32 %v5407, %v5539
      %v5668 = vadd.f32 %v5408, %v5540
      %v5669 = vadd.f32 %v5409, %v5541
      %v5670 = vadd.f32 %v5410, %v5542
      %v5671 = vadd.f32 %v5411, %v5543
      %v5672 = vadd.f32 %v5412, %v5544
      %v5673 = vadd.f32 %v5413, %v5545
      %v5674 = vadd.f32 %v5414, %v5546
      %v5675 = vadd.f32 %v5415, %v5547
      %v5676 = vadd.f32 %v5416, %v5548
      %v5677 = vadd.f32 %v5417, %v5549
      %v5678 = vadd.f32 %v5418, %v5550
      %v5679 = vadd.f32 %v5419, %v5551
      %v5680 = vadd.f32 %v5420, %v5552
      %v5681 = vadd.f32 %v5421, %v5553
      %v5682 = vadd.f32 %v5422, %v5554
      %v5683 = vadd.f32 %v5423, %v5555
      %v5684 = vadd.f32 %v5424, %v5556
      %v5685 = vadd.f32 %v5425, %v5557
      %v5686 = vadd.f32 %v5426, %v5558
      %v5687 = vadd.f32 %v5427, %v5559
      %v5688 = vadd.f32 %v5428, %v5560
      %v5689 = vadd.f32 %v5429, %v5561
      %v5690 = vadd.f32 %v5430, %v5562
      %v5691 = vadd.f32 %v5431, %v5563
      %v5692 = vadd.f32 %v5432, %v5564
      %v5693 = vadd.f32 %v5433, %v5565
      %v5694 = vadd.f32 %v5434, %v5566
      %v5695 = vadd.f32 %v5435, %v5567
      %v5696 = vadd.f32 %v5436, %v5568
      %v5697 = vadd.f32 %v5437, %v5569
      %v5698 = vadd.f32 %v5438, %v5570
      %v5699 = vadd.f32 %v5439, %v5571
      %v5700 = vadd.f32 %v5440, %v5572
      %v5701 = vadd.f32 %v5441, %v5573
      %v5702 = vadd.f32 %v5442, %v5574
      %v5703 = vadd.f32 %v5443, %v5575
      %v5704 = vadd.f32 %v5444, %v5576
      %v5705 = vadd.f32 %v5445, %v5577
      %v5706 = vadd.f32 %v5446, %v5578
      %v5707 = vadd.f32 %v5447, %v5579
      %v5708 = vadd.f32 %v5448, %v5580
      %v5709 = vadd.f32 %v5449, %v5581
      %v5710 = vadd.f32 %v5450, %v5582
      %v5711 = vadd.f32 %v5451, %v5583
      %v5712 = vadd.f32 %v5452, %v5584
      %v5713 = vadd.f32 %v5453, %v5585
      %v5714 = vadd.f32 %v5454, %v5586
      %v5715 = vadd.f32 %v5455, %v5587
      %v5716 = vadd.f32 %v5456, %v5588
      %v5717 = vadd.f32 %v5457, %v5589
      %v5718 = vadd.f32 %v5458, %v5590
      %v5719 = vadd.f32 %v5459, %v5591
      %v5720 = vadd.f32 %v5460, %v5592
      %v5721 = vadd.f32 %v5461, %v5593
      %v5722 = vadd.f32 %v5462, %v5594
      %v5723 = vadd.f32 %v5463, %v5595
      %v5724 = vadd.f32 %v5464, %v5596
      %v5725 = vadd.f32 %v5465, %v5597
      %v5726 = vadd.f32 %v5466, %v5598
      %v5727 = vadd.f32 %v5467, %v5599
      %v5728 = vadd.f32 %v5468, %v5600
      %v5729 = vadd.f32 %v5469, %v5601
      %v5730 = vadd.f32 %v5470, %v5602
      %v5731 = vadd.f32 %v5471, %v5603
      %v5732 = vadd.f32 %v5472, %v5604
      %v5733 = vadd.f32 %v5473, %v5605
      %v5734 = vadd.f32 %v5474, %v5606
      %v5735 = vadd.f32 %v5475, %v5607
      %v5736 = vadd.f32 %v5476, %v5608
      %v5737 = vadd.f32 %v5477, %v5609
      %v5738 = vadd.f32 %v5478, %v5610
      %v5739 = vadd.f32 %v5479, %v5611
      %v5740 = vadd.f32 %v5480, %v5612
      %v5741 = vadd.f32 %v5481, %v5613
      %v5742 = vadd.f32 %v5482, %v5614
      %v5743 = vadd.f32 %v5483, %v5615
      %v5744 = vadd.f32 %v5484, %v5616
      %v5745 = vadd.f32 %v5485, %v5617
      %v5746 = vadd.f32 %v5486, %v5618
      %v5747 = vadd.f32 %v5487, %v5619
      %v5748 = vadd.f32 %v5488, %v5620
      %v5749 = vadd.f32 %v5489, %v5621
      %v5750 = vadd.f32 %v5490, %v5622
      %v5751 = vadd.f32 %v5491, %v5623
      %v5752 = vadd.f32 %v5492, %v5624
      %v5753 = vadd.f32 %v5493, %v5625
      %v5754 = vadd.f32 %v5494, %v5626
      %v5755 = vadd.f32 %v5495, %v5627
      %v5756 = vadd.f32 %v5496, %v5628
      %v5757 = vadd.f32 %v5497, %v5629
      %v5758 = vadd.f32 %v5498, %v5630
      %v5759 = vadd.f32 %v5499, %v5631
      %v5760 = vadd.f32 %v5500, %v5632
      %v5761 = vadd.f32 %v5501, %v5633
      %v5762 = vadd.f32 %v5502, %v5634
      %v5763 = vadd.f32 %v5503, %v5635
      %v5764 = vadd.f32 %v5504, %v5636
      %v5765 = vadd.f32 %v5505, %v5637
      %v5766 = vadd.f32 %v5506, %v5638
      %v5767 = vadd.f32 %v5507, %v5639
      %v5768 = vadd.f32 %v5508, %v5640
      %v5769 = vadd.f32 %v5509, %v5641
      %v5770 = vadd.f32 %v5510, %v5642
      %v5771 = vadd.f32 %v5511, %v5643
      %v5772 = vadd.f32 %v5512, %v5644
      %v5773 = vadd.f32 %v5513, %v5645
      %v5774 = vadd.f32 %v5514, %v5646
      %v5775 = vadd.f32 %v5515, %v5647
      %v5776 = vadd.f32 %v5516, %v5648
      %v5777 = vadd.f32 %v5517, %v5649
      %v5778 = vadd.f32 %v5518, %v5650
      %v5779 = vlaneseq
      %v5780 = vshrl.u32 %v5779, 7
      %v5781 = vsub.s32 4, %v5780
      %v5782 = vrot.slane %v623, %v5781
      %v5783 = vmul.f32 %v1398, %v5782
      %v5784 = vmul.f32 %v1402, %v5782
      %v5785 = vmul.f32 %v1406, %v5782
      %v5786 = vmul.f32 %v1410, %v5782
      %v5787 = vmul.f32 %v1414, %v5782
      %v5788 = vmul.f32 %v1418, %v5782
      %v5789 = vmul.f32 %v1422, %v5782
      %v5790 = vmul.f32 %v1426, %v5782
      %v5791 = vmul.f32 %v1430, %v5782
      %v5792 = vmul.f32 %v1434, %v5782
      %v5793 = vmul.f32 %v1438, %v5782
      %v5794 = vmul.f32 %v1442, %v5782
      %v5795 = vmul.f32 %v1446, %v5782
      %v5796 = vmul.f32 %v1450, %v5782
      %v5797 = vmul.f32 %v1454, %v5782
      %v5798 = vmul.f32 %v1458, %v5782
      %v5799 = vmul.f32 %v1462, %v5782
      %v5800 = vmul.f32 %v1466, %v5782
      %v5801 = vmul.f32 %v1470, %v5782
      %v5802 = vmul.f32 %v1474, %v5782
      %v5803 = vmul.f32 %v1478, %v5782
      %v5804 = vmul.f32 %v1482, %v5782
      %v5805 = vmul.f32 %v1486, %v5782
      %v5806 = vmul.f32 %v1490, %v5782
      %v5807 = vmul.f32 %v1494, %v5782
      %v5808 = vmul.f32 %v1498, %v5782
      %v5809 = vmul.f32 %v1502, %v5782
      %v5810 = vmul.f32 %v1506, %v5782
      %v5811 = vmul.f32 %v1510, %v5782
      %v5812 = vmul.f32 %v1514, %v5782
      %v5813 = vmul.f32 %v1518, %v5782
      %v5814 = vmul.f32 %v1522, %v5782
      %v5815 = vmul.f32 %v1526, %v5782
      %v5816 = vmul.f32 %v1530, %v5782
      %v5817 = vmul.f32 %v1534, %v5782
      %v5818 = vmul.f32 %v1538, %v5782
      %v5819 = vmul.f32 %v1542, %v5782
      %v5820 = vmul.f32 %v1546, %v5782
      %v5821 = vmul.f32 %v1550, %v5782
      %v5822 = vmul.f32 %v1554, %v5782
      %v5823 = vmul.f32 %v1558, %v5782
      %v5824 = vmul.f32 %v1562, %v5782
      %v5825 = vmul.f32 %v1566, %v5782
      %v5826 = vmul.f32 %v1570, %v5782
      %v5827 = vmul.f32 %v1574, %v5782
      %v5828 = vmul.f32 %v1578, %v5782
      %v5829 = vmul.f32 %v1582, %v5782
      %v5830 = vmul.f32 %v1586, %v5782
      %v5831 = vmul.f32 %v1590, %v5782
      %v5832 = vmul.f32 %v1594, %v5782
      %v5833 = vmul.f32 %v1598, %v5782
      %v5834 = vmul.f32 %v1602, %v5782
      %v5835 = vmul.f32 %v1606, %v5782
      %v5836 = vmul.f32 %v1610, %v5782
      %v5837 = vmul.f32 %v1614, %v5782
      %v5838 = vmul.f32 %v1618, %v5782
      %v5839 = vmul.f32 %v1622, %v5782
      %v5840 = vmul.f32 %v1626, %v5782
      %v5841 = vmul.f32 %v1630, %v5782
      %v5842 = vmul.f32 %v1634, %v5782
      %v5843 = vmul.f32 %v1638, %v5782
      %v5844 = vmul.f32 %v1642, %v5782
      %v5845 = vmul.f32 %v1646, %v5782
      %v5846 = vmul.f32 %v1650, %v5782
      %v5847 = vmul.f32 %v1654, %v5782
      %v5848 = vmul.f32 %v1658, %v5782
      %v5849 = vmul.f32 %v1662, %v5782
      %v5850 = vmul.f32 %v1666, %v5782
      %v5851 = vmul.f32 %v1670, %v5782
      %v5852 = vmul.f32 %v1674, %v5782
      %v5853 = vmul.f32 %v1678, %v5782
      %v5854 = vmul.f32 %v1682, %v5782
      %v5855 = vmul.f32 %v1686, %v5782
      %v5856 = vmul.f32 %v1690, %v5782
      %v5857 = vmul.f32 %v1694, %v5782
      %v5858 = vmul.f32 %v1698, %v5782
      %v5859 = vmul.f32 %v1702, %v5782
      %v5860 = vmul.f32 %v1706, %v5782
      %v5861 = vmul.f32 %v1710, %v5782
      %v5862 = vmul.f32 %v1714, %v5782
      %v5863 = vmul.f32 %v1718, %v5782
      %v5864 = vmul.f32 %v1722, %v5782
      %v5865 = vmul.f32 %v1726, %v5782
      %v5866 = vmul.f32 %v1730, %v5782
      %v5867 = vmul.f32 %v1734, %v5782
      %v5868 = vmul.f32 %v1738, %v5782
      %v5869 = vmul.f32 %v1742, %v5782
      %v5870 = vmul.f32 %v1746, %v5782
      %v5871 = vmul.f32 %v1750, %v5782
      %v5872 = vmul.f32 %v1754, %v5782
      %v5873 = vmul.f32 %v1758, %v5782
      %v5874 = vmul.f32 %v1762, %v5782
      %v5875 = vmul.f32 %v1766, %v5782
      %v5876 = vmul.f32 %v1770, %v5782
      %v5877 = vmul.f32 %v1774, %v5782
      %v5878 = vmul.f32 %v1778, %v5782
      %v5879 = vmul.f32 %v1782, %v5782
      %v5880 = vmul.f32 %v1786, %v5782
      %v5881 = vmul.f32 %v1790, %v5782
      %v5882 = vmul.f32 %v1794, %v5782
      %v5883 = vmul.f32 %v1798, %v5782
      %v5884 = vmul.f32 %v1802, %v5782
      %v5885 = vmul.f32 %v1806, %v5782
      %v5886 = vmul.f32 %v1810, %v5782
      %v5887 = vmul.f32 %v1814, %v5782
      %v5888 = vmul.f32 %v1818, %v5782
      %v5889 = vmul.f32 %v1822, %v5782
      %v5890 = vmul.f32 %v1826, %v5782
      %v5891 = vmul.f32 %v1830, %v5782
      %v5892 = vmul.f32 %v1834, %v5782
      %v5893 = vmul.f32 %v1838, %v5782
      %v5894 = vmul.f32 %v1842, %v5782
      %v5895 = vmul.f32 %v1846, %v5782
      %v5896 = vmul.f32 %v1850, %v5782
      %v5897 = vmul.f32 %v1854, %v5782
      %v5898 = vmul.f32 %v1858, %v5782
      %v5899 = vmul.f32 %v1862, %v5782
      %v5900 = vmul.f32 %v1866, %v5782
      %v5901 = vmul.f32 %v1870, %v5782
      %v5902 = vmul.f32 %v1874, %v5782
      %v5903 = vmul.f32 %v1878, %v5782
      %v5904 = vmul.f32 %v1882, %v5782
      %v5905 = vmul.f32 %v1886, %v5782
      %v5906 = vmul.f32 %v1890, %v5782
      %v5907 = vmul.f32 %v1894, %v5782
      %v5908 = vmul.f32 %v1898, %v5782
      %v5909 = vmul.f32 %v1902, %v5782
      %v5910 = vmul.f32 %v1906, %v5782
      %v5911 = vadd.f32 %v5651, %v5783
      %v5912 = vadd.f32 %v5652, %v5784
      %v5913 = vadd.f32 %v5653, %v5785
      %v5914 = vadd.f32 %v5654, %v5786
      %v5915 = vadd.f32 %v5655, %v5787
      %v5916 = vadd.f32 %v5656, %v5788
      %v5917 = vadd.f32 %v5657, %v5789
      %v5918 = vadd.f32 %v5658, %v5790
      %v5919 = vadd.f32 %v5659, %v5791
      %v5920 = vadd.f32 %v5660, %v5792
      %v5921 = vadd.f32 %v5661, %v5793
      %v5922 = vadd.f32 %v5662, %v5794
      %v5923 = vadd.f32 %v5663, %v5795
      %v5924 = vadd.f32 %v5664, %v5796
      %v5925 = vadd.f32 %v5665, %v5797
      %v5926 = vadd.f32 %v5666, %v5798
      %v5927 = vadd.f32 %v5667, %v5799
      %v5928 = vadd.f32 %v5668, %v5800
      %v5929 = vadd.f32 %v5669, %v5801
      %v5930 = vadd.f32 %v5670, %v5802
      %v5931 = vadd.f32 %v5671, %v5803
      %v5932 = vadd.f32 %v5672, %v5804
      %v5933 = vadd.f32 %v5673, %v5805
      %v5934 = vadd.f32 %v5674, %v5806
      %v5935 = vadd.f32 %v5675, %v5807
      %v5936 = vadd.f32 %v5676, %v5808
      %v5937 = vadd.f32 %v5677, %v5809
      %v5938 = vadd.f32 %v5678, %v5810
      %v5939 = vadd.f32 %v5679, %v5811
      %v5940 = vadd.f32 %v5680, %v5812
      %v5941 = vadd.f32 %v5681, %v5813
      %v5942 = vadd.f32 %v5682, %v5814
      %v5943 = vadd.f32 %v5683, %v5815
      %v5944 = vadd.f32 %v5684, %v5816
      %v5945 = vadd.f32 %v5685, %v5817
      %v5946 = vadd.f32 %v5686, %v5818
      %v5947 = vadd.f32 %v5687, %v5819
      %v5948 = vadd.f32 %v5688, %v5820
      %v5949 = vadd.f32 %v5689, %v5821
      %v5950 = vadd.f32 %v5690, %v5822
      %v5951 = vadd.f32 %v5691, %v5823
      %v5952 = vadd.f32 %v5692, %v5824
      %v5953 = vadd.f32 %v5693, %v5825
      %v5954 = vadd.f32 %v5694, %v5826
      %v5955 = vadd.f32 %v5695, %v5827
      %v5956 = vadd.f32 %v5696, %v5828
      %v5957 = vadd.f32 %v5697, %v5829
      %v5958 = vadd.f32 %v5698, %v5830
      %v5959 = vadd.f32 %v5699, %v5831
      %v5960 = vadd.f32 %v5700, %v5832
      %v5961 = vadd.f32 %v5701, %v5833
      %v5962 = vadd.f32 %v5702, %v5834
      %v5963 = vadd.f32 %v5703, %v5835
      %v5964 = vadd.f32 %v5704, %v5836
      %v5965 = vadd.f32 %v5705, %v5837
      %v5966 = vadd.f32 %v5706, %v5838
      %v5967 = vadd.f32 %v5707, %v5839
      %v5968 = vadd.f32 %v5708, %v5840
      %v5969 = vadd.f32 %v5709, %v5841
      %v5970 = vadd.f32 %v5710, %v5842
      %v5971 = vadd.f32 %v5711, %v5843
      %v5972 = vadd.f32 %v5712, %v5844
      %v5973 = vadd.f32 %v5713, %v5845
      %v5974 = vadd.f32 %v5714, %v5846
      %v5975 = vadd.f32 %v5715, %v5847
      %v5976 = vadd.f32 %v5716, %v5848
      %v5977 = vadd.f32 %v5717, %v5849
      %v5978 = vadd.f32 %v5718, %v5850
      %v5979 = vadd.f32 %v5719, %v5851
      %v5980 = vadd.f32 %v5720, %v5852
      %v5981 = vadd.f32 %v5721, %v5853
      %v5982 = vadd.f32 %v5722, %v5854
      %v5983 = vadd.f32 %v5723, %v5855
      %v5984 = vadd.f32 %v5724, %v5856
      %v5985 = vadd.f32 %v5725, %v5857
      %v5986 = vadd.f32 %v5726, %v5858
      %v5987 = vadd.f32 %v5727, %v5859
      %v5988 = vadd.f32 %v5728, %v5860
      %v5989 = vadd.f32 %v5729, %v5861
      %v5990 = vadd.f32 %v5730, %v5862
      %v5991 = vadd.f32 %v5731, %v5863
      %v5992 = vadd.f32 %v5732, %v5864
      %v5993 = vadd.f32 %v5733, %v5865
      %v5994 = vadd.f32 %v5734, %v5866
      %v5995 = vadd.f32 %v5735, %v5867
      %v5996 = vadd.f32 %v5736, %v5868
      %v5997 = vadd.f32 %v5737, %v5869
      %v5998 = vadd.f32 %v5738, %v5870
      %v5999 = vadd.f32 %v5739, %v5871
      %v6000 = vadd.f32 %v5740, %v5872
      %v6001 = vadd.f32 %v5741, %v5873
      %v6002 = vadd.f32 %v5742, %v5874
      %v6003 = vadd.f32 %v5743, %v5875
      %v6004 = vadd.f32 %v5744, %v5876
      %v6005 = vadd.f32 %v5745, %v5877
      %v6006 = vadd.f32 %v5746, %v5878
      %v6007 = vadd.f32 %v5747, %v5879
      %v6008 = vadd.f32 %v5748, %v5880
      %v6009 = vadd.f32 %v5749, %v5881
      %v6010 = vadd.f32 %v5750, %v5882
      %v6011 = vadd.f32 %v5751, %v5883
      %v6012 = vadd.f32 %v5752, %v5884
      %v6013 = vadd.f32 %v5753, %v5885
      %v6014 = vadd.f32 %v5754, %v5886
      %v6015 = vadd.f32 %v5755, %v5887
      %v6016 = vadd.f32 %v5756, %v5888
      %v6017 = vadd.f32 %v5757, %v5889
      %v6018 = vadd.f32 %v5758, %v5890
      %v6019 = vadd.f32 %v5759, %v5891
      %v6020 = vadd.f32 %v5760, %v5892
      %v6021 = vadd.f32 %v5761, %v5893
      %v6022 = vadd.f32 %v5762, %v5894
      %v6023 = vadd.f32 %v5763, %v5895
      %v6024 = vadd.f32 %v5764, %v5896
      %v6025 = vadd.f32 %v5765, %v5897
      %v6026 = vadd.f32 %v5766, %v5898
      %v6027 = vadd.f32 %v5767, %v5899
      %v6028 = vadd.f32 %v5768, %v5900
      %v6029 = vadd.f32 %v5769, %v5901
      %v6030 = vadd.f32 %v5770, %v5902
      %v6031 = vadd.f32 %v5771, %v5903
      %v6032 = vadd.f32 %v5772, %v5904
      %v6033 = vadd.f32 %v5773, %v5905
      %v6034 = vadd.f32 %v5774, %v5906
      %v6035 = vadd.f32 %v5775, %v5907
      %v6036 = vadd.f32 %v5776, %v5908
      %v6037 = vadd.f32 %v5777, %v5909
      %v6038 = vadd.f32 %v5778, %v5910
      %v6039 = vlaneseq
      %v6040 = vshrl.u32 %v6039, 7
      %v6041 = vsub.s32 5, %v6040
      %v6042 = vrot.slane %v623, %v6041
      %v6043 = vmul.f32 %v2170, %v6042
      %v6044 = vmul.f32 %v2174, %v6042
      %v6045 = vmul.f32 %v2178, %v6042
      %v6046 = vmul.f32 %v2182, %v6042
      %v6047 = vmul.f32 %v2186, %v6042
      %v6048 = vmul.f32 %v2190, %v6042
      %v6049 = vmul.f32 %v2194, %v6042
      %v6050 = vmul.f32 %v2198, %v6042
      %v6051 = vmul.f32 %v2202, %v6042
      %v6052 = vmul.f32 %v2206, %v6042
      %v6053 = vmul.f32 %v2210, %v6042
      %v6054 = vmul.f32 %v2214, %v6042
      %v6055 = vmul.f32 %v2218, %v6042
      %v6056 = vmul.f32 %v2222, %v6042
      %v6057 = vmul.f32 %v2226, %v6042
      %v6058 = vmul.f32 %v2230, %v6042
      %v6059 = vmul.f32 %v2234, %v6042
      %v6060 = vmul.f32 %v2238, %v6042
      %v6061 = vmul.f32 %v2242, %v6042
      %v6062 = vmul.f32 %v2246, %v6042
      %v6063 = vmul.f32 %v2250, %v6042
      %v6064 = vmul.f32 %v2254, %v6042
      %v6065 = vmul.f32 %v2258, %v6042
      %v6066 = vmul.f32 %v2262, %v6042
      %v6067 = vmul.f32 %v2266, %v6042
      %v6068 = vmul.f32 %v2270, %v6042
      %v6069 = vmul.f32 %v2274, %v6042
      %v6070 = vmul.f32 %v2278, %v6042
      %v6071 = vmul.f32 %v2282, %v6042
      %v6072 = vmul.f32 %v2286, %v6042
      %v6073 = vmul.f32 %v2290, %v6042
      %v6074 = vmul.f32 %v2294, %v6042
      %v6075 = vmul.f32 %v2298, %v6042
      %v6076 = vmul.f32 %v2302, %v6042
      %v6077 = vmul.f32 %v2306, %v6042
      %v6078 = vmul.f32 %v2310, %v6042
      %v6079 = vmul.f32 %v2314, %v6042
      %v6080 = vmul.f32 %v2318, %v6042
      %v6081 = vmul.f32 %v2322, %v6042
      %v6082 = vmul.f32 %v2326, %v6042
      %v6083 = vmul.f32 %v2330, %v6042
      %v6084 = vmul.f32 %v2334, %v6042
      %v6085 = vmul.f32 %v2338, %v6042
      %v6086 = vmul.f32 %v2342, %v6042
      %v6087 = vmul.f32 %v2346, %v6042
      %v6088 = vmul.f32 %v2350, %v6042
      %v6089 = vmul.f32 %v2354, %v6042
      %v6090 = vmul.f32 %v2358, %v6042
      %v6091 = vmul.f32 %v2362, %v6042
      %v6092 = vmul.f32 %v2366, %v6042
      %v6093 = vmul.f32 %v2370, %v6042
      %v6094 = vmul.f32 %v2374, %v6042
      %v6095 = vmul.f32 %v2378, %v6042
      %v6096 = vmul.f32 %v2382, %v6042
      %v6097 = vmul.f32 %v2386, %v6042
      %v6098 = vmul.f32 %v2390, %v6042
      %v6099 = vmul.f32 %v2394, %v6042
      %v6100 = vmul.f32 %v2398, %v6042
      %v6101 = vmul.f32 %v2402, %v6042
      %v6102 = vmul.f32 %v2406, %v6042
      %v6103 = vmul.f32 %v2410, %v6042
      %v6104 = vmul.f32 %v2414, %v6042
      %v6105 = vmul.f32 %v2418, %v6042
      %v6106 = vmul.f32 %v2422, %v6042
      %v6107 = vmul.f32 %v2426, %v6042
      %v6108 = vmul.f32 %v2430, %v6042
      %v6109 = vmul.f32 %v2434, %v6042
      %v6110 = vmul.f32 %v2438, %v6042
      %v6111 = vmul.f32 %v2442, %v6042
      %v6112 = vmul.f32 %v2446, %v6042
      %v6113 = vmul.f32 %v2450, %v6042
      %v6114 = vmul.f32 %v2454, %v6042
      %v6115 = vmul.f32 %v2458, %v6042
      %v6116 = vmul.f32 %v2462, %v6042
      %v6117 = vmul.f32 %v2466, %v6042
      %v6118 = vmul.f32 %v2470, %v6042
      %v6119 = vmul.f32 %v2474, %v6042
      %v6120 = vmul.f32 %v2478, %v6042
      %v6121 = vmul.f32 %v2482, %v6042
      %v6122 = vmul.f32 %v2486, %v6042
      %v6123 = vmul.f32 %v2490, %v6042
      %v6124 = vmul.f32 %v2494, %v6042
      %v6125 = vmul.f32 %v2498, %v6042
      %v6126 = vmul.f32 %v2502, %v6042
      %v6127 = vmul.f32 %v2506, %v6042
      %v6128 = vmul.f32 %v2510, %v6042
      %v6129 = vmul.f32 %v2514, %v6042
      %v6130 = vmul.f32 %v2518, %v6042
      %v6131 = vmul.f32 %v2522, %v6042
      %v6132 = vmul.f32 %v2526, %v6042
      %v6133 = vmul.f32 %v2530, %v6042
      %v6134 = vmul.f32 %v2534, %v6042
      %v6135 = vmul.f32 %v2538, %v6042
      %v6136 = vmul.f32 %v2542, %v6042
      %v6137 = vmul.f32 %v2546, %v6042
      %v6138 = vmul.f32 %v2550, %v6042
      %v6139 = vmul.f32 %v2554, %v6042
      %v6140 = vmul.f32 %v2558, %v6042
      %v6141 = vmul.f32 %v2562, %v6042
      %v6142 = vmul.f32 %v2566, %v6042
      %v6143 = vmul.f32 %v2570, %v6042
      %v6144 = vmul.f32 %v2574, %v6042
      %v6145 = vmul.f32 %v2578, %v6042
      %v6146 = vmul.f32 %v2582, %v6042
      %v6147 = vmul.f32 %v2586, %v6042
      %v6148 = vmul.f32 %v2590, %v6042
      %v6149 = vmul.f32 %v2594, %v6042
      %v6150 = vmul.f32 %v2598, %v6042
      %v6151 = vmul.f32 %v2602, %v6042
      %v6152 = vmul.f32 %v2606, %v6042
      %v6153 = vmul.f32 %v2610, %v6042
      %v6154 = vmul.f32 %v2614, %v6042
      %v6155 = vmul.f32 %v2618, %v6042
      %v6156 = vmul.f32 %v2622, %v6042
      %v6157 = vmul.f32 %v2626, %v6042
      %v6158 = vmul.f32 %v2630, %v6042
      %v6159 = vmul.f32 %v2634, %v6042
      %v6160 = vmul.f32 %v2638, %v6042
      %v6161 = vmul.f32 %v2642, %v6042
      %v6162 = vmul.f32 %v2646, %v6042
      %v6163 = vmul.f32 %v2650, %v6042
      %v6164 = vmul.f32 %v2654, %v6042
      %v6165 = vmul.f32 %v2658, %v6042
      %v6166 = vmul.f32 %v2662, %v6042
      %v6167 = vmul.f32 %v2666, %v6042
      %v6168 = vmul.f32 %v2670, %v6042
      %v6169 = vmul.f32 %v2674, %v6042
      %v6170 = vmul.f32 %v2678, %v6042
      %v6171 = vadd.f32 %v5911, %v6043
      %v6172 = vadd.f32 %v5912, %v6044
      %v6173 = vadd.f32 %v5913, %v6045
      %v6174 = vadd.f32 %v5914, %v6046
      %v6175 = vadd.f32 %v5915, %v6047
      %v6176 = vadd.f32 %v5916, %v6048
      %v6177 = vadd.f32 %v5917, %v6049
      %v6178 = vadd.f32 %v5918, %v6050
      %v6179 = vadd.f32 %v5919, %v6051
      %v6180 = vadd.f32 %v5920, %v6052
      %v6181 = vadd.f32 %v5921, %v6053
      %v6182 = vadd.f32 %v5922, %v6054
      %v6183 = vadd.f32 %v5923, %v6055
      %v6184 = vadd.f32 %v5924, %v6056
      %v6185 = vadd.f32 %v5925, %v6057
      %v6186 = vadd.f32 %v5926, %v6058
      %v6187 = vadd.f32 %v5927, %v6059
      %v6188 = vadd.f32 %v5928, %v6060
      %v6189 = vadd.f32 %v5929, %v6061
      %v6190 = vadd.f32 %v5930, %v6062
      %v6191 = vadd.f32 %v5931, %v6063
      %v6192 = vadd.f32 %v5932, %v6064
      %v6193 = vadd.f32 %v5933, %v6065
      %v6194 = vadd.f32 %v5934, %v6066
      %v6195 = vadd.f32 %v5935, %v6067
      %v6196 = vadd.f32 %v5936, %v6068
      %v6197 = vadd.f32 %v5937, %v6069
      %v6198 = vadd.f32 %v5938, %v6070
      %v6199 = vadd.f32 %v5939, %v6071
      %v6200 = vadd.f32 %v5940, %v6072
      %v6201 = vadd.f32 %v5941, %v6073
      %v6202 = vadd.f32 %v5942, %v6074
      %v6203 = vadd.f32 %v5943, %v6075
      %v6204 = vadd.f32 %v5944, %v6076
      %v6205 = vadd.f32 %v5945, %v6077
      %v6206 = vadd.f32 %v5946, %v6078
      %v6207 = vadd.f32 %v5947, %v6079
      %v6208 = vadd.f32 %v5948, %v6080
      %v6209 = vadd.f32 %v5949, %v6081
      %v6210 = vadd.f32 %v5950, %v6082
      %v6211 = vadd.f32 %v5951, %v6083
      %v6212 = vadd.f32 %v5952, %v6084
      %v6213 = vadd.f32 %v5953, %v6085
      %v6214 = vadd.f32 %v5954, %v6086
      %v6215 = vadd.f32 %v5955, %v6087
      %v6216 = vadd.f32 %v5956, %v6088
      %v6217 = vadd.f32 %v5957, %v6089
      %v6218 = vadd.f32 %v5958, %v6090
      %v6219 = vadd.f32 %v5959, %v6091
      %v6220 = vadd.f32 %v5960, %v6092
      %v6221 = vadd.f32 %v5961, %v6093
      %v6222 = vadd.f32 %v5962, %v6094
      %v6223 = vadd.f32 %v5963, %v6095
      %v6224 = vadd.f32 %v5964, %v6096
      %v6225 = vadd.f32 %v5965, %v6097
      %v6226 = vadd.f32 %v5966, %v6098
      %v6227 = vadd.f32 %v5967, %v6099
      %v6228 = vadd.f32 %v5968, %v6100
      %v6229 = vadd.f32 %v5969, %v6101
      %v6230 = vadd.f32 %v5970, %v6102
      %v6231 = vadd.f32 %v5971, %v6103
      %v6232 = vadd.f32 %v5972, %v6104
      %v6233 = vadd.f32 %v5973, %v6105
      %v6234 = vadd.f32 %v5974, %v6106
      %v6235 = vadd.f32 %v5975, %v6107
      %v6236 = vadd.f32 %v5976, %v6108
      %v6237 = vadd.f32 %v5977, %v6109
      %v6238 = vadd.f32 %v5978, %v6110
      %v6239 = vadd.f32 %v5979, %v6111
      %v6240 = vadd.f32 %v5980, %v6112
      %v6241 = vadd.f32 %v5981, %v6113
      %v6242 = vadd.f32 %v5982, %v6114
      %v6243 = vadd.f32 %v5983, %v6115
      %v6244 = vadd.f32 %v5984, %v6116
      %v6245 = vadd.f32 %v5985, %v6117
      %v6246 = vadd.f32 %v5986, %v6118
      %v6247 = vadd.f32 %v5987, %v6119
      %v6248 = vadd.f32 %v5988, %v6120
      %v6249 = vadd.f32 %v5989, %v6121
      %v6250 = vadd.f32 %v5990, %v6122
      %v6251 = vadd.f32 %v5991, %v6123
      %v6252 = vadd.f32 %v5992, %v6124
      %v6253 = vadd.f32 %v5993, %v6125
      %v6254 = vadd.f32 %v5994, %v6126
      %v6255 = vadd.f32 %v5995, %v6127
      %v6256 = vadd.f32 %v5996, %v6128
      %v6257 = vadd.f32 %v5997, %v6129
      %v6258 = vadd.f32 %v5998, %v6130
      %v6259 = vadd.f32 %v5999, %v6131
      %v6260 = vadd.f32 %v6000, %v6132
      %v6261 = vadd.f32 %v6001, %v6133
      %v6262 = vadd.f32 %v6002, %v6134
      %v6263 = vadd.f32 %v6003, %v6135
      %v6264 = vadd.f32 %v6004, %v6136
      %v6265 = vadd.f32 %v6005, %v6137
      %v6266 = vadd.f32 %v6006, %v6138
      %v6267 = vadd.f32 %v6007, %v6139
      %v6268 = vadd.f32 %v6008, %v6140
      %v6269 = vadd.f32 %v6009, %v6141
      %v6270 = vadd.f32 %v6010, %v6142
      %v6271 = vadd.f32 %v6011, %v6143
      %v6272 = vadd.f32 %v6012, %v6144
      %v6273 = vadd.f32 %v6013, %v6145
      %v6274 = vadd.f32 %v6014, %v6146
      %v6275 = vadd.f32 %v6015, %v6147
      %v6276 = vadd.f32 %v6016, %v6148
      %v6277 = vadd.f32 %v6017, %v6149
      %v6278 = vadd.f32 %v6018, %v6150
      %v6279 = vadd.f32 %v6019, %v6151
      %v6280 = vadd.f32 %v6020, %v6152
      %v6281 = vadd.f32 %v6021, %v6153
      %v6282 = vadd.f32 %v6022, %v6154
      %v6283 = vadd.f32 %v6023, %v6155
      %v6284 = vadd.f32 %v6024, %v6156
      %v6285 = vadd.f32 %v6025, %v6157
      %v6286 = vadd.f32 %v6026, %v6158
      %v6287 = vadd.f32 %v6027, %v6159
      %v6288 = vadd.f32 %v6028, %v6160
      %v6289 = vadd.f32 %v6029, %v6161
      %v6290 = vadd.f32 %v6030, %v6162
      %v6291 = vadd.f32 %v6031, %v6163
      %v6292 = vadd.f32 %v6032, %v6164
      %v6293 = vadd.f32 %v6033, %v6165
      %v6294 = vadd.f32 %v6034, %v6166
      %v6295 = vadd.f32 %v6035, %v6167
      %v6296 = vadd.f32 %v6036, %v6168
      %v6297 = vadd.f32 %v6037, %v6169
      %v6298 = vadd.f32 %v6038, %v6170
      %v6299 = vld [vmem:[%s4] sm:$0x1]
      %v6301 = vlaneseq
      %v6302 = vshrl.u32 %v6301, 7
      %v6303 = vsub.s32 0, %v6302
      %v6304 = vrot.slane %v6299, %v6303
      %v6306 = vadd.f32 %v6171, %v6304
      %v6307 = vadd.f32 %v6172, %v6304
      %v6308 = vadd.f32 %v6173, %v6304
      %v6309 = vadd.f32 %v6174, %v6304
      %v6310 = vadd.f32 %v6175, %v6304
      %v6311 = vadd.f32 %v6176, %v6304
      %v6312 = vadd.f32 %v6177, %v6304
      %v6313 = vadd.f32 %v6178, %v6304
      %v6314 = vadd.f32 %v6179, %v6304
      %v6315 = vadd.f32 %v6180, %v6304
      %v6316 = vadd.f32 %v6181, %v6304
      %v6317 = vadd.f32 %v6182, %v6304
      %v6318 = vadd.f32 %v6183, %v6304
      %v6319 = vadd.f32 %v6184, %v6304
      %v6320 = vadd.f32 %v6185, %v6304
      %v6321 = vadd.f32 %v6186, %v6304
      %v6322 = vadd.f32 %v6187, %v6304
      %v6323 = vadd.f32 %v6188, %v6304
      %v6324 = vadd.f32 %v6189, %v6304
      %v6325 = vadd.f32 %v6190, %v6304
      %v6326 = vadd.f32 %v6191, %v6304
      %v6327 = vadd.f32 %v6192, %v6304
      %v6328 = vadd.f32 %v6193, %v6304
      %v6329 = vadd.f32 %v6194, %v6304
      %v6330 = vadd.f32 %v6195, %v6304
      %v6331 = vadd.f32 %v6196, %v6304
      %v6332 = vadd.f32 %v6197, %v6304
      %v6333 = vadd.f32 %v6198, %v6304
      %v6334 = vadd.f32 %v6199, %v6304
      %v6335 = vadd.f32 %v6200, %v6304
      %v6336 = vadd.f32 %v6201, %v6304
      %v6337 = vadd.f32 %v6202, %v6304
      %v6338 = vadd.f32 %v6203, %v6304
      %v6339 = vadd.f32 %v6204, %v6304
      %v6340 = vadd.f32 %v6205, %v6304
      %v6341 = vadd.f32 %v6206, %v6304
      %v6342 = vadd.f32 %v6207, %v6304
      %v6343 = vadd.f32 %v6208, %v6304
      %v6344 = vadd.f32 %v6209, %v6304
      %v6345 = vadd.f32 %v6210, %v6304
      %v6346 = vadd.f32 %v6211, %v6304
      %v6347 = vadd.f32 %v6212, %v6304
      %v6348 = vadd.f32 %v6213, %v6304
      %v6349 = vadd.f32 %v6214, %v6304
      %v6350 = vadd.f32 %v6215, %v6304
      %v6351 = vadd.f32 %v6216, %v6304
      %v6352 = vadd.f32 %v6217, %v6304
      %v6353 = vadd.f32 %v6218, %v6304
      %v6354 = vadd.f32 %v6219, %v6304
      %v6355 = vadd.f32 %v6220, %v6304
      %v6356 = vadd.f32 %v6221, %v6304
      %v6357 = vadd.f32 %v6222, %v6304
      %v6358 = vadd.f32 %v6223, %v6304
      %v6359 = vadd.f32 %v6224, %v6304
      %v6360 = vadd.f32 %v6225, %v6304
      %v6361 = vadd.f32 %v6226, %v6304
      %v6362 = vadd.f32 %v6227, %v6304
      %v6363 = vadd.f32 %v6228, %v6304
      %v6364 = vadd.f32 %v6229, %v6304
      %v6365 = vadd.f32 %v6230, %v6304
      %v6366 = vadd.f32 %v6231, %v6304
      %v6367 = vadd.f32 %v6232, %v6304
      %v6368 = vadd.f32 %v6233, %v6304
      %v6369 = vadd.f32 %v6234, %v6304
      %v6370 = vadd.f32 %v6235, %v6304
      %v6371 = vadd.f32 %v6236, %v6304
      %v6372 = vadd.f32 %v6237, %v6304
      %v6373 = vadd.f32 %v6238, %v6304
      %v6374 = vadd.f32 %v6239, %v6304
      %v6375 = vadd.f32 %v6240, %v6304
      %v6376 = vadd.f32 %v6241, %v6304
      %v6377 = vadd.f32 %v6242, %v6304
      %v6378 = vadd.f32 %v6243, %v6304
      %v6379 = vadd.f32 %v6244, %v6304
      %v6380 = vadd.f32 %v6245, %v6304
      %v6381 = vadd.f32 %v6246, %v6304
      %v6382 = vadd.f32 %v6247, %v6304
      %v6383 = vadd.f32 %v6248, %v6304
      %v6384 = vadd.f32 %v6249, %v6304
      %v6385 = vadd.f32 %v6250, %v6304
      %v6386 = vadd.f32 %v6251, %v6304
      %v6387 = vadd.f32 %v6252, %v6304
      %v6388 = vadd.f32 %v6253, %v6304
      %v6389 = vadd.f32 %v6254, %v6304
      %v6390 = vadd.f32 %v6255, %v6304
      %v6391 = vadd.f32 %v6256, %v6304
      %v6392 = vadd.f32 %v6257, %v6304
      %v6393 = vadd.f32 %v6258, %v6304
      %v6394 = vadd.f32 %v6259, %v6304
      %v6395 = vadd.f32 %v6260, %v6304
      %v6396 = vadd.f32 %v6261, %v6304
      %v6397 = vadd.f32 %v6262, %v6304
      %v6398 = vadd.f32 %v6263, %v6304
      %v6399 = vadd.f32 %v6264, %v6304
      %v6400 = vadd.f32 %v6265, %v6304
      %v6401 = vadd.f32 %v6266, %v6304
      %v6402 = vadd.f32 %v6267, %v6304
      %v6403 = vadd.f32 %v6268, %v6304
      %v6404 = vadd.f32 %v6269, %v6304
      %v6405 = vadd.f32 %v6270, %v6304
      %v6406 = vadd.f32 %v6271, %v6304
      %v6407 = vadd.f32 %v6272, %v6304
      %v6408 = vadd.f32 %v6273, %v6304
      %v6409 = vadd.f32 %v6274, %v6304
      %v6410 = vadd.f32 %v6275, %v6304
      %v6411 = vadd.f32 %v6276, %v6304
      %v6412 = vadd.f32 %v6277, %v6304
      %v6413 = vadd.f32 %v6278, %v6304
      %v6414 = vadd.f32 %v6279, %v6304
      %v6415 = vadd.f32 %v6280, %v6304
      %v6416 = vadd.f32 %v6281, %v6304
      %v6417 = vadd.f32 %v6282, %v6304
      %v6418 = vadd.f32 %v6283, %v6304
      %v6419 = vadd.f32 %v6284, %v6304
      %v6420 = vadd.f32 %v6285, %v6304
      %v6421 = vadd.f32 %v6286, %v6304
      %v6422 = vadd.f32 %v6287, %v6304
      %v6423 = vadd.f32 %v6288, %v6304
      %v6424 = vadd.f32 %v6289, %v6304
      %v6425 = vadd.f32 %v6290, %v6304
      %v6426 = vadd.f32 %v6291, %v6304
      %v6427 = vadd.f32 %v6292, %v6304
      %v6428 = vadd.f32 %v6293, %v6304
      %v6429 = vadd.f32 %v6294, %v6304
      %v6430 = vadd.f32 %v6295, %v6304
      %v6431 = vadd.f32 %v6296, %v6304
      %v6432 = vadd.f32 %v6297, %v6304
      %v6433 = vadd.f32 %v6298, %v6304
      %v6434 = vmax.f32 %v6306, 0.0
      %v6435 = vmax.f32 %v6307, 0.0
      %v6436 = vmax.f32 %v6308, 0.0
      %v6437 = vmax.f32 %v6309, 0.0
      %v6438 = vmax.f32 %v6310, 0.0
      %v6439 = vmax.f32 %v6311, 0.0
      %v6440 = vmax.f32 %v6312, 0.0
      %v6441 = vmax.f32 %v6313, 0.0
      %v6442 = vmax.f32 %v6314, 0.0
      %v6443 = vmax.f32 %v6315, 0.0
      %v6444 = vmax.f32 %v6316, 0.0
      %v6445 = vmax.f32 %v6317, 0.0
      %v6446 = vmax.f32 %v6318, 0.0
      %v6447 = vmax.f32 %v6319, 0.0
      %v6448 = vmax.f32 %v6320, 0.0
      %v6449 = vmax.f32 %v6321, 0.0
      %v6450 = vmax.f32 %v6322, 0.0
      %v6451 = vmax.f32 %v6323, 0.0
      %v6452 = vmax.f32 %v6324, 0.0
      %v6453 = vmax.f32 %v6325, 0.0
      %v6454 = vmax.f32 %v6326, 0.0
      %v6455 = vmax.f32 %v6327, 0.0
      %v6456 = vmax.f32 %v6328, 0.0
      %v6457 = vmax.f32 %v6329, 0.0
      %v6458 = vmax.f32 %v6330, 0.0
      %v6459 = vmax.f32 %v6331, 0.0
      %v6460 = vmax.f32 %v6332, 0.0
      %v6461 = vmax.f32 %v6333, 0.0
      %v6462 = vmax.f32 %v6334, 0.0
      %v6463 = vmax.f32 %v6335, 0.0
      %v6464 = vmax.f32 %v6336, 0.0
      %v6465 = vmax.f32 %v6337, 0.0
      %v6466 = vmax.f32 %v6338, 0.0
      %v6467 = vmax.f32 %v6339, 0.0
      %v6468 = vmax.f32 %v6340, 0.0
      %v6469 = vmax.f32 %v6341, 0.0
      %v6470 = vmax.f32 %v6342, 0.0
      %v6471 = vmax.f32 %v6343, 0.0
      %v6472 = vmax.f32 %v6344, 0.0
      %v6473 = vmax.f32 %v6345, 0.0
      %v6474 = vmax.f32 %v6346, 0.0
      %v6475 = vmax.f32 %v6347, 0.0
      %v6476 = vmax.f32 %v6348, 0.0
      %v6477 = vmax.f32 %v6349, 0.0
      %v6478 = vmax.f32 %v6350, 0.0
      %v6479 = vmax.f32 %v6351, 0.0
      %v6480 = vmax.f32 %v6352, 0.0
      %v6481 = vmax.f32 %v6353, 0.0
      %v6482 = vmax.f32 %v6354, 0.0
      %v6483 = vmax.f32 %v6355, 0.0
      %v6484 = vmax.f32 %v6356, 0.0
      %v6485 = vmax.f32 %v6357, 0.0
      %v6486 = vmax.f32 %v6358, 0.0
      %v6487 = vmax.f32 %v6359, 0.0
      %v6488 = vmax.f32 %v6360, 0.0
      %v6489 = vmax.f32 %v6361, 0.0
      %v6490 = vmax.f32 %v6362, 0.0
      %v6491 = vmax.f32 %v6363, 0.0
      %v6492 = vmax.f32 %v6364, 0.0
      %v6493 = vmax.f32 %v6365, 0.0
      %v6494 = vmax.f32 %v6366, 0.0
      %v6495 = vmax.f32 %v6367, 0.0
      %v6496 = vmax.f32 %v6368, 0.0
      %v6497 = vmax.f32 %v6369, 0.0
      %v6498 = vmax.f32 %v6370, 0.0
      %v6499 = vmax.f32 %v6371, 0.0
      %v6500 = vmax.f32 %v6372, 0.0
      %v6501 = vmax.f32 %v6373, 0.0
      %v6502 = vmax.f32 %v6374, 0.0
      %v6503 = vmax.f32 %v6375, 0.0
      %v6504 = vmax.f32 %v6376, 0.0
      %v6505 = vmax.f32 %v6377, 0.0
      %v6506 = vmax.f32 %v6378, 0.0
      %v6507 = vmax.f32 %v6379, 0.0
      %v6508 = vmax.f32 %v6380, 0.0
      %v6509 = vmax.f32 %v6381, 0.0
      %v6510 = vmax.f32 %v6382, 0.0
      %v6511 = vmax.f32 %v6383, 0.0
      %v6512 = vmax.f32 %v6384, 0.0
      %v6513 = vmax.f32 %v6385, 0.0
      %v6514 = vmax.f32 %v6386, 0.0
      %v6515 = vmax.f32 %v6387, 0.0
      %v6516 = vmax.f32 %v6388, 0.0
      %v6517 = vmax.f32 %v6389, 0.0
      %v6518 = vmax.f32 %v6390, 0.0
      %v6519 = vmax.f32 %v6391, 0.0
      %v6520 = vmax.f32 %v6392, 0.0
      %v6521 = vmax.f32 %v6393, 0.0
      %v6522 = vmax.f32 %v6394, 0.0
      %v6523 = vmax.f32 %v6395, 0.0
      %v6524 = vmax.f32 %v6396, 0.0
      %v6525 = vmax.f32 %v6397, 0.0
      %v6526 = vmax.f32 %v6398, 0.0
      %v6527 = vmax.f32 %v6399, 0.0
      %v6528 = vmax.f32 %v6400, 0.0
      %v6529 = vmax.f32 %v6401, 0.0
      %v6530 = vmax.f32 %v6402, 0.0
      %v6531 = vmax.f32 %v6403, 0.0
      %v6532 = vmax.f32 %v6404, 0.0
      %v6533 = vmax.f32 %v6405, 0.0
      %v6534 = vmax.f32 %v6406, 0.0
      %v6535 = vmax.f32 %v6407, 0.0
      %v6536 = vmax.f32 %v6408, 0.0
      %v6537 = vmax.f32 %v6409, 0.0
      %v6538 = vmax.f32 %v6410, 0.0
      %v6539 = vmax.f32 %v6411, 0.0
      %v6540 = vmax.f32 %v6412, 0.0
      %v6541 = vmax.f32 %v6413, 0.0
      %v6542 = vmax.f32 %v6414, 0.0
      %v6543 = vmax.f32 %v6415, 0.0
      %v6544 = vmax.f32 %v6416, 0.0
      %v6545 = vmax.f32 %v6417, 0.0
      %v6546 = vmax.f32 %v6418, 0.0
      %v6547 = vmax.f32 %v6419, 0.0
      %v6548 = vmax.f32 %v6420, 0.0
      %v6549 = vmax.f32 %v6421, 0.0
      %v6550 = vmax.f32 %v6422, 0.0
      %v6551 = vmax.f32 %v6423, 0.0
      %v6552 = vmax.f32 %v6424, 0.0
      %v6553 = vmax.f32 %v6425, 0.0
      %v6554 = vmax.f32 %v6426, 0.0
      %v6555 = vmax.f32 %v6427, 0.0
      %v6556 = vmax.f32 %v6428, 0.0
      %v6557 = vmax.f32 %v6429, 0.0
      %v6558 = vmax.f32 %v6430, 0.0
      %v6559 = vmax.f32 %v6431, 0.0
      %v6560 = vmax.f32 %v6432, 0.0
      %v6561 = vmax.f32 %v6433, 0.0
      %v6562 = vpack.c.bf16 %v6435, %v6434
      %v6563 = vpack.c.bf16 %v6437, %v6436
      %v6564 = vpack.c.bf16 %v6439, %v6438
      %v6565 = vpack.c.bf16 %v6441, %v6440
      %v6566 = vpack.c.bf16 %v6443, %v6442
      %v6567 = vpack.c.bf16 %v6445, %v6444
      %v6568 = vpack.c.bf16 %v6447, %v6446
      %v6569 = vpack.c.bf16 %v6449, %v6448
      %v6570 = vpack.c.bf16 %v6451, %v6450
      %v6571 = vpack.c.bf16 %v6453, %v6452
      %v6572 = vpack.c.bf16 %v6455, %v6454
      %v6573 = vpack.c.bf16 %v6457, %v6456
      %v6574 = vpack.c.bf16 %v6459, %v6458
      %v6575 = vpack.c.bf16 %v6461, %v6460
      %v6576 = vpack.c.bf16 %v6463, %v6462
      %v6577 = vpack.c.bf16 %v6465, %v6464
      %v6578 = vpack.c.bf16 %v6467, %v6466
      %v6579 = vpack.c.bf16 %v6469, %v6468
      %v6580 = vpack.c.bf16 %v6471, %v6470
      %v6581 = vpack.c.bf16 %v6473, %v6472
      %v6582 = vpack.c.bf16 %v6475, %v6474
      %v6583 = vpack.c.bf16 %v6477, %v6476
      %v6584 = vpack.c.bf16 %v6479, %v6478
      %v6585 = vpack.c.bf16 %v6481, %v6480
      %v6586 = vpack.c.bf16 %v6483, %v6482
      %v6587 = vpack.c.bf16 %v6485, %v6484
      %v6588 = vpack.c.bf16 %v6487, %v6486
      %v6589 = vpack.c.bf16 %v6489, %v6488
      %v6590 = vpack.c.bf16 %v6491, %v6490
      %v6591 = vpack.c.bf16 %v6493, %v6492
      %v6592 = vpack.c.bf16 %v6495, %v6494
      %v6593 = vpack.c.bf16 %v6497, %v6496
      %v6594 = vpack.c.bf16 %v6499, %v6498
      %v6595 = vpack.c.bf16 %v6501, %v6500
      %v6596 = vpack.c.bf16 %v6503, %v6502
      %v6597 = vpack.c.bf16 %v6505, %v6504
      %v6598 = vpack.c.bf16 %v6507, %v6506
      %v6599 = vpack.c.bf16 %v6509, %v6508
      %v6600 = vpack.c.bf16 %v6511, %v6510
      %v6601 = vpack.c.bf16 %v6513, %v6512
      %v6602 = vpack.c.bf16 %v6515, %v6514
      %v6603 = vpack.c.bf16 %v6517, %v6516
      %v6604 = vpack.c.bf16 %v6519, %v6518
      %v6605 = vpack.c.bf16 %v6521, %v6520
      %v6606 = vpack.c.bf16 %v6523, %v6522
      %v6607 = vpack.c.bf16 %v6525, %v6524
      %v6608 = vpack.c.bf16 %v6527, %v6526
      %v6609 = vpack.c.bf16 %v6529, %v6528
      %v6610 = vpack.c.bf16 %v6531, %v6530
      %v6611 = vpack.c.bf16 %v6533, %v6532
      %v6612 = vpack.c.bf16 %v6535, %v6534
      %v6613 = vpack.c.bf16 %v6537, %v6536
      %v6614 = vpack.c.bf16 %v6539, %v6538
      %v6615 = vpack.c.bf16 %v6541, %v6540
      %v6616 = vpack.c.bf16 %v6543, %v6542
      %v6617 = vpack.c.bf16 %v6545, %v6544
      %v6618 = vpack.c.bf16 %v6547, %v6546
      %v6619 = vpack.c.bf16 %v6549, %v6548
      %v6620 = vpack.c.bf16 %v6551, %v6550
      %v6621 = vpack.c.bf16 %v6553, %v6552
      %v6622 = vpack.c.bf16 %v6555, %v6554
      %v6623 = vpack.c.bf16 %v6557, %v6556
      %v6624 = vpack.c.bf16 %v6559, %v6558
      %v6625 = vpack.c.bf16 %v6561, %v6560
      %v6626 = vld [vmem:[%s5] sm:$0xf]
      %v6627 = vld [vmem:[%s5 + $0x4] sm:$0xf]
      %v6628 = vld [vmem:[%s5 + $0x8] sm:$0xf]
      %v6629 = vld [vmem:[%s5 + $0xc] sm:$0xf]
      %v6630 = vld [vmem:[%s5 + $0x10] sm:$0xf]
      %v6631 = vld [vmem:[%s5 + $0x14] sm:$0xf]
      %v6632 = vld [vmem:[%s5 + $0x18] sm:$0xf]
      %v6633 = vld [vmem:[%s5 + $0x1c] sm:$0xf]
      %v6634 = vld [vmem:[%s6] sm:$0x1]
      %v6636 = vlaneseq
      %v6637 = vshrl.u32 %v6636, 7
      %v6638 = vsub.s32 0, %v6637
      %v6639 = vrot.slane %v6634, %v6638
      %v6649 = vunpack.c.l.b16 %v6626
      %v6650 = vunpack.c.l.b16 %v6627
      %v6651 = vunpack.c.l.b16 %v6628
      %v6652 = vunpack.c.l.b16 %v6629
      %v6653 = vunpack.c.l.b16 %v6630
      %v6654 = vunpack.c.l.b16 %v6631
      %v6655 = vunpack.c.l.b16 %v6632
      %v6656 = vunpack.c.l.b16 %v6633
      %v6657 = vpack.c.b16 %v6650, %v6649
      %v6658 = vpack.c.b16 %v6652, %v6651
      %v6659 = vpack.c.b16 %v6654, %v6653
      %v6660 = vpack.c.b16 %v6656, %v6655
      %vm6665 = vcmask 523264
      %v6667 = vsel %vm6665, %v6562, 0
      %v6670 = vsel %vm6665, %v6563, 0
      %v6673 = vsel %vm6665, %v6564, 0
      %v6676 = vsel %vm6665, %v6565, 0
      %v6679 = vsel %vm6665, %v6566, 0
      %v6682 = vsel %vm6665, %v6567, 0
      %v6685 = vsel %vm6665, %v6568, 0
      %v6688 = vsel %vm6665, %v6569, 0
      %v6691 = vsel %vm6665, %v6570, 0
      %v6694 = vsel %vm6665, %v6571, 0
      %v6697 = vsel %vm6665, %v6572, 0
      %v6700 = vsel %vm6665, %v6573, 0
      %v6703 = vsel %vm6665, %v6574, 0
      %v6706 = vsel %vm6665, %v6575, 0
      %v6709 = vsel %vm6665, %v6576, 0
      %v6712 = vsel %vm6665, %v6577, 0
      %v6715 = vsel %vm6665, %v6578, 0
      %v6718 = vsel %vm6665, %v6579, 0
      %v6721 = vsel %vm6665, %v6580, 0
      %v6724 = vsel %vm6665, %v6581, 0
      %v6727 = vsel %vm6665, %v6582, 0
      %v6730 = vsel %vm6665, %v6583, 0
      %v6733 = vsel %vm6665, %v6584, 0
      %v6736 = vsel %vm6665, %v6585, 0
      %v6739 = vsel %vm6665, %v6586, 0
      %v6742 = vsel %vm6665, %v6587, 0
      %v6745 = vsel %vm6665, %v6588, 0
      %v6748 = vsel %vm6665, %v6589, 0
      %v6751 = vsel %vm6665, %v6590, 0
      %v6754 = vsel %vm6665, %v6591, 0
      %v6757 = vsel %vm6665, %v6592, 0
      %v6760 = vsel %vm6665, %v6593, 0
      %v6763 = vsel %vm6665, %v6594, 0
      %v6766 = vsel %vm6665, %v6595, 0
      %v6769 = vsel %vm6665, %v6596, 0
      %v6772 = vsel %vm6665, %v6597, 0
      %v6775 = vsel %vm6665, %v6598, 0
      %v6778 = vsel %vm6665, %v6599, 0
      %v6781 = vsel %vm6665, %v6600, 0
      %v6784 = vsel %vm6665, %v6601, 0
      %v6787 = vsel %vm6665, %v6602, 0
      %v6790 = vsel %vm6665, %v6603, 0
      %v6793 = vsel %vm6665, %v6604, 0
      %v6796 = vsel %vm6665, %v6605, 0
      %v6799 = vsel %vm6665, %v6606, 0
      %v6802 = vsel %vm6665, %v6607, 0
      %v6805 = vsel %vm6665, %v6608, 0
      %v6808 = vsel %vm6665, %v6609, 0
      %v6811 = vsel %vm6665, %v6610, 0
      %v6814 = vsel %vm6665, %v6611, 0
      %v6817 = vsel %vm6665, %v6612, 0
      %v6820 = vsel %vm6665, %v6613, 0
      %v6823 = vsel %vm6665, %v6614, 0
      %v6826 = vsel %vm6665, %v6615, 0
      %v6829 = vsel %vm6665, %v6616, 0
      %v6832 = vsel %vm6665, %v6617, 0
      %v6835 = vsel %vm6665, %v6618, 0
      %v6838 = vsel %vm6665, %v6619, 0
      %v6841 = vsel %vm6665, %v6620, 0
      %v6844 = vsel %vm6665, %v6621, 0
      %v6847 = vsel %vm6665, %v6622, 0
      %v6850 = vsel %vm6665, %v6623, 0
      %v6853 = vsel %vm6665, %v6624, 0
      %v6856 = vsel %vm6665, %v6625, 0
      %6858 = vmatprep.subr.bf16.mxu0 0
      %6859 = vmatpush1.bf16.msra.mxu0 %v6657
      %6860 = vmatprep.subr.bf16.mxu0 0
      %6861 = vmatpush1.bf16.msra.mxu0 %v6658
      %6862 = vmatprep.subr.bf16.mxu0 0
      %6863 = vmatpush1.bf16.msra.mxu0 %v6659
      %6864 = vmatprep.subr.bf16.mxu0 0
      %6865 = vmatpush1.bf16.msra.mxu0 %v6660
      %6866 = vmatprep.subr.bf16.mxu0 0
      %6867 = vmatpush1.bf16.msra.mxu0 0
      %6868 = vmatprep.subr.bf16.mxu0 0
      %6869 = vmatpush1.bf16.msra.mxu0 0
      %6870 = vmatprep.subr.bf16.mxu0 0
      %6871 = vmatpush1.bf16.msra.mxu0 0
      %6872 = vmatprep.subr.bf16.mxu0 0
      %6873 = vmatpush1.bf16.msra.mxu0 0
      %6874 = vmatprep.subr.bf16.mxu0 0
      %6875 = vmatpush1.bf16.msra.mxu0 0
      %6876 = vmatprep.subr.bf16.mxu0 0
      %6877 = vmatpush1.bf16.msra.mxu0 0
      %6878 = vmatprep.subr.bf16.mxu0 0
      %6879 = vmatpush1.bf16.msra.mxu0 0
      %6880 = vmatprep.subr.bf16.mxu0 0
      %6881 = vmatpush1.bf16.msra.mxu0 0
      %6882 = vmatprep.subr.bf16.mxu0 0
      %6883 = vmatpush1.bf16.msra.mxu0 0
      %6884 = vmatprep.subr.bf16.mxu0 0
      %6885 = vmatpush1.bf16.msra.mxu0 0
      %6886 = vmatprep.subr.bf16.mxu0 0
      %6887 = vmatpush1.bf16.msra.mxu0 0
      %6888 = vmatprep.subr.bf16.mxu0 0
      %6889 = vmatpush1.bf16.msra.mxu0 0
      %6890 = vmatprep.mubr.bf16.mxu0 0
      %6891 = vmatmul.mubr.bf16.gmra.mrb[0].mxu0 %v6667
      %v6892 = vpop.f32.mrb[0].mxu0
      %v6893 = vadd.f32 %v6639, %v6892
      %v6894 = vpop.f32.mrb[0].mxu0
      %v6895 = vpop.f32.mrb[0].mxu0
      %v6896 = vadd.f32 %v6639, %v6895
      %v6897 = vpop.f32.mrb[0].mxu0
      %6898 = vmatprep.mubr.bf16.mxu0 0
      %6899 = vmatmul.mubr.bf16.gmra.mrb[0].mxu0 %v6670
      %v6900 = vpop.f32.mrb[0].mxu0
      %v6901 = vadd.f32 %v6639, %v6900
      %v6902 = vpop.f32.mrb[0].mxu0
      %v6903 = vpop.f32.mrb[0].mxu0
      %v6904 = vadd.f32 %v6639, %v6903
      %v6905 = vpop.f32.mrb[0].mxu0
      %6906 = vmatprep.mubr.bf16.mxu0 0
      %6907 = vmatmul.mubr.bf16.gmra.mrb[0].mxu0 %v6673
      %v6908 = vpop.f32.mrb[0].mxu0
      %v6909 = vadd.f32 %v6639, %v6908
      %v6910 = vpop.f32.mrb[0].mxu0
      %v6911 = vpop.f32.mrb[0].mxu0
      %v6912 = vadd.f32 %v6639, %v6911
      %v6913 = vpop.f32.mrb[0].mxu0
      %6914 = vmatprep.mubr.bf16.mxu0 0
      %6915 = vmatmul.mubr.bf16.gmra.mrb[0].mxu0 %v6676
      %v6916 = vpop.f32.mrb[0].mxu0
      %v6917 = vadd.f32 %v6639, %v6916
      %v6918 = vpop.f32.mrb[0].mxu0
      %v6919 = vpop.f32.mrb[0].mxu0
      %v6920 = vadd.f32 %v6639, %v6919
      %v6921 = vpop.f32.mrb[0].mxu0
      %6922 = vmatprep.mubr.bf16.mxu0 0
      %6923 = vmatmul.mubr.bf16.gmra.mrb[0].mxu0 %v6679
      %v6924 = vpop.f32.mrb[0].mxu0
      %v6925 = vadd.f32 %v6639, %v6924
      %v6926 = vpop.f32.mrb[0].mxu0
      %v6927 = vpop.f32.mrb[0].mxu0
      %v6928 = vadd.f32 %v6639, %v6927
      %v6929 = vpop.f32.mrb[0].mxu0
      %6930 = vmatprep.mubr.bf16.mxu0 0
      %6931 = vmatmul.mubr.bf16.gmra.mrb[0].mxu0 %v6682
      %v6932 = vpop.f32.mrb[0].mxu0
      %v6933 = vadd.f32 %v6639, %v6932
      %v6934 = vpop.f32.mrb[0].mxu0
      %v6935 = vpop.f32.mrb[0].mxu0
      %v6936 = vadd.f32 %v6639, %v6935
      %v6937 = vpop.f32.mrb[0].mxu0
      %6938 = vmatprep.mubr.bf16.mxu0 0
      %6939 = vmatmul.mubr.bf16.gmra.mrb[0].mxu0 %v6685
      %v6940 = vpop.f32.mrb[0].mxu0
      %v6941 = vadd.f32 %v6639, %v6940
      %v6942 = vpop.f32.mrb[0].mxu0
      %v6943 = vpop.f32.mrb[0].mxu0
      %v6944 = vadd.f32 %v6639, %v6943
      %v6945 = vpop.f32.mrb[0].mxu0
      %6946 = vmatprep.mubr.bf16.mxu0 0
      %6947 = vmatmul.mubr.bf16.gmra.mrb[0].mxu0 %v6688
      %v6948 = vpop.f32.mrb[0].mxu0
      %v6949 = vadd.f32 %v6639, %v6948
      %v6950 = vpop.f32.mrb[0].mxu0
      %v6951 = vpop.f32.mrb[0].mxu0
      %v6952 = vadd.f32 %v6639, %v6951
      %v6953 = vpop.f32.mrb[0].mxu0
      %6954 = vmatprep.mubr.bf16.mxu0 0
      %6955 = vmatmul.mubr.bf16.gmra.mrb[0].mxu0 %v6691
      %v6956 = vpop.f32.mrb[0].mxu0
      %v6957 = vadd.f32 %v6639, %v6956
      %v6958 = vpop.f32.mrb[0].mxu0
      %v6959 = vpop.f32.mrb[0].mxu0
      %v6960 = vadd.f32 %v6639, %v6959
      %v6961 = vpop.f32.mrb[0].mxu0
      %6962 = vmatprep.mubr.bf16.mxu0 0
      %6963 = vmatmul.mubr.bf16.gmra.mrb[0].mxu0 %v6694
      %v6964 = vpop.f32.mrb[0].mxu0
      %v6965 = vadd.f32 %v6639, %v6964
      %v6966 = vpop.f32.mrb[0].mxu0
      %v6967 = vpop.f32.mrb[0].mxu0
      %v6968 = vadd.f32 %v6639, %v6967
      %v6969 = vpop.f32.mrb[0].mxu0
      %6970 = vmatprep.mubr.bf16.mxu0 0
      %6971 = vmatmul.mubr.bf16.gmra.mrb[0].mxu0 %v6697
      %v6972 = vpop.f32.mrb[0].mxu0
      %v6973 = vadd.f32 %v6639, %v6972
      %v6974 = vpop.f32.mrb[0].mxu0
      %v6975 = vpop.f32.mrb[0].mxu0
      %v6976 = vadd.f32 %v6639, %v6975
      %v6977 = vpop.f32.mrb[0].mxu0
      %6978 = vmatprep.mubr.bf16.mxu0 0
      %6979 = vmatmul.mubr.bf16.gmra.mrb[0].mxu0 %v6700
      %v6980 = vpop.f32.mrb[0].mxu0
      %v6981 = vadd.f32 %v6639, %v6980
      %v6982 = vpop.f32.mrb[0].mxu0
      %v6983 = vpop.f32.mrb[0].mxu0
      %v6984 = vadd.f32 %v6639, %v6983
      %v6985 = vpop.f32.mrb[0].mxu0
      %6986 = vmatprep.mubr.bf16.mxu0 0
      %6987 = vmatmul.mubr.bf16.gmra.mrb[0].mxu0 %v6703
      %v6988 = vpop.f32.mrb[0].mxu0
      %v6989 = vadd.f32 %v6639, %v6988
      %v6990 = vpop.f32.mrb[0].mxu0
      %v6991 = vpop.f32.mrb[0].mxu0
      %v6992 = vadd.f32 %v6639, %v6991
      %v6993 = vpop.f32.mrb[0].mxu0
      %6994 = vmatprep.mubr.bf16.mxu0 0
      %6995 = vmatmul.mubr.bf16.gmra.mrb[0].mxu0 %v6706
      %v6996 = vpop.f32.mrb[0].mxu0
      %v6997 = vadd.f32 %v6639, %v6996
      %v6998 = vpop.f32.mrb[0].mxu0
      %v6999 = vpop.f32.mrb[0].mxu0
      %v7000 = vadd.f32 %v6639, %v6999
      %v7001 = vpop.f32.mrb[0].mxu0
      %7002 = vmatprep.mubr.bf16.mxu0 0
      %7003 = vmatmul.mubr.bf16.gmra.mrb[0].mxu0 %v6709
      %v7004 = vpop.f32.mrb[0].mxu0
      %v7005 = vadd.f32 %v6639, %v7004
      %v7006 = vpop.f32.mrb[0].mxu0
      %v7007 = vpop.f32.mrb[0].mxu0
      %v7008 = vadd.f32 %v6639, %v7007
      %v7009 = vpop.f32.mrb[0].mxu0
      %7010 = vmatprep.mubr.bf16.mxu0 0
      %7011 = vmatmul.mubr.bf16.gmra.mrb[0].mxu0 %v6712
      %v7012 = vpop.f32.mrb[0].mxu0
      %v7013 = vadd.f32 %v6639, %v7012
      %v7014 = vpop.f32.mrb[0].mxu0
      %v7015 = vpop.f32.mrb[0].mxu0
      %v7016 = vadd.f32 %v6639, %v7015
      %v7017 = vpop.f32.mrb[0].mxu0
      %7018 = vmatprep.mubr.bf16.mxu0 0
      %7019 = vmatmul.mubr.bf16.gmra.mrb[0].mxu0 %v6715
      %v7020 = vpop.f32.mrb[0].mxu0
      %v7021 = vadd.f32 %v6639, %v7020
      %v7022 = vpop.f32.mrb[0].mxu0
      %v7023 = vpop.f32.mrb[0].mxu0
      %v7024 = vadd.f32 %v6639, %v7023
      %v7025 = vpop.f32.mrb[0].mxu0
      %7026 = vmatprep.mubr.bf16.mxu0 0
      %7027 = vmatmul.mubr.bf16.gmra.mrb[0].mxu0 %v6718
      %v7028 = vpop.f32.mrb[0].mxu0
      %v7029 = vadd.f32 %v6639, %v7028
      %v7030 = vpop.f32.mrb[0].mxu0
      %v7031 = vpop.f32.mrb[0].mxu0
      %v7032 = vadd.f32 %v6639, %v7031
      %v7033 = vpop.f32.mrb[0].mxu0
      %7034 = vmatprep.mubr.bf16.mxu0 0
      %7035 = vmatmul.mubr.bf16.gmra.mrb[0].mxu0 %v6721
      %v7036 = vpop.f32.mrb[0].mxu0
      %v7037 = vadd.f32 %v6639, %v7036
      %v7038 = vpop.f32.mrb[0].mxu0
      %v7039 = vpop.f32.mrb[0].mxu0
      %v7040 = vadd.f32 %v6639, %v7039
      %v7041 = vpop.f32.mrb[0].mxu0
      %7042 = vmatprep.mubr.bf16.mxu0 0
      %7043 = vmatmul.mubr.bf16.gmra.mrb[0].mxu0 %v6724
      %v7044 = vpop.f32.mrb[0].mxu0
      %v7045 = vadd.f32 %v6639, %v7044
      %v7046 = vpop.f32.mrb[0].mxu0
      %v7047 = vpop.f32.mrb[0].mxu0
      %v7048 = vadd.f32 %v6639, %v7047
      %v7049 = vpop.f32.mrb[0].mxu0
      %7050 = vmatprep.mubr.bf16.mxu0 0
      %7051 = vmatmul.mubr.bf16.gmra.mrb[0].mxu0 %v6727
      %v7052 = vpop.f32.mrb[0].mxu0
      %v7053 = vadd.f32 %v6639, %v7052
      %v7054 = vpop.f32.mrb[0].mxu0
      %v7055 = vpop.f32.mrb[0].mxu0
      %v7056 = vadd.f32 %v6639, %v7055
      %v7057 = vpop.f32.mrb[0].mxu0
      %7058 = vmatprep.mubr.bf16.mxu0 0
      %7059 = vmatmul.mubr.bf16.gmra.mrb[0].mxu0 %v6730
      %v7060 = vpop.f32.mrb[0].mxu0
      %v7061 = vadd.f32 %v6639, %v7060
      %v7062 = vpop.f32.mrb[0].mxu0
      %v7063 = vpop.f32.mrb[0].mxu0
      %v7064 = vadd.f32 %v6639, %v7063
      %v7065 = vpop.f32.mrb[0].mxu0
      %7066 = vmatprep.mubr.bf16.mxu0 0
      %7067 = vmatmul.mubr.bf16.gmra.mrb[0].mxu0 %v6733
      %v7068 = vpop.f32.mrb[0].mxu0
      %v7069 = vadd.f32 %v6639, %v7068
      %v7070 = vpop.f32.mrb[0].mxu0
      %v7071 = vpop.f32.mrb[0].mxu0
      %v7072 = vadd.f32 %v6639, %v7071
      %v7073 = vpop.f32.mrb[0].mxu0
      %7074 = vmatprep.mubr.bf16.mxu0 0
      %7075 = vmatmul.mubr.bf16.gmra.mrb[0].mxu0 %v6736
      %v7076 = vpop.f32.mrb[0].mxu0
      %v7077 = vadd.f32 %v6639, %v7076
      %v7078 = vpop.f32.mrb[0].mxu0
      %v7079 = vpop.f32.mrb[0].mxu0
      %v7080 = vadd.f32 %v6639, %v7079
      %v7081 = vpop.f32.mrb[0].mxu0
      %7082 = vmatprep.mubr.bf16.mxu0 0
      %7083 = vmatmul.mubr.bf16.gmra.mrb[0].mxu0 %v6739
      %v7084 = vpop.f32.mrb[0].mxu0
      %v7085 = vadd.f32 %v6639, %v7084
      %v7086 = vpop.f32.mrb[0].mxu0
      %v7087 = vpop.f32.mrb[0].mxu0
      %v7088 = vadd.f32 %v6639, %v7087
      %v7089 = vpop.f32.mrb[0].mxu0
      %7090 = vmatprep.mubr.bf16.mxu0 0
      %7091 = vmatmul.mubr.bf16.gmra.mrb[0].mxu0 %v6742
      %v7092 = vpop.f32.mrb[0].mxu0
      %v7093 = vadd.f32 %v6639, %v7092
      %v7094 = vpop.f32.mrb[0].mxu0
      %v7095 = vpop.f32.mrb[0].mxu0
      %v7096 = vadd.f32 %v6639, %v7095
      %v7097 = vpop.f32.mrb[0].mxu0
      %7098 = vmatprep.mubr.bf16.mxu0 0
      %7099 = vmatmul.mubr.bf16.gmra.mrb[0].mxu0 %v6745
      %v7100 = vpop.f32.mrb[0].mxu0
      %v7101 = vadd.f32 %v6639, %v7100
      %v7102 = vpop.f32.mrb[0].mxu0
      %v7103 = vpop.f32.mrb[0].mxu0
      %v7104 = vadd.f32 %v6639, %v7103
      %v7105 = vpop.f32.mrb[0].mxu0
      %7106 = vmatprep.mubr.bf16.mxu0 0
      %7107 = vmatmul.mubr.bf16.gmra.mrb[0].mxu0 %v6748
      %v7108 = vpop.f32.mrb[0].mxu0
      %v7109 = vadd.f32 %v6639, %v7108
      %v7110 = vpop.f32.mrb[0].mxu0
      %v7111 = vpop.f32.mrb[0].mxu0
      %v7112 = vadd.f32 %v6639, %v7111
      %v7113 = vpop.f32.mrb[0].mxu0
      %7114 = vmatprep.mubr.bf16.mxu0 0
      %7115 = vmatmul.mubr.bf16.gmra.mrb[0].mxu0 %v6751
      %v7116 = vpop.f32.mrb[0].mxu0
      %v7117 = vadd.f32 %v6639, %v7116
      %v7118 = vpop.f32.mrb[0].mxu0
      %v7119 = vpop.f32.mrb[0].mxu0
      %v7120 = vadd.f32 %v6639, %v7119
      %v7121 = vpop.f32.mrb[0].mxu0
      %7122 = vmatprep.mubr.bf16.mxu0 0
      %7123 = vmatmul.mubr.bf16.gmra.mrb[0].mxu0 %v6754
      %v7124 = vpop.f32.mrb[0].mxu0
      %v7125 = vadd.f32 %v6639, %v7124
      %v7126 = vpop.f32.mrb[0].mxu0
      %v7127 = vpop.f32.mrb[0].mxu0
      %v7128 = vadd.f32 %v6639, %v7127
      %v7129 = vpop.f32.mrb[0].mxu0
      %7130 = vmatprep.mubr.bf16.mxu0 0
      %7131 = vmatmul.mubr.bf16.gmra.mrb[0].mxu0 %v6757
      %v7132 = vpop.f32.mrb[0].mxu0
      %v7133 = vadd.f32 %v6639, %v7132
      %v7134 = vpop.f32.mrb[0].mxu0
      %v7135 = vpop.f32.mrb[0].mxu0
      %v7136 = vadd.f32 %v6639, %v7135
      %v7137 = vpop.f32.mrb[0].mxu0
      %7138 = vmatprep.mubr.bf16.mxu0 0
      %7139 = vmatmul.mubr.bf16.gmra.mrb[0].mxu0 %v6760
      %v7140 = vpop.f32.mrb[0].mxu0
      %v7141 = vadd.f32 %v6639, %v7140
      %v7142 = vpop.f32.mrb[0].mxu0
      %v7143 = vpop.f32.mrb[0].mxu0
      %v7144 = vadd.f32 %v6639, %v7143
      %v7145 = vpop.f32.mrb[0].mxu0
      %7146 = vmatprep.mubr.bf16.mxu0 0
      %7147 = vmatmul.mubr.bf16.gmra.mrb[0].mxu0 %v6763
      %v7148 = vpop.f32.mrb[0].mxu0
      %v7149 = vadd.f32 %v6639, %v7148
      %v7150 = vpop.f32.mrb[0].mxu0
      %v7151 = vpop.f32.mrb[0].mxu0
      %v7152 = vadd.f32 %v6639, %v7151
      %v7153 = vpop.f32.mrb[0].mxu0
      %7154 = vmatprep.mubr.bf16.mxu0 0
      %7155 = vmatmul.mubr.bf16.gmra.mrb[0].mxu0 %v6766
      %v7156 = vpop.f32.mrb[0].mxu0
      %v7157 = vadd.f32 %v6639, %v7156
      %v7158 = vpop.f32.mrb[0].mxu0
      %v7159 = vpop.f32.mrb[0].mxu0
      %v7160 = vadd.f32 %v6639, %v7159
      %v7161 = vpop.f32.mrb[0].mxu0
      %7162 = vmatprep.mubr.bf16.mxu0 0
      %7163 = vmatmul.mubr.bf16.gmra.mrb[0].mxu0 %v6769
      %v7164 = vpop.f32.mrb[0].mxu0
      %v7165 = vadd.f32 %v6639, %v7164
      %v7166 = vpop.f32.mrb[0].mxu0
      %v7167 = vpop.f32.mrb[0].mxu0
      %v7168 = vadd.f32 %v6639, %v7167
      %v7169 = vpop.f32.mrb[0].mxu0
      %7170 = vmatprep.mubr.bf16.mxu0 0
      %7171 = vmatmul.mubr.bf16.gmra.mrb[0].mxu0 %v6772
      %v7172 = vpop.f32.mrb[0].mxu0
      %v7173 = vadd.f32 %v6639, %v7172
      %v7174 = vpop.f32.mrb[0].mxu0
      %v7175 = vpop.f32.mrb[0].mxu0
      %v7176 = vadd.f32 %v6639, %v7175
      %v7177 = vpop.f32.mrb[0].mxu0
      %7178 = vmatprep.mubr.bf16.mxu0 0
      %7179 = vmatmul.mubr.bf16.gmra.mrb[0].mxu0 %v6775
      %v7180 = vpop.f32.mrb[0].mxu0
      %v7181 = vadd.f32 %v6639, %v7180
      %v7182 = vpop.f32.mrb[0].mxu0
      %v7183 = vpop.f32.mrb[0].mxu0
      %v7184 = vadd.f32 %v6639, %v7183
      %v7185 = vpop.f32.mrb[0].mxu0
      %7186 = vmatprep.mubr.bf16.mxu0 0
      %7187 = vmatmul.mubr.bf16.gmra.mrb[0].mxu0 %v6778
      %v7188 = vpop.f32.mrb[0].mxu0
      %v7189 = vadd.f32 %v6639, %v7188
      %v7190 = vpop.f32.mrb[0].mxu0
      %v7191 = vpop.f32.mrb[0].mxu0
      %v7192 = vadd.f32 %v6639, %v7191
      %v7193 = vpop.f32.mrb[0].mxu0
      %7194 = vmatprep.mubr.bf16.mxu0 0
      %7195 = vmatmul.mubr.bf16.gmra.mrb[0].mxu0 %v6781
      %v7196 = vpop.f32.mrb[0].mxu0
      %v7197 = vadd.f32 %v6639, %v7196
      %v7198 = vpop.f32.mrb[0].mxu0
      %v7199 = vpop.f32.mrb[0].mxu0
      %v7200 = vadd.f32 %v6639, %v7199
      %v7201 = vpop.f32.mrb[0].mxu0
      %7202 = vmatprep.mubr.bf16.mxu0 0
      %7203 = vmatmul.mubr.bf16.gmra.mrb[0].mxu0 %v6784
      %v7204 = vpop.f32.mrb[0].mxu0
      %v7205 = vadd.f32 %v6639, %v7204
      %v7206 = vpop.f32.mrb[0].mxu0
      %v7207 = vpop.f32.mrb[0].mxu0
      %v7208 = vadd.f32 %v6639, %v7207
      %v7209 = vpop.f32.mrb[0].mxu0
      %7210 = vmatprep.mubr.bf16.mxu0 0
      %7211 = vmatmul.mubr.bf16.gmra.mrb[0].mxu0 %v6787
      %v7212 = vpop.f32.mrb[0].mxu0
      %v7213 = vadd.f32 %v6639, %v7212
      %v7214 = vpop.f32.mrb[0].mxu0
      %v7215 = vpop.f32.mrb[0].mxu0
      %v7216 = vadd.f32 %v6639, %v7215
      %v7217 = vpop.f32.mrb[0].mxu0
      %7218 = vmatprep.mubr.bf16.mxu0 0
      %7219 = vmatmul.mubr.bf16.gmra.mrb[0].mxu0 %v6790
      %v7220 = vpop.f32.mrb[0].mxu0
      %v7221 = vadd.f32 %v6639, %v7220
      %v7222 = vpop.f32.mrb[0].mxu0
      %v7223 = vpop.f32.mrb[0].mxu0
      %v7224 = vadd.f32 %v6639, %v7223
      %v7225 = vpop.f32.mrb[0].mxu0
      %7226 = vmatprep.mubr.bf16.mxu0 0
      %7227 = vmatmul.mubr.bf16.gmra.mrb[0].mxu0 %v6793
      %v7228 = vpop.f32.mrb[0].mxu0
      %v7229 = vadd.f32 %v6639, %v7228
      %v7230 = vpop.f32.mrb[0].mxu0
      %v7231 = vpop.f32.mrb[0].mxu0
      %v7232 = vadd.f32 %v6639, %v7231
      %v7233 = vpop.f32.mrb[0].mxu0
      %7234 = vmatprep.mubr.bf16.mxu0 0
      %7235 = vmatmul.mubr.bf16.gmra.mrb[0].mxu0 %v6796
      %v7236 = vpop.f32.mrb[0].mxu0
      %v7237 = vadd.f32 %v6639, %v7236
      %v7238 = vpop.f32.mrb[0].mxu0
      %v7239 = vpop.f32.mrb[0].mxu0
      %v7240 = vadd.f32 %v6639, %v7239
      %v7241 = vpop.f32.mrb[0].mxu0
      %7242 = vmatprep.mubr.bf16.mxu0 0
      %7243 = vmatmul.mubr.bf16.gmra.mrb[0].mxu0 %v6799
      %v7244 = vpop.f32.mrb[0].mxu0
      %v7245 = vadd.f32 %v6639, %v7244
      %v7246 = vpop.f32.mrb[0].mxu0
      %v7247 = vpop.f32.mrb[0].mxu0
      %v7248 = vadd.f32 %v6639, %v7247
      %v7249 = vpop.f32.mrb[0].mxu0
      %7250 = vmatprep.mubr.bf16.mxu0 0
      %7251 = vmatmul.mubr.bf16.gmra.mrb[0].mxu0 %v6802
      %v7252 = vpop.f32.mrb[0].mxu0
      %v7253 = vadd.f32 %v6639, %v7252
      %v7254 = vpop.f32.mrb[0].mxu0
      %v7255 = vpop.f32.mrb[0].mxu0
      %v7256 = vadd.f32 %v6639, %v7255
      %v7257 = vpop.f32.mrb[0].mxu0
      %7258 = vmatprep.mubr.bf16.mxu0 0
      %7259 = vmatmul.mubr.bf16.gmra.mrb[0].mxu0 %v6805
      %v7260 = vpop.f32.mrb[0].mxu0
      %v7261 = vadd.f32 %v6639, %v7260
      %v7262 = vpop.f32.mrb[0].mxu0
      %v7263 = vpop.f32.mrb[0].mxu0
      %v7264 = vadd.f32 %v6639, %v7263
      %v7265 = vpop.f32.mrb[0].mxu0
      %7266 = vmatprep.mubr.bf16.mxu0 0
      %7267 = vmatmul.mubr.bf16.gmra.mrb[0].mxu0 %v6808
      %v7268 = vpop.f32.mrb[0].mxu0
      %v7269 = vadd.f32 %v6639, %v7268
      %v7270 = vpop.f32.mrb[0].mxu0
      %v7271 = vpop.f32.mrb[0].mxu0
      %v7272 = vadd.f32 %v6639, %v7271
      %v7273 = vpop.f32.mrb[0].mxu0
      %7274 = vmatprep.mubr.bf16.mxu0 0
      %7275 = vmatmul.mubr.bf16.gmra.mrb[0].mxu0 %v6811
      %v7276 = vpop.f32.mrb[0].mxu0
      %v7277 = vadd.f32 %v6639, %v7276
      %v7278 = vpop.f32.mrb[0].mxu0
      %v7279 = vpop.f32.mrb[0].mxu0
      %v7280 = vadd.f32 %v6639, %v7279
      %v7281 = vpop.f32.mrb[0].mxu0
      %7282 = vmatprep.mubr.bf16.mxu0 0
      %7283 = vmatmul.mubr.bf16.gmra.mrb[0].mxu0 %v6814
      %v7284 = vpop.f32.mrb[0].mxu0
      %v7285 = vadd.f32 %v6639, %v7284
      %v7286 = vpop.f32.mrb[0].mxu0
      %v7287 = vpop.f32.mrb[0].mxu0
      %v7288 = vadd.f32 %v6639, %v7287
      %v7289 = vpop.f32.mrb[0].mxu0
      %7290 = vmatprep.mubr.bf16.mxu0 0
      %7291 = vmatmul.mubr.bf16.gmra.mrb[0].mxu0 %v6817
      %v7292 = vpop.f32.mrb[0].mxu0
      %v7293 = vadd.f32 %v6639, %v7292
      %v7294 = vpop.f32.mrb[0].mxu0
      %v7295 = vpop.f32.mrb[0].mxu0
      %v7296 = vadd.f32 %v6639, %v7295
      %v7297 = vpop.f32.mrb[0].mxu0
      %7298 = vmatprep.mubr.bf16.mxu0 0
      %7299 = vmatmul.mubr.bf16.gmra.mrb[0].mxu0 %v6820
      %v7300 = vpop.f32.mrb[0].mxu0
      %v7301 = vadd.f32 %v6639, %v7300
      %v7302 = vpop.f32.mrb[0].mxu0
      %v7303 = vpop.f32.mrb[0].mxu0
      %v7304 = vadd.f32 %v6639, %v7303
      %v7305 = vpop.f32.mrb[0].mxu0
      %7306 = vmatprep.mubr.bf16.mxu0 0
      %7307 = vmatmul.mubr.bf16.gmra.mrb[0].mxu0 %v6823
      %v7308 = vpop.f32.mrb[0].mxu0
      %v7309 = vadd.f32 %v6639, %v7308
      %v7310 = vpop.f32.mrb[0].mxu0
      %v7311 = vpop.f32.mrb[0].mxu0
      %v7312 = vadd.f32 %v6639, %v7311
      %v7313 = vpop.f32.mrb[0].mxu0
      %7314 = vmatprep.mubr.bf16.mxu0 0
      %7315 = vmatmul.mubr.bf16.gmra.mrb[0].mxu0 %v6826
      %v7316 = vpop.f32.mrb[0].mxu0
      %v7317 = vadd.f32 %v6639, %v7316
      %v7318 = vpop.f32.mrb[0].mxu0
      %v7319 = vpop.f32.mrb[0].mxu0
      %v7320 = vadd.f32 %v6639, %v7319
      %v7321 = vpop.f32.mrb[0].mxu0
      %7322 = vmatprep.mubr.bf16.mxu0 0
      %7323 = vmatmul.mubr.bf16.gmra.mrb[0].mxu0 %v6829
      %v7324 = vpop.f32.mrb[0].mxu0
      %v7325 = vadd.f32 %v6639, %v7324
      %v7326 = vpop.f32.mrb[0].mxu0
      %v7327 = vpop.f32.mrb[0].mxu0
      %v7328 = vadd.f32 %v6639, %v7327
      %v7329 = vpop.f32.mrb[0].mxu0
      %7330 = vmatprep.mubr.bf16.mxu0 0
      %7331 = vmatmul.mubr.bf16.gmra.mrb[0].mxu0 %v6832
      %v7332 = vpop.f32.mrb[0].mxu0
      %v7333 = vadd.f32 %v6639, %v7332
      %v7334 = vpop.f32.mrb[0].mxu0
      %v7335 = vpop.f32.mrb[0].mxu0
      %v7336 = vadd.f32 %v6639, %v7335
      %v7337 = vpop.f32.mrb[0].mxu0
      %7338 = vmatprep.mubr.bf16.mxu0 0
      %7339 = vmatmul.mubr.bf16.gmra.mrb[0].mxu0 %v6835
      %v7340 = vpop.f32.mrb[0].mxu0
      %v7341 = vadd.f32 %v6639, %v7340
      %v7342 = vpop.f32.mrb[0].mxu0
      %v7343 = vpop.f32.mrb[0].mxu0
      %v7344 = vadd.f32 %v6639, %v7343
      %v7345 = vpop.f32.mrb[0].mxu0
      %7346 = vmatprep.mubr.bf16.mxu0 0
      %7347 = vmatmul.mubr.bf16.gmra.mrb[0].mxu0 %v6838
      %v7348 = vpop.f32.mrb[0].mxu0
      %v7349 = vadd.f32 %v6639, %v7348
      %v7350 = vpop.f32.mrb[0].mxu0
      %v7351 = vpop.f32.mrb[0].mxu0
      %v7352 = vadd.f32 %v6639, %v7351
      %v7353 = vpop.f32.mrb[0].mxu0
      %7354 = vmatprep.mubr.bf16.mxu0 0
      %7355 = vmatmul.mubr.bf16.gmra.mrb[0].mxu0 %v6841
      %v7356 = vpop.f32.mrb[0].mxu0
      %v7357 = vadd.f32 %v6639, %v7356
      %v7358 = vpop.f32.mrb[0].mxu0
      %v7359 = vpop.f32.mrb[0].mxu0
      %v7360 = vadd.f32 %v6639, %v7359
      %v7361 = vpop.f32.mrb[0].mxu0
      %7362 = vmatprep.mubr.bf16.mxu0 0
      %7363 = vmatmul.mubr.bf16.gmra.mrb[0].mxu0 %v6844
      %v7364 = vpop.f32.mrb[0].mxu0
      %v7365 = vadd.f32 %v6639, %v7364
      %v7366 = vpop.f32.mrb[0].mxu0
      %v7367 = vpop.f32.mrb[0].mxu0
      %v7368 = vadd.f32 %v6639, %v7367
      %v7369 = vpop.f32.mrb[0].mxu0
      %7370 = vmatprep.mubr.bf16.mxu0 0
      %7371 = vmatmul.mubr.bf16.gmra.mrb[0].mxu0 %v6847
      %v7372 = vpop.f32.mrb[0].mxu0
      %v7373 = vadd.f32 %v6639, %v7372
      %v7374 = vpop.f32.mrb[0].mxu0
      %v7375 = vpop.f32.mrb[0].mxu0
      %v7376 = vadd.f32 %v6639, %v7375
      %v7377 = vpop.f32.mrb[0].mxu0
      %7378 = vmatprep.mubr.bf16.mxu0 0
      %7379 = vmatmul.mubr.bf16.gmra.mrb[0].mxu0 %v6850
      %v7380 = vpop.f32.mrb[0].mxu0
      %v7381 = vadd.f32 %v6639, %v7380
      %v7382 = vpop.f32.mrb[0].mxu0
      %v7383 = vpop.f32.mrb[0].mxu0
      %v7384 = vadd.f32 %v6639, %v7383
      %v7385 = vpop.f32.mrb[0].mxu0
      %7386 = vmatprep.mubr.bf16.mxu0 0
      %7387 = vmatmul.mubr.bf16.gmra.mrb[0].mxu0 %v6853
      %v7388 = vpop.f32.mrb[0].mxu0
      %v7389 = vadd.f32 %v6639, %v7388
      %v7390 = vpop.f32.mrb[0].mxu0
      %v7391 = vpop.f32.mrb[0].mxu0
      %v7392 = vadd.f32 %v6639, %v7391
      %v7393 = vpop.f32.mrb[0].mxu0
      %7394 = vmatprep.mubr.bf16.mxu0 0
      %7395 = vmatmul.mubr.bf16.gmra.mrb[0].mxu0 %v6856
      %v7396 = vpop.f32.mrb[0].mxu0
      %v7397 = vadd.f32 %v6639, %v7396
      %v7398 = vpop.f32.mrb[0].mxu0
      %v7399 = vpop.f32.mrb[0].mxu0
      %v7400 = vadd.f32 %v6639, %v7399
      %v7401 = vpop.f32.mrb[0].mxu0
      %7402 = vdwg.mxu0
      %v7403 = vmax.f32 %v6893, 0.0
      %v7404 = vmax.f32 %v6896, 0.0
      %v7405 = vmax.f32 %v6901, 0.0
      %v7406 = vmax.f32 %v6904, 0.0
      %v7407 = vmax.f32 %v6909, 0.0
      %v7408 = vmax.f32 %v6912, 0.0
      %v7409 = vmax.f32 %v6917, 0.0
      %v7410 = vmax.f32 %v6920, 0.0
      %v7411 = vmax.f32 %v6925, 0.0
      %v7412 = vmax.f32 %v6928, 0.0
      %v7413 = vmax.f32 %v6933, 0.0
      %v7414 = vmax.f32 %v6936, 0.0
      %v7415 = vmax.f32 %v6941, 0.0
      %v7416 = vmax.f32 %v6944, 0.0
      %v7417 = vmax.f32 %v6949, 0.0
      %v7418 = vmax.f32 %v6952, 0.0
      %v7419 = vmax.f32 %v6957, 0.0
      %v7420 = vmax.f32 %v6960, 0.0
      %v7421 = vmax.f32 %v6965, 0.0
      %v7422 = vmax.f32 %v6968, 0.0
      %v7423 = vmax.f32 %v6973, 0.0
      %v7424 = vmax.f32 %v6976, 0.0
      %v7425 = vmax.f32 %v6981, 0.0
      %v7426 = vmax.f32 %v6984, 0.0
      %v7427 = vmax.f32 %v6989, 0.0
      %v7428 = vmax.f32 %v6992, 0.0
      %v7429 = vmax.f32 %v6997, 0.0
      %v7430 = vmax.f32 %v7000, 0.0
      %v7431 = vmax.f32 %v7005, 0.0
      %v7432 = vmax.f32 %v7008, 0.0
      %v7433 = vmax.f32 %v7013, 0.0
      %v7434 = vmax.f32 %v7016, 0.0
      %v7435 = vmax.f32 %v7021, 0.0
      %v7436 = vmax.f32 %v7024, 0.0
      %v7437 = vmax.f32 %v7029, 0.0
      %v7438 = vmax.f32 %v7032, 0.0
      %v7439 = vmax.f32 %v7037, 0.0
      %v7440 = vmax.f32 %v7040, 0.0
      %v7441 = vmax.f32 %v7045, 0.0
      %v7442 = vmax.f32 %v7048, 0.0
      %v7443 = vmax.f32 %v7053, 0.0
      %v7444 = vmax.f32 %v7056, 0.0
      %v7445 = vmax.f32 %v7061, 0.0
      %v7446 = vmax.f32 %v7064, 0.0
      %v7447 = vmax.f32 %v7069, 0.0
      %v7448 = vmax.f32 %v7072, 0.0
      %v7449 = vmax.f32 %v7077, 0.0
      %v7450 = vmax.f32 %v7080, 0.0
      %v7451 = vmax.f32 %v7085, 0.0
      %v7452 = vmax.f32 %v7088, 0.0
      %v7453 = vmax.f32 %v7093, 0.0
      %v7454 = vmax.f32 %v7096, 0.0
      %v7455 = vmax.f32 %v7101, 0.0
      %v7456 = vmax.f32 %v7104, 0.0
      %v7457 = vmax.f32 %v7109, 0.0
      %v7458 = vmax.f32 %v7112, 0.0
      %v7459 = vmax.f32 %v7117, 0.0
      %v7460 = vmax.f32 %v7120, 0.0
      %v7461 = vmax.f32 %v7125, 0.0
      %v7462 = vmax.f32 %v7128, 0.0
      %v7463 = vmax.f32 %v7133, 0.0
      %v7464 = vmax.f32 %v7136, 0.0
      %v7465 = vmax.f32 %v7141, 0.0
      %v7466 = vmax.f32 %v7144, 0.0
      %v7467 = vmax.f32 %v7149, 0.0
      %v7468 = vmax.f32 %v7152, 0.0
      %v7469 = vmax.f32 %v7157, 0.0
      %v7470 = vmax.f32 %v7160, 0.0
      %v7471 = vmax.f32 %v7165, 0.0
      %v7472 = vmax.f32 %v7168, 0.0
      %v7473 = vmax.f32 %v7173, 0.0
      %v7474 = vmax.f32 %v7176, 0.0
      %v7475 = vmax.f32 %v7181, 0.0
      %v7476 = vmax.f32 %v7184, 0.0
      %v7477 = vmax.f32 %v7189, 0.0
      %v7478 = vmax.f32 %v7192, 0.0
      %v7479 = vmax.f32 %v7197, 0.0
      %v7480 = vmax.f32 %v7200, 0.0
      %v7481 = vmax.f32 %v7205, 0.0
      %v7482 = vmax.f32 %v7208, 0.0
      %v7483 = vmax.f32 %v7213, 0.0
      %v7484 = vmax.f32 %v7216, 0.0
      %v7485 = vmax.f32 %v7221, 0.0
      %v7486 = vmax.f32 %v7224, 0.0
      %v7487 = vmax.f32 %v7229, 0.0
      %v7488 = vmax.f32 %v7232, 0.0
      %v7489 = vmax.f32 %v7237, 0.0
      %v7490 = vmax.f32 %v7240, 0.0
      %v7491 = vmax.f32 %v7245, 0.0
      %v7492 = vmax.f32 %v7248, 0.0
      %v7493 = vmax.f32 %v7253, 0.0
      %v7494 = vmax.f32 %v7256, 0.0
      %v7495 = vmax.f32 %v7261, 0.0
      %v7496 = vmax.f32 %v7264, 0.0
      %v7497 = vmax.f32 %v7269, 0.0
      %v7498 = vmax.f32 %v7272, 0.0
      %v7499 = vmax.f32 %v7277, 0.0
      %v7500 = vmax.f32 %v7280, 0.0
      %v7501 = vmax.f32 %v7285, 0.0
      %v7502 = vmax.f32 %v7288, 0.0
      %v7503 = vmax.f32 %v7293, 0.0
      %v7504 = vmax.f32 %v7296, 0.0
      %v7505 = vmax.f32 %v7301, 0.0
      %v7506 = vmax.f32 %v7304, 0.0
      %v7507 = vmax.f32 %v7309, 0.0
      %v7508 = vmax.f32 %v7312, 0.0
      %v7509 = vmax.f32 %v7317, 0.0
      %v7510 = vmax.f32 %v7320, 0.0
      %v7511 = vmax.f32 %v7325, 0.0
      %v7512 = vmax.f32 %v7328, 0.0
      %v7513 = vmax.f32 %v7333, 0.0
      %v7514 = vmax.f32 %v7336, 0.0
      %v7515 = vmax.f32 %v7341, 0.0
      %v7516 = vmax.f32 %v7344, 0.0
      %v7517 = vmax.f32 %v7349, 0.0
      %v7518 = vmax.f32 %v7352, 0.0
      %v7519 = vmax.f32 %v7357, 0.0
      %v7520 = vmax.f32 %v7360, 0.0
      %v7521 = vmax.f32 %v7365, 0.0
      %v7522 = vmax.f32 %v7368, 0.0
      %v7523 = vmax.f32 %v7373, 0.0
      %v7524 = vmax.f32 %v7376, 0.0
      %v7525 = vmax.f32 %v7381, 0.0
      %v7526 = vmax.f32 %v7384, 0.0
      %v7527 = vmax.f32 %v7389, 0.0
      %v7528 = vmax.f32 %v7392, 0.0
      %v7529 = vmax.f32 %v7397, 0.0
      %v7530 = vmax.f32 %v7400, 0.0
      %v7531 = vpack.c.bf16 %v7404, %v7403
      %v7532 = vpack.c.bf16 %v7406, %v7405
      %v7533 = vpack.c.bf16 %v7408, %v7407
      %v7534 = vpack.c.bf16 %v7410, %v7409
      %v7535 = vpack.c.bf16 %v7412, %v7411
      %v7536 = vpack.c.bf16 %v7414, %v7413
      %v7537 = vpack.c.bf16 %v7416, %v7415
      %v7538 = vpack.c.bf16 %v7418, %v7417
      %v7539 = vpack.c.bf16 %v7420, %v7419
      %v7540 = vpack.c.bf16 %v7422, %v7421
      %v7541 = vpack.c.bf16 %v7424, %v7423
      %v7542 = vpack.c.bf16 %v7426, %v7425
      %v7543 = vpack.c.bf16 %v7428, %v7427
      %v7544 = vpack.c.bf16 %v7430, %v7429
      %v7545 = vpack.c.bf16 %v7432, %v7431
      %v7546 = vpack.c.bf16 %v7434, %v7433
      %v7547 = vpack.c.bf16 %v7436, %v7435
      %v7548 = vpack.c.bf16 %v7438, %v7437
      %v7549 = vpack.c.bf16 %v7440, %v7439
      %v7550 = vpack.c.bf16 %v7442, %v7441
      %v7551 = vpack.c.bf16 %v7444, %v7443
      %v7552 = vpack.c.bf16 %v7446, %v7445
      %v7553 = vpack.c.bf16 %v7448, %v7447
      %v7554 = vpack.c.bf16 %v7450, %v7449
      %v7555 = vpack.c.bf16 %v7452, %v7451
      %v7556 = vpack.c.bf16 %v7454, %v7453
      %v7557 = vpack.c.bf16 %v7456, %v7455
      %v7558 = vpack.c.bf16 %v7458, %v7457
      %v7559 = vpack.c.bf16 %v7460, %v7459
      %v7560 = vpack.c.bf16 %v7462, %v7461
      %v7561 = vpack.c.bf16 %v7464, %v7463
      %v7562 = vpack.c.bf16 %v7466, %v7465
      %v7563 = vpack.c.bf16 %v7468, %v7467
      %v7564 = vpack.c.bf16 %v7470, %v7469
      %v7565 = vpack.c.bf16 %v7472, %v7471
      %v7566 = vpack.c.bf16 %v7474, %v7473
      %v7567 = vpack.c.bf16 %v7476, %v7475
      %v7568 = vpack.c.bf16 %v7478, %v7477
      %v7569 = vpack.c.bf16 %v7480, %v7479
      %v7570 = vpack.c.bf16 %v7482, %v7481
      %v7571 = vpack.c.bf16 %v7484, %v7483
      %v7572 = vpack.c.bf16 %v7486, %v7485
      %v7573 = vpack.c.bf16 %v7488, %v7487
      %v7574 = vpack.c.bf16 %v7490, %v7489
      %v7575 = vpack.c.bf16 %v7492, %v7491
      %v7576 = vpack.c.bf16 %v7494, %v7493
      %v7577 = vpack.c.bf16 %v7496, %v7495
      %v7578 = vpack.c.bf16 %v7498, %v7497
      %v7579 = vpack.c.bf16 %v7500, %v7499
      %v7580 = vpack.c.bf16 %v7502, %v7501
      %v7581 = vpack.c.bf16 %v7504, %v7503
      %v7582 = vpack.c.bf16 %v7506, %v7505
      %v7583 = vpack.c.bf16 %v7508, %v7507
      %v7584 = vpack.c.bf16 %v7510, %v7509
      %v7585 = vpack.c.bf16 %v7512, %v7511
      %v7586 = vpack.c.bf16 %v7514, %v7513
      %v7587 = vpack.c.bf16 %v7516, %v7515
      %v7588 = vpack.c.bf16 %v7518, %v7517
      %v7589 = vpack.c.bf16 %v7520, %v7519
      %v7590 = vpack.c.bf16 %v7522, %v7521
      %v7591 = vpack.c.bf16 %v7524, %v7523
      %v7592 = vpack.c.bf16 %v7526, %v7525
      %v7593 = vpack.c.bf16 %v7528, %v7527
      %v7594 = vpack.c.bf16 %v7530, %v7529
      %v7595 = vld [vmem:[%s7] sm:$0xf]
      %v7596 = vld [vmem:[%s7 + $0x4] sm:$0xf]
      %v7597 = vld [vmem:[%s7 + $0x8] sm:$0xf]
      %v7598 = vld [vmem:[%s7 + $0xc] sm:$0xf]
      %v7599 = vld [vmem:[%s7 + $0x10] sm:$0xf]
      %v7600 = vld [vmem:[%s7 + $0x14] sm:$0xf]
      %v7601 = vld [vmem:[%s7 + $0x18] sm:$0xf]
      %v7602 = vld [vmem:[%s7 + $0x1c] sm:$0xf]
      %v7603 = vld [vmem:[%s7 + $0x20] sm:$0xf]
      %v7604 = vld [vmem:[%s7 + $0x24] sm:$0xf]
      %v7605 = vld [vmem:[%s7 + $0x28] sm:$0xf]
      %v7606 = vld [vmem:[%s7 + $0x2c] sm:$0xf]
      %v7607 = vld [vmem:[%s7 + $0x30] sm:$0xf]
      %v7608 = vld [vmem:[%s7 + $0x34] sm:$0xf]
      %v7609 = vld [vmem:[%s7 + $0x38] sm:$0xf]
      %v7610 = vld [vmem:[%s7 + $0x3c] sm:$0xf]
      %v7611 = vld [vmem:[%s7 + $0x40] sm:$0xf]
      %v7612 = vld [vmem:[%s7 + $0x44] sm:$0xf]
      %v7613 = vld [vmem:[%s7 + $0x48] sm:$0xf]
      %v7614 = vld [vmem:[%s7 + $0x4c] sm:$0xf]
      %v7615 = vld [vmem:[%s7 + $0x50] sm:$0xf]
      %v7616 = vld [vmem:[%s7 + $0x54] sm:$0xf]
      %v7617 = vld [vmem:[%s7 + $0x58] sm:$0xf]
      %v7618 = vld [vmem:[%s7 + $0x5c] sm:$0xf]
      %v7619 = vld [vmem:[%s8] sm:$0x1]
      %v7621 = vlaneseq
      %v7622 = vshrl.u32 %v7621, 7
      %v7623 = vsub.s32 0, %v7622
      %v7624 = vrot.slane %v7619, %v7623
      %v7650 = vunpack.c.l.b16 %v7595
      %v7651 = vunpack.c.l.b16 %v7596
      %v7652 = vunpack.c.l.b16 %v7597
      %v7653 = vunpack.c.l.b16 %v7598
      %v7654 = vunpack.c.l.b16 %v7599
      %v7655 = vunpack.c.l.b16 %v7600
      %v7656 = vunpack.c.l.b16 %v7601
      %v7657 = vunpack.c.l.b16 %v7602
      %v7658 = vunpack.c.l.b16 %v7603
      %v7659 = vunpack.c.l.b16 %v7604
      %v7660 = vunpack.c.l.b16 %v7605
      %v7661 = vunpack.c.l.b16 %v7606
      %v7662 = vunpack.c.l.b16 %v7607
      %v7663 = vunpack.c.l.b16 %v7608
      %v7664 = vunpack.c.l.b16 %v7609
      %v7665 = vunpack.c.l.b16 %v7610
      %v7666 = vunpack.c.l.b16 %v7611
      %v7667 = vunpack.c.l.b16 %v7612
      %v7668 = vunpack.c.l.b16 %v7613
      %v7669 = vunpack.c.l.b16 %v7614
      %v7670 = vunpack.c.l.b16 %v7615
      %v7671 = vunpack.c.l.b16 %v7616
      %v7672 = vunpack.c.l.b16 %v7617
      %v7673 = vunpack.c.l.b16 %v7618
      %v7674 = vpack.c.b16 %v7651, %v7650
      %v7675 = vpack.c.b16 %v7653, %v7652
      %v7676 = vpack.c.b16 %v7655, %v7654
      %v7677 = vpack.c.b16 %v7657, %v7656
      %v7678 = vpack.c.b16 %v7659, %v7658
      %v7679 = vpack.c.b16 %v7661, %v7660
      %v7680 = vpack.c.b16 %v7663, %v7662
      %v7681 = vpack.c.b16 %v7665, %v7664
      %v7682 = vpack.c.b16 %v7667, %v7666
      %v7683 = vpack.c.b16 %v7669, %v7668
      %v7684 = vpack.c.b16 %v7671, %v7670
      %v7685 = vpack.c.b16 %v7673, %v7672
      %7698 = vmatprep.subr.bf16.mxu0 0
      %7699 = vmatpush1.bf16.msra.mxu0 %v7674
      %7700 = vmatprep.subr.bf16.mxu0 0
      %7701 = vmatpush1.bf16.msra.mxu0 %v7675
      %7702 = vmatprep.subr.bf16.mxu0 0
      %7703 = vmatpush1.bf16.msra.mxu0 %v7676
      %7704 = vmatprep.subr.bf16.mxu0 0
      %7705 = vmatpush1.bf16.msra.mxu0 %v7677
      %7706 = vmatprep.subr.bf16.mxu0 0
      %7707 = vmatpush1.bf16.msra.mxu0 %v7678
      %7708 = vmatprep.subr.bf16.mxu0 0
      %7709 = vmatpush1.bf16.msra.mxu0 %v7679
      %7710 = vmatprep.subr.bf16.mxu0 0
      %7711 = vmatpush1.bf16.msra.mxu0 %v7680
      %7712 = vmatprep.subr.bf16.mxu0 0
      %7713 = vmatpush1.bf16.msra.mxu0 %v7681
      %7714 = vmatprep.subr.bf16.mxu0 0
      %7715 = vmatpush1.bf16.msra.mxu0 %v7682
      %7716 = vmatprep.subr.bf16.mxu0 0
      %7717 = vmatpush1.bf16.msra.mxu0 %v7683
      %7718 = vmatprep.subr.bf16.mxu0 0
      %7719 = vmatpush1.bf16.msra.mxu0 %v7684
      %7720 = vmatprep.subr.bf16.mxu0 0
      %7721 = vmatpush1.bf16.msra.mxu0 %v7685
      %7722 = vmatprep.subr.bf16.mxu0 0
      %7723 = vmatpush1.bf16.msra.mxu0 0
      %7724 = vmatprep.subr.bf16.mxu0 0
      %7725 = vmatpush1.bf16.msra.mxu0 0
      %7726 = vmatprep.subr.bf16.mxu0 0
      %7727 = vmatpush1.bf16.msra.mxu0 0
      %7728 = vmatprep.subr.bf16.mxu0 0
      %7729 = vmatpush1.bf16.msra.mxu0 0
      %7730 = vmatprep.mubr.bf16.mxu0 %v6667
      %7731 = vmatmul.mubr.bf16.gmra.mrb[0].mxu0 %v7531
      %v7732 = vpop.f32.mrb[0].mxu0
      %v7733 = vadd.f32 %v7624, %v7732
      %v7734 = vpop.f32.mrb[0].mxu0
      %v7735 = vpop.f32.mrb[0].mxu0
      %v7736 = vadd.f32 %v7624, %v7735
      %v7737 = vpop.f32.mrb[0].mxu0
      %7738 = vmatprep.mubr.bf16.mxu0 %v6670
      %7739 = vmatmul.mubr.bf16.gmra.mrb[0].mxu0 %v7532
      %v7740 = vpop.f32.mrb[0].mxu0
      %v7741 = vadd.f32 %v7624, %v7740
      %v7742 = vpop.f32.mrb[0].mxu0
      %v7743 = vpop.f32.mrb[0].mxu0
      %v7744 = vadd.f32 %v7624, %v7743
      %v7745 = vpop.f32.mrb[0].mxu0
      %7746 = vmatprep.mubr.bf16.mxu0 %v6673
      %7747 = vmatmul.mubr.bf16.gmra.mrb[0].mxu0 %v7533
      %v7748 = vpop.f32.mrb[0].mxu0
      %v7749 = vadd.f32 %v7624, %v7748
      %v7750 = vpop.f32.mrb[0].mxu0
      %v7751 = vpop.f32.mrb[0].mxu0
      %v7752 = vadd.f32 %v7624, %v7751
      %v7753 = vpop.f32.mrb[0].mxu0
      %7754 = vmatprep.mubr.bf16.mxu0 %v6676
      %7755 = vmatmul.mubr.bf16.gmra.mrb[0].mxu0 %v7534
      %v7756 = vpop.f32.mrb[0].mxu0
      %v7757 = vadd.f32 %v7624, %v7756
      %v7758 = vpop.f32.mrb[0].mxu0
      %v7759 = vpop.f32.mrb[0].mxu0
      %v7760 = vadd.f32 %v7624, %v7759
      %v7761 = vpop.f32.mrb[0].mxu0
      %7762 = vmatprep.mubr.bf16.mxu0 %v6679
      %7763 = vmatmul.mubr.bf16.gmra.mrb[0].mxu0 %v7535
      %v7764 = vpop.f32.mrb[0].mxu0
      %v7765 = vadd.f32 %v7624, %v7764
      %v7766 = vpop.f32.mrb[0].mxu0
      %v7767 = vpop.f32.mrb[0].mxu0
      %v7768 = vadd.f32 %v7624, %v7767
      %v7769 = vpop.f32.mrb[0].mxu0
      %7770 = vmatprep.mubr.bf16.mxu0 %v6682
      %7771 = vmatmul.mubr.bf16.gmra.mrb[0].mxu0 %v7536
      %v7772 = vpop.f32.mrb[0].mxu0
      %v7773 = vadd.f32 %v7624, %v7772
      %v7774 = vpop.f32.mrb[0].mxu0
      %v7775 = vpop.f32.mrb[0].mxu0
      %v7776 = vadd.f32 %v7624, %v7775
      %v7777 = vpop.f32.mrb[0].mxu0
      %7778 = vmatprep.mubr.bf16.mxu0 %v6685
      %7779 = vmatmul.mubr.bf16.gmra.mrb[0].mxu0 %v7537
      %v7780 = vpop.f32.mrb[0].mxu0
      %v7781 = vadd.f32 %v7624, %v7780
      %v7782 = vpop.f32.mrb[0].mxu0
      %v7783 = vpop.f32.mrb[0].mxu0
      %v7784 = vadd.f32 %v7624, %v7783
      %v7785 = vpop.f32.mrb[0].mxu0
      %7786 = vmatprep.mubr.bf16.mxu0 %v6688
      %7787 = vmatmul.mubr.bf16.gmra.mrb[0].mxu0 %v7538
      %v7788 = vpop.f32.mrb[0].mxu0
      %v7789 = vadd.f32 %v7624, %v7788
      %v7790 = vpop.f32.mrb[0].mxu0
      %v7791 = vpop.f32.mrb[0].mxu0
      %v7792 = vadd.f32 %v7624, %v7791
      %v7793 = vpop.f32.mrb[0].mxu0
      %7794 = vmatprep.mubr.bf16.mxu0 %v6691
      %7795 = vmatmul.mubr.bf16.gmra.mrb[0].mxu0 %v7539
      %v7796 = vpop.f32.mrb[0].mxu0
      %v7797 = vadd.f32 %v7624, %v7796
      %v7798 = vpop.f32.mrb[0].mxu0
      %v7799 = vpop.f32.mrb[0].mxu0
      %v7800 = vadd.f32 %v7624, %v7799
      %v7801 = vpop.f32.mrb[0].mxu0
      %7802 = vmatprep.mubr.bf16.mxu0 %v6694
      %7803 = vmatmul.mubr.bf16.gmra.mrb[0].mxu0 %v7540
      %v7804 = vpop.f32.mrb[0].mxu0
      %v7805 = vadd.f32 %v7624, %v7804
      %v7806 = vpop.f32.mrb[0].mxu0
      %v7807 = vpop.f32.mrb[0].mxu0
      %v7808 = vadd.f32 %v7624, %v7807
      %v7809 = vpop.f32.mrb[0].mxu0
      %7810 = vmatprep.mubr.bf16.mxu0 %v6697
      %7811 = vmatmul.mubr.bf16.gmra.mrb[0].mxu0 %v7541
      %v7812 = vpop.f32.mrb[0].mxu0
      %v7813 = vadd.f32 %v7624, %v7812
      %v7814 = vpop.f32.mrb[0].mxu0
      %v7815 = vpop.f32.mrb[0].mxu0
      %v7816 = vadd.f32 %v7624, %v7815
      %v7817 = vpop.f32.mrb[0].mxu0
      %7818 = vmatprep.mubr.bf16.mxu0 %v6700
      %7819 = vmatmul.mubr.bf16.gmra.mrb[0].mxu0 %v7542
      %v7820 = vpop.f32.mrb[0].mxu0
      %v7821 = vadd.f32 %v7624, %v7820
      %v7822 = vpop.f32.mrb[0].mxu0
      %v7823 = vpop.f32.mrb[0].mxu0
      %v7824 = vadd.f32 %v7624, %v7823
      %v7825 = vpop.f32.mrb[0].mxu0
      %7826 = vmatprep.mubr.bf16.mxu0 %v6703
      %7827 = vmatmul.mubr.bf16.gmra.mrb[0].mxu0 %v7543
      %v7828 = vpop.f32.mrb[0].mxu0
      %v7829 = vadd.f32 %v7624, %v7828
      %v7830 = vpop.f32.mrb[0].mxu0
      %v7831 = vpop.f32.mrb[0].mxu0
      %v7832 = vadd.f32 %v7624, %v7831
      %v7833 = vpop.f32.mrb[0].mxu0
      %7834 = vmatprep.mubr.bf16.mxu0 %v6706
      %7835 = vmatmul.mubr.bf16.gmra.mrb[0].mxu0 %v7544
      %v7836 = vpop.f32.mrb[0].mxu0
      %v7837 = vadd.f32 %v7624, %v7836
      %v7838 = vpop.f32.mrb[0].mxu0
      %v7839 = vpop.f32.mrb[0].mxu0
      %v7840 = vadd.f32 %v7624, %v7839
      %v7841 = vpop.f32.mrb[0].mxu0
      %7842 = vmatprep.mubr.bf16.mxu0 %v6709
      %7843 = vmatmul.mubr.bf16.gmra.mrb[0].mxu0 %v7545
      %v7844 = vpop.f32.mrb[0].mxu0
      %v7845 = vadd.f32 %v7624, %v7844
      %v7846 = vpop.f32.mrb[0].mxu0
      %v7847 = vpop.f32.mrb[0].mxu0
      %v7848 = vadd.f32 %v7624, %v7847
      %v7849 = vpop.f32.mrb[0].mxu0
      %7850 = vmatprep.mubr.bf16.mxu0 %v6712
      %7851 = vmatmul.mubr.bf16.gmra.mrb[0].mxu0 %v7546
      %v7852 = vpop.f32.mrb[0].mxu0
      %v7853 = vadd.f32 %v7624, %v7852
      %v7854 = vpop.f32.mrb[0].mxu0
      %v7855 = vpop.f32.mrb[0].mxu0
      %v7856 = vadd.f32 %v7624, %v7855
      %v7857 = vpop.f32.mrb[0].mxu0
      %7858 = vmatprep.mubr.bf16.mxu0 %v6715
      %7859 = vmatmul.mubr.bf16.gmra.mrb[0].mxu0 %v7547
      %v7860 = vpop.f32.mrb[0].mxu0
      %v7861 = vadd.f32 %v7624, %v7860
      %v7862 = vpop.f32.mrb[0].mxu0
      %v7863 = vpop.f32.mrb[0].mxu0
      %v7864 = vadd.f32 %v7624, %v7863
      %v7865 = vpop.f32.mrb[0].mxu0
      %7866 = vmatprep.mubr.bf16.mxu0 %v6718
      %7867 = vmatmul.mubr.bf16.gmra.mrb[0].mxu0 %v7548
      %v7868 = vpop.f32.mrb[0].mxu0
      %v7869 = vadd.f32 %v7624, %v7868
      %v7870 = vpop.f32.mrb[0].mxu0
      %v7871 = vpop.f32.mrb[0].mxu0
      %v7872 = vadd.f32 %v7624, %v7871
      %v7873 = vpop.f32.mrb[0].mxu0
      %7874 = vmatprep.mubr.bf16.mxu0 %v6721
      %7875 = vmatmul.mubr.bf16.gmra.mrb[0].mxu0 %v7549
      %v7876 = vpop.f32.mrb[0].mxu0
      %v7877 = vadd.f32 %v7624, %v7876
      %v7878 = vpop.f32.mrb[0].mxu0
      %v7879 = vpop.f32.mrb[0].mxu0
      %v7880 = vadd.f32 %v7624, %v7879
      %v7881 = vpop.f32.mrb[0].mxu0
      %7882 = vmatprep.mubr.bf16.mxu0 %v6724
      %7883 = vmatmul.mubr.bf16.gmra.mrb[0].mxu0 %v7550
      %v7884 = vpop.f32.mrb[0].mxu0
      %v7885 = vadd.f32 %v7624, %v7884
      %v7886 = vpop.f32.mrb[0].mxu0
      %v7887 = vpop.f32.mrb[0].mxu0
      %v7888 = vadd.f32 %v7624, %v7887
      %v7889 = vpop.f32.mrb[0].mxu0
      %7890 = vmatprep.mubr.bf16.mxu0 %v6727
      %7891 = vmatmul.mubr.bf16.gmra.mrb[0].mxu0 %v7551
      %v7892 = vpop.f32.mrb[0].mxu0
      %v7893 = vadd.f32 %v7624, %v7892
      %v7894 = vpop.f32.mrb[0].mxu0
      %v7895 = vpop.f32.mrb[0].mxu0
      %v7896 = vadd.f32 %v7624, %v7895
      %v7897 = vpop.f32.mrb[0].mxu0
      %7898 = vmatprep.mubr.bf16.mxu0 %v6730
      %7899 = vmatmul.mubr.bf16.gmra.mrb[0].mxu0 %v7552
      %v7900 = vpop.f32.mrb[0].mxu0
      %v7901 = vadd.f32 %v7624, %v7900
      %v7902 = vpop.f32.mrb[0].mxu0
      %v7903 = vpop.f32.mrb[0].mxu0
      %v7904 = vadd.f32 %v7624, %v7903
      %v7905 = vpop.f32.mrb[0].mxu0
      %7906 = vmatprep.mubr.bf16.mxu0 %v6733
      %7907 = vmatmul.mubr.bf16.gmra.mrb[0].mxu0 %v7553
      %v7908 = vpop.f32.mrb[0].mxu0
      %v7909 = vadd.f32 %v7624, %v7908
      %v7910 = vpop.f32.mrb[0].mxu0
      %v7911 = vpop.f32.mrb[0].mxu0
      %v7912 = vadd.f32 %v7624, %v7911
      %v7913 = vpop.f32.mrb[0].mxu0
      %7914 = vmatprep.mubr.bf16.mxu0 %v6736
      %7915 = vmatmul.mubr.bf16.gmra.mrb[0].mxu0 %v7554
      %v7916 = vpop.f32.mrb[0].mxu0
      %v7917 = vadd.f32 %v7624, %v7916
      %v7918 = vpop.f32.mrb[0].mxu0
      %v7919 = vpop.f32.mrb[0].mxu0
      %v7920 = vadd.f32 %v7624, %v7919
      %v7921 = vpop.f32.mrb[0].mxu0
      %7922 = vmatprep.mubr.bf16.mxu0 %v6739
      %7923 = vmatmul.mubr.bf16.gmra.mrb[0].mxu0 %v7555
      %v7924 = vpop.f32.mrb[0].mxu0
      %v7925 = vadd.f32 %v7624, %v7924
      %v7926 = vpop.f32.mrb[0].mxu0
      %v7927 = vpop.f32.mrb[0].mxu0
      %v7928 = vadd.f32 %v7624, %v7927
      %v7929 = vpop.f32.mrb[0].mxu0
      %7930 = vmatprep.mubr.bf16.mxu0 %v6742
      %7931 = vmatmul.mubr.bf16.gmra.mrb[0].mxu0 %v7556
      %v7932 = vpop.f32.mrb[0].mxu0
      %v7933 = vadd.f32 %v7624, %v7932
      %v7934 = vpop.f32.mrb[0].mxu0
      %v7935 = vpop.f32.mrb[0].mxu0
      %v7936 = vadd.f32 %v7624, %v7935
      %v7937 = vpop.f32.mrb[0].mxu0
      %7938 = vmatprep.mubr.bf16.mxu0 %v6745
      %7939 = vmatmul.mubr.bf16.gmra.mrb[0].mxu0 %v7557
      %v7940 = vpop.f32.mrb[0].mxu0
      %v7941 = vadd.f32 %v7624, %v7940
      %v7942 = vpop.f32.mrb[0].mxu0
      %v7943 = vpop.f32.mrb[0].mxu0
      %v7944 = vadd.f32 %v7624, %v7943
      %v7945 = vpop.f32.mrb[0].mxu0
      %7946 = vmatprep.mubr.bf16.mxu0 %v6748
      %7947 = vmatmul.mubr.bf16.gmra.mrb[0].mxu0 %v7558
      %v7948 = vpop.f32.mrb[0].mxu0
      %v7949 = vadd.f32 %v7624, %v7948
      %v7950 = vpop.f32.mrb[0].mxu0
      %v7951 = vpop.f32.mrb[0].mxu0
      %v7952 = vadd.f32 %v7624, %v7951
      %v7953 = vpop.f32.mrb[0].mxu0
      %7954 = vmatprep.mubr.bf16.mxu0 %v6751
      %7955 = vmatmul.mubr.bf16.gmra.mrb[0].mxu0 %v7559
      %v7956 = vpop.f32.mrb[0].mxu0
      %v7957 = vadd.f32 %v7624, %v7956
      %v7958 = vpop.f32.mrb[0].mxu0
      %v7959 = vpop.f32.mrb[0].mxu0
      %v7960 = vadd.f32 %v7624, %v7959
      %v7961 = vpop.f32.mrb[0].mxu0
      %7962 = vmatprep.mubr.bf16.mxu0 %v6754
      %7963 = vmatmul.mubr.bf16.gmra.mrb[0].mxu0 %v7560
      %v7964 = vpop.f32.mrb[0].mxu0
      %v7965 = vadd.f32 %v7624, %v7964
      %v7966 = vpop.f32.mrb[0].mxu0
      %v7967 = vpop.f32.mrb[0].mxu0
      %v7968 = vadd.f32 %v7624, %v7967
      %v7969 = vpop.f32.mrb[0].mxu0
      %7970 = vmatprep.mubr.bf16.mxu0 %v6757
      %7971 = vmatmul.mubr.bf16.gmra.mrb[0].mxu0 %v7561
      %v7972 = vpop.f32.mrb[0].mxu0
      %v7973 = vadd.f32 %v7624, %v7972
      %v7974 = vpop.f32.mrb[0].mxu0
      %v7975 = vpop.f32.mrb[0].mxu0
      %v7976 = vadd.f32 %v7624, %v7975
      %v7977 = vpop.f32.mrb[0].mxu0
      %7978 = vmatprep.mubr.bf16.mxu0 %v6760
      %7979 = vmatmul.mubr.bf16.gmra.mrb[0].mxu0 %v7562
      %v7980 = vpop.f32.mrb[0].mxu0
      %v7981 = vadd.f32 %v7624, %v7980
      %v7982 = vpop.f32.mrb[0].mxu0
      %v7983 = vpop.f32.mrb[0].mxu0
      %v7984 = vadd.f32 %v7624, %v7983
      %v7985 = vpop.f32.mrb[0].mxu0
      %7986 = vmatprep.mubr.bf16.mxu0 %v6763
      %7987 = vmatmul.mubr.bf16.gmra.mrb[0].mxu0 %v7563
      %v7988 = vpop.f32.mrb[0].mxu0
      %v7989 = vadd.f32 %v7624, %v7988
      %v7990 = vpop.f32.mrb[0].mxu0
      %v7991 = vpop.f32.mrb[0].mxu0
      %v7992 = vadd.f32 %v7624, %v7991
      %v7993 = vpop.f32.mrb[0].mxu0
      %7994 = vmatprep.mubr.bf16.mxu0 %v6766
      %7995 = vmatmul.mubr.bf16.gmra.mrb[0].mxu0 %v7564
      %v7996 = vpop.f32.mrb[0].mxu0
      %v7997 = vadd.f32 %v7624, %v7996
      %v7998 = vpop.f32.mrb[0].mxu0
      %v7999 = vpop.f32.mrb[0].mxu0
      %v8000 = vadd.f32 %v7624, %v7999
      %v8001 = vpop.f32.mrb[0].mxu0
      %8002 = vmatprep.mubr.bf16.mxu0 %v6769
      %8003 = vmatmul.mubr.bf16.gmra.mrb[0].mxu0 %v7565
      %v8004 = vpop.f32.mrb[0].mxu0
      %v8005 = vadd.f32 %v7624, %v8004
      %v8006 = vpop.f32.mrb[0].mxu0
      %v8007 = vpop.f32.mrb[0].mxu0
      %v8008 = vadd.f32 %v7624, %v8007
      %v8009 = vpop.f32.mrb[0].mxu0
      %8010 = vmatprep.mubr.bf16.mxu0 %v6772
      %8011 = vmatmul.mubr.bf16.gmra.mrb[0].mxu0 %v7566
      %v8012 = vpop.f32.mrb[0].mxu0
      %v8013 = vadd.f32 %v7624, %v8012
      %v8014 = vpop.f32.mrb[0].mxu0
      %v8015 = vpop.f32.mrb[0].mxu0
      %v8016 = vadd.f32 %v7624, %v8015
      %v8017 = vpop.f32.mrb[0].mxu0
      %8018 = vmatprep.mubr.bf16.mxu0 %v6775
      %8019 = vmatmul.mubr.bf16.gmra.mrb[0].mxu0 %v7567
      %v8020 = vpop.f32.mrb[0].mxu0
      %v8021 = vadd.f32 %v7624, %v8020
      %v8022 = vpop.f32.mrb[0].mxu0
      %v8023 = vpop.f32.mrb[0].mxu0
      %v8024 = vadd.f32 %v7624, %v8023
      %v8025 = vpop.f32.mrb[0].mxu0
      %8026 = vmatprep.mubr.bf16.mxu0 %v6778
      %8027 = vmatmul.mubr.bf16.gmra.mrb[0].mxu0 %v7568
      %v8028 = vpop.f32.mrb[0].mxu0
      %v8029 = vadd.f32 %v7624, %v8028
      %v8030 = vpop.f32.mrb[0].mxu0
      %v8031 = vpop.f32.mrb[0].mxu0
      %v8032 = vadd.f32 %v7624, %v8031
      %v8033 = vpop.f32.mrb[0].mxu0
      %8034 = vmatprep.mubr.bf16.mxu0 %v6781
      %8035 = vmatmul.mubr.bf16.gmra.mrb[0].mxu0 %v7569
      %v8036 = vpop.f32.mrb[0].mxu0
      %v8037 = vadd.f32 %v7624, %v8036
      %v8038 = vpop.f32.mrb[0].mxu0
      %v8039 = vpop.f32.mrb[0].mxu0
      %v8040 = vadd.f32 %v7624, %v8039
      %v8041 = vpop.f32.mrb[0].mxu0
      %8042 = vmatprep.mubr.bf16.mxu0 %v6784
      %8043 = vmatmul.mubr.bf16.gmra.mrb[0].mxu0 %v7570
      %v8044 = vpop.f32.mrb[0].mxu0
      %v8045 = vadd.f32 %v7624, %v8044
      %v8046 = vpop.f32.mrb[0].mxu0
      %v8047 = vpop.f32.mrb[0].mxu0
      %v8048 = vadd.f32 %v7624, %v8047
      %v8049 = vpop.f32.mrb[0].mxu0
      %8050 = vmatprep.mubr.bf16.mxu0 %v6787
      %8051 = vmatmul.mubr.bf16.gmra.mrb[0].mxu0 %v7571
      %v8052 = vpop.f32.mrb[0].mxu0
      %v8053 = vadd.f32 %v7624, %v8052
      %v8054 = vpop.f32.mrb[0].mxu0
      %v8055 = vpop.f32.mrb[0].mxu0
      %v8056 = vadd.f32 %v7624, %v8055
      %v8057 = vpop.f32.mrb[0].mxu0
      %8058 = vmatprep.mubr.bf16.mxu0 %v6790
      %8059 = vmatmul.mubr.bf16.gmra.mrb[0].mxu0 %v7572
      %v8060 = vpop.f32.mrb[0].mxu0
      %v8061 = vadd.f32 %v7624, %v8060
      %v8062 = vpop.f32.mrb[0].mxu0
      %v8063 = vpop.f32.mrb[0].mxu0
      %v8064 = vadd.f32 %v7624, %v8063
      %v8065 = vpop.f32.mrb[0].mxu0
      %8066 = vmatprep.mubr.bf16.mxu0 %v6793
      %8067 = vmatmul.mubr.bf16.gmra.mrb[0].mxu0 %v7573
      %v8068 = vpop.f32.mrb[0].mxu0
      %v8069 = vadd.f32 %v7624, %v8068
      %v8070 = vpop.f32.mrb[0].mxu0
      %v8071 = vpop.f32.mrb[0].mxu0
      %v8072 = vadd.f32 %v7624, %v8071
      %v8073 = vpop.f32.mrb[0].mxu0
      %8074 = vmatprep.mubr.bf16.mxu0 %v6796
      %8075 = vmatmul.mubr.bf16.gmra.mrb[0].mxu0 %v7574
      %v8076 = vpop.f32.mrb[0].mxu0
      %v8077 = vadd.f32 %v7624, %v8076
      %v8078 = vpop.f32.mrb[0].mxu0
      %v8079 = vpop.f32.mrb[0].mxu0
      %v8080 = vadd.f32 %v7624, %v8079
      %v8081 = vpop.f32.mrb[0].mxu0
      %8082 = vmatprep.mubr.bf16.mxu0 %v6799
      %8083 = vmatmul.mubr.bf16.gmra.mrb[0].mxu0 %v7575
      %v8084 = vpop.f32.mrb[0].mxu0
      %v8085 = vadd.f32 %v7624, %v8084
      %v8086 = vpop.f32.mrb[0].mxu0
      %v8087 = vpop.f32.mrb[0].mxu0
      %v8088 = vadd.f32 %v7624, %v8087
      %v8089 = vpop.f32.mrb[0].mxu0
      %8090 = vmatprep.mubr.bf16.mxu0 %v6802
      %8091 = vmatmul.mubr.bf16.gmra.mrb[0].mxu0 %v7576
      %v8092 = vpop.f32.mrb[0].mxu0
      %v8093 = vadd.f32 %v7624, %v8092
      %v8094 = vpop.f32.mrb[0].mxu0
      %v8095 = vpop.f32.mrb[0].mxu0
      %v8096 = vadd.f32 %v7624, %v8095
      %v8097 = vpop.f32.mrb[0].mxu0
      %8098 = vmatprep.mubr.bf16.mxu0 %v6805
      %8099 = vmatmul.mubr.bf16.gmra.mrb[0].mxu0 %v7577
      %v8100 = vpop.f32.mrb[0].mxu0
      %v8101 = vadd.f32 %v7624, %v8100
      %v8102 = vpop.f32.mrb[0].mxu0
      %v8103 = vpop.f32.mrb[0].mxu0
      %v8104 = vadd.f32 %v7624, %v8103
      %v8105 = vpop.f32.mrb[0].mxu0
      %8106 = vmatprep.mubr.bf16.mxu0 %v6808
      %8107 = vmatmul.mubr.bf16.gmra.mrb[0].mxu0 %v7578
      %v8108 = vpop.f32.mrb[0].mxu0
      %v8109 = vadd.f32 %v7624, %v8108
      %v8110 = vpop.f32.mrb[0].mxu0
      %v8111 = vpop.f32.mrb[0].mxu0
      %v8112 = vadd.f32 %v7624, %v8111
      %v8113 = vpop.f32.mrb[0].mxu0
      %8114 = vmatprep.mubr.bf16.mxu0 %v6811
      %8115 = vmatmul.mubr.bf16.gmra.mrb[0].mxu0 %v7579
      %v8116 = vpop.f32.mrb[0].mxu0
      %v8117 = vadd.f32 %v7624, %v8116
      %v8118 = vpop.f32.mrb[0].mxu0
      %v8119 = vpop.f32.mrb[0].mxu0
      %v8120 = vadd.f32 %v7624, %v8119
      %v8121 = vpop.f32.mrb[0].mxu0
      %8122 = vmatprep.mubr.bf16.mxu0 %v6814
      %8123 = vmatmul.mubr.bf16.gmra.mrb[0].mxu0 %v7580
      %v8124 = vpop.f32.mrb[0].mxu0
      %v8125 = vadd.f32 %v7624, %v8124
      %v8126 = vpop.f32.mrb[0].mxu0
      %v8127 = vpop.f32.mrb[0].mxu0
      %v8128 = vadd.f32 %v7624, %v8127
      %v8129 = vpop.f32.mrb[0].mxu0
      %8130 = vmatprep.mubr.bf16.mxu0 %v6817
      %8131 = vmatmul.mubr.bf16.gmra.mrb[0].mxu0 %v7581
      %v8132 = vpop.f32.mrb[0].mxu0
      %v8133 = vadd.f32 %v7624, %v8132
      %v8134 = vpop.f32.mrb[0].mxu0
      %v8135 = vpop.f32.mrb[0].mxu0
      %v8136 = vadd.f32 %v7624, %v8135
      %v8137 = vpop.f32.mrb[0].mxu0
      %8138 = vmatprep.mubr.bf16.mxu0 %v6820
      %8139 = vmatmul.mubr.bf16.gmra.mrb[0].mxu0 %v7582
      %v8140 = vpop.f32.mrb[0].mxu0
      %v8141 = vadd.f32 %v7624, %v8140
      %v8142 = vpop.f32.mrb[0].mxu0
      %v8143 = vpop.f32.mrb[0].mxu0
      %v8144 = vadd.f32 %v7624, %v8143
      %v8145 = vpop.f32.mrb[0].mxu0
      %8146 = vmatprep.mubr.bf16.mxu0 %v6823
      %8147 = vmatmul.mubr.bf16.gmra.mrb[0].mxu0 %v7583
      %v8148 = vpop.f32.mrb[0].mxu0
      %v8149 = vadd.f32 %v7624, %v8148
      %v8150 = vpop.f32.mrb[0].mxu0
      %v8151 = vpop.f32.mrb[0].mxu0
      %v8152 = vadd.f32 %v7624, %v8151
      %v8153 = vpop.f32.mrb[0].mxu0
      %8154 = vmatprep.mubr.bf16.mxu0 %v6826
      %8155 = vmatmul.mubr.bf16.gmra.mrb[0].mxu0 %v7584
      %v8156 = vpop.f32.mrb[0].mxu0
      %v8157 = vadd.f32 %v7624, %v8156
      %v8158 = vpop.f32.mrb[0].mxu0
      %v8159 = vpop.f32.mrb[0].mxu0
      %v8160 = vadd.f32 %v7624, %v8159
      %v8161 = vpop.f32.mrb[0].mxu0
      %8162 = vmatprep.mubr.bf16.mxu0 %v6829
      %8163 = vmatmul.mubr.bf16.gmra.mrb[0].mxu0 %v7585
      %v8164 = vpop.f32.mrb[0].mxu0
      %v8165 = vadd.f32 %v7624, %v8164
      %v8166 = vpop.f32.mrb[0].mxu0
      %v8167 = vpop.f32.mrb[0].mxu0
      %v8168 = vadd.f32 %v7624, %v8167
      %v8169 = vpop.f32.mrb[0].mxu0
      %8170 = vmatprep.mubr.bf16.mxu0 %v6832
      %8171 = vmatmul.mubr.bf16.gmra.mrb[0].mxu0 %v7586
      %v8172 = vpop.f32.mrb[0].mxu0
      %v8173 = vadd.f32 %v7624, %v8172
      %v8174 = vpop.f32.mrb[0].mxu0
      %v8175 = vpop.f32.mrb[0].mxu0
      %v8176 = vadd.f32 %v7624, %v8175
      %v8177 = vpop.f32.mrb[0].mxu0
      %8178 = vmatprep.mubr.bf16.mxu0 %v6835
      %8179 = vmatmul.mubr.bf16.gmra.mrb[0].mxu0 %v7587
      %v8180 = vpop.f32.mrb[0].mxu0
      %v8181 = vadd.f32 %v7624, %v8180
      %v8182 = vpop.f32.mrb[0].mxu0
      %v8183 = vpop.f32.mrb[0].mxu0
      %v8184 = vadd.f32 %v7624, %v8183
      %v8185 = vpop.f32.mrb[0].mxu0
      %8186 = vmatprep.mubr.bf16.mxu0 %v6838
      %8187 = vmatmul.mubr.bf16.gmra.mrb[0].mxu0 %v7588
      %v8188 = vpop.f32.mrb[0].mxu0
      %v8189 = vadd.f32 %v7624, %v8188
      %v8190 = vpop.f32.mrb[0].mxu0
      %v8191 = vpop.f32.mrb[0].mxu0
      %v8192 = vadd.f32 %v7624, %v8191
      %v8193 = vpop.f32.mrb[0].mxu0
      %8194 = vmatprep.mubr.bf16.mxu0 %v6841
      %8195 = vmatmul.mubr.bf16.gmra.mrb[0].mxu0 %v7589
      %v8196 = vpop.f32.mrb[0].mxu0
      %v8197 = vadd.f32 %v7624, %v8196
      %v8198 = vpop.f32.mrb[0].mxu0
      %v8199 = vpop.f32.mrb[0].mxu0
      %v8200 = vadd.f32 %v7624, %v8199
      %v8201 = vpop.f32.mrb[0].mxu0
      %8202 = vmatprep.mubr.bf16.mxu0 %v6844
      %8203 = vmatmul.mubr.bf16.gmra.mrb[0].mxu0 %v7590
      %v8204 = vpop.f32.mrb[0].mxu0
      %v8205 = vadd.f32 %v7624, %v8204
      %v8206 = vpop.f32.mrb[0].mxu0
      %v8207 = vpop.f32.mrb[0].mxu0
      %v8208 = vadd.f32 %v7624, %v8207
      %v8209 = vpop.f32.mrb[0].mxu0
      %8210 = vmatprep.mubr.bf16.mxu0 %v6847
      %8211 = vmatmul.mubr.bf16.gmra.mrb[0].mxu0 %v7591
      %v8212 = vpop.f32.mrb[0].mxu0
      %v8213 = vadd.f32 %v7624, %v8212
      %v8214 = vpop.f32.mrb[0].mxu0
      %v8215 = vpop.f32.mrb[0].mxu0
      %v8216 = vadd.f32 %v7624, %v8215
      %v8217 = vpop.f32.mrb[0].mxu0
      %8218 = vmatprep.mubr.bf16.mxu0 %v6850
      %8219 = vmatmul.mubr.bf16.gmra.mrb[0].mxu0 %v7592
      %v8220 = vpop.f32.mrb[0].mxu0
      %v8221 = vadd.f32 %v7624, %v8220
      %v8222 = vpop.f32.mrb[0].mxu0
      %v8223 = vpop.f32.mrb[0].mxu0
      %v8224 = vadd.f32 %v7624, %v8223
      %v8225 = vpop.f32.mrb[0].mxu0
      %8226 = vmatprep.mubr.bf16.mxu0 %v6853
      %8227 = vmatmul.mubr.bf16.gmra.mrb[0].mxu0 %v7593
      %v8228 = vpop.f32.mrb[0].mxu0
      %v8229 = vadd.f32 %v7624, %v8228
      %v8230 = vpop.f32.mrb[0].mxu0
      %v8231 = vpop.f32.mrb[0].mxu0
      %v8232 = vadd.f32 %v7624, %v8231
      %v8233 = vpop.f32.mrb[0].mxu0
      %8234 = vmatprep.mubr.bf16.mxu0 %v6856
      %8235 = vmatmul.mubr.bf16.gmra.mrb[0].mxu0 %v7594
      %v8236 = vpop.f32.mrb[0].mxu0
      %v8237 = vadd.f32 %v7624, %v8236
      %v8238 = vpop.f32.mrb[0].mxu0
      %v8239 = vpop.f32.mrb[0].mxu0
      %v8240 = vadd.f32 %v7624, %v8239
      %v8241 = vpop.f32.mrb[0].mxu0
      %8242 = vdwg.mxu0
      %v8243 = vmax.f32 %v7733, 0.0
      %v8244 = vmax.f32 %v7736, 0.0
      %v8245 = vmax.f32 %v7741, 0.0
      %v8246 = vmax.f32 %v7744, 0.0
      %v8247 = vmax.f32 %v7749, 0.0
      %v8248 = vmax.f32 %v7752, 0.0
      %v8249 = vmax.f32 %v7757, 0.0
      %v8250 = vmax.f32 %v7760, 0.0
      %v8251 = vmax.f32 %v7765, 0.0
      %v8252 = vmax.f32 %v7768, 0.0
      %v8253 = vmax.f32 %v7773, 0.0
      %v8254 = vmax.f32 %v7776, 0.0
      %v8255 = vmax.f32 %v7781, 0.0
      %v8256 = vmax.f32 %v7784, 0.0
      %v8257 = vmax.f32 %v7789, 0.0
      %v8258 = vmax.f32 %v7792, 0.0
      %v8259 = vmax.f32 %v7797, 0.0
      %v8260 = vmax.f32 %v7800, 0.0
      %v8261 = vmax.f32 %v7805, 0.0
      %v8262 = vmax.f32 %v7808, 0.0
      %v8263 = vmax.f32 %v7813, 0.0
      %v8264 = vmax.f32 %v7816, 0.0
      %v8265 = vmax.f32 %v7821, 0.0
      %v8266 = vmax.f32 %v7824, 0.0
      %v8267 = vmax.f32 %v7829, 0.0
      %v8268 = vmax.f32 %v7832, 0.0
      %v8269 = vmax.f32 %v7837, 0.0
      %v8270 = vmax.f32 %v7840, 0.0
      %v8271 = vmax.f32 %v7845, 0.0
      %v8272 = vmax.f32 %v7848, 0.0
      %v8273 = vmax.f32 %v7853, 0.0
      %v8274 = vmax.f32 %v7856, 0.0
      %v8275 = vmax.f32 %v7861, 0.0
      %v8276 = vmax.f32 %v7864, 0.0
      %v8277 = vmax.f32 %v7869, 0.0
      %v8278 = vmax.f32 %v7872, 0.0
      %v8279 = vmax.f32 %v7877, 0.0
      %v8280 = vmax.f32 %v7880, 0.0
      %v8281 = vmax.f32 %v7885, 0.0
      %v8282 = vmax.f32 %v7888, 0.0
      %v8283 = vmax.f32 %v7893, 0.0
      %v8284 = vmax.f32 %v7896, 0.0
      %v8285 = vmax.f32 %v7901, 0.0
      %v8286 = vmax.f32 %v7904, 0.0
      %v8287 = vmax.f32 %v7909, 0.0
      %v8288 = vmax.f32 %v7912, 0.0
      %v8289 = vmax.f32 %v7917, 0.0
      %v8290 = vmax.f32 %v7920, 0.0
      %v8291 = vmax.f32 %v7925, 0.0
      %v8292 = vmax.f32 %v7928, 0.0
      %v8293 = vmax.f32 %v7933, 0.0
      %v8294 = vmax.f32 %v7936, 0.0
      %v8295 = vmax.f32 %v7941, 0.0
      %v8296 = vmax.f32 %v7944, 0.0
      %v8297 = vmax.f32 %v7949, 0.0
      %v8298 = vmax.f32 %v7952, 0.0
      %v8299 = vmax.f32 %v7957, 0.0
      %v8300 = vmax.f32 %v7960, 0.0
      %v8301 = vmax.f32 %v7965, 0.0
      %v8302 = vmax.f32 %v7968, 0.0
      %v8303 = vmax.f32 %v7973, 0.0
      %v8304 = vmax.f32 %v7976, 0.0
      %v8305 = vmax.f32 %v7981, 0.0
      %v8306 = vmax.f32 %v7984, 0.0
      %v8307 = vmax.f32 %v7989, 0.0
      %v8308 = vmax.f32 %v7992, 0.0
      %v8309 = vmax.f32 %v7997, 0.0
      %v8310 = vmax.f32 %v8000, 0.0
      %v8311 = vmax.f32 %v8005, 0.0
      %v8312 = vmax.f32 %v8008, 0.0
      %v8313 = vmax.f32 %v8013, 0.0
      %v8314 = vmax.f32 %v8016, 0.0
      %v8315 = vmax.f32 %v8021, 0.0
      %v8316 = vmax.f32 %v8024, 0.0
      %v8317 = vmax.f32 %v8029, 0.0
      %v8318 = vmax.f32 %v8032, 0.0
      %v8319 = vmax.f32 %v8037, 0.0
      %v8320 = vmax.f32 %v8040, 0.0
      %v8321 = vmax.f32 %v8045, 0.0
      %v8322 = vmax.f32 %v8048, 0.0
      %v8323 = vmax.f32 %v8053, 0.0
      %v8324 = vmax.f32 %v8056, 0.0
      %v8325 = vmax.f32 %v8061, 0.0
      %v8326 = vmax.f32 %v8064, 0.0
      %v8327 = vmax.f32 %v8069, 0.0
      %v8328 = vmax.f32 %v8072, 0.0
      %v8329 = vmax.f32 %v8077, 0.0
      %v8330 = vmax.f32 %v8080, 0.0
      %v8331 = vmax.f32 %v8085, 0.0
      %v8332 = vmax.f32 %v8088, 0.0
      %v8333 = vmax.f32 %v8093, 0.0
      %v8334 = vmax.f32 %v8096, 0.0
      %v8335 = vmax.f32 %v8101, 0.0
      %v8336 = vmax.f32 %v8104, 0.0
      %v8337 = vmax.f32 %v8109, 0.0
      %v8338 = vmax.f32 %v8112, 0.0
      %v8339 = vmax.f32 %v8117, 0.0
      %v8340 = vmax.f32 %v8120, 0.0
      %v8341 = vmax.f32 %v8125, 0.0
      %v8342 = vmax.f32 %v8128, 0.0
      %v8343 = vmax.f32 %v8133, 0.0
      %v8344 = vmax.f32 %v8136, 0.0
      %v8345 = vmax.f32 %v8141, 0.0
      %v8346 = vmax.f32 %v8144, 0.0
      %v8347 = vmax.f32 %v8149, 0.0
      %v8348 = vmax.f32 %v8152, 0.0
      %v8349 = vmax.f32 %v8157, 0.0
      %v8350 = vmax.f32 %v8160, 0.0
      %v8351 = vmax.f32 %v8165, 0.0
      %v8352 = vmax.f32 %v8168, 0.0
      %v8353 = vmax.f32 %v8173, 0.0
      %v8354 = vmax.f32 %v8176, 0.0
      %v8355 = vmax.f32 %v8181, 0.0
      %v8356 = vmax.f32 %v8184, 0.0
      %v8357 = vmax.f32 %v8189, 0.0
      %v8358 = vmax.f32 %v8192, 0.0
      %v8359 = vmax.f32 %v8197, 0.0
      %v8360 = vmax.f32 %v8200, 0.0
      %v8361 = vmax.f32 %v8205, 0.0
      %v8362 = vmax.f32 %v8208, 0.0
      %v8363 = vmax.f32 %v8213, 0.0
      %v8364 = vmax.f32 %v8216, 0.0
      %v8365 = vmax.f32 %v8221, 0.0
      %v8366 = vmax.f32 %v8224, 0.0
      %v8367 = vmax.f32 %v8229, 0.0
      %v8368 = vmax.f32 %v8232, 0.0
      %v8369 = vmax.f32 %v8237, 0.0
      %v8370 = vmax.f32 %v8240, 0.0
      %v8371 = vpack.c.bf16 %v8244, %v8243
      %v8372 = vpack.c.bf16 %v8246, %v8245
      %v8373 = vpack.c.bf16 %v8248, %v8247
      %v8374 = vpack.c.bf16 %v8250, %v8249
      %v8375 = vpack.c.bf16 %v8252, %v8251
      %v8376 = vpack.c.bf16 %v8254, %v8253
      %v8377 = vpack.c.bf16 %v8256, %v8255
      %v8378 = vpack.c.bf16 %v8258, %v8257
      %v8379 = vpack.c.bf16 %v8260, %v8259
      %v8380 = vpack.c.bf16 %v8262, %v8261
      %v8381 = vpack.c.bf16 %v8264, %v8263
      %v8382 = vpack.c.bf16 %v8266, %v8265
      %v8383 = vpack.c.bf16 %v8268, %v8267
      %v8384 = vpack.c.bf16 %v8270, %v8269
      %v8385 = vpack.c.bf16 %v8272, %v8271
      %v8386 = vpack.c.bf16 %v8274, %v8273
      %v8387 = vpack.c.bf16 %v8276, %v8275
      %v8388 = vpack.c.bf16 %v8278, %v8277
      %v8389 = vpack.c.bf16 %v8280, %v8279
      %v8390 = vpack.c.bf16 %v8282, %v8281
      %v8391 = vpack.c.bf16 %v8284, %v8283
      %v8392 = vpack.c.bf16 %v8286, %v8285
      %v8393 = vpack.c.bf16 %v8288, %v8287
      %v8394 = vpack.c.bf16 %v8290, %v8289
      %v8395 = vpack.c.bf16 %v8292, %v8291
      %v8396 = vpack.c.bf16 %v8294, %v8293
      %v8397 = vpack.c.bf16 %v8296, %v8295
      %v8398 = vpack.c.bf16 %v8298, %v8297
      %v8399 = vpack.c.bf16 %v8300, %v8299
      %v8400 = vpack.c.bf16 %v8302, %v8301
      %v8401 = vpack.c.bf16 %v8304, %v8303
      %v8402 = vpack.c.bf16 %v8306, %v8305
      %v8403 = vpack.c.bf16 %v8308, %v8307
      %v8404 = vpack.c.bf16 %v8310, %v8309
      %v8405 = vpack.c.bf16 %v8312, %v8311
      %v8406 = vpack.c.bf16 %v8314, %v8313
      %v8407 = vpack.c.bf16 %v8316, %v8315
      %v8408 = vpack.c.bf16 %v8318, %v8317
      %v8409 = vpack.c.bf16 %v8320, %v8319
      %v8410 = vpack.c.bf16 %v8322, %v8321
      %v8411 = vpack.c.bf16 %v8324, %v8323
      %v8412 = vpack.c.bf16 %v8326, %v8325
      %v8413 = vpack.c.bf16 %v8328, %v8327
      %v8414 = vpack.c.bf16 %v8330, %v8329
      %v8415 = vpack.c.bf16 %v8332, %v8331
      %v8416 = vpack.c.bf16 %v8334, %v8333
      %v8417 = vpack.c.bf16 %v8336, %v8335
      %v8418 = vpack.c.bf16 %v8338, %v8337
      %v8419 = vpack.c.bf16 %v8340, %v8339
      %v8420 = vpack.c.bf16 %v8342, %v8341
      %v8421 = vpack.c.bf16 %v8344, %v8343
      %v8422 = vpack.c.bf16 %v8346, %v8345
      %v8423 = vpack.c.bf16 %v8348, %v8347
      %v8424 = vpack.c.bf16 %v8350, %v8349
      %v8425 = vpack.c.bf16 %v8352, %v8351
      %v8426 = vpack.c.bf16 %v8354, %v8353
      %v8427 = vpack.c.bf16 %v8356, %v8355
      %v8428 = vpack.c.bf16 %v8358, %v8357
      %v8429 = vpack.c.bf16 %v8360, %v8359
      %v8430 = vpack.c.bf16 %v8362, %v8361
      %v8431 = vpack.c.bf16 %v8364, %v8363
      %v8432 = vpack.c.bf16 %v8366, %v8365
      %v8433 = vpack.c.bf16 %v8368, %v8367
      %v8434 = vpack.c.bf16 %v8370, %v8369
      %v8435 = vld [vmem:[%s9] sm:$0xf]
      %v8436 = vld [vmem:[%s9 + $0x4] sm:$0xf]
      %v8437 = vld [vmem:[%s9 + $0x8] sm:$0xf]
      %v8438 = vld [vmem:[%s9 + $0xc] sm:$0xf]
      %v8439 = vld [vmem:[%s9 + $0x10] sm:$0xf]
      %v8440 = vld [vmem:[%s9 + $0x14] sm:$0xf]
      %v8441 = vld [vmem:[%s9 + $0x18] sm:$0xf]
      %v8442 = vld [vmem:[%s9 + $0x1c] sm:$0xf]
      %v8443 = vld [vmem:[%s9 + $0x20] sm:$0xf]
      %v8444 = vld [vmem:[%s9 + $0x24] sm:$0xf]
      %v8445 = vld [vmem:[%s9 + $0x28] sm:$0xf]
      %v8446 = vld [vmem:[%s9 + $0x2c] sm:$0xf]
      %v8447 = vld [vmem:[%s9 + $0x30] sm:$0xf]
      %v8448 = vld [vmem:[%s9 + $0x34] sm:$0xf]
      %v8449 = vld [vmem:[%s9 + $0x38] sm:$0xf]
      %v8450 = vld [vmem:[%s9 + $0x3c] sm:$0xf]
      %v8451 = vld [vmem:[%s10] sm:$0x1]
      %v8453 = vlaneseq
      %v8454 = vshrl.u32 %v8453, 7
      %v8455 = vsub.s32 0, %v8454
      %v8456 = vrot.slane %v8451, %v8455
      %v8474 = vunpack.c.l.b16 %v8435
      %v8475 = vunpack.c.l.b16 %v8436
      %v8476 = vunpack.c.l.b16 %v8437
      %v8477 = vunpack.c.l.b16 %v8438
      %v8478 = vunpack.c.l.b16 %v8439
      %v8479 = vunpack.c.l.b16 %v8440
      %v8480 = vunpack.c.l.b16 %v8441
      %v8481 = vunpack.c.l.b16 %v8442
      %v8482 = vunpack.c.l.b16 %v8443
      %v8483 = vunpack.c.l.b16 %v8444
      %v8484 = vunpack.c.l.b16 %v8445
      %v8485 = vunpack.c.l.b16 %v8446
      %v8486 = vunpack.c.l.b16 %v8447
      %v8487 = vunpack.c.l.b16 %v8448
      %v8488 = vunpack.c.l.b16 %v8449
      %v8489 = vunpack.c.l.b16 %v8450
      %v8490 = vpack.c.b16 %v8475, %v8474
      %v8491 = vpack.c.b16 %v8477, %v8476
      %v8492 = vpack.c.b16 %v8479, %v8478
      %v8493 = vpack.c.b16 %v8481, %v8480
      %v8494 = vpack.c.b16 %v8483, %v8482
      %v8495 = vpack.c.b16 %v8485, %v8484
      %v8496 = vpack.c.b16 %v8487, %v8486
      %v8497 = vpack.c.b16 %v8489, %v8488
      %8506 = vmatprep.subr.bf16.mxu0 0
      %8507 = vmatpush1.bf16.msra.mxu0 %v8490
      %8508 = vmatprep.subr.bf16.mxu0 0
      %8509 = vmatpush1.bf16.msra.mxu0 %v8491
      %8510 = vmatprep.subr.bf16.mxu0 0
      %8511 = vmatpush1.bf16.msra.mxu0 %v8492
      %8512 = vmatprep.subr.bf16.mxu0 0
      %8513 = vmatpush1.bf16.msra.mxu0 %v8493
      %8514 = vmatprep.subr.bf16.mxu0 0
      %8515 = vmatpush1.bf16.msra.mxu0 %v8494
      %8516 = vmatprep.subr.bf16.mxu0 0
      %8517 = vmatpush1.bf16.msra.mxu0 %v8495
      %8518 = vmatprep.subr.bf16.mxu0 0
      %8519 = vmatpush1.bf16.msra.mxu0 %v8496
      %8520 = vmatprep.subr.bf16.mxu0 0
      %8521 = vmatpush1.bf16.msra.mxu0 %v8497
      %8522 = vmatprep.subr.bf16.mxu0 0
      %8523 = vmatpush1.bf16.msra.mxu0 0
      %8524 = vmatprep.subr.bf16.mxu0 0
      %8525 = vmatpush1.bf16.msra.mxu0 0
      %8526 = vmatprep.subr.bf16.mxu0 0
      %8527 = vmatpush1.bf16.msra.mxu0 0
      %8528 = vmatprep.subr.bf16.mxu0 0
      %8529 = vmatpush1.bf16.msra.mxu0 0
      %8530 = vmatprep.subr.bf16.mxu0 0
      %8531 = vmatpush1.bf16.msra.mxu0 0
      %8532 = vmatprep.subr.bf16.mxu0 0
      %8533 = vmatpush1.bf16.msra.mxu0 0
      %8534 = vmatprep.subr.bf16.mxu0 0
      %8535 = vmatpush1.bf16.msra.mxu0 0
      %8536 = vmatprep.subr.bf16.mxu0 0
      %8537 = vmatpush1.bf16.msra.mxu0 0
      %8538 = vmatprep.mubr.bf16.mxu0 0
      %8539 = vmatmul.mubr.bf16.gmra.mrb[0].mxu0 %v8371
      %v8540 = vpop.f32.mrb[0].mxu0
      %v8541 = vadd.f32 %v8456, %v8540
      %v8542 = vpop.f32.mrb[0].mxu0
      %v8543 = vpop.f32.mrb[0].mxu0
      %v8544 = vadd.f32 %v8456, %v8543
      %v8545 = vpop.f32.mrb[0].mxu0
      %8546 = vmatprep.mubr.bf16.mxu0 0
      %8547 = vmatmul.mubr.bf16.gmra.mrb[0].mxu0 %v8372
      %v8548 = vpop.f32.mrb[0].mxu0
      %v8549 = vadd.f32 %v8456, %v8548
      %v8550 = vpop.f32.mrb[0].mxu0
      %v8551 = vpop.f32.mrb[0].mxu0
      %v8552 = vadd.f32 %v8456, %v8551
      %v8553 = vpop.f32.mrb[0].mxu0
      %8554 = vmatprep.mubr.bf16.mxu0 0
      %8555 = vmatmul.mubr.bf16.gmra.mrb[0].mxu0 %v8373
      %v8556 = vpop.f32.mrb[0].mxu0
      %v8557 = vadd.f32 %v8456, %v8556
      %v8558 = vpop.f32.mrb[0].mxu0
      %v8559 = vpop.f32.mrb[0].mxu0
      %v8560 = vadd.f32 %v8456, %v8559
      %v8561 = vpop.f32.mrb[0].mxu0
      %8562 = vmatprep.mubr.bf16.mxu0 0
      %8563 = vmatmul.mubr.bf16.gmra.mrb[0].mxu0 %v8374
      %v8564 = vpop.f32.mrb[0].mxu0
      %v8565 = vadd.f32 %v8456, %v8564
      %v8566 = vpop.f32.mrb[0].mxu0
      %v8567 = vpop.f32.mrb[0].mxu0
      %v8568 = vadd.f32 %v8456, %v8567
      %v8569 = vpop.f32.mrb[0].mxu0
      %8570 = vmatprep.mubr.bf16.mxu0 0
      %8571 = vmatmul.mubr.bf16.gmra.mrb[0].mxu0 %v8375
      %v8572 = vpop.f32.mrb[0].mxu0
      %v8573 = vadd.f32 %v8456, %v8572
      %v8574 = vpop.f32.mrb[0].mxu0
      %v8575 = vpop.f32.mrb[0].mxu0
      %v8576 = vadd.f32 %v8456, %v8575
      %v8577 = vpop.f32.mrb[0].mxu0
      %8578 = vmatprep.mubr.bf16.mxu0 0
      %8579 = vmatmul.mubr.bf16.gmra.mrb[0].mxu0 %v8376
      %v8580 = vpop.f32.mrb[0].mxu0
      %v8581 = vadd.f32 %v8456, %v8580
      %v8582 = vpop.f32.mrb[0].mxu0
      %v8583 = vpop.f32.mrb[0].mxu0
      %v8584 = vadd.f32 %v8456, %v8583
      %v8585 = vpop.f32.mrb[0].mxu0
      %8586 = vmatprep.mubr.bf16.mxu0 0
      %8587 = vmatmul.mubr.bf16.gmra.mrb[0].mxu0 %v8377
      %v8588 = vpop.f32.mrb[0].mxu0
      %v8589 = vadd.f32 %v8456, %v8588
      %v8590 = vpop.f32.mrb[0].mxu0
      %v8591 = vpop.f32.mrb[0].mxu0
      %v8592 = vadd.f32 %v8456, %v8591
      %v8593 = vpop.f32.mrb[0].mxu0
      %8594 = vmatprep.mubr.bf16.mxu0 0
      %8595 = vmatmul.mubr.bf16.gmra.mrb[0].mxu0 %v8378
      %v8596 = vpop.f32.mrb[0].mxu0
      %v8597 = vadd.f32 %v8456, %v8596
      %v8598 = vpop.f32.mrb[0].mxu0
      %v8599 = vpop.f32.mrb[0].mxu0
      %v8600 = vadd.f32 %v8456, %v8599
      %v8601 = vpop.f32.mrb[0].mxu0
      %8602 = vmatprep.mubr.bf16.mxu0 0
      %8603 = vmatmul.mubr.bf16.gmra.mrb[0].mxu0 %v8379
      %v8604 = vpop.f32.mrb[0].mxu0
      %v8605 = vadd.f32 %v8456, %v8604
      %v8606 = vpop.f32.mrb[0].mxu0
      %v8607 = vpop.f32.mrb[0].mxu0
      %v8608 = vadd.f32 %v8456, %v8607
      %v8609 = vpop.f32.mrb[0].mxu0
      %8610 = vmatprep.mubr.bf16.mxu0 0
      %8611 = vmatmul.mubr.bf16.gmra.mrb[0].mxu0 %v8380
      %v8612 = vpop.f32.mrb[0].mxu0
      %v8613 = vadd.f32 %v8456, %v8612
      %v8614 = vpop.f32.mrb[0].mxu0
      %v8615 = vpop.f32.mrb[0].mxu0
      %v8616 = vadd.f32 %v8456, %v8615
      %v8617 = vpop.f32.mrb[0].mxu0
      %8618 = vmatprep.mubr.bf16.mxu0 0
      %8619 = vmatmul.mubr.bf16.gmra.mrb[0].mxu0 %v8381
      %v8620 = vpop.f32.mrb[0].mxu0
      %v8621 = vadd.f32 %v8456, %v8620
      %v8622 = vpop.f32.mrb[0].mxu0
      %v8623 = vpop.f32.mrb[0].mxu0
      %v8624 = vadd.f32 %v8456, %v8623
      %v8625 = vpop.f32.mrb[0].mxu0
      %8626 = vmatprep.mubr.bf16.mxu0 0
      %8627 = vmatmul.mubr.bf16.gmra.mrb[0].mxu0 %v8382
      %v8628 = vpop.f32.mrb[0].mxu0
      %v8629 = vadd.f32 %v8456, %v8628
      %v8630 = vpop.f32.mrb[0].mxu0
      %v8631 = vpop.f32.mrb[0].mxu0
      %v8632 = vadd.f32 %v8456, %v8631
      %v8633 = vpop.f32.mrb[0].mxu0
      %8634 = vmatprep.mubr.bf16.mxu0 0
      %8635 = vmatmul.mubr.bf16.gmra.mrb[0].mxu0 %v8383
      %v8636 = vpop.f32.mrb[0].mxu0
      %v8637 = vadd.f32 %v8456, %v8636
      %v8638 = vpop.f32.mrb[0].mxu0
      %v8639 = vpop.f32.mrb[0].mxu0
      %v8640 = vadd.f32 %v8456, %v8639
      %v8641 = vpop.f32.mrb[0].mxu0
      %8642 = vmatprep.mubr.bf16.mxu0 0
      %8643 = vmatmul.mubr.bf16.gmra.mrb[0].mxu0 %v8384
      %v8644 = vpop.f32.mrb[0].mxu0
      %v8645 = vadd.f32 %v8456, %v8644
      %v8646 = vpop.f32.mrb[0].mxu0
      %v8647 = vpop.f32.mrb[0].mxu0
      %v8648 = vadd.f32 %v8456, %v8647
      %v8649 = vpop.f32.mrb[0].mxu0
      %8650 = vmatprep.mubr.bf16.mxu0 0
      %8651 = vmatmul.mubr.bf16.gmra.mrb[0].mxu0 %v8385
      %v8652 = vpop.f32.mrb[0].mxu0
      %v8653 = vadd.f32 %v8456, %v8652
      %v8654 = vpop.f32.mrb[0].mxu0
      %v8655 = vpop.f32.mrb[0].mxu0
      %v8656 = vadd.f32 %v8456, %v8655
      %v8657 = vpop.f32.mrb[0].mxu0
      %8658 = vmatprep.mubr.bf16.mxu0 0
      %8659 = vmatmul.mubr.bf16.gmra.mrb[0].mxu0 %v8386
      %v8660 = vpop.f32.mrb[0].mxu0
      %v8661 = vadd.f32 %v8456, %v8660
      %v8662 = vpop.f32.mrb[0].mxu0
      %v8663 = vpop.f32.mrb[0].mxu0
      %v8664 = vadd.f32 %v8456, %v8663
      %v8665 = vpop.f32.mrb[0].mxu0
      %8666 = vmatprep.mubr.bf16.mxu0 0
      %8667 = vmatmul.mubr.bf16.gmra.mrb[0].mxu0 %v8387
      %v8668 = vpop.f32.mrb[0].mxu0
      %v8669 = vadd.f32 %v8456, %v8668
      %v8670 = vpop.f32.mrb[0].mxu0
      %v8671 = vpop.f32.mrb[0].mxu0
      %v8672 = vadd.f32 %v8456, %v8671
      %v8673 = vpop.f32.mrb[0].mxu0
      %8674 = vmatprep.mubr.bf16.mxu0 0
      %8675 = vmatmul.mubr.bf16.gmra.mrb[0].mxu0 %v8388
      %v8676 = vpop.f32.mrb[0].mxu0
      %v8677 = vadd.f32 %v8456, %v8676
      %v8678 = vpop.f32.mrb[0].mxu0
      %v8679 = vpop.f32.mrb[0].mxu0
      %v8680 = vadd.f32 %v8456, %v8679
      %v8681 = vpop.f32.mrb[0].mxu0
      %8682 = vmatprep.mubr.bf16.mxu0 0
      %8683 = vmatmul.mubr.bf16.gmra.mrb[0].mxu0 %v8389
      %v8684 = vpop.f32.mrb[0].mxu0
      %v8685 = vadd.f32 %v8456, %v8684
      %v8686 = vpop.f32.mrb[0].mxu0
      %v8687 = vpop.f32.mrb[0].mxu0
      %v8688 = vadd.f32 %v8456, %v8687
      %v8689 = vpop.f32.mrb[0].mxu0
      %8690 = vmatprep.mubr.bf16.mxu0 0
      %8691 = vmatmul.mubr.bf16.gmra.mrb[0].mxu0 %v8390
      %v8692 = vpop.f32.mrb[0].mxu0
      %v8693 = vadd.f32 %v8456, %v8692
      %v8694 = vpop.f32.mrb[0].mxu0
      %v8695 = vpop.f32.mrb[0].mxu0
      %v8696 = vadd.f32 %v8456, %v8695
      %v8697 = vpop.f32.mrb[0].mxu0
      %8698 = vmatprep.mubr.bf16.mxu0 0
      %8699 = vmatmul.mubr.bf16.gmra.mrb[0].mxu0 %v8391
      %v8700 = vpop.f32.mrb[0].mxu0
      %v8701 = vadd.f32 %v8456, %v8700
      %v8702 = vpop.f32.mrb[0].mxu0
      %v8703 = vpop.f32.mrb[0].mxu0
      %v8704 = vadd.f32 %v8456, %v8703
      %v8705 = vpop.f32.mrb[0].mxu0
      %8706 = vmatprep.mubr.bf16.mxu0 0
      %8707 = vmatmul.mubr.bf16.gmra.mrb[0].mxu0 %v8392
      %v8708 = vpop.f32.mrb[0].mxu0
      %v8709 = vadd.f32 %v8456, %v8708
      %v8710 = vpop.f32.mrb[0].mxu0
      %v8711 = vpop.f32.mrb[0].mxu0
      %v8712 = vadd.f32 %v8456, %v8711
      %v8713 = vpop.f32.mrb[0].mxu0
      %8714 = vmatprep.mubr.bf16.mxu0 0
      %8715 = vmatmul.mubr.bf16.gmra.mrb[0].mxu0 %v8393
      %v8716 = vpop.f32.mrb[0].mxu0
      %v8717 = vadd.f32 %v8456, %v8716
      %v8718 = vpop.f32.mrb[0].mxu0
      %v8719 = vpop.f32.mrb[0].mxu0
      %v8720 = vadd.f32 %v8456, %v8719
      %v8721 = vpop.f32.mrb[0].mxu0
      %8722 = vmatprep.mubr.bf16.mxu0 0
      %8723 = vmatmul.mubr.bf16.gmra.mrb[0].mxu0 %v8394
      %v8724 = vpop.f32.mrb[0].mxu0
      %v8725 = vadd.f32 %v8456, %v8724
      %v8726 = vpop.f32.mrb[0].mxu0
      %v8727 = vpop.f32.mrb[0].mxu0
      %v8728 = vadd.f32 %v8456, %v8727
      %v8729 = vpop.f32.mrb[0].mxu0
      %8730 = vmatprep.mubr.bf16.mxu0 0
      %8731 = vmatmul.mubr.bf16.gmra.mrb[0].mxu0 %v8395
      %v8732 = vpop.f32.mrb[0].mxu0
      %v8733 = vadd.f32 %v8456, %v8732
      %v8734 = vpop.f32.mrb[0].mxu0
      %v8735 = vpop.f32.mrb[0].mxu0
      %v8736 = vadd.f32 %v8456, %v8735
      %v8737 = vpop.f32.mrb[0].mxu0
      %8738 = vmatprep.mubr.bf16.mxu0 0
      %8739 = vmatmul.mubr.bf16.gmra.mrb[0].mxu0 %v8396
      %v8740 = vpop.f32.mrb[0].mxu0
      %v8741 = vadd.f32 %v8456, %v8740
      %v8742 = vpop.f32.mrb[0].mxu0
      %v8743 = vpop.f32.mrb[0].mxu0
      %v8744 = vadd.f32 %v8456, %v8743
      %v8745 = vpop.f32.mrb[0].mxu0
      %8746 = vmatprep.mubr.bf16.mxu0 0
      %8747 = vmatmul.mubr.bf16.gmra.mrb[0].mxu0 %v8397
      %v8748 = vpop.f32.mrb[0].mxu0
      %v8749 = vadd.f32 %v8456, %v8748
      %v8750 = vpop.f32.mrb[0].mxu0
      %v8751 = vpop.f32.mrb[0].mxu0
      %v8752 = vadd.f32 %v8456, %v8751
      %v8753 = vpop.f32.mrb[0].mxu0
      %8754 = vmatprep.mubr.bf16.mxu0 0
      %8755 = vmatmul.mubr.bf16.gmra.mrb[0].mxu0 %v8398
      %v8756 = vpop.f32.mrb[0].mxu0
      %v8757 = vadd.f32 %v8456, %v8756
      %v8758 = vpop.f32.mrb[0].mxu0
      %v8759 = vpop.f32.mrb[0].mxu0
      %v8760 = vadd.f32 %v8456, %v8759
      %v8761 = vpop.f32.mrb[0].mxu0
      %8762 = vmatprep.mubr.bf16.mxu0 0
      %8763 = vmatmul.mubr.bf16.gmra.mrb[0].mxu0 %v8399
      %v8764 = vpop.f32.mrb[0].mxu0
      %v8765 = vadd.f32 %v8456, %v8764
      %v8766 = vpop.f32.mrb[0].mxu0
      %v8767 = vpop.f32.mrb[0].mxu0
      %v8768 = vadd.f32 %v8456, %v8767
      %v8769 = vpop.f32.mrb[0].mxu0
      %8770 = vmatprep.mubr.bf16.mxu0 0
      %8771 = vmatmul.mubr.bf16.gmra.mrb[0].mxu0 %v8400
      %v8772 = vpop.f32.mrb[0].mxu0
      %v8773 = vadd.f32 %v8456, %v8772
      %v8774 = vpop.f32.mrb[0].mxu0
      %v8775 = vpop.f32.mrb[0].mxu0
      %v8776 = vadd.f32 %v8456, %v8775
      %v8777 = vpop.f32.mrb[0].mxu0
      %8778 = vmatprep.mubr.bf16.mxu0 0
      %8779 = vmatmul.mubr.bf16.gmra.mrb[0].mxu0 %v8401
      %v8780 = vpop.f32.mrb[0].mxu0
      %v8781 = vadd.f32 %v8456, %v8780
      %v8782 = vpop.f32.mrb[0].mxu0
      %v8783 = vpop.f32.mrb[0].mxu0
      %v8784 = vadd.f32 %v8456, %v8783
      %v8785 = vpop.f32.mrb[0].mxu0
      %8786 = vmatprep.mubr.bf16.mxu0 0
      %8787 = vmatmul.mubr.bf16.gmra.mrb[0].mxu0 %v8402
      %v8788 = vpop.f32.mrb[0].mxu0
      %v8789 = vadd.f32 %v8456, %v8788
      %v8790 = vpop.f32.mrb[0].mxu0
      %v8791 = vpop.f32.mrb[0].mxu0
      %v8792 = vadd.f32 %v8456, %v8791
      %v8793 = vpop.f32.mrb[0].mxu0
      %8794 = vmatprep.mubr.bf16.mxu0 0
      %8795 = vmatmul.mubr.bf16.gmra.mrb[0].mxu0 %v8403
      %v8796 = vpop.f32.mrb[0].mxu0
      %v8797 = vadd.f32 %v8456, %v8796
      %v8798 = vpop.f32.mrb[0].mxu0
      %v8799 = vpop.f32.mrb[0].mxu0
      %v8800 = vadd.f32 %v8456, %v8799
      %v8801 = vpop.f32.mrb[0].mxu0
      %8802 = vmatprep.mubr.bf16.mxu0 0
      %8803 = vmatmul.mubr.bf16.gmra.mrb[0].mxu0 %v8404
      %v8804 = vpop.f32.mrb[0].mxu0
      %v8805 = vadd.f32 %v8456, %v8804
      %v8806 = vpop.f32.mrb[0].mxu0
      %v8807 = vpop.f32.mrb[0].mxu0
      %v8808 = vadd.f32 %v8456, %v8807
      %v8809 = vpop.f32.mrb[0].mxu0
      %8810 = vmatprep.mubr.bf16.mxu0 0
      %8811 = vmatmul.mubr.bf16.gmra.mrb[0].mxu0 %v8405
      %v8812 = vpop.f32.mrb[0].mxu0
      %v8813 = vadd.f32 %v8456, %v8812
      %v8814 = vpop.f32.mrb[0].mxu0
      %v8815 = vpop.f32.mrb[0].mxu0
      %v8816 = vadd.f32 %v8456, %v8815
      %v8817 = vpop.f32.mrb[0].mxu0
      %8818 = vmatprep.mubr.bf16.mxu0 0
      %8819 = vmatmul.mubr.bf16.gmra.mrb[0].mxu0 %v8406
      %v8820 = vpop.f32.mrb[0].mxu0
      %v8821 = vadd.f32 %v8456, %v8820
      %v8822 = vpop.f32.mrb[0].mxu0
      %v8823 = vpop.f32.mrb[0].mxu0
      %v8824 = vadd.f32 %v8456, %v8823
      %v8825 = vpop.f32.mrb[0].mxu0
      %8826 = vmatprep.mubr.bf16.mxu0 0
      %8827 = vmatmul.mubr.bf16.gmra.mrb[0].mxu0 %v8407
      %v8828 = vpop.f32.mrb[0].mxu0
      %v8829 = vadd.f32 %v8456, %v8828
      %v8830 = vpop.f32.mrb[0].mxu0
      %v8831 = vpop.f32.mrb[0].mxu0
      %v8832 = vadd.f32 %v8456, %v8831
      %v8833 = vpop.f32.mrb[0].mxu0
      %8834 = vmatprep.mubr.bf16.mxu0 0
      %8835 = vmatmul.mubr.bf16.gmra.mrb[0].mxu0 %v8408
      %v8836 = vpop.f32.mrb[0].mxu0
      %v8837 = vadd.f32 %v8456, %v8836
      %v8838 = vpop.f32.mrb[0].mxu0
      %v8839 = vpop.f32.mrb[0].mxu0
      %v8840 = vadd.f32 %v8456, %v8839
      %v8841 = vpop.f32.mrb[0].mxu0
      %8842 = vmatprep.mubr.bf16.mxu0 0
      %8843 = vmatmul.mubr.bf16.gmra.mrb[0].mxu0 %v8409
      %v8844 = vpop.f32.mrb[0].mxu0
      %v8845 = vadd.f32 %v8456, %v8844
      %v8846 = vpop.f32.mrb[0].mxu0
      %v8847 = vpop.f32.mrb[0].mxu0
      %v8848 = vadd.f32 %v8456, %v8847
      %v8849 = vpop.f32.mrb[0].mxu0
      %8850 = vmatprep.mubr.bf16.mxu0 0
      %8851 = vmatmul.mubr.bf16.gmra.mrb[0].mxu0 %v8410
      %v8852 = vpop.f32.mrb[0].mxu0
      %v8853 = vadd.f32 %v8456, %v8852
      %v8854 = vpop.f32.mrb[0].mxu0
      %v8855 = vpop.f32.mrb[0].mxu0
      %v8856 = vadd.f32 %v8456, %v8855
      %v8857 = vpop.f32.mrb[0].mxu0
      %8858 = vmatprep.mubr.bf16.mxu0 0
      %8859 = vmatmul.mubr.bf16.gmra.mrb[0].mxu0 %v8411
      %v8860 = vpop.f32.mrb[0].mxu0
      %v8861 = vadd.f32 %v8456, %v8860
      %v8862 = vpop.f32.mrb[0].mxu0
      %v8863 = vpop.f32.mrb[0].mxu0
      %v8864 = vadd.f32 %v8456, %v8863
      %v8865 = vpop.f32.mrb[0].mxu0
      %8866 = vmatprep.mubr.bf16.mxu0 0
      %8867 = vmatmul.mubr.bf16.gmra.mrb[0].mxu0 %v8412
      %v8868 = vpop.f32.mrb[0].mxu0
      %v8869 = vadd.f32 %v8456, %v8868
      %v8870 = vpop.f32.mrb[0].mxu0
      %v8871 = vpop.f32.mrb[0].mxu0
      %v8872 = vadd.f32 %v8456, %v8871
      %v8873 = vpop.f32.mrb[0].mxu0
      %8874 = vmatprep.mubr.bf16.mxu0 0
      %8875 = vmatmul.mubr.bf16.gmra.mrb[0].mxu0 %v8413
      %v8876 = vpop.f32.mrb[0].mxu0
      %v8877 = vadd.f32 %v8456, %v8876
      %v8878 = vpop.f32.mrb[0].mxu0
      %v8879 = vpop.f32.mrb[0].mxu0
      %v8880 = vadd.f32 %v8456, %v8879
      %v8881 = vpop.f32.mrb[0].mxu0
      %8882 = vmatprep.mubr.bf16.mxu0 0
      %8883 = vmatmul.mubr.bf16.gmra.mrb[0].mxu0 %v8414
      %v8884 = vpop.f32.mrb[0].mxu0
      %v8885 = vadd.f32 %v8456, %v8884
      %v8886 = vpop.f32.mrb[0].mxu0
      %v8887 = vpop.f32.mrb[0].mxu0
      %v8888 = vadd.f32 %v8456, %v8887
      %v8889 = vpop.f32.mrb[0].mxu0
      %8890 = vmatprep.mubr.bf16.mxu0 0
      %8891 = vmatmul.mubr.bf16.gmra.mrb[0].mxu0 %v8415
      %v8892 = vpop.f32.mrb[0].mxu0
      %v8893 = vadd.f32 %v8456, %v8892
      %v8894 = vpop.f32.mrb[0].mxu0
      %v8895 = vpop.f32.mrb[0].mxu0
      %v8896 = vadd.f32 %v8456, %v8895
      %v8897 = vpop.f32.mrb[0].mxu0
      %8898 = vmatprep.mubr.bf16.mxu0 0
      %8899 = vmatmul.mubr.bf16.gmra.mrb[0].mxu0 %v8416
      %v8900 = vpop.f32.mrb[0].mxu0
      %v8901 = vadd.f32 %v8456, %v8900
      %v8902 = vpop.f32.mrb[0].mxu0
      %v8903 = vpop.f32.mrb[0].mxu0
      %v8904 = vadd.f32 %v8456, %v8903
      %v8905 = vpop.f32.mrb[0].mxu0
      %8906 = vmatprep.mubr.bf16.mxu0 0
      %8907 = vmatmul.mubr.bf16.gmra.mrb[0].mxu0 %v8417
      %v8908 = vpop.f32.mrb[0].mxu0
      %v8909 = vadd.f32 %v8456, %v8908
      %v8910 = vpop.f32.mrb[0].mxu0
      %v8911 = vpop.f32.mrb[0].mxu0
      %v8912 = vadd.f32 %v8456, %v8911
      %v8913 = vpop.f32.mrb[0].mxu0
      %8914 = vmatprep.mubr.bf16.mxu0 0
      %8915 = vmatmul.mubr.bf16.gmra.mrb[0].mxu0 %v8418
      %v8916 = vpop.f32.mrb[0].mxu0
      %v8917 = vadd.f32 %v8456, %v8916
      %v8918 = vpop.f32.mrb[0].mxu0
      %v8919 = vpop.f32.mrb[0].mxu0
      %v8920 = vadd.f32 %v8456, %v8919
      %v8921 = vpop.f32.mrb[0].mxu0
      %8922 = vmatprep.mubr.bf16.mxu0 0
      %8923 = vmatmul.mubr.bf16.gmra.mrb[0].mxu0 %v8419
      %v8924 = vpop.f32.mrb[0].mxu0
      %v8925 = vadd.f32 %v8456, %v8924
      %v8926 = vpop.f32.mrb[0].mxu0
      %v8927 = vpop.f32.mrb[0].mxu0
      %v8928 = vadd.f32 %v8456, %v8927
      %v8929 = vpop.f32.mrb[0].mxu0
      %8930 = vmatprep.mubr.bf16.mxu0 0
      %8931 = vmatmul.mubr.bf16.gmra.mrb[0].mxu0 %v8420
      %v8932 = vpop.f32.mrb[0].mxu0
      %v8933 = vadd.f32 %v8456, %v8932
      %v8934 = vpop.f32.mrb[0].mxu0
      %v8935 = vpop.f32.mrb[0].mxu0
      %v8936 = vadd.f32 %v8456, %v8935
      %v8937 = vpop.f32.mrb[0].mxu0
      %8938 = vmatprep.mubr.bf16.mxu0 0
      %8939 = vmatmul.mubr.bf16.gmra.mrb[0].mxu0 %v8421
      %v8940 = vpop.f32.mrb[0].mxu0
      %v8941 = vadd.f32 %v8456, %v8940
      %v8942 = vpop.f32.mrb[0].mxu0
      %v8943 = vpop.f32.mrb[0].mxu0
      %v8944 = vadd.f32 %v8456, %v8943
      %v8945 = vpop.f32.mrb[0].mxu0
      %8946 = vmatprep.mubr.bf16.mxu0 0
      %8947 = vmatmul.mubr.bf16.gmra.mrb[0].mxu0 %v8422
      %v8948 = vpop.f32.mrb[0].mxu0
      %v8949 = vadd.f32 %v8456, %v8948
      %v8950 = vpop.f32.mrb[0].mxu0
      %v8951 = vpop.f32.mrb[0].mxu0
      %v8952 = vadd.f32 %v8456, %v8951
      %v8953 = vpop.f32.mrb[0].mxu0
      %8954 = vmatprep.mubr.bf16.mxu0 0
      %8955 = vmatmul.mubr.bf16.gmra.mrb[0].mxu0 %v8423
      %v8956 = vpop.f32.mrb[0].mxu0
      %v8957 = vadd.f32 %v8456, %v8956
      %v8958 = vpop.f32.mrb[0].mxu0
      %v8959 = vpop.f32.mrb[0].mxu0
      %v8960 = vadd.f32 %v8456, %v8959
      %v8961 = vpop.f32.mrb[0].mxu0
      %8962 = vmatprep.mubr.bf16.mxu0 0
      %8963 = vmatmul.mubr.bf16.gmra.mrb[0].mxu0 %v8424
      %v8964 = vpop.f32.mrb[0].mxu0
      %v8965 = vadd.f32 %v8456, %v8964
      %v8966 = vpop.f32.mrb[0].mxu0
      %v8967 = vpop.f32.mrb[0].mxu0
      %v8968 = vadd.f32 %v8456, %v8967
      %v8969 = vpop.f32.mrb[0].mxu0
      %8970 = vmatprep.mubr.bf16.mxu0 0
      %8971 = vmatmul.mubr.bf16.gmra.mrb[0].mxu0 %v8425
      %v8972 = vpop.f32.mrb[0].mxu0
      %v8973 = vadd.f32 %v8456, %v8972
      %v8974 = vpop.f32.mrb[0].mxu0
      %v8975 = vpop.f32.mrb[0].mxu0
      %v8976 = vadd.f32 %v8456, %v8975
      %v8977 = vpop.f32.mrb[0].mxu0
      %8978 = vmatprep.mubr.bf16.mxu0 0
      %8979 = vmatmul.mubr.bf16.gmra.mrb[0].mxu0 %v8426
      %v8980 = vpop.f32.mrb[0].mxu0
      %v8981 = vadd.f32 %v8456, %v8980
      %v8982 = vpop.f32.mrb[0].mxu0
      %v8983 = vpop.f32.mrb[0].mxu0
      %v8984 = vadd.f32 %v8456, %v8983
      %v8985 = vpop.f32.mrb[0].mxu0
      %8986 = vmatprep.mubr.bf16.mxu0 0
      %8987 = vmatmul.mubr.bf16.gmra.mrb[0].mxu0 %v8427
      %v8988 = vpop.f32.mrb[0].mxu0
      %v8989 = vadd.f32 %v8456, %v8988
      %v8990 = vpop.f32.mrb[0].mxu0
      %v8991 = vpop.f32.mrb[0].mxu0
      %v8992 = vadd.f32 %v8456, %v8991
      %v8993 = vpop.f32.mrb[0].mxu0
      %8994 = vmatprep.mubr.bf16.mxu0 0
      %8995 = vmatmul.mubr.bf16.gmra.mrb[0].mxu0 %v8428
      %v8996 = vpop.f32.mrb[0].mxu0
      %v8997 = vadd.f32 %v8456, %v8996
      %v8998 = vpop.f32.mrb[0].mxu0
      %v8999 = vpop.f32.mrb[0].mxu0
      %v9000 = vadd.f32 %v8456, %v8999
      %v9001 = vpop.f32.mrb[0].mxu0
      %9002 = vmatprep.mubr.bf16.mxu0 0
      %9003 = vmatmul.mubr.bf16.gmra.mrb[0].mxu0 %v8429
      %v9004 = vpop.f32.mrb[0].mxu0
      %v9005 = vadd.f32 %v8456, %v9004
      %v9006 = vpop.f32.mrb[0].mxu0
      %v9007 = vpop.f32.mrb[0].mxu0
      %v9008 = vadd.f32 %v8456, %v9007
      %v9009 = vpop.f32.mrb[0].mxu0
      %9010 = vmatprep.mubr.bf16.mxu0 0
      %9011 = vmatmul.mubr.bf16.gmra.mrb[0].mxu0 %v8430
      %v9012 = vpop.f32.mrb[0].mxu0
      %v9013 = vadd.f32 %v8456, %v9012
      %v9014 = vpop.f32.mrb[0].mxu0
      %v9015 = vpop.f32.mrb[0].mxu0
      %v9016 = vadd.f32 %v8456, %v9015
      %v9017 = vpop.f32.mrb[0].mxu0
      %9018 = vmatprep.mubr.bf16.mxu0 0
      %9019 = vmatmul.mubr.bf16.gmra.mrb[0].mxu0 %v8431
      %v9020 = vpop.f32.mrb[0].mxu0
      %v9021 = vadd.f32 %v8456, %v9020
      %v9022 = vpop.f32.mrb[0].mxu0
      %v9023 = vpop.f32.mrb[0].mxu0
      %v9024 = vadd.f32 %v8456, %v9023
      %v9025 = vpop.f32.mrb[0].mxu0
      %9026 = vmatprep.mubr.bf16.mxu0 0
      %9027 = vmatmul.mubr.bf16.gmra.mrb[0].mxu0 %v8432
      %v9028 = vpop.f32.mrb[0].mxu0
      %v9029 = vadd.f32 %v8456, %v9028
      %v9030 = vpop.f32.mrb[0].mxu0
      %v9031 = vpop.f32.mrb[0].mxu0
      %v9032 = vadd.f32 %v8456, %v9031
      %v9033 = vpop.f32.mrb[0].mxu0
      %9034 = vmatprep.mubr.bf16.mxu0 0
      %9035 = vmatmul.mubr.bf16.gmra.mrb[0].mxu0 %v8433
      %v9036 = vpop.f32.mrb[0].mxu0
      %v9037 = vadd.f32 %v8456, %v9036
      %v9038 = vpop.f32.mrb[0].mxu0
      %v9039 = vpop.f32.mrb[0].mxu0
      %v9040 = vadd.f32 %v8456, %v9039
      %v9041 = vpop.f32.mrb[0].mxu0
      %9042 = vmatprep.mubr.bf16.mxu0 0
      %9043 = vmatmul.mubr.bf16.gmra.mrb[0].mxu0 %v8434
      %v9044 = vpop.f32.mrb[0].mxu0
      %v9045 = vadd.f32 %v8456, %v9044
      %v9046 = vpop.f32.mrb[0].mxu0
      %v9047 = vpop.f32.mrb[0].mxu0
      %v9048 = vadd.f32 %v8456, %v9047
      %v9049 = vpop.f32.mrb[0].mxu0
      %9050 = vdwg.mxu0
      %v9051 = vmax.f32 %v8541, 0.0
      %v9052 = vmax.f32 %v8544, 0.0
      %v9053 = vmax.f32 %v8549, 0.0
      %v9054 = vmax.f32 %v8552, 0.0
      %v9055 = vmax.f32 %v8557, 0.0
      %v9056 = vmax.f32 %v8560, 0.0
      %v9057 = vmax.f32 %v8565, 0.0
      %v9058 = vmax.f32 %v8568, 0.0
      %v9059 = vmax.f32 %v8573, 0.0
      %v9060 = vmax.f32 %v8576, 0.0
      %v9061 = vmax.f32 %v8581, 0.0
      %v9062 = vmax.f32 %v8584, 0.0
      %v9063 = vmax.f32 %v8589, 0.0
      %v9064 = vmax.f32 %v8592, 0.0
      %v9065 = vmax.f32 %v8597, 0.0
      %v9066 = vmax.f32 %v8600, 0.0
      %v9067 = vmax.f32 %v8605, 0.0
      %v9068 = vmax.f32 %v8608, 0.0
      %v9069 = vmax.f32 %v8613, 0.0
      %v9070 = vmax.f32 %v8616, 0.0
      %v9071 = vmax.f32 %v8621, 0.0
      %v9072 = vmax.f32 %v8624, 0.0
      %v9073 = vmax.f32 %v8629, 0.0
      %v9074 = vmax.f32 %v8632, 0.0
      %v9075 = vmax.f32 %v8637, 0.0
      %v9076 = vmax.f32 %v8640, 0.0
      %v9077 = vmax.f32 %v8645, 0.0
      %v9078 = vmax.f32 %v8648, 0.0
      %v9079 = vmax.f32 %v8653, 0.0
      %v9080 = vmax.f32 %v8656, 0.0
      %v9081 = vmax.f32 %v8661, 0.0
      %v9082 = vmax.f32 %v8664, 0.0
      %v9083 = vmax.f32 %v8669, 0.0
      %v9084 = vmax.f32 %v8672, 0.0
      %v9085 = vmax.f32 %v8677, 0.0
      %v9086 = vmax.f32 %v8680, 0.0
      %v9087 = vmax.f32 %v8685, 0.0
      %v9088 = vmax.f32 %v8688, 0.0
      %v9089 = vmax.f32 %v8693, 0.0
      %v9090 = vmax.f32 %v8696, 0.0
      %v9091 = vmax.f32 %v8701, 0.0
      %v9092 = vmax.f32 %v8704, 0.0
      %v9093 = vmax.f32 %v8709, 0.0
      %v9094 = vmax.f32 %v8712, 0.0
      %v9095 = vmax.f32 %v8717, 0.0
      %v9096 = vmax.f32 %v8720, 0.0
      %v9097 = vmax.f32 %v8725, 0.0
      %v9098 = vmax.f32 %v8728, 0.0
      %v9099 = vmax.f32 %v8733, 0.0
      %v9100 = vmax.f32 %v8736, 0.0
      %v9101 = vmax.f32 %v8741, 0.0
      %v9102 = vmax.f32 %v8744, 0.0
      %v9103 = vmax.f32 %v8749, 0.0
      %v9104 = vmax.f32 %v8752, 0.0
      %v9105 = vmax.f32 %v8757, 0.0
      %v9106 = vmax.f32 %v8760, 0.0
      %v9107 = vmax.f32 %v8765, 0.0
      %v9108 = vmax.f32 %v8768, 0.0
      %v9109 = vmax.f32 %v8773, 0.0
      %v9110 = vmax.f32 %v8776, 0.0
      %v9111 = vmax.f32 %v8781, 0.0
      %v9112 = vmax.f32 %v8784, 0.0
      %v9113 = vmax.f32 %v8789, 0.0
      %v9114 = vmax.f32 %v8792, 0.0
      %v9115 = vmax.f32 %v8797, 0.0
      %v9116 = vmax.f32 %v8800, 0.0
      %v9117 = vmax.f32 %v8805, 0.0
      %v9118 = vmax.f32 %v8808, 0.0
      %v9119 = vmax.f32 %v8813, 0.0
      %v9120 = vmax.f32 %v8816, 0.0
      %v9121 = vmax.f32 %v8821, 0.0
      %v9122 = vmax.f32 %v8824, 0.0
      %v9123 = vmax.f32 %v8829, 0.0
      %v9124 = vmax.f32 %v8832, 0.0
      %v9125 = vmax.f32 %v8837, 0.0
      %v9126 = vmax.f32 %v8840, 0.0
      %v9127 = vmax.f32 %v8845, 0.0
      %v9128 = vmax.f32 %v8848, 0.0
      %v9129 = vmax.f32 %v8853, 0.0
      %v9130 = vmax.f32 %v8856, 0.0
      %v9131 = vmax.f32 %v8861, 0.0
      %v9132 = vmax.f32 %v8864, 0.0
      %v9133 = vmax.f32 %v8869, 0.0
      %v9134 = vmax.f32 %v8872, 0.0
      %v9135 = vmax.f32 %v8877, 0.0
      %v9136 = vmax.f32 %v8880, 0.0
      %v9137 = vmax.f32 %v8885, 0.0
      %v9138 = vmax.f32 %v8888, 0.0
      %v9139 = vmax.f32 %v8893, 0.0
      %v9140 = vmax.f32 %v8896, 0.0
      %v9141 = vmax.f32 %v8901, 0.0
      %v9142 = vmax.f32 %v8904, 0.0
      %v9143 = vmax.f32 %v8909, 0.0
      %v9144 = vmax.f32 %v8912, 0.0
      %v9145 = vmax.f32 %v8917, 0.0
      %v9146 = vmax.f32 %v8920, 0.0
      %v9147 = vmax.f32 %v8925, 0.0
      %v9148 = vmax.f32 %v8928, 0.0
      %v9149 = vmax.f32 %v8933, 0.0
      %v9150 = vmax.f32 %v8936, 0.0
      %v9151 = vmax.f32 %v8941, 0.0
      %v9152 = vmax.f32 %v8944, 0.0
      %v9153 = vmax.f32 %v8949, 0.0
      %v9154 = vmax.f32 %v8952, 0.0
      %v9155 = vmax.f32 %v8957, 0.0
      %v9156 = vmax.f32 %v8960, 0.0
      %v9157 = vmax.f32 %v8965, 0.0
      %v9158 = vmax.f32 %v8968, 0.0
      %v9159 = vmax.f32 %v8973, 0.0
      %v9160 = vmax.f32 %v8976, 0.0
      %v9161 = vmax.f32 %v8981, 0.0
      %v9162 = vmax.f32 %v8984, 0.0
      %v9163 = vmax.f32 %v8989, 0.0
      %v9164 = vmax.f32 %v8992, 0.0
      %v9165 = vmax.f32 %v8997, 0.0
      %v9166 = vmax.f32 %v9000, 0.0
      %v9167 = vmax.f32 %v9005, 0.0
      %v9168 = vmax.f32 %v9008, 0.0
      %v9169 = vmax.f32 %v9013, 0.0
      %v9170 = vmax.f32 %v9016, 0.0
      %v9171 = vmax.f32 %v9021, 0.0
      %v9172 = vmax.f32 %v9024, 0.0
      %v9173 = vmax.f32 %v9029, 0.0
      %v9174 = vmax.f32 %v9032, 0.0
      %v9175 = vmax.f32 %v9037, 0.0
      %v9176 = vmax.f32 %v9040, 0.0
      %v9177 = vmax.f32 %v9045, 0.0
      %v9178 = vmax.f32 %v9048, 0.0
      %v9179 = vpack.c.bf16 %v9052, %v9051
      %v9180 = vpack.c.bf16 %v9054, %v9053
      %v9181 = vpack.c.bf16 %v9056, %v9055
      %v9182 = vpack.c.bf16 %v9058, %v9057
      %v9183 = vpack.c.bf16 %v9060, %v9059
      %v9184 = vpack.c.bf16 %v9062, %v9061
      %v9185 = vpack.c.bf16 %v9064, %v9063
      %v9186 = vpack.c.bf16 %v9066, %v9065
      %v9187 = vpack.c.bf16 %v9068, %v9067
      %v9188 = vpack.c.bf16 %v9070, %v9069
      %v9189 = vpack.c.bf16 %v9072, %v9071
      %v9190 = vpack.c.bf16 %v9074, %v9073
      %v9191 = vpack.c.bf16 %v9076, %v9075
      %v9192 = vpack.c.bf16 %v9078, %v9077
      %v9193 = vpack.c.bf16 %v9080, %v9079
      %v9194 = vpack.c.bf16 %v9082, %v9081
      %v9195 = vpack.c.bf16 %v9084, %v9083
      %v9196 = vpack.c.bf16 %v9086, %v9085
      %v9197 = vpack.c.bf16 %v9088, %v9087
      %v9198 = vpack.c.bf16 %v9090, %v9089
      %v9199 = vpack.c.bf16 %v9092, %v9091
      %v9200 = vpack.c.bf16 %v9094, %v9093
      %v9201 = vpack.c.bf16 %v9096, %v9095
      %v9202 = vpack.c.bf16 %v9098, %v9097
      %v9203 = vpack.c.bf16 %v9100, %v9099
      %v9204 = vpack.c.bf16 %v9102, %v9101
      %v9205 = vpack.c.bf16 %v9104, %v9103
      %v9206 = vpack.c.bf16 %v9106, %v9105
      %v9207 = vpack.c.bf16 %v9108, %v9107
      %v9208 = vpack.c.bf16 %v9110, %v9109
      %v9209 = vpack.c.bf16 %v9112, %v9111
      %v9210 = vpack.c.bf16 %v9114, %v9113
      %v9211 = vpack.c.bf16 %v9116, %v9115
      %v9212 = vpack.c.bf16 %v9118, %v9117
      %v9213 = vpack.c.bf16 %v9120, %v9119
      %v9214 = vpack.c.bf16 %v9122, %v9121
      %v9215 = vpack.c.bf16 %v9124, %v9123
      %v9216 = vpack.c.bf16 %v9126, %v9125
      %v9217 = vpack.c.bf16 %v9128, %v9127
      %v9218 = vpack.c.bf16 %v9130, %v9129
      %v9219 = vpack.c.bf16 %v9132, %v9131
      %v9220 = vpack.c.bf16 %v9134, %v9133
      %v9221 = vpack.c.bf16 %v9136, %v9135
      %v9222 = vpack.c.bf16 %v9138, %v9137
      %v9223 = vpack.c.bf16 %v9140, %v9139
      %v9224 = vpack.c.bf16 %v9142, %v9141
      %v9225 = vpack.c.bf16 %v9144, %v9143
      %v9226 = vpack.c.bf16 %v9146, %v9145
      %v9227 = vpack.c.bf16 %v9148, %v9147
      %v9228 = vpack.c.bf16 %v9150, %v9149
      %v9229 = vpack.c.bf16 %v9152, %v9151
      %v9230 = vpack.c.bf16 %v9154, %v9153
      %v9231 = vpack.c.bf16 %v9156, %v9155
      %v9232 = vpack.c.bf16 %v9158, %v9157
      %v9233 = vpack.c.bf16 %v9160, %v9159
      %v9234 = vpack.c.bf16 %v9162, %v9161
      %v9235 = vpack.c.bf16 %v9164, %v9163
      %v9236 = vpack.c.bf16 %v9166, %v9165
      %v9237 = vpack.c.bf16 %v9168, %v9167
      %v9238 = vpack.c.bf16 %v9170, %v9169
      %v9239 = vpack.c.bf16 %v9172, %v9171
      %v9240 = vpack.c.bf16 %v9174, %v9173
      %v9241 = vpack.c.bf16 %v9176, %v9175
      %v9242 = vpack.c.bf16 %v9178, %v9177
      %v9243 = vld [vmem:[%s11] sm:$0xff]
      %v9244 = vld [vmem:[%s11 + $0x8] sm:$0xff]
      %v9245 = vld [vmem:[%s11 + $0x10] sm:$0xff]
      %v9246 = vld [vmem:[%s11 + $0x18] sm:$0xff]
      %v9247 = vld [vmem:[%s11 + $0x20] sm:$0xff]
      %v9248 = vld [vmem:[%s11 + $0x28] sm:$0xff]
      %v9249 = vld [vmem:[%s11 + $0x30] sm:$0xff]
      %v9250 = vld [vmem:[%s11 + $0x38] sm:$0xff]
      %v9251 = vld [vmem:[%s11 + $0x40] sm:$0xff]
      %v9252 = vld [vmem:[%s11 + $0x48] sm:$0xff]
      %v9253 = vld [vmem:[%s11 + $0x50] sm:$0xff]
      %v9254 = vld [vmem:[%s11 + $0x58] sm:$0xff]
      %v9255 = vld [vmem:[%s11 + $0x60] sm:$0xff]
      %v9256 = vld [vmem:[%s11 + $0x68] sm:$0xff]
      %v9257 = vld [vmem:[%s11 + $0x70] sm:$0xff]
      %v9258 = vld [vmem:[%s11 + $0x78] sm:$0xff]
      %v9259 = vld [vmem:[%s11 + $0x80] sm:$0xff]
      %v9260 = vld [vmem:[%s11 + $0x88] sm:$0xff]
      %v9261 = vld [vmem:[%s11 + $0x90] sm:$0xff]
      %v9262 = vld [vmem:[%s11 + $0x98] sm:$0xff]
      %v9263 = vld [vmem:[%s11 + $0xa0] sm:$0xff]
      %v9264 = vld [vmem:[%s11 + $0xa8] sm:$0xff]
      %v9265 = vld [vmem:[%s11 + $0xb0] sm:$0xff]
      %v9266 = vld [vmem:[%s11 + $0xb8] sm:$0xff]
      %v9267 = vld [vmem:[%s11 + $0xc0] sm:$0xff]
      %v9268 = vld [vmem:[%s11 + $0xc8] sm:$0xff]
      %v9269 = vld [vmem:[%s11 + $0xd0] sm:$0xff]
      %v9270 = vld [vmem:[%s11 + $0xd8] sm:$0xff]
      %v9271 = vld [vmem:[%s11 + $0xe0] sm:$0xff]
      %v9272 = vld [vmem:[%s11 + $0xe8] sm:$0xff]
      %v9273 = vld [vmem:[%s11 + $0xf0] sm:$0xff]
      %v9274 = vld [vmem:[%s11 + $0xf8] sm:$0xff]
      %v9275 = vld [vmem:[%s12] sm:$0x3]
      %v9277 = vlaneseq
      %v9278 = vshrl.u32 %v9277, 7
      %v9279 = vsub.s32 0, %v9278
      %v9280 = vrot.slane %v9275, %v9279
      %v9281 = vlaneseq
      %v9282 = vshrl.u32 %v9281, 7
      %v9283 = vsub.s32 1, %v9282
      %v9284 = vrot.slane %v9275, %v9283
      %v9319 = vunpack.c.l.b16 %v9243
      %v9320 = vunpack.c.h.b16 %v9243
      %v9321 = vunpack.c.l.b16 %v9244
      %v9322 = vunpack.c.h.b16 %v9244
      %v9323 = vunpack.c.l.b16 %v9245
      %v9324 = vunpack.c.h.b16 %v9245
      %v9325 = vunpack.c.l.b16 %v9246
      %v9326 = vunpack.c.h.b16 %v9246
      %v9327 = vunpack.c.l.b16 %v9247
      %v9328 = vunpack.c.h.b16 %v9247
      %v9329 = vunpack.c.l.b16 %v9248
      %v9330 = vunpack.c.h.b16 %v9248
      %v9331 = vunpack.c.l.b16 %v9249
      %v9332 = vunpack.c.h.b16 %v9249
      %v9333 = vunpack.c.l.b16 %v9250
      %v9334 = vunpack.c.h.b16 %v9250
      %v9335 = vunpack.c.l.b16 %v9251
      %v9336 = vunpack.c.h.b16 %v9251
      %v9337 = vunpack.c.l.b16 %v9252
      %v9338 = vunpack.c.h.b16 %v9252
      %v9339 = vunpack.c.l.b16 %v9253
      %v9340 = vunpack.c.h.b16 %v9253
      %v9341 = vunpack.c.l.b16 %v9254
      %v9342 = vunpack.c.h.b16 %v9254
      %v9343 = vunpack.c.l.b16 %v9255
      %v9344 = vunpack.c.h.b16 %v9255
      %v9345 = vunpack.c.l.b16 %v9256
      %v9346 = vunpack.c.h.b16 %v9256
      %v9347 = vunpack.c.l.b16 %v9257
      %v9348 = vunpack.c.h.b16 %v9257
      %v9349 = vunpack.c.l.b16 %v9258
      %v9350 = vunpack.c.h.b16 %v9258
      %v9351 = vunpack.c.l.b16 %v9259
      %v9352 = vunpack.c.h.b16 %v9259
      %v9353 = vunpack.c.l.b16 %v9260
      %v9354 = vunpack.c.h.b16 %v9260
      %v9355 = vunpack.c.l.b16 %v9261
      %v9356 = vunpack.c.h.b16 %v9261
      %v9357 = vunpack.c.l.b16 %v9262
      %v9358 = vunpack.c.h.b16 %v9262
      %v9359 = vunpack.c.l.b16 %v9263
      %v9360 = vunpack.c.h.b16 %v9263
      %v9361 = vunpack.c.l.b16 %v9264
      %v9362 = vunpack.c.h.b16 %v9264
      %v9363 = vunpack.c.l.b16 %v9265
      %v9364 = vunpack.c.h.b16 %v9265
      %v9365 = vunpack.c.l.b16 %v9266
      %v9366 = vunpack.c.h.b16 %v9266
      %v9367 = vunpack.c.l.b16 %v9267
      %v9368 = vunpack.c.h.b16 %v9267
      %v9369 = vunpack.c.l.b16 %v9268
      %v9370 = vunpack.c.h.b16 %v9268
      %v9371 = vunpack.c.l.b16 %v9269
      %v9372 = vunpack.c.h.b16 %v9269
      %v9373 = vunpack.c.l.b16 %v9270
      %v9374 = vunpack.c.h.b16 %v9270
      %v9375 = vunpack.c.l.b16 %v9271
      %v9376 = vunpack.c.h.b16 %v9271
      %v9377 = vunpack.c.l.b16 %v9272
      %v9378 = vunpack.c.h.b16 %v9272
      %v9379 = vunpack.c.l.b16 %v9273
      %v9380 = vunpack.c.h.b16 %v9273
      %v9381 = vunpack.c.l.b16 %v9274
      %v9382 = vunpack.c.h.b16 %v9274
      %v9383 = vpack.c.b16 %v9321, %v9319
      %v9384 = vpack.c.b16 %v9322, %v9320
      %v9385 = vpack.c.b16 %v9325, %v9323
      %v9386 = vpack.c.b16 %v9326, %v9324
      %v9387 = vpack.c.b16 %v9329, %v9327
      %v9388 = vpack.c.b16 %v9330, %v9328
      %v9389 = vpack.c.b16 %v9333, %v9331
      %v9390 = vpack.c.b16 %v9334, %v9332
      %v9391 = vpack.c.b16 %v9337, %v9335
      %v9392 = vpack.c.b16 %v9338, %v9336
      %v9393 = vpack.c.b16 %v9341, %v9339
      %v9394 = vpack.c.b16 %v9342, %v9340
      %v9395 = vpack.c.b16 %v9345, %v9343
      %v9396 = vpack.c.b16 %v9346, %v9344
      %v9397 = vpack.c.b16 %v9349, %v9347
      %v9398 = vpack.c.b16 %v9350, %v9348
      %v9399 = vpack.c.b16 %v9353, %v9351
      %v9400 = vpack.c.b16 %v9354, %v9352
      %v9401 = vpack.c.b16 %v9357, %v9355
      %v9402 = vpack.c.b16 %v9358, %v9356
      %v9403 = vpack.c.b16 %v9361, %v9359
      %v9404 = vpack.c.b16 %v9362, %v9360
      %v9405 = vpack.c.b16 %v9365, %v9363
      %v9406 = vpack.c.b16 %v9366, %v9364
      %v9407 = vpack.c.b16 %v9369, %v9367
      %v9408 = vpack.c.b16 %v9370, %v9368
      %v9409 = vpack.c.b16 %v9373, %v9371
      %v9410 = vpack.c.b16 %v9374, %v9372
      %v9411 = vpack.c.b16 %v9377, %v9375
      %v9412 = vpack.c.b16 %v9378, %v9376
      %v9413 = vpack.c.b16 %v9381, %v9379
      %v9414 = vpack.c.b16 %v9382, %v9380
      %9447 = vmatprep.subr.bf16.mxu0 %v9384
      %9448 = vmatpush1.bf16.msra.mxu0 %v9383
      %9449 = vmatprep.subr.bf16.mxu0 %v9386
      %9450 = vmatpush1.bf16.msra.mxu0 %v9385
      %9451 = vmatprep.subr.bf16.mxu0 %v9388
      %9452 = vmatpush1.bf16.msra.mxu0 %v9387
      %9453 = vmatprep.subr.bf16.mxu0 %v9390
      %9454 = vmatpush1.bf16.msra.mxu0 %v9389
      %9455 = vmatprep.subr.bf16.mxu0 %v9392
      %9456 = vmatpush1.bf16.msra.mxu0 %v9391
      %9457 = vmatprep.subr.bf16.mxu0 %v9394
      %9458 = vmatpush1.bf16.msra.mxu0 %v9393
      %9459 = vmatprep.subr.bf16.mxu0 %v9396
      %9460 = vmatpush1.bf16.msra.mxu0 %v9395
      %9461 = vmatprep.subr.bf16.mxu0 %v9398
      %9462 = vmatpush1.bf16.msra.mxu0 %v9397
      %9463 = vmatprep.subr.bf16.mxu0 %v9400
      %9464 = vmatpush1.bf16.msra.mxu0 %v9399
      %9465 = vmatprep.subr.bf16.mxu0 %v9402
      %9466 = vmatpush1.bf16.msra.mxu0 %v9401
      %9467 = vmatprep.subr.bf16.mxu0 %v9404
      %9468 = vmatpush1.bf16.msra.mxu0 %v9403
      %9469 = vmatprep.subr.bf16.mxu0 %v9406
      %9470 = vmatpush1.bf16.msra.mxu0 %v9405
      %9471 = vmatprep.subr.bf16.mxu0 %v9408
      %9472 = vmatpush1.bf16.msra.mxu0 %v9407
      %9473 = vmatprep.subr.bf16.mxu0 %v9410
      %9474 = vmatpush1.bf16.msra.mxu0 %v9409
      %9475 = vmatprep.subr.bf16.mxu0 %v9412
      %9476 = vmatpush1.bf16.msra.mxu0 %v9411
      %9477 = vmatprep.subr.bf16.mxu0 %v9414
      %9478 = vmatpush1.bf16.msra.mxu0 %v9413
      %9479 = vmatprep.mubr.bf16.mxu0 %v8371
      %9480 = vmatmul.mubr.bf16.gmra.mrb[0].mxu0 %v9179
      %v9481 = vpop.f32.mrb[0].mxu0
      %v9482 = vadd.f32 %v9280, %v9481
      %v9483 = vpop.f32.mrb[0].mxu0
      %v9484 = vadd.f32 %v9284, %v9483
      %v9485 = vpop.f32.mrb[0].mxu0
      %v9486 = vadd.f32 %v9280, %v9485
      %v9487 = vpop.f32.mrb[0].mxu0
      %v9488 = vadd.f32 %v9284, %v9487
      %9489 = vmatprep.mubr.bf16.mxu0 %v8372
      %9490 = vmatmul.mubr.bf16.gmra.mrb[0].mxu0 %v9180
      %v9491 = vpop.f32.mrb[0].mxu0
      %v9492 = vadd.f32 %v9280, %v9491
      %v9493 = vpop.f32.mrb[0].mxu0
      %v9494 = vadd.f32 %v9284, %v9493
      %v9495 = vpop.f32.mrb[0].mxu0
      %v9496 = vadd.f32 %v9280, %v9495
      %v9497 = vpop.f32.mrb[0].mxu0
      %v9498 = vadd.f32 %v9284, %v9497
      %9499 = vmatprep.mubr.bf16.mxu0 %v8373
      %9500 = vmatmul.mubr.bf16.gmra.mrb[0].mxu0 %v9181
      %v9501 = vpop.f32.mrb[0].mxu0
      %v9502 = vadd.f32 %v9280, %v9501
      %v9503 = vpop.f32.mrb[0].mxu0
      %v9504 = vadd.f32 %v9284, %v9503
      %v9505 = vpop.f32.mrb[0].mxu0
      %v9506 = vadd.f32 %v9280, %v9505
      %v9507 = vpop.f32.mrb[0].mxu0
      %v9508 = vadd.f32 %v9284, %v9507
      %9509 = vmatprep.mubr.bf16.mxu0 %v8374
      %9510 = vmatmul.mubr.bf16.gmra.mrb[0].mxu0 %v9182
      %v9511 = vpop.f32.mrb[0].mxu0
      %v9512 = vadd.f32 %v9280, %v9511
      %v9513 = vpop.f32.mrb[0].mxu0
      %v9514 = vadd.f32 %v9284, %v9513
      %v9515 = vpop.f32.mrb[0].mxu0
      %v9516 = vadd.f32 %v9280, %v9515
      %v9517 = vpop.f32.mrb[0].mxu0
      %v9518 = vadd.f32 %v9284, %v9517
      %9519 = vmatprep.mubr.bf16.mxu0 %v8375
      %9520 = vmatmul.mubr.bf16.gmra.mrb[0].mxu0 %v9183
      %v9521 = vpop.f32.mrb[0].mxu0
      %v9522 = vadd.f32 %v9280, %v9521
      %v9523 = vpop.f32.mrb[0].mxu0
      %v9524 = vadd.f32 %v9284, %v9523
      %v9525 = vpop.f32.mrb[0].mxu0
      %v9526 = vadd.f32 %v9280, %v9525
      %v9527 = vpop.f32.mrb[0].mxu0
      %v9528 = vadd.f32 %v9284, %v9527
      %9529 = vmatprep.mubr.bf16.mxu0 %v8376
      %9530 = vmatmul.mubr.bf16.gmra.mrb[0].mxu0 %v9184
      %v9531 = vpop.f32.mrb[0].mxu0
      %v9532 = vadd.f32 %v9280, %v9531
      %v9533 = vpop.f32.mrb[0].mxu0
      %v9534 = vadd.f32 %v9284, %v9533
      %v9535 = vpop.f32.mrb[0].mxu0
      %v9536 = vadd.f32 %v9280, %v9535
      %v9537 = vpop.f32.mrb[0].mxu0
      %v9538 = vadd.f32 %v9284, %v9537
      %9539 = vmatprep.mubr.bf16.mxu0 %v8377
      %9540 = vmatmul.mubr.bf16.gmra.mrb[0].mxu0 %v9185
      %v9541 = vpop.f32.mrb[0].mxu0
      %v9542 = vadd.f32 %v9280, %v9541
      %v9543 = vpop.f32.mrb[0].mxu0
      %v9544 = vadd.f32 %v9284, %v9543
      %v9545 = vpop.f32.mrb[0].mxu0
      %v9546 = vadd.f32 %v9280, %v9545
      %v9547 = vpop.f32.mrb[0].mxu0
      %v9548 = vadd.f32 %v9284, %v9547
      %9549 = vmatprep.mubr.bf16.mxu0 %v8378
      %9550 = vmatmul.mubr.bf16.gmra.mrb[0].mxu0 %v9186
      %v9551 = vpop.f32.mrb[0].mxu0
      %v9552 = vadd.f32 %v9280, %v9551
      %v9553 = vpop.f32.mrb[0].mxu0
      %v9554 = vadd.f32 %v9284, %v9553
      %v9555 = vpop.f32.mrb[0].mxu0
      %v9556 = vadd.f32 %v9280, %v9555
      %v9557 = vpop.f32.mrb[0].mxu0
      %v9558 = vadd.f32 %v9284, %v9557
      %9559 = vmatprep.mubr.bf16.mxu0 %v8379
      %9560 = vmatmul.mubr.bf16.gmra.mrb[0].mxu0 %v9187
      %v9561 = vpop.f32.mrb[0].mxu0
      %v9562 = vadd.f32 %v9280, %v9561
      %v9563 = vpop.f32.mrb[0].mxu0
      %v9564 = vadd.f32 %v9284, %v9563
      %v9565 = vpop.f32.mrb[0].mxu0
      %v9566 = vadd.f32 %v9280, %v9565
      %v9567 = vpop.f32.mrb[0].mxu0
      %v9568 = vadd.f32 %v9284, %v9567
      %9569 = vmatprep.mubr.bf16.mxu0 %v8380
      %9570 = vmatmul.mubr.bf16.gmra.mrb[0].mxu0 %v9188
      %v9571 = vpop.f32.mrb[0].mxu0
      %v9572 = vadd.f32 %v9280, %v9571
      %v9573 = vpop.f32.mrb[0].mxu0
      %v9574 = vadd.f32 %v9284, %v9573
      %v9575 = vpop.f32.mrb[0].mxu0
      %v9576 = vadd.f32 %v9280, %v9575
      %v9577 = vpop.f32.mrb[0].mxu0
      %v9578 = vadd.f32 %v9284, %v9577
      %9579 = vmatprep.mubr.bf16.mxu0 %v8381
      %9580 = vmatmul.mubr.bf16.gmra.mrb[0].mxu0 %v9189
      %v9581 = vpop.f32.mrb[0].mxu0
      %v9582 = vadd.f32 %v9280, %v9581
      %v9583 = vpop.f32.mrb[0].mxu0
      %v9584 = vadd.f32 %v9284, %v9583
      %v9585 = vpop.f32.mrb[0].mxu0
      %v9586 = vadd.f32 %v9280, %v9585
      %v9587 = vpop.f32.mrb[0].mxu0
      %v9588 = vadd.f32 %v9284, %v9587
      %9589 = vmatprep.mubr.bf16.mxu0 %v8382
      %9590 = vmatmul.mubr.bf16.gmra.mrb[0].mxu0 %v9190
      %v9591 = vpop.f32.mrb[0].mxu0
      %v9592 = vadd.f32 %v9280, %v9591
      %v9593 = vpop.f32.mrb[0].mxu0
      %v9594 = vadd.f32 %v9284, %v9593
      %v9595 = vpop.f32.mrb[0].mxu0
      %v9596 = vadd.f32 %v9280, %v9595
      %v9597 = vpop.f32.mrb[0].mxu0
      %v9598 = vadd.f32 %v9284, %v9597
      %9599 = vmatprep.mubr.bf16.mxu0 %v8383
      %9600 = vmatmul.mubr.bf16.gmra.mrb[0].mxu0 %v9191
      %v9601 = vpop.f32.mrb[0].mxu0
      %v9602 = vadd.f32 %v9280, %v9601
      %v9603 = vpop.f32.mrb[0].mxu0
      %v9604 = vadd.f32 %v9284, %v9603
      %v9605 = vpop.f32.mrb[0].mxu0
      %v9606 = vadd.f32 %v9280, %v9605
      %v9607 = vpop.f32.mrb[0].mxu0
      %v9608 = vadd.f32 %v9284, %v9607
      %9609 = vmatprep.mubr.bf16.mxu0 %v8384
      %9610 = vmatmul.mubr.bf16.gmra.mrb[0].mxu0 %v9192
      %v9611 = vpop.f32.mrb[0].mxu0
      %v9612 = vadd.f32 %v9280, %v9611
      %v9613 = vpop.f32.mrb[0].mxu0
      %v9614 = vadd.f32 %v9284, %v9613
      %v9615 = vpop.f32.mrb[0].mxu0
      %v9616 = vadd.f32 %v9280, %v9615
      %v9617 = vpop.f32.mrb[0].mxu0
      %v9618 = vadd.f32 %v9284, %v9617
      %9619 = vmatprep.mubr.bf16.mxu0 %v8385
      %9620 = vmatmul.mubr.bf16.gmra.mrb[0].mxu0 %v9193
      %v9621 = vpop.f32.mrb[0].mxu0
      %v9622 = vadd.f32 %v9280, %v9621
      %v9623 = vpop.f32.mrb[0].mxu0
      %v9624 = vadd.f32 %v9284, %v9623
      %v9625 = vpop.f32.mrb[0].mxu0
      %v9626 = vadd.f32 %v9280, %v9625
      %v9627 = vpop.f32.mrb[0].mxu0
      %v9628 = vadd.f32 %v9284, %v9627
      %9629 = vmatprep.mubr.bf16.mxu0 %v8386
      %9630 = vmatmul.mubr.bf16.gmra.mrb[0].mxu0 %v9194
      %v9631 = vpop.f32.mrb[0].mxu0
      %v9632 = vadd.f32 %v9280, %v9631
      %v9633 = vpop.f32.mrb[0].mxu0
      %v9634 = vadd.f32 %v9284, %v9633
      %v9635 = vpop.f32.mrb[0].mxu0
      %v9636 = vadd.f32 %v9280, %v9635
      %v9637 = vpop.f32.mrb[0].mxu0
      %v9638 = vadd.f32 %v9284, %v9637
      %9639 = vmatprep.mubr.bf16.mxu0 %v8387
      %9640 = vmatmul.mubr.bf16.gmra.mrb[0].mxu0 %v9195
      %v9641 = vpop.f32.mrb[0].mxu0
      %v9642 = vadd.f32 %v9280, %v9641
      %v9643 = vpop.f32.mrb[0].mxu0
      %v9644 = vadd.f32 %v9284, %v9643
      %v9645 = vpop.f32.mrb[0].mxu0
      %v9646 = vadd.f32 %v9280, %v9645
      %v9647 = vpop.f32.mrb[0].mxu0
      %v9648 = vadd.f32 %v9284, %v9647
      %9649 = vmatprep.mubr.bf16.mxu0 %v8388
      %9650 = vmatmul.mubr.bf16.gmra.mrb[0].mxu0 %v9196
      %v9651 = vpop.f32.mrb[0].mxu0
      %v9652 = vadd.f32 %v9280, %v9651
      %v9653 = vpop.f32.mrb[0].mxu0
      %v9654 = vadd.f32 %v9284, %v9653
      %v9655 = vpop.f32.mrb[0].mxu0
      %v9656 = vadd.f32 %v9280, %v9655
      %v9657 = vpop.f32.mrb[0].mxu0
      %v9658 = vadd.f32 %v9284, %v9657
      %9659 = vmatprep.mubr.bf16.mxu0 %v8389
      %9660 = vmatmul.mubr.bf16.gmra.mrb[0].mxu0 %v9197
      %v9661 = vpop.f32.mrb[0].mxu0
      %v9662 = vadd.f32 %v9280, %v9661
      %v9663 = vpop.f32.mrb[0].mxu0
      %v9664 = vadd.f32 %v9284, %v9663
      %v9665 = vpop.f32.mrb[0].mxu0
      %v9666 = vadd.f32 %v9280, %v9665
      %v9667 = vpop.f32.mrb[0].mxu0
      %v9668 = vadd.f32 %v9284, %v9667
      %9669 = vmatprep.mubr.bf16.mxu0 %v8390
      %9670 = vmatmul.mubr.bf16.gmra.mrb[0].mxu0 %v9198
      %v9671 = vpop.f32.mrb[0].mxu0
      %v9672 = vadd.f32 %v9280, %v9671
      %v9673 = vpop.f32.mrb[0].mxu0
      %v9674 = vadd.f32 %v9284, %v9673
      %v9675 = vpop.f32.mrb[0].mxu0
      %v9676 = vadd.f32 %v9280, %v9675
      %v9677 = vpop.f32.mrb[0].mxu0
      %v9678 = vadd.f32 %v9284, %v9677
      %9679 = vmatprep.mubr.bf16.mxu0 %v8391
      %9680 = vmatmul.mubr.bf16.gmra.mrb[0].mxu0 %v9199
      %v9681 = vpop.f32.mrb[0].mxu0
      %v9682 = vadd.f32 %v9280, %v9681
      %v9683 = vpop.f32.mrb[0].mxu0
      %v9684 = vadd.f32 %v9284, %v9683
      %v9685 = vpop.f32.mrb[0].mxu0
      %v9686 = vadd.f32 %v9280, %v9685
      %v9687 = vpop.f32.mrb[0].mxu0
      %v9688 = vadd.f32 %v9284, %v9687
      %9689 = vmatprep.mubr.bf16.mxu0 %v8392
      %9690 = vmatmul.mubr.bf16.gmra.mrb[0].mxu0 %v9200
      %v9691 = vpop.f32.mrb[0].mxu0
      %v9692 = vadd.f32 %v9280, %v9691
      %v9693 = vpop.f32.mrb[0].mxu0
      %v9694 = vadd.f32 %v9284, %v9693
      %v9695 = vpop.f32.mrb[0].mxu0
      %v9696 = vadd.f32 %v9280, %v9695
      %v9697 = vpop.f32.mrb[0].mxu0
      %v9698 = vadd.f32 %v9284, %v9697
      %9699 = vmatprep.mubr.bf16.mxu0 %v8393
      %9700 = vmatmul.mubr.bf16.gmra.mrb[0].mxu0 %v9201
      %v9701 = vpop.f32.mrb[0].mxu0
      %v9702 = vadd.f32 %v9280, %v9701
      %v9703 = vpop.f32.mrb[0].mxu0
      %v9704 = vadd.f32 %v9284, %v9703
      %v9705 = vpop.f32.mrb[0].mxu0
      %v9706 = vadd.f32 %v9280, %v9705
      %v9707 = vpop.f32.mrb[0].mxu0
      %v9708 = vadd.f32 %v9284, %v9707
      %9709 = vmatprep.mubr.bf16.mxu0 %v8394
      %9710 = vmatmul.mubr.bf16.gmra.mrb[0].mxu0 %v9202
      %v9711 = vpop.f32.mrb[0].mxu0
      %v9712 = vadd.f32 %v9280, %v9711
      %v9713 = vpop.f32.mrb[0].mxu0
      %v9714 = vadd.f32 %v9284, %v9713
      %v9715 = vpop.f32.mrb[0].mxu0
      %v9716 = vadd.f32 %v9280, %v9715
      %v9717 = vpop.f32.mrb[0].mxu0
      %v9718 = vadd.f32 %v9284, %v9717
      %9719 = vmatprep.mubr.bf16.mxu0 %v8395
      %9720 = vmatmul.mubr.bf16.gmra.mrb[0].mxu0 %v9203
      %v9721 = vpop.f32.mrb[0].mxu0
      %v9722 = vadd.f32 %v9280, %v9721
      %v9723 = vpop.f32.mrb[0].mxu0
      %v9724 = vadd.f32 %v9284, %v9723
      %v9725 = vpop.f32.mrb[0].mxu0
      %v9726 = vadd.f32 %v9280, %v9725
      %v9727 = vpop.f32.mrb[0].mxu0
      %v9728 = vadd.f32 %v9284, %v9727
      %9729 = vmatprep.mubr.bf16.mxu0 %v8396
      %9730 = vmatmul.mubr.bf16.gmra.mrb[0].mxu0 %v9204
      %v9731 = vpop.f32.mrb[0].mxu0
      %v9732 = vadd.f32 %v9280, %v9731
      %v9733 = vpop.f32.mrb[0].mxu0
      %v9734 = vadd.f32 %v9284, %v9733
      %v9735 = vpop.f32.mrb[0].mxu0
      %v9736 = vadd.f32 %v9280, %v9735
      %v9737 = vpop.f32.mrb[0].mxu0
      %v9738 = vadd.f32 %v9284, %v9737
      %9739 = vmatprep.mubr.bf16.mxu0 %v8397
      %9740 = vmatmul.mubr.bf16.gmra.mrb[0].mxu0 %v9205
      %v9741 = vpop.f32.mrb[0].mxu0
      %v9742 = vadd.f32 %v9280, %v9741
      %v9743 = vpop.f32.mrb[0].mxu0
      %v9744 = vadd.f32 %v9284, %v9743
      %v9745 = vpop.f32.mrb[0].mxu0
      %v9746 = vadd.f32 %v9280, %v9745
      %v9747 = vpop.f32.mrb[0].mxu0
      %v9748 = vadd.f32 %v9284, %v9747
      %9749 = vmatprep.mubr.bf16.mxu0 %v8398
      %9750 = vmatmul.mubr.bf16.gmra.mrb[0].mxu0 %v9206
      %v9751 = vpop.f32.mrb[0].mxu0
      %v9752 = vadd.f32 %v9280, %v9751
      %v9753 = vpop.f32.mrb[0].mxu0
      %v9754 = vadd.f32 %v9284, %v9753
      %v9755 = vpop.f32.mrb[0].mxu0
      %v9756 = vadd.f32 %v9280, %v9755
      %v9757 = vpop.f32.mrb[0].mxu0
      %v9758 = vadd.f32 %v9284, %v9757
      %9759 = vmatprep.mubr.bf16.mxu0 %v8399
      %9760 = vmatmul.mubr.bf16.gmra.mrb[0].mxu0 %v9207
      %v9761 = vpop.f32.mrb[0].mxu0
      %v9762 = vadd.f32 %v9280, %v9761
      %v9763 = vpop.f32.mrb[0].mxu0
      %v9764 = vadd.f32 %v9284, %v9763
      %v9765 = vpop.f32.mrb[0].mxu0
      %v9766 = vadd.f32 %v9280, %v9765
      %v9767 = vpop.f32.mrb[0].mxu0
      %v9768 = vadd.f32 %v9284, %v9767
      %9769 = vmatprep.mubr.bf16.mxu0 %v8400
      %9770 = vmatmul.mubr.bf16.gmra.mrb[0].mxu0 %v9208
      %v9771 = vpop.f32.mrb[0].mxu0
      %v9772 = vadd.f32 %v9280, %v9771
      %v9773 = vpop.f32.mrb[0].mxu0
      %v9774 = vadd.f32 %v9284, %v9773
      %v9775 = vpop.f32.mrb[0].mxu0
      %v9776 = vadd.f32 %v9280, %v9775
      %v9777 = vpop.f32.mrb[0].mxu0
      %v9778 = vadd.f32 %v9284, %v9777
      %9779 = vmatprep.mubr.bf16.mxu0 %v8401
      %9780 = vmatmul.mubr.bf16.gmra.mrb[0].mxu0 %v9209
      %v9781 = vpop.f32.mrb[0].mxu0
      %v9782 = vadd.f32 %v9280, %v9781
      %v9783 = vpop.f32.mrb[0].mxu0
      %v9784 = vadd.f32 %v9284, %v9783
      %v9785 = vpop.f32.mrb[0].mxu0
      %v9786 = vadd.f32 %v9280, %v9785
      %v9787 = vpop.f32.mrb[0].mxu0
      %v9788 = vadd.f32 %v9284, %v9787
      %9789 = vmatprep.mubr.bf16.mxu0 %v8402
      %9790 = vmatmul.mubr.bf16.gmra.mrb[0].mxu0 %v9210
      %v9791 = vpop.f32.mrb[0].mxu0
      %v9792 = vadd.f32 %v9280, %v9791
      %v9793 = vpop.f32.mrb[0].mxu0
      %v9794 = vadd.f32 %v9284, %v9793
      %v9795 = vpop.f32.mrb[0].mxu0
      %v9796 = vadd.f32 %v9280, %v9795
      %v9797 = vpop.f32.mrb[0].mxu0
      %v9798 = vadd.f32 %v9284, %v9797
      %9799 = vmatprep.mubr.bf16.mxu0 %v8403
      %9800 = vmatmul.mubr.bf16.gmra.mrb[0].mxu0 %v9211
      %v9801 = vpop.f32.mrb[0].mxu0
      %v9802 = vadd.f32 %v9280, %v9801
      %v9803 = vpop.f32.mrb[0].mxu0
      %v9804 = vadd.f32 %v9284, %v9803
      %v9805 = vpop.f32.mrb[0].mxu0
      %v9806 = vadd.f32 %v9280, %v9805
      %v9807 = vpop.f32.mrb[0].mxu0
      %v9808 = vadd.f32 %v9284, %v9807
      %9809 = vmatprep.mubr.bf16.mxu0 %v8404
      %9810 = vmatmul.mubr.bf16.gmra.mrb[0].mxu0 %v9212
      %v9811 = vpop.f32.mrb[0].mxu0
      %v9812 = vadd.f32 %v9280, %v9811
      %v9813 = vpop.f32.mrb[0].mxu0
      %v9814 = vadd.f32 %v9284, %v9813
      %v9815 = vpop.f32.mrb[0].mxu0
      %v9816 = vadd.f32 %v9280, %v9815
      %v9817 = vpop.f32.mrb[0].mxu0
      %v9818 = vadd.f32 %v9284, %v9817
      %9819 = vmatprep.mubr.bf16.mxu0 %v8405
      %9820 = vmatmul.mubr.bf16.gmra.mrb[0].mxu0 %v9213
      %v9821 = vpop.f32.mrb[0].mxu0
      %v9822 = vadd.f32 %v9280, %v9821
      %v9823 = vpop.f32.mrb[0].mxu0
      %v9824 = vadd.f32 %v9284, %v9823
      %v9825 = vpop.f32.mrb[0].mxu0
      %v9826 = vadd.f32 %v9280, %v9825
      %v9827 = vpop.f32.mrb[0].mxu0
      %v9828 = vadd.f32 %v9284, %v9827
      %9829 = vmatprep.mubr.bf16.mxu0 %v8406
      %9830 = vmatmul.mubr.bf16.gmra.mrb[0].mxu0 %v9214
      %v9831 = vpop.f32.mrb[0].mxu0
      %v9832 = vadd.f32 %v9280, %v9831
      %v9833 = vpop.f32.mrb[0].mxu0
      %v9834 = vadd.f32 %v9284, %v9833
      %v9835 = vpop.f32.mrb[0].mxu0
      %v9836 = vadd.f32 %v9280, %v9835
      %v9837 = vpop.f32.mrb[0].mxu0
      %v9838 = vadd.f32 %v9284, %v9837
      %9839 = vmatprep.mubr.bf16.mxu0 %v8407
      %9840 = vmatmul.mubr.bf16.gmra.mrb[0].mxu0 %v9215
      %v9841 = vpop.f32.mrb[0].mxu0
      %v9842 = vadd.f32 %v9280, %v9841
      %v9843 = vpop.f32.mrb[0].mxu0
      %v9844 = vadd.f32 %v9284, %v9843
      %v9845 = vpop.f32.mrb[0].mxu0
      %v9846 = vadd.f32 %v9280, %v9845
      %v9847 = vpop.f32.mrb[0].mxu0
      %v9848 = vadd.f32 %v9284, %v9847
      %9849 = vmatprep.mubr.bf16.mxu0 %v8408
      %9850 = vmatmul.mubr.bf16.gmra.mrb[0].mxu0 %v9216
      %v9851 = vpop.f32.mrb[0].mxu0
      %v9852 = vadd.f32 %v9280, %v9851
      %v9853 = vpop.f32.mrb[0].mxu0
      %v9854 = vadd.f32 %v9284, %v9853
      %v9855 = vpop.f32.mrb[0].mxu0
      %v9856 = vadd.f32 %v9280, %v9855
      %v9857 = vpop.f32.mrb[0].mxu0
      %v9858 = vadd.f32 %v9284, %v9857
      %9859 = vmatprep.mubr.bf16.mxu0 %v8409
      %9860 = vmatmul.mubr.bf16.gmra.mrb[0].mxu0 %v9217
      %v9861 = vpop.f32.mrb[0].mxu0
      %v9862 = vadd.f32 %v9280, %v9861
      %v9863 = vpop.f32.mrb[0].mxu0
      %v9864 = vadd.f32 %v9284, %v9863
      %v9865 = vpop.f32.mrb[0].mxu0
      %v9866 = vadd.f32 %v9280, %v9865
      %v9867 = vpop.f32.mrb[0].mxu0
      %v9868 = vadd.f32 %v9284, %v9867
      %9869 = vmatprep.mubr.bf16.mxu0 %v8410
      %9870 = vmatmul.mubr.bf16.gmra.mrb[0].mxu0 %v9218
      %v9871 = vpop.f32.mrb[0].mxu0
      %v9872 = vadd.f32 %v9280, %v9871
      %v9873 = vpop.f32.mrb[0].mxu0
      %v9874 = vadd.f32 %v9284, %v9873
      %v9875 = vpop.f32.mrb[0].mxu0
      %v9876 = vadd.f32 %v9280, %v9875
      %v9877 = vpop.f32.mrb[0].mxu0
      %v9878 = vadd.f32 %v9284, %v9877
      %9879 = vmatprep.mubr.bf16.mxu0 %v8411
      %9880 = vmatmul.mubr.bf16.gmra.mrb[0].mxu0 %v9219
      %v9881 = vpop.f32.mrb[0].mxu0
      %v9882 = vadd.f32 %v9280, %v9881
      %v9883 = vpop.f32.mrb[0].mxu0
      %v9884 = vadd.f32 %v9284, %v9883
      %v9885 = vpop.f32.mrb[0].mxu0
      %v9886 = vadd.f32 %v9280, %v9885
      %v9887 = vpop.f32.mrb[0].mxu0
      %v9888 = vadd.f32 %v9284, %v9887
      %9889 = vmatprep.mubr.bf16.mxu0 %v8412
      %9890 = vmatmul.mubr.bf16.gmra.mrb[0].mxu0 %v9220
      %v9891 = vpop.f32.mrb[0].mxu0
      %v9892 = vadd.f32 %v9280, %v9891
      %v9893 = vpop.f32.mrb[0].mxu0
      %v9894 = vadd.f32 %v9284, %v9893
      %v9895 = vpop.f32.mrb[0].mxu0
      %v9896 = vadd.f32 %v9280, %v9895
      %v9897 = vpop.f32.mrb[0].mxu0
      %v9898 = vadd.f32 %v9284, %v9897
      %9899 = vmatprep.mubr.bf16.mxu0 %v8413
      %9900 = vmatmul.mubr.bf16.gmra.mrb[0].mxu0 %v9221
      %v9901 = vpop.f32.mrb[0].mxu0
      %v9902 = vadd.f32 %v9280, %v9901
      %v9903 = vpop.f32.mrb[0].mxu0
      %v9904 = vadd.f32 %v9284, %v9903
      %v9905 = vpop.f32.mrb[0].mxu0
      %v9906 = vadd.f32 %v9280, %v9905
      %v9907 = vpop.f32.mrb[0].mxu0
      %v9908 = vadd.f32 %v9284, %v9907
      %9909 = vmatprep.mubr.bf16.mxu0 %v8414
      %9910 = vmatmul.mubr.bf16.gmra.mrb[0].mxu0 %v9222
      %v9911 = vpop.f32.mrb[0].mxu0
      %v9912 = vadd.f32 %v9280, %v9911
      %v9913 = vpop.f32.mrb[0].mxu0
      %v9914 = vadd.f32 %v9284, %v9913
      %v9915 = vpop.f32.mrb[0].mxu0
      %v9916 = vadd.f32 %v9280, %v9915
      %v9917 = vpop.f32.mrb[0].mxu0
      %v9918 = vadd.f32 %v9284, %v9917
      %9919 = vmatprep.mubr.bf16.mxu0 %v8415
      %9920 = vmatmul.mubr.bf16.gmra.mrb[0].mxu0 %v9223
      %v9921 = vpop.f32.mrb[0].mxu0
      %v9922 = vadd.f32 %v9280, %v9921
      %v9923 = vpop.f32.mrb[0].mxu0
      %v9924 = vadd.f32 %v9284, %v9923
      %v9925 = vpop.f32.mrb[0].mxu0
      %v9926 = vadd.f32 %v9280, %v9925
      %v9927 = vpop.f32.mrb[0].mxu0
      %v9928 = vadd.f32 %v9284, %v9927
      %9929 = vmatprep.mubr.bf16.mxu0 %v8416
      %9930 = vmatmul.mubr.bf16.gmra.mrb[0].mxu0 %v9224
      %v9931 = vpop.f32.mrb[0].mxu0
      %v9932 = vadd.f32 %v9280, %v9931
      %v9933 = vpop.f32.mrb[0].mxu0
      %v9934 = vadd.f32 %v9284, %v9933
      %v9935 = vpop.f32.mrb[0].mxu0
      %v9936 = vadd.f32 %v9280, %v9935
      %v9937 = vpop.f32.mrb[0].mxu0
      %v9938 = vadd.f32 %v9284, %v9937
      %9939 = vmatprep.mubr.bf16.mxu0 %v8417
      %9940 = vmatmul.mubr.bf16.gmra.mrb[0].mxu0 %v9225
      %v9941 = vpop.f32.mrb[0].mxu0
      %v9942 = vadd.f32 %v9280, %v9941
      %v9943 = vpop.f32.mrb[0].mxu0
      %v9944 = vadd.f32 %v9284, %v9943
      %v9945 = vpop.f32.mrb[0].mxu0
      %v9946 = vadd.f32 %v9280, %v9945
      %v9947 = vpop.f32.mrb[0].mxu0
      %v9948 = vadd.f32 %v9284, %v9947
      %9949 = vmatprep.mubr.bf16.mxu0 %v8418
      %9950 = vmatmul.mubr.bf16.gmra.mrb[0].mxu0 %v9226
      %v9951 = vpop.f32.mrb[0].mxu0
      %v9952 = vadd.f32 %v9280, %v9951
      %v9953 = vpop.f32.mrb[0].mxu0
      %v9954 = vadd.f32 %v9284, %v9953
      %v9955 = vpop.f32.mrb[0].mxu0
      %v9956 = vadd.f32 %v9280, %v9955
      %v9957 = vpop.f32.mrb[0].mxu0
      %v9958 = vadd.f32 %v9284, %v9957
      %9959 = vmatprep.mubr.bf16.mxu0 %v8419
      %9960 = vmatmul.mubr.bf16.gmra.mrb[0].mxu0 %v9227
      %v9961 = vpop.f32.mrb[0].mxu0
      %v9962 = vadd.f32 %v9280, %v9961
      %v9963 = vpop.f32.mrb[0].mxu0
      %v9964 = vadd.f32 %v9284, %v9963
      %v9965 = vpop.f32.mrb[0].mxu0
      %v9966 = vadd.f32 %v9280, %v9965
      %v9967 = vpop.f32.mrb[0].mxu0
      %v9968 = vadd.f32 %v9284, %v9967
      %9969 = vmatprep.mubr.bf16.mxu0 %v8420
      %9970 = vmatmul.mubr.bf16.gmra.mrb[0].mxu0 %v9228
      %v9971 = vpop.f32.mrb[0].mxu0
      %v9972 = vadd.f32 %v9280, %v9971
      %v9973 = vpop.f32.mrb[0].mxu0
      %v9974 = vadd.f32 %v9284, %v9973
      %v9975 = vpop.f32.mrb[0].mxu0
      %v9976 = vadd.f32 %v9280, %v9975
      %v9977 = vpop.f32.mrb[0].mxu0
      %v9978 = vadd.f32 %v9284, %v9977
      %9979 = vmatprep.mubr.bf16.mxu0 %v8421
      %9980 = vmatmul.mubr.bf16.gmra.mrb[0].mxu0 %v9229
      %v9981 = vpop.f32.mrb[0].mxu0
      %v9982 = vadd.f32 %v9280, %v9981
      %v9983 = vpop.f32.mrb[0].mxu0
      %v9984 = vadd.f32 %v9284, %v9983
      %v9985 = vpop.f32.mrb[0].mxu0
      %v9986 = vadd.f32 %v9280, %v9985
      %v9987 = vpop.f32.mrb[0].mxu0
      %v9988 = vadd.f32 %v9284, %v9987
      %9989 = vmatprep.mubr.bf16.mxu0 %v8422
      %9990 = vmatmul.mubr.bf16.gmra.mrb[0].mxu0 %v9230
      %v9991 = vpop.f32.mrb[0].mxu0
      %v9992 = vadd.f32 %v9280, %v9991
      %v9993 = vpop.f32.mrb[0].mxu0
      %v9994 = vadd.f32 %v9284, %v9993
      %v9995 = vpop.f32.mrb[0].mxu0
      %v9996 = vadd.f32 %v9280, %v9995
      %v9997 = vpop.f32.mrb[0].mxu0
      %v9998 = vadd.f32 %v9284, %v9997
      %9999 = vmatprep.mubr.bf16.mxu0 %v8423
      %10000 = vmatmul.mubr.bf16.gmra.mrb[0].mxu0 %v9231
      %v10001 = vpop.f32.mrb[0].mxu0
      %v10002 = vadd.f32 %v9280, %v10001
      %v10003 = vpop.f32.mrb[0].mxu0
      %v10004 = vadd.f32 %v9284, %v10003
      %v10005 = vpop.f32.mrb[0].mxu0
      %v10006 = vadd.f32 %v9280, %v10005
      %v10007 = vpop.f32.mrb[0].mxu0
      %v10008 = vadd.f32 %v9284, %v10007
      %10009 = vmatprep.mubr.bf16.mxu0 %v8424
      %10010 = vmatmul.mubr.bf16.gmra.mrb[0].mxu0 %v9232
      %v10011 = vpop.f32.mrb[0].mxu0
      %v10012 = vadd.f32 %v9280, %v10011
      %v10013 = vpop.f32.mrb[0].mxu0
      %v10014 = vadd.f32 %v9284, %v10013
      %v10015 = vpop.f32.mrb[0].mxu0
      %v10016 = vadd.f32 %v9280, %v10015
      %v10017 = vpop.f32.mrb[0].mxu0
      %v10018 = vadd.f32 %v9284, %v10017
      %10019 = vmatprep.mubr.bf16.mxu0 %v8425
      %10020 = vmatmul.mubr.bf16.gmra.mrb[0].mxu0 %v9233
      %v10021 = vpop.f32.mrb[0].mxu0
      %v10022 = vadd.f32 %v9280, %v10021
      %v10023 = vpop.f32.mrb[0].mxu0
      %v10024 = vadd.f32 %v9284, %v10023
      %v10025 = vpop.f32.mrb[0].mxu0
      %v10026 = vadd.f32 %v9280, %v10025
      %v10027 = vpop.f32.mrb[0].mxu0
      %v10028 = vadd.f32 %v9284, %v10027
      %10029 = vmatprep.mubr.bf16.mxu0 %v8426
      %10030 = vmatmul.mubr.bf16.gmra.mrb[0].mxu0 %v9234
      %v10031 = vpop.f32.mrb[0].mxu0
      %v10032 = vadd.f32 %v9280, %v10031
      %v10033 = vpop.f32.mrb[0].mxu0
      %v10034 = vadd.f32 %v9284, %v10033
      %v10035 = vpop.f32.mrb[0].mxu0
      %v10036 = vadd.f32 %v9280, %v10035
      %v10037 = vpop.f32.mrb[0].mxu0
      %v10038 = vadd.f32 %v9284, %v10037
      %10039 = vmatprep.mubr.bf16.mxu0 %v8427
      %10040 = vmatmul.mubr.bf16.gmra.mrb[0].mxu0 %v9235
      %v10041 = vpop.f32.mrb[0].mxu0
      %v10042 = vadd.f32 %v9280, %v10041
      %v10043 = vpop.f32.mrb[0].mxu0
      %v10044 = vadd.f32 %v9284, %v10043
      %v10045 = vpop.f32.mrb[0].mxu0
      %v10046 = vadd.f32 %v9280, %v10045
      %v10047 = vpop.f32.mrb[0].mxu0
      %v10048 = vadd.f32 %v9284, %v10047
      %10049 = vmatprep.mubr.bf16.mxu0 %v8428
      %10050 = vmatmul.mubr.bf16.gmra.mrb[0].mxu0 %v9236
      %v10051 = vpop.f32.mrb[0].mxu0
      %v10052 = vadd.f32 %v9280, %v10051
      %v10053 = vpop.f32.mrb[0].mxu0
      %v10054 = vadd.f32 %v9284, %v10053
      %v10055 = vpop.f32.mrb[0].mxu0
      %v10056 = vadd.f32 %v9280, %v10055
      %v10057 = vpop.f32.mrb[0].mxu0
      %v10058 = vadd.f32 %v9284, %v10057
      %10059 = vmatprep.mubr.bf16.mxu0 %v8429
      %10060 = vmatmul.mubr.bf16.gmra.mrb[0].mxu0 %v9237
      %v10061 = vpop.f32.mrb[0].mxu0
      %v10062 = vadd.f32 %v9280, %v10061
      %v10063 = vpop.f32.mrb[0].mxu0
      %v10064 = vadd.f32 %v9284, %v10063
      %v10065 = vpop.f32.mrb[0].mxu0
      %v10066 = vadd.f32 %v9280, %v10065
      %v10067 = vpop.f32.mrb[0].mxu0
      %v10068 = vadd.f32 %v9284, %v10067
      %10069 = vmatprep.mubr.bf16.mxu0 %v8430
      %10070 = vmatmul.mubr.bf16.gmra.mrb[0].mxu0 %v9238
      %v10071 = vpop.f32.mrb[0].mxu0
      %v10072 = vadd.f32 %v9280, %v10071
      %v10073 = vpop.f32.mrb[0].mxu0
      %v10074 = vadd.f32 %v9284, %v10073
      %v10075 = vpop.f32.mrb[0].mxu0
      %v10076 = vadd.f32 %v9280, %v10075
      %v10077 = vpop.f32.mrb[0].mxu0
      %v10078 = vadd.f32 %v9284, %v10077
      %10079 = vmatprep.mubr.bf16.mxu0 %v8431
      %10080 = vmatmul.mubr.bf16.gmra.mrb[0].mxu0 %v9239
      %v10081 = vpop.f32.mrb[0].mxu0
      %v10082 = vadd.f32 %v9280, %v10081
      %v10083 = vpop.f32.mrb[0].mxu0
      %v10084 = vadd.f32 %v9284, %v10083
      %v10085 = vpop.f32.mrb[0].mxu0
      %v10086 = vadd.f32 %v9280, %v10085
      %v10087 = vpop.f32.mrb[0].mxu0
      %v10088 = vadd.f32 %v9284, %v10087
      %10089 = vmatprep.mubr.bf16.mxu0 %v8432
      %10090 = vmatmul.mubr.bf16.gmra.mrb[0].mxu0 %v9240
      %v10091 = vpop.f32.mrb[0].mxu0
      %v10092 = vadd.f32 %v9280, %v10091
      %v10093 = vpop.f32.mrb[0].mxu0
      %v10094 = vadd.f32 %v9284, %v10093
      %v10095 = vpop.f32.mrb[0].mxu0
      %v10096 = vadd.f32 %v9280, %v10095
      %v10097 = vpop.f32.mrb[0].mxu0
      %v10098 = vadd.f32 %v9284, %v10097
      %10099 = vmatprep.mubr.bf16.mxu0 %v8433
      %10100 = vmatmul.mubr.bf16.gmra.mrb[0].mxu0 %v9241
      %v10101 = vpop.f32.mrb[0].mxu0
      %v10102 = vadd.f32 %v9280, %v10101
      %v10103 = vpop.f32.mrb[0].mxu0
      %v10104 = vadd.f32 %v9284, %v10103
      %v10105 = vpop.f32.mrb[0].mxu0
      %v10106 = vadd.f32 %v9280, %v10105
      %v10107 = vpop.f32.mrb[0].mxu0
      %v10108 = vadd.f32 %v9284, %v10107
      %10109 = vmatprep.mubr.bf16.mxu0 %v8434
      %10110 = vmatmul.mubr.bf16.gmra.mrb[0].mxu0 %v9242
      %v10111 = vpop.f32.mrb[0].mxu0
      %v10112 = vadd.f32 %v9280, %v10111
      %v10113 = vpop.f32.mrb[0].mxu0
      %v10114 = vadd.f32 %v9284, %v10113
      %v10115 = vpop.f32.mrb[0].mxu0
      %v10116 = vadd.f32 %v9280, %v10115
      %v10117 = vpop.f32.mrb[0].mxu0
      %v10118 = vadd.f32 %v9284, %v10117
      %10119 = vdwg.mxu0
      %v10120 = vmax.f32 %v9482, 0.0
      %v10121 = vmax.f32 %v9484, 0.0
      %v10122 = vmax.f32 %v9486, 0.0
      %v10123 = vmax.f32 %v9488, 0.0
      %v10124 = vmax.f32 %v9492, 0.0
      %v10125 = vmax.f32 %v9494, 0.0
      %v10126 = vmax.f32 %v9496, 0.0
      %v10127 = vmax.f32 %v9498, 0.0
      %v10128 = vmax.f32 %v9502, 0.0
      %v10129 = vmax.f32 %v9504, 0.0
      %v10130 = vmax.f32 %v9506, 0.0
      %v10131 = vmax.f32 %v9508, 0.0
      %v10132 = vmax.f32 %v9512, 0.0
      %v10133 = vmax.f32 %v9514, 0.0
      %v10134 = vmax.f32 %v9516, 0.0
      %v10135 = vmax.f32 %v9518, 0.0
      %v10136 = vmax.f32 %v9522, 0.0
      %v10137 = vmax.f32 %v9524, 0.0
      %v10138 = vmax.f32 %v9526, 0.0
      %v10139 = vmax.f32 %v9528, 0.0
      %v10140 = vmax.f32 %v9532, 0.0
      %v10141 = vmax.f32 %v9534, 0.0
      %v10142 = vmax.f32 %v9536, 0.0
      %v10143 = vmax.f32 %v9538, 0.0
      %v10144 = vmax.f32 %v9542, 0.0
      %v10145 = vmax.f32 %v9544, 0.0
      %v10146 = vmax.f32 %v9546, 0.0
      %v10147 = vmax.f32 %v9548, 0.0
      %v10148 = vmax.f32 %v9552, 0.0
      %v10149 = vmax.f32 %v9554, 0.0
      %v10150 = vmax.f32 %v9556, 0.0
      %v10151 = vmax.f32 %v9558, 0.0
      %v10152 = vmax.f32 %v9562, 0.0
      %v10153 = vmax.f32 %v9564, 0.0
      %v10154 = vmax.f32 %v9566, 0.0
      %v10155 = vmax.f32 %v9568, 0.0
      %v10156 = vmax.f32 %v9572, 0.0
      %v10157 = vmax.f32 %v9574, 0.0
      %v10158 = vmax.f32 %v9576, 0.0
      %v10159 = vmax.f32 %v9578, 0.0
      %v10160 = vmax.f32 %v9582, 0.0
      %v10161 = vmax.f32 %v9584, 0.0
      %v10162 = vmax.f32 %v9586, 0.0
      %v10163 = vmax.f32 %v9588, 0.0
      %v10164 = vmax.f32 %v9592, 0.0
      %v10165 = vmax.f32 %v9594, 0.0
      %v10166 = vmax.f32 %v9596, 0.0
      %v10167 = vmax.f32 %v9598, 0.0
      %v10168 = vmax.f32 %v9602, 0.0
      %v10169 = vmax.f32 %v9604, 0.0
      %v10170 = vmax.f32 %v9606, 0.0
      %v10171 = vmax.f32 %v9608, 0.0
      %v10172 = vmax.f32 %v9612, 0.0
      %v10173 = vmax.f32 %v9614, 0.0
      %v10174 = vmax.f32 %v9616, 0.0
      %v10175 = vmax.f32 %v9618, 0.0
      %v10176 = vmax.f32 %v9622, 0.0
      %v10177 = vmax.f32 %v9624, 0.0
      %v10178 = vmax.f32 %v9626, 0.0
      %v10179 = vmax.f32 %v9628, 0.0
      %v10180 = vmax.f32 %v9632, 0.0
      %v10181 = vmax.f32 %v9634, 0.0
      %v10182 = vmax.f32 %v9636, 0.0
      %v10183 = vmax.f32 %v9638, 0.0
      %v10184 = vmax.f32 %v9642, 0.0
      %v10185 = vmax.f32 %v9644, 0.0
      %v10186 = vmax.f32 %v9646, 0.0
      %v10187 = vmax.f32 %v9648, 0.0
      %v10188 = vmax.f32 %v9652, 0.0
      %v10189 = vmax.f32 %v9654, 0.0
      %v10190 = vmax.f32 %v9656, 0.0
      %v10191 = vmax.f32 %v9658, 0.0
      %v10192 = vmax.f32 %v9662, 0.0
      %v10193 = vmax.f32 %v9664, 0.0
      %v10194 = vmax.f32 %v9666, 0.0
      %v10195 = vmax.f32 %v9668, 0.0
      %v10196 = vmax.f32 %v9672, 0.0
      %v10197 = vmax.f32 %v9674, 0.0
      %v10198 = vmax.f32 %v9676, 0.0
      %v10199 = vmax.f32 %v9678, 0.0
      %v10200 = vmax.f32 %v9682, 0.0
      %v10201 = vmax.f32 %v9684, 0.0
      %v10202 = vmax.f32 %v9686, 0.0
      %v10203 = vmax.f32 %v9688, 0.0
      %v10204 = vmax.f32 %v9692, 0.0
      %v10205 = vmax.f32 %v9694, 0.0
      %v10206 = vmax.f32 %v9696, 0.0
      %v10207 = vmax.f32 %v9698, 0.0
      %v10208 = vmax.f32 %v9702, 0.0
      %v10209 = vmax.f32 %v9704, 0.0
      %v10210 = vmax.f32 %v9706, 0.0
      %v10211 = vmax.f32 %v9708, 0.0
      %v10212 = vmax.f32 %v9712, 0.0
      %v10213 = vmax.f32 %v9714, 0.0
      %v10214 = vmax.f32 %v9716, 0.0
      %v10215 = vmax.f32 %v9718, 0.0
      %v10216 = vmax.f32 %v9722, 0.0
      %v10217 = vmax.f32 %v9724, 0.0
      %v10218 = vmax.f32 %v9726, 0.0
      %v10219 = vmax.f32 %v9728, 0.0
      %v10220 = vmax.f32 %v9732, 0.0
      %v10221 = vmax.f32 %v9734, 0.0
      %v10222 = vmax.f32 %v9736, 0.0
      %v10223 = vmax.f32 %v9738, 0.0
      %v10224 = vmax.f32 %v9742, 0.0
      %v10225 = vmax.f32 %v9744, 0.0
      %v10226 = vmax.f32 %v9746, 0.0
      %v10227 = vmax.f32 %v9748, 0.0
      %v10228 = vmax.f32 %v9752, 0.0
      %v10229 = vmax.f32 %v9754, 0.0
      %v10230 = vmax.f32 %v9756, 0.0
      %v10231 = vmax.f32 %v9758, 0.0
      %v10232 = vmax.f32 %v9762, 0.0
      %v10233 = vmax.f32 %v9764, 0.0
      %v10234 = vmax.f32 %v9766, 0.0
      %v10235 = vmax.f32 %v9768, 0.0
      %v10236 = vmax.f32 %v9772, 0.0
      %v10237 = vmax.f32 %v9774, 0.0
      %v10238 = vmax.f32 %v9776, 0.0
      %v10239 = vmax.f32 %v9778, 0.0
      %v10240 = vmax.f32 %v9782, 0.0
      %v10241 = vmax.f32 %v9784, 0.0
      %v10242 = vmax.f32 %v9786, 0.0
      %v10243 = vmax.f32 %v9788, 0.0
      %v10244 = vmax.f32 %v9792, 0.0
      %v10245 = vmax.f32 %v9794, 0.0
      %v10246 = vmax.f32 %v9796, 0.0
      %v10247 = vmax.f32 %v9798, 0.0
      %v10248 = vmax.f32 %v9802, 0.0
      %v10249 = vmax.f32 %v9804, 0.0
      %v10250 = vmax.f32 %v9806, 0.0
      %v10251 = vmax.f32 %v9808, 0.0
      %v10252 = vmax.f32 %v9812, 0.0
      %v10253 = vmax.f32 %v9814, 0.0
      %v10254 = vmax.f32 %v9816, 0.0
      %v10255 = vmax.f32 %v9818, 0.0
      %v10256 = vmax.f32 %v9822, 0.0
      %v10257 = vmax.f32 %v9824, 0.0
      %v10258 = vmax.f32 %v9826, 0.0
      %v10259 = vmax.f32 %v9828, 0.0
      %v10260 = vmax.f32 %v9832, 0.0
      %v10261 = vmax.f32 %v9834, 0.0
      %v10262 = vmax.f32 %v9836, 0.0
      %v10263 = vmax.f32 %v9838, 0.0
      %v10264 = vmax.f32 %v9842, 0.0
      %v10265 = vmax.f32 %v9844, 0.0
      %v10266 = vmax.f32 %v9846, 0.0
      %v10267 = vmax.f32 %v9848, 0.0
      %v10268 = vmax.f32 %v9852, 0.0
      %v10269 = vmax.f32 %v9854, 0.0
      %v10270 = vmax.f32 %v9856, 0.0
      %v10271 = vmax.f32 %v9858, 0.0
      %v10272 = vmax.f32 %v9862, 0.0
      %v10273 = vmax.f32 %v9864, 0.0
      %v10274 = vmax.f32 %v9866, 0.0
      %v10275 = vmax.f32 %v9868, 0.0
      %v10276 = vmax.f32 %v9872, 0.0
      %v10277 = vmax.f32 %v9874, 0.0
      %v10278 = vmax.f32 %v9876, 0.0
      %v10279 = vmax.f32 %v9878, 0.0
      %v10280 = vmax.f32 %v9882, 0.0
      %v10281 = vmax.f32 %v9884, 0.0
      %v10282 = vmax.f32 %v9886, 0.0
      %v10283 = vmax.f32 %v9888, 0.0
      %v10284 = vmax.f32 %v9892, 0.0
      %v10285 = vmax.f32 %v9894, 0.0
      %v10286 = vmax.f32 %v9896, 0.0
      %v10287 = vmax.f32 %v9898, 0.0
      %v10288 = vmax.f32 %v9902, 0.0
      %v10289 = vmax.f32 %v9904, 0.0
      %v10290 = vmax.f32 %v9906, 0.0
      %v10291 = vmax.f32 %v9908, 0.0
      %v10292 = vmax.f32 %v9912, 0.0
      %v10293 = vmax.f32 %v9914, 0.0
      %v10294 = vmax.f32 %v9916, 0.0
      %v10295 = vmax.f32 %v9918, 0.0
      %v10296 = vmax.f32 %v9922, 0.0
      %v10297 = vmax.f32 %v9924, 0.0
      %v10298 = vmax.f32 %v9926, 0.0
      %v10299 = vmax.f32 %v9928, 0.0
      %v10300 = vmax.f32 %v9932, 0.0
      %v10301 = vmax.f32 %v9934, 0.0
      %v10302 = vmax.f32 %v9936, 0.0
      %v10303 = vmax.f32 %v9938, 0.0
      %v10304 = vmax.f32 %v9942, 0.0
      %v10305 = vmax.f32 %v9944, 0.0
      %v10306 = vmax.f32 %v9946, 0.0
      %v10307 = vmax.f32 %v9948, 0.0
      %v10308 = vmax.f32 %v9952, 0.0
      %v10309 = vmax.f32 %v9954, 0.0
      %v10310 = vmax.f32 %v9956, 0.0
      %v10311 = vmax.f32 %v9958, 0.0
      %v10312 = vmax.f32 %v9962, 0.0
      %v10313 = vmax.f32 %v9964, 0.0
      %v10314 = vmax.f32 %v9966, 0.0
      %v10315 = vmax.f32 %v9968, 0.0
      %v10316 = vmax.f32 %v9972, 0.0
      %v10317 = vmax.f32 %v9974, 0.0
      %v10318 = vmax.f32 %v9976, 0.0
      %v10319 = vmax.f32 %v9978, 0.0
      %v10320 = vmax.f32 %v9982, 0.0
      %v10321 = vmax.f32 %v9984, 0.0
      %v10322 = vmax.f32 %v9986, 0.0
      %v10323 = vmax.f32 %v9988, 0.0
      %v10324 = vmax.f32 %v9992, 0.0
      %v10325 = vmax.f32 %v9994, 0.0
      %v10326 = vmax.f32 %v9996, 0.0
      %v10327 = vmax.f32 %v9998, 0.0
      %v10328 = vmax.f32 %v10002, 0.0
      %v10329 = vmax.f32 %v10004, 0.0
      %v10330 = vmax.f32 %v10006, 0.0
      %v10331 = vmax.f32 %v10008, 0.0
      %v10332 = vmax.f32 %v10012, 0.0
      %v10333 = vmax.f32 %v10014, 0.0
      %v10334 = vmax.f32 %v10016, 0.0
      %v10335 = vmax.f32 %v10018, 0.0
      %v10336 = vmax.f32 %v10022, 0.0
      %v10337 = vmax.f32 %v10024, 0.0
      %v10338 = vmax.f32 %v10026, 0.0
      %v10339 = vmax.f32 %v10028, 0.0
      %v10340 = vmax.f32 %v10032, 0.0
      %v10341 = vmax.f32 %v10034, 0.0
      %v10342 = vmax.f32 %v10036, 0.0
      %v10343 = vmax.f32 %v10038, 0.0
      %v10344 = vmax.f32 %v10042, 0.0
      %v10345 = vmax.f32 %v10044, 0.0
      %v10346 = vmax.f32 %v10046, 0.0
      %v10347 = vmax.f32 %v10048, 0.0
      %v10348 = vmax.f32 %v10052, 0.0
      %v10349 = vmax.f32 %v10054, 0.0
      %v10350 = vmax.f32 %v10056, 0.0
      %v10351 = vmax.f32 %v10058, 0.0
      %v10352 = vmax.f32 %v10062, 0.0
      %v10353 = vmax.f32 %v10064, 0.0
      %v10354 = vmax.f32 %v10066, 0.0
      %v10355 = vmax.f32 %v10068, 0.0
      %v10356 = vmax.f32 %v10072, 0.0
      %v10357 = vmax.f32 %v10074, 0.0
      %v10358 = vmax.f32 %v10076, 0.0
      %v10359 = vmax.f32 %v10078, 0.0
      %v10360 = vmax.f32 %v10082, 0.0
      %v10361 = vmax.f32 %v10084, 0.0
      %v10362 = vmax.f32 %v10086, 0.0
      %v10363 = vmax.f32 %v10088, 0.0
      %v10364 = vmax.f32 %v10092, 0.0
      %v10365 = vmax.f32 %v10094, 0.0
      %v10366 = vmax.f32 %v10096, 0.0
      %v10367 = vmax.f32 %v10098, 0.0
      %v10368 = vmax.f32 %v10102, 0.0
      %v10369 = vmax.f32 %v10104, 0.0
      %v10370 = vmax.f32 %v10106, 0.0
      %v10371 = vmax.f32 %v10108, 0.0
      %v10372 = vmax.f32 %v10112, 0.0
      %v10373 = vmax.f32 %v10114, 0.0
      %v10374 = vmax.f32 %v10116, 0.0
      %v10375 = vmax.f32 %v10118, 0.0
      %v10376 = vmax.f32 %v10120, %v10248
      %v10377 = vmax.f32 %v10121, %v10249
      %v10378 = vmax.f32 %v10122, %v10250
      %v10379 = vmax.f32 %v10123, %v10251
      %v10380 = vmax.f32 %v10124, %v10252
      %v10381 = vmax.f32 %v10125, %v10253
      %v10382 = vmax.f32 %v10126, %v10254
      %v10383 = vmax.f32 %v10127, %v10255
      %v10384 = vmax.f32 %v10128, %v10256
      %v10385 = vmax.f32 %v10129, %v10257
      %v10386 = vmax.f32 %v10130, %v10258
      %v10387 = vmax.f32 %v10131, %v10259
      %v10388 = vmax.f32 %v10132, %v10260
      %v10389 = vmax.f32 %v10133, %v10261
      %v10390 = vmax.f32 %v10134, %v10262
      %v10391 = vmax.f32 %v10135, %v10263
      %v10392 = vmax.f32 %v10136, %v10264
      %v10393 = vmax.f32 %v10137, %v10265
      %v10394 = vmax.f32 %v10138, %v10266
      %v10395 = vmax.f32 %v10139, %v10267
      %v10396 = vmax.f32 %v10140, %v10268
      %v10397 = vmax.f32 %v10141, %v10269
      %v10398 = vmax.f32 %v10142, %v10270
      %v10399 = vmax.f32 %v10143, %v10271
      %v10400 = vmax.f32 %v10144, %v10272
      %v10401 = vmax.f32 %v10145, %v10273
      %v10402 = vmax.f32 %v10146, %v10274
      %v10403 = vmax.f32 %v10147, %v10275
      %v10404 = vmax.f32 %v10148, %v10276
      %v10405 = vmax.f32 %v10149, %v10277
      %v10406 = vmax.f32 %v10150, %v10278
      %v10407 = vmax.f32 %v10151, %v10279
      %v10408 = vmax.f32 %v10152, %v10280
      %v10409 = vmax.f32 %v10153, %v10281
      %v10410 = vmax.f32 %v10154, %v10282
      %v10411 = vmax.f32 %v10155, %v10283
      %v10412 = vmax.f32 %v10156, %v10284
      %v10413 = vmax.f32 %v10157, %v10285
      %v10414 = vmax.f32 %v10158, %v10286
      %v10415 = vmax.f32 %v10159, %v10287
      %v10416 = vmax.f32 %v10160, %v10288
      %v10417 = vmax.f32 %v10161, %v10289
      %v10418 = vmax.f32 %v10162, %v10290
      %v10419 = vmax.f32 %v10163, %v10291
      %v10420 = vmax.f32 %v10164, %v10292
      %v10421 = vmax.f32 %v10165, %v10293
      %v10422 = vmax.f32 %v10166, %v10294
      %v10423 = vmax.f32 %v10167, %v10295
      %v10424 = vmax.f32 %v10168, %v10296
      %v10425 = vmax.f32 %v10169, %v10297
      %v10426 = vmax.f32 %v10170, %v10298
      %v10427 = vmax.f32 %v10171, %v10299
      %v10428 = vmax.f32 %v10172, %v10300
      %v10429 = vmax.f32 %v10173, %v10301
      %v10430 = vmax.f32 %v10174, %v10302
      %v10431 = vmax.f32 %v10175, %v10303
      %v10432 = vmax.f32 %v10176, %v10304
      %v10433 = vmax.f32 %v10177, %v10305
      %v10434 = vmax.f32 %v10178, %v10306
      %v10435 = vmax.f32 %v10179, %v10307
      %v10436 = vmax.f32 %v10180, %v10308
      %v10437 = vmax.f32 %v10181, %v10309
      %v10438 = vmax.f32 %v10182, %v10310
      %v10439 = vmax.f32 %v10183, %v10311
      %v10440 = vmax.f32 %v10184, %v10312
      %v10441 = vmax.f32 %v10185, %v10313
      %v10442 = vmax.f32 %v10186, %v10314
      %v10443 = vmax.f32 %v10187, %v10315
      %v10444 = vmax.f32 %v10188, %v10316
      %v10445 = vmax.f32 %v10189, %v10317
      %v10446 = vmax.f32 %v10190, %v10318
      %v10447 = vmax.f32 %v10191, %v10319
      %v10448 = vmax.f32 %v10192, %v10320
      %v10449 = vmax.f32 %v10193, %v10321
      %v10450 = vmax.f32 %v10194, %v10322
      %v10451 = vmax.f32 %v10195, %v10323
      %v10452 = vmax.f32 %v10196, %v10324
      %v10453 = vmax.f32 %v10197, %v10325
      %v10454 = vmax.f32 %v10198, %v10326
      %v10455 = vmax.f32 %v10199, %v10327
      %v10456 = vmax.f32 %v10200, %v10328
      %v10457 = vmax.f32 %v10201, %v10329
      %v10458 = vmax.f32 %v10202, %v10330
      %v10459 = vmax.f32 %v10203, %v10331
      %v10460 = vmax.f32 %v10204, %v10332
      %v10461 = vmax.f32 %v10205, %v10333
      %v10462 = vmax.f32 %v10206, %v10334
      %v10463 = vmax.f32 %v10207, %v10335
      %v10464 = vmax.f32 %v10208, %v10336
      %v10465 = vmax.f32 %v10209, %v10337
      %v10466 = vmax.f32 %v10210, %v10338
      %v10467 = vmax.f32 %v10211, %v10339
      %v10468 = vmax.f32 %v10212, %v10340
      %v10469 = vmax.f32 %v10213, %v10341
      %v10470 = vmax.f32 %v10214, %v10342
      %v10471 = vmax.f32 %v10215, %v10343
      %v10472 = vmax.f32 %v10216, %v10344
      %v10473 = vmax.f32 %v10217, %v10345
      %v10474 = vmax.f32 %v10218, %v10346
      %v10475 = vmax.f32 %v10219, %v10347
      %v10476 = vmax.f32 %v10220, %v10348
      %v10477 = vmax.f32 %v10221, %v10349
      %v10478 = vmax.f32 %v10222, %v10350
      %v10479 = vmax.f32 %v10223, %v10351
      %v10480 = vmax.f32 %v10224, %v10352
      %v10481 = vmax.f32 %v10225, %v10353
      %v10482 = vmax.f32 %v10226, %v10354
      %v10483 = vmax.f32 %v10227, %v10355
      %v10484 = vmax.f32 %v10228, %v10356
      %v10485 = vmax.f32 %v10229, %v10357
      %v10486 = vmax.f32 %v10230, %v10358
      %v10487 = vmax.f32 %v10231, %v10359
      %v10488 = vmax.f32 %v10232, %v10360
      %v10489 = vmax.f32 %v10233, %v10361
      %v10490 = vmax.f32 %v10234, %v10362
      %v10491 = vmax.f32 %v10235, %v10363
      %v10492 = vmax.f32 %v10236, %v10364
      %v10493 = vmax.f32 %v10237, %v10365
      %v10494 = vmax.f32 %v10238, %v10366
      %v10495 = vmax.f32 %v10239, %v10367
      %v10496 = vmax.f32 %v10240, %v10368
      %v10497 = vmax.f32 %v10241, %v10369
      %v10498 = vmax.f32 %v10242, %v10370
      %v10499 = vmax.f32 %v10243, %v10371
      %v10500 = vmax.f32 %v10244, %v10372
      %v10501 = vmax.f32 %v10245, %v10373
      %v10502 = vmax.f32 %v10246, %v10374
      %v10503 = vmax.f32 %v10247, %v10375
      %v10504 = vmax.f32 %v10376, %v10440
      %v10505 = vmax.f32 %v10377, %v10441
      %v10506 = vmax.f32 %v10378, %v10442
      %v10507 = vmax.f32 %v10379, %v10443
      %v10508 = vmax.f32 %v10380, %v10444
      %v10509 = vmax.f32 %v10381, %v10445
      %v10510 = vmax.f32 %v10382, %v10446
      %v10511 = vmax.f32 %v10383, %v10447
      %v10512 = vmax.f32 %v10384, %v10448
      %v10513 = vmax.f32 %v10385, %v10449
      %v10514 = vmax.f32 %v10386, %v10450
      %v10515 = vmax.f32 %v10387, %v10451
      %v10516 = vmax.f32 %v10388, %v10452
      %v10517 = vmax.f32 %v10389, %v10453
      %v10518 = vmax.f32 %v10390, %v10454
      %v10519 = vmax.f32 %v10391, %v10455
      %v10520 = vmax.f32 %v10392, %v10456
      %v10521 = vmax.f32 %v10393, %v10457
      %v10522 = vmax.f32 %v10394, %v10458
      %v10523 = vmax.f32 %v10395, %v10459
      %v10524 = vmax.f32 %v10396, %v10460
      %v10525 = vmax.f32 %v10397, %v10461
      %v10526 = vmax.f32 %v10398, %v10462
      %v10527 = vmax.f32 %v10399, %v10463
      %v10528 = vmax.f32 %v10400, %v10464
      %v10529 = vmax.f32 %v10401, %v10465
      %v10530 = vmax.f32 %v10402, %v10466
      %v10531 = vmax.f32 %v10403, %v10467
      %v10532 = vmax.f32 %v10404, %v10468
      %v10533 = vmax.f32 %v10405, %v10469
      %v10534 = vmax.f32 %v10406, %v10470
      %v10535 = vmax.f32 %v10407, %v10471
      %v10536 = vmax.f32 %v10408, %v10472
      %v10537 = vmax.f32 %v10409, %v10473
      %v10538 = vmax.f32 %v10410, %v10474
      %v10539 = vmax.f32 %v10411, %v10475
      %v10540 = vmax.f32 %v10412, %v10476
      %v10541 = vmax.f32 %v10413, %v10477
      %v10542 = vmax.f32 %v10414, %v10478
      %v10543 = vmax.f32 %v10415, %v10479
      %v10544 = vmax.f32 %v10416, %v10480
      %v10545 = vmax.f32 %v10417, %v10481
      %v10546 = vmax.f32 %v10418, %v10482
      %v10547 = vmax.f32 %v10419, %v10483
      %v10548 = vmax.f32 %v10420, %v10484
      %v10549 = vmax.f32 %v10421, %v10485
      %v10550 = vmax.f32 %v10422, %v10486
      %v10551 = vmax.f32 %v10423, %v10487
      %v10552 = vmax.f32 %v10424, %v10488
      %v10553 = vmax.f32 %v10425, %v10489
      %v10554 = vmax.f32 %v10426, %v10490
      %v10555 = vmax.f32 %v10427, %v10491
      %v10556 = vmax.f32 %v10428, %v10492
      %v10557 = vmax.f32 %v10429, %v10493
      %v10558 = vmax.f32 %v10430, %v10494
      %v10559 = vmax.f32 %v10431, %v10495
      %v10560 = vmax.f32 %v10432, %v10496
      %v10561 = vmax.f32 %v10433, %v10497
      %v10562 = vmax.f32 %v10434, %v10498
      %v10563 = vmax.f32 %v10435, %v10499
      %v10564 = vmax.f32 %v10436, %v10500
      %v10565 = vmax.f32 %v10437, %v10501
      %v10566 = vmax.f32 %v10438, %v10502
      %v10567 = vmax.f32 %v10439, %v10503
      %v10568 = vmax.f32 %v10504, %v10536
      %v10569 = vmax.f32 %v10505, %v10537
      %v10570 = vmax.f32 %v10506, %v10538
      %v10571 = vmax.f32 %v10507, %v10539
      %v10572 = vmax.f32 %v10508, %v10540
      %v10573 = vmax.f32 %v10509, %v10541
      %v10574 = vmax.f32 %v10510, %v10542
      %v10575 = vmax.f32 %v10511, %v10543
      %v10576 = vmax.f32 %v10512, %v10544
      %v10577 = vmax.f32 %v10513, %v10545
      %v10578 = vmax.f32 %v10514, %v10546
      %v10579 = vmax.f32 %v10515, %v10547
      %v10580 = vmax.f32 %v10516, %v10548
      %v10581 = vmax.f32 %v10517, %v10549
      %v10582 = vmax.f32 %v10518, %v10550
      %v10583 = vmax.f32 %v10519, %v10551
      %v10584 = vmax.f32 %v10520, %v10552
      %v10585 = vmax.f32 %v10521, %v10553
      %v10586 = vmax.f32 %v10522, %v10554
      %v10587 = vmax.f32 %v10523, %v10555
      %v10588 = vmax.f32 %v10524, %v10556
      %v10589 = vmax.f32 %v10525, %v10557
      %v10590 = vmax.f32 %v10526, %v10558
      %v10591 = vmax.f32 %v10527, %v10559
      %v10592 = vmax.f32 %v10528, %v10560
      %v10593 = vmax.f32 %v10529, %v10561
      %v10594 = vmax.f32 %v10530, %v10562
      %v10595 = vmax.f32 %v10531, %v10563
      %v10596 = vmax.f32 %v10532, %v10564
      %v10597 = vmax.f32 %v10533, %v10565
      %v10598 = vmax.f32 %v10534, %v10566
      %v10599 = vmax.f32 %v10535, %v10567
      %v10600 = vmax.f32 %v10568, %v10584
      %v10601 = vmax.f32 %v10569, %v10585
      %v10602 = vmax.f32 %v10570, %v10586
      %v10603 = vmax.f32 %v10571, %v10587
      %v10604 = vmax.f32 %v10572, %v10588
      %v10605 = vmax.f32 %v10573, %v10589
      %v10606 = vmax.f32 %v10574, %v10590
      %v10607 = vmax.f32 %v10575, %v10591
      %v10608 = vmax.f32 %v10576, %v10592
      %v10609 = vmax.f32 %v10577, %v10593
      %v10610 = vmax.f32 %v10578, %v10594
      %v10611 = vmax.f32 %v10579, %v10595
      %v10612 = vmax.f32 %v10580, %v10596
      %v10613 = vmax.f32 %v10581, %v10597
      %v10614 = vmax.f32 %v10582, %v10598
      %v10615 = vmax.f32 %v10583, %v10599
      %v10616 = vmax.f32 %v10600, %v10608
      %v10617 = vmax.f32 %v10601, %v10609
      %v10618 = vmax.f32 %v10602, %v10610
      %v10619 = vmax.f32 %v10603, %v10611
      %v10620 = vmax.f32 %v10604, %v10612
      %v10621 = vmax.f32 %v10605, %v10613
      %v10622 = vmax.f32 %v10606, %v10614
      %v10623 = vmax.f32 %v10607, %v10615
      %v10624 = vmax.f32 %v10616, %v10620
      %v10625 = vmax.f32 %v10617, %v10621
      %v10626 = vmax.f32 %v10618, %v10622
      %v10627 = vmax.f32 %v10619, %v10623
      %v10628 = vmax.f32 %v10624, %v10626
      %v10629 = vmax.f32 %v10625, %v10627
      %p10630 = scmp.eq.s32.totalorder %s31, 0
      // Predicated region
      $region73: #{cdw_extractor_forward.1} parent=71 // pred_check
        %p10631 = pneg %p10630
      $region74: #{cdw_extractor_forward.1} parent=71 // pred_check_branch
        %10633 = sbr.rel (%p10631) target = $region76
      $region75: #{cdw_extractor_forward.1} parent=71 // pred_region
        %10634 = vst [vmem:[#allocation2] sm:$0xff] %v10628
        %10635 = vst [vmem:[#allocation2 + $0x8] sm:$0xff] %v10629
      $region76: #{cdw_extractor_forward.1} parent=71 // pred_fallthru
        _
      %p10636 = scmp.ne.s32.totalorder %s31, 0
      // Predicated region
      $region77: #{cdw_extractor_forward.1} parent=71 // pred_check
        %p10637 = pneg %p10636
      $region78: #{cdw_extractor_forward.1} parent=71 // pred_check_branch
        %10639 = sbr.rel (%p10637) target = $region80
      $region79: #{cdw_extractor_forward.1} parent=71 // pred_region
        %v10640 = vld [vmem:[#allocation2] sm:$0xff]
        %v10641 = vld [vmem:[#allocation2 + $0x8] sm:$0xff]
        %v10642 = vmax.f32 %v10640, %v10628
        %v10643 = vmax.f32 %v10641, %v10629
        %10644 = vst [vmem:[#allocation2] sm:$0xff] %v10642
        %10645 = vst [vmem:[#allocation2 + $0x8] sm:$0xff] %v10643
      $region80: #{cdw_extractor_forward.1} parent=71 // pred_fallthru
        _
      // Predicated region
      $region81: #{cdw_extractor_forward.1} parent=71 // pred_check
        %p10646 = pneg %p10630
      $region82: #{cdw_extractor_forward.1} parent=71 // pred_check_branch
        %10648 = sbr.rel (%p10646) target = $region84
      $region83: #{cdw_extractor_forward.1} parent=71 // pred_region
        %v10649 = vld [vmem:[#allocation2] sm:$0xff]
        %v10650 = vld [vmem:[#allocation2 + $0x8] sm:$0xff]
        %10651 = vst [vmem:[%s492] sm:$0xff] %v10649
        %10652 = vst [vmem:[%s492 + $0x8] sm:$0xff] %v10650
      $region84: #{cdw_extractor_forward.1} parent=71 // pred_fallthru
        _
      %p10653 = scmp.lt.s32.totalorder %s29, 1
      %s10654 = scalar_select %p10653, %s29, 1
      %p10655 = scmp.lt.s32.totalorder %s30, 0
      %s10656 = scalar_select %p10655, %s30, 0
      %s10657 = smul.addr %s10656, 2
      %s10658 = smul.addr %s10654, 2
      %s10659 = sadd.s32 %s10657, %s10658
      %s10660 = smul.addr %s10659, 8
      %s10661 = scalar_lea.vmem %s13, %s10660
      // Predicated region
      $region85: #{cdw_extractor_forward.1} parent=71 // pred_check
        %p10662 = pneg %p345
      $region86: #{cdw_extractor_forward.1} parent=71 // pred_check_branch
        %10664 = sbr.rel (%p10662) target = $region88
      $region87: #{cdw_extractor_forward.1} parent=71 // pred_region
        _
      $region88: #{cdw_extractor_forward.1} parent=71 // pred_fallthru
        _
    $region72: #{cdw_extractor_forward.1} parent=5 // pred_fallthru
      _
    %p10665 = scmp.le.s32.totalorder 2, %s19
    // Predicated region
    $region89: #{cdw_extractor_forward.1} parent=5 // pred_check
      %p10666 = pneg %p10665
    $region90: #{cdw_extractor_forward.1} parent=5 // pred_check_branch
      %10668 = sbr.rel (%p10666) target = $region92
    $region91: #{cdw_extractor_forward.1} parent=5 // pred_region
      %s10669 = ssub.s32 %s19, 2
      // Predicated region
      $region93: #{cdw_extractor_forward.1} parent=91 // pred_check
        %p10670 = pneg %p351
      $region94: #{cdw_extractor_forward.1} parent=91 // pred_check_branch
        %10672 = sbr.rel (%p10670) target = $region96
      $region95: #{cdw_extractor_forward.1} parent=91 // pred_region
        %p10673 = scmp.lt.s32.totalorder %s32, 1
        %s10674 = scalar_select %p10673, %s32, 1
        %p10675 = scmp.lt.s32.totalorder %s33, 0
        %s10676 = scalar_select %p10675, %s33, 0
        %s10677 = smul.addr %s10676, 2
        %s10678 = smul.addr %s10674, 2
        %s10679 = sadd.s32 %s10677, %s10678
        %s10680 = smul.addr %s10679, 8
        %s10681 = scalar_lea.vmem %s13, %s10680
      $region96: #{cdw_extractor_forward.1} parent=91 // pred_fallthru
        _
    $region92: #{cdw_extractor_forward.1} parent=5 // pred_fallthru
      _
  $region6: #{cdw_extractor_forward.1} parent=0 // loop_footer
    %s23 = sadd.s32 1, %s19
  $region7: #{cdw_extractor_forward.1} parent=0 // loop_footer_branch
    %18 = sbr.rel target = $region3
  $region8: #{cdw_extractor_forward.1} parent=0 // loop_exit
    _

</llo_original>
